<compile_context>
chip_gen: v5e
topology: v5e:2x2
jax: 0.10.0
libtpu: 0.0.40
codegen_flags: <defaults>
</compile_context>

<pallas_src>
import functools
import math

import jax
import jax.numpy as jnp
from jax.experimental import pallas as pl
from jax.experimental.pallas import tpu as pltpu


# ----------------------------------------------------------------------------
# helpers / hardware-aware configuration
# ----------------------------------------------------------------------------
def _round_up(x, m):
    return ((x + m - 1) // m) * m


def _device_kind():
    try:
        return jax.devices()[0].device_kind.lower()
    except Exception:
        return ""


_KIND = _device_kind()
# bf16 exp only on generations with bf16 VPU/EUP (v6e, v7x); keep f32 on v2-v5.
_USE_BF16_EXP = not any(t in _KIND for t in ("v2", "v3", "v4", "v5"))


def _vmem_limit_bytes():
    cap = None
    try:
        cap = getattr(pltpu.get_tpu_info(), "vmem_capacity_bytes", None)
    except Exception:
        cap = None
    if not cap:
        cap = (64 if "7" in _KIND else 128) * 1024 * 1024
    # leave headroom; never request more than 96 MiB (v7x physical is only 64 MiB)
    return int(max(32 * 1024 * 1024, min(3 * cap // 4, 96 * 1024 * 1024)))


_VMEM_LIMIT = _vmem_limit_bytes()


def _choose_row_tile(n_rows, w, c, vmem_limit):
    """Rows-per-grid-step TR (multiple of 8, <=128) from a generation-aware VMEM budget,
    accounting for double-buffered blocks, projection intermediates and f32 score temps."""
    fixed = 2 * w * w * 4 + 8 * c * c + (1 << 20)          # resident constants / weights
    budget = max(vmem_limit - fixed, 4 << 20)
    per_row = 48 * w * c + 14 * w * w
    tr = budget // max(per_row, 1)
    tr = max(8, min(128, (tr // 8) * 8))
    if n_rows >= 16:                                        # keep >=2 row blocks (feeds 2 TCs)
        tr = min(tr, _round_up((n_rows + 1) // 2, 8))
    tr = min(tr, _round_up(n_rows, 8))
    return int(tr)


# ----------------------------------------------------------------------------
# GEMM kernel (backbone im2col convs + 1x1 tokenizer convs)
# ----------------------------------------------------------------------------
def gemm_bias_act_kernel(a_ref, b_ref, bias_ref, o_ref, *, apply_relu):
    acc = jnp.dot(a_ref[...], b_ref[...], preferred_element_type=jnp.float32)
    acc = acc + bias_ref[...]
    if apply_relu:
        acc = jnp.maximum(acc, 0.0)
    o_ref[...] = acc.astype(o_ref.dtype)


def gemm_bias_act(a, b, bias=None, relu=False, out_dtype=jnp.bfloat16):
    """Tiled GEMM + bias + optional ReLU.  tm scales with K (~4 MiB bf16 A block) and
    guarantees >=2 grid steps when M >= 256 (both v7x TensorCores busy)."""
    M, K = a.shape
    _, N = b.shape
    if bias is None:
        bias = jnp.zeros((1, N), jnp.float32)
    bias = bias.astype(jnp.float32).reshape(1, N)
    a = a.astype(jnp.bfloat16)
    b = b.astype(jnp.bfloat16)

    tm = max(256, min(2048, (4 * 1024 * 1024) // max(2 * K, 1)))
    tm = _round_up(tm, 8)
    tm = min(tm, _round_up(M, 8))
    if M >= 256:
        tm = min(tm, _round_up((M + 1) // 2, 8))
    M_pad = _round_up(M, tm)
    if M_pad != M:
        a = jnp.pad(a, ((0, M_pad - M), (0, 0)))

    out = pl.pallas_call(
        functools.partial(gemm_bias_act_kernel, apply_relu=relu),
        out_shape=jax.ShapeDtypeStruct((M_pad, N), out_dtype),
        grid=(M_pad // tm,),
        in_specs=[
            pl.BlockSpec((tm, K), lambda i: (i, 0)),
            pl.BlockSpec((K, N), lambda i: (0, 0)),
            pl.BlockSpec((1, N), lambda i: (0, 0)),
        ],
        out_specs=pl.BlockSpec((tm, N), lambda i: (i, 0)),
        compiler_params=pltpu.CompilerParams(dimension_semantics=("parallel",)),
    )(a, b, bias)
    return out[:M]


# ----------------------------------------------------------------------------
# fused self-attention kernel: pos add + QKV projection + attention + residual
# ----------------------------------------------------------------------------
def self_attn_kernel(x_ref, pos_ref, w_ref, kbias_ref, o_ref, *,
                     use_bf16_exp, apply_kmask):
    """x:(1,TR,W,C) bf16 tokens, pos:(TR,W,C) bf16, w:(C,3C) bf16 (Q columns pre-scaled),
    kbias:(1,W) f32 additive key mask (only used when width was padded)."""
    C = x_ref.shape[-1]
    TR = x_ref.shape[1]
    W = x_ref.shape[2]
    x = x_ref[0]                                            # (TR, W, C) bf16
    xp = x + pos_ref[...]                                   # bf16 add, never hits HBM
    # fused QKV projection (MXU, bf16 operands, f32 accumulation)
    qkv = jnp.dot(xp.reshape(TR * W, C), w_ref[...],
                  preferred_element_type=jnp.float32)
    qkv = qkv.astype(jnp.bfloat16).reshape(TR, W, 3 * C)
    q = qkv[:, :, :C]
    k = qkv[:, :, C:2 * C]
    v = qkv[:, :, 2 * C:]
    s = jnp.einsum("rwc,rvc->rwv", q, k, preferred_element_type=jnp.float32)
    if apply_kmask:
        s = s + kbias_ref[...][None]                        # mask padded key columns
    s = s - jnp.max(s, axis=-1, keepdims=True)
    if use_bf16_exp:
        e = jnp.exp(s.astype(jnp.bfloat16))
    else:
        e = jnp.exp(s)
    denom = jnp.sum(e, axis=-1, keepdims=True, dtype=jnp.float32)
    # deferred softmax normalization: scale the (TR,W,C) output, not the (TR,W,W) weights
    o = jnp.einsum("rwv,rvc->rwc", e.astype(jnp.bfloat16), v,
                   preferred_element_type=jnp.float32)
    o = o * pl.reciprocal(denom, approx=True)
    o_ref[0] = (x.astype(jnp.float32) + o).astype(o_ref.dtype)


def fused_self_attention(tokens, pos, w_qkv):
    """tokens:(N,H,W,C) bf16, pos:(H,W,C) bf16, w_qkv:(C,3C) bf16 -> (N,H,W,C) bf16."""
    N, Hh, Wd, C = tokens.shape
    Wp = _round_up(Wd, 8)
    apply_kmask = Wp != Wd
    if apply_kmask:
        tokens = jnp.pad(tokens, ((0, 0), (0, 0), (0, Wp - Wd), (0, 0)))
        pos = jnp.pad(pos, ((0, 0), (0, Wp - Wd), (0, 0)))
        kbias = jnp.concatenate(
            [jnp.zeros((1, Wd), jnp.float32),
             jnp.full((1, Wp - Wd), -1e9, jnp.float32)], axis=1)
    else:
        kbias = jnp.zeros((1, Wp), jnp.float32)

    tr = _choose_row_tile(Hh, Wp, C, _VMEM_LIMIT)
    Hp = _round_up(Hh, tr)
    if Hp != Hh:
        tokens = jnp.pad(tokens, ((0, 0), (0, Hp - Hh), (0, 0), (0, 0)))
        pos = jnp.pad(pos, ((0, Hp - Hh), (0, 0), (0, 0)))

    out = pl.pallas_call(
        functools.partial(self_attn_kernel, use_bf16_exp=_USE_BF16_EXP,
                          apply_kmask=apply_kmask),
        out_shape=jax.ShapeDtypeStruct((N, Hp, Wp, C), jnp.bfloat16),
        grid=(N, Hp // tr),
        in_specs=[
            pl.BlockSpec((1, tr, Wp, C), lambda i, j: (i, j, 0, 0)),
            pl.BlockSpec((tr, Wp, C), lambda i, j: (j, 0, 0)),
            pl.BlockSpec((C, 3 * C), lambda i, j: (0, 0)),     # VMEM-resident weight
            pl.BlockSpec((1, Wp), lambda i, j: (0, 0)),
        ],
        out_specs=pl.BlockSpec((1, tr, Wp, C), lambda i, j: (i, j, 0, 0)),
        compiler_params=pltpu.CompilerParams(
            dimension_semantics=("parallel", "parallel"),
            vmem_limit_bytes=_VMEM_LIMIT),
    )(tokens.astype(jnp.bfloat16), pos.astype(jnp.bfloat16), w_qkv, kbias)
    return out[:, :Hh, :Wd]


# ----------------------------------------------------------------------------
# fused cross-attention + regression kernel: cq/ck projection + attention + disparity/occlusion
# ----------------------------------------------------------------------------
def cross_reg_kernel(fl_ref, fr_ref, wq_ref, wk_ref, valid_ref, dval_ref, kbias_ref,
                     disp_ref, occ_ref, *, use_bf16_exp, apply_kmask):
    """Left->right cross attention fused with the regression head for TR epipolar rows.
    The (TR,W,W) attention tensor never leaves VMEM; outputs are lane-dense (TR,W)."""
    C = fl_ref.shape[-1]
    TR = fl_ref.shape[1]
    W = fl_ref.shape[2]
    fl = fl_ref[0]
    fr = fr_ref[0]
    ql = jnp.dot(fl.reshape(TR * W, C), wq_ref[...],
                 preferred_element_type=jnp.float32)
    kr = jnp.dot(fr.reshape(TR * W, C), wk_ref[...],
                 preferred_element_type=jnp.float32)
    ql = ql.astype(jnp.bfloat16).reshape(TR, W, C)
    kr = kr.astype(jnp.bfloat16).reshape(TR, W, C)
    s = jnp.einsum("rwc,rvc->rwv", ql, kr, preferred_element_type=jnp.float32)
    if apply_kmask:
        s = s + kbias_ref[...][None]
    s = s - jnp.max(s, axis=-1, keepdims=True)
    if use_bf16_exp:
        e = jnp.exp(s.astype(jnp.bfloat16))
    else:
        e = jnp.exp(s)
    # deferred normalization: all reductions on unnormalized exp weights
    denom = jnp.sum(e, axis=-1, dtype=jnp.float32)                        # (TR, W)
    mass_un = jnp.sum(e * valid_ref[...][None], axis=-1, dtype=jnp.float32)
    dnum = jnp.sum(e * dval_ref[...][None], axis=-1, dtype=jnp.float32)
    mass = mass_un / denom                                                # valid prob mass
    # exact divide on the small (TR,W) result (accurate near full occlusion)
    disp = dnum / jnp.maximum(mass_un, 1e-6 * denom)
    disp_ref[0] = disp.astype(disp_ref.dtype)
    occ_ref[0] = (1.0 - mass).astype(occ_ref.dtype)


def fused_cross_attention_regression(fl, fr, w_cq, w_ck):
    bs, Hh, Wd, C = fl.shape
    Wp = _round_up(Wd, 8)
    apply_kmask = Wp != Wd
    if apply_kmask:
        fl = jnp.pad(fl, ((0, 0), (0, 0), (0, Wp - Wd), (0, 0)))
        fr = jnp.pad(fr, ((0, 0), (0, 0), (0, Wp - Wd), (0, 0)))
        kbias = jnp.concatenate(
            [jnp.zeros((1, Wd), jnp.float32),
             jnp.full((1, Wp - Wd), -1e9, jnp.float32)], axis=1)
    else:
        kbias = jnp.zeros((1, Wp), jnp.float32)

    tr = _choose_row_tile(Hh, Wp, C, _VMEM_LIMIT)
    Hp = _round_up(Hh, tr)
    if Hp != Hh:
        fl = jnp.pad(fl, ((0, 0), (0, Hp - Hh), (0, 0), (0, 0)))
        fr = jnp.pad(fr, ((0, 0), (0, Hp - Hh), (0, 0), (0, 0)))

    # disparity-candidate / validity constants: built once, VMEM-resident across the grid
    i_idx = jnp.arange(Wp, dtype=jnp.float32)[:, None]
    j_idx = jnp.arange(Wp, dtype=jnp.float32)[None, :]
    d = i_idx - j_idx
    valid = (d >= 0.0).astype(jnp.float32)
    dval = valid * d

    disp, occ = pl.pallas_call(
        functools.partial(cross_reg_kernel, use_bf16_exp=_USE_BF16_EXP,
                          apply_kmask=apply_kmask),
        out_shape=(jax.ShapeDtypeStruct((bs, Hp, Wp), jnp.float32),
                   jax.ShapeDtypeStruct((bs, Hp, Wp), jnp.float32)),
        grid=(bs, Hp // tr),
        in_specs=[
            pl.BlockSpec((1, tr, Wp, C), lambda i, j: (i, j, 0, 0)),
            pl.BlockSpec((1, tr, Wp, C), lambda i, j: (i, j, 0, 0)),
            pl.BlockSpec((C, C), lambda i, j: (0, 0)),
            pl.BlockSpec((C, C), lambda i, j: (0, 0)),
            pl.BlockSpec((Wp, Wp), lambda i, j: (0, 0)),
            pl.BlockSpec((Wp, Wp), lambda i, j: (0, 0)),
            pl.BlockSpec((1, Wp), lambda i, j: (0, 0)),
        ],
        out_specs=(
            pl.BlockSpec((1, tr, Wp), lambda i, j: (i, j, 0)),
            pl.BlockSpec((1, tr, Wp), lambda i, j: (i, j, 0)),
        ),
        compiler_params=pltpu.CompilerParams(
            dimension_semantics=("parallel", "parallel"),
            vmem_limit_bytes=_VMEM_LIMIT),
    )(fl.astype(jnp.bfloat16), fr.astype(jnp.bfloat16), w_cq, w_ck, valid, dval, kbias)
    return disp[:, :Hh, :Wd], occ[:, :Hh, :Wd]


# ----------------------------------------------------------------------------
# Plain-JAX glue: im2col, pooling, pos encoding, parameter init
# ----------------------------------------------------------------------------
def im2col(x, kh, kw, stride, pad):
    """x: [B,H,W,C] NHWC -> patches [B*Ho*Wo, kh*kw*C] (matches HWIO weight reshape)."""
    # TODO(synk): fuse the kh*kw tap loop into the conv GEMM (tap grid axis + f32 accumulator)
    # to avoid materializing the 9x-expanded patch matrix in HBM.
    x = jnp.pad(x, ((0, 0), (pad, pad), (pad, pad), (0, 0)))
    B, Hp, Wp, C = x.shape
    Ho = (Hp - kh) // stride + 1
    Wo = (Wp - kw) // stride + 1
    cols = []
    for i in range(kh):
        for j in range(kw):
            cols.append(x[:, i:i + stride * Ho:stride, j:j + stride * Wo:stride, :])
    patches = jnp.concatenate(cols, axis=-1)                    # [B,Ho,Wo,kh*kw*C]
    return patches.reshape(B * Ho * Wo, kh * kw * C), (B, Ho, Wo)


def conv2d(x, w, b, stride, pad, relu):
    kh, kw, cin, cout = w.shape
    cols, (B, Ho, Wo) = im2col(x, kh, kw, stride, pad)
    out = gemm_bias_act(cols, w.reshape(kh * kw * cin, cout), b, relu=relu)
    return out.reshape(B, Ho, Wo, cout)


def conv1x1(x, w, b):
    B, H, W, C = x.shape
    out = gemm_bias_act(x.reshape(B * H * W, C), w, b, relu=False)
    return out.reshape(B, H, W, w.shape[1])


def avgpool2(x):
    B, H, W, C = x.shape
    y = x.astype(jnp.float32).reshape(B, H // 2, 2, W // 2, 2, C).mean(axis=(2, 4))
    return y.astype(x.dtype)


def sine_pos_1d(length, dim):
    pos = jnp.arange(length, dtype=jnp.float32)[:, None]
    div = jnp.exp(jnp.arange(0, dim, 2, dtype=jnp.float32) * (-math.log(10000.0) / dim))
    pe = jnp.zeros((length, dim), jnp.float32)
    pe = pe.at[:, 0::2].set(jnp.sin(pos * div))
    pe = pe.at[:, 1::2].set(jnp.cos(pos * div))
    return pe


def init_params(key):
    ks = jax.random.split(key, 16)

    def conv_w(k, kh, kw, cin, cout):            # kaiming_normal fan_out, relu
        fan_out = kh * kw * cout
        return jax.random.normal(k, (kh, kw, cin, cout), jnp.float32) * jnp.sqrt(2.0 / fan_out)

    def lin_w(k, cin, cout):                     # xavier-uniform-like
        bound = math.sqrt(6.0 / (cin + cout))
        return jax.random.uniform(k, (cin, cout), jnp.float32, -bound, bound)

    C = 128
    p = {
        "w1": conv_w(ks[0], 3, 3, 3, 64), "b1": jnp.zeros((1, 64), jnp.float32),
        "w2": conv_w(ks[1], 3, 3, 64, 128), "b2": jnp.zeros((1, 128), jnp.float32),
        "w3": conv_w(ks[2], 3, 3, 128, 128), "b3": jnp.zeros((1, 128), jnp.float32),
        "tw": lin_w(ks[3], C, C), "tb": jnp.zeros((1, C), jnp.float32),
        "t1w": lin_w(ks[4], C, C), "t1b": jnp.zeros((1, C), jnp.float32),
    }
    for name, idx in [("wq", 5), ("wk", 6), ("wv", 7),
                      ("wq1", 8), ("wk1", 9), ("wv1", 10),
                      ("cq", 11), ("ck", 12)]:
        p[name] = lin_w(ks[idx], C, C)
    return p


# ----------------------------------------------------------------------------
# CSTR forward
# ----------------------------------------------------------------------------
def cstr_forward(params, left_nchw, right_nchw):
    bs, _, H, W = left_nchw.shape
    assert H % 8 == 0 and W % 8 == 0, "H, W must be multiples of 8 (downscale 4 + coarse pool 2)"
    s = 4                                                     # feature downscale
    C = 128

    # --- stack left/right along batch like the PyTorch backbone; NCHW -> NHWC, bf16 for MXU
    x = jnp.concatenate([left_nchw, right_nchw], axis=0)
    x = jnp.transpose(x, (0, 2, 3, 1)).astype(jnp.bfloat16)

    # --- backbone: contracting path (layer_channel = [64, 128, 128]); no channel padding
    feat = conv2d(x, params["w1"], params["b1"], stride=2, pad=1, relu=True)   # [2bs,H/2,W/2,64]
    feat = conv2d(feat, params["w2"], params["b2"], stride=2, pad=1, relu=True)  # [2bs,H/4,W/4,128]
    feat = conv2d(feat, params["w3"], params["b3"], stride=1, pad=1, relu=True)

    # --- tokenizer: fine tokens + coarse tokens (expanding-path surrogate)
    tokens = conv1x1(feat, params["tw"], params["tb"])                         # [2bs,Hs,Ws,128]
    tokens1 = conv1x1(avgpool2(feat), params["t1w"], params["t1b"])            # [2bs,Hs/2,Ws/2,128]
    Hs, Ws = H // s, W // s
    H1, W1 = Hs // 2, Ws // 2

    # --- pos encoder: relative sine encodings (two scales); consumed directly by the kernels
    pos = (sine_pos_1d(Hs, C)[:, None, :] + sine_pos_1d(Ws, C)[None, :, :]).astype(jnp.bfloat16)
    pos1 = (sine_pos_1d(H1, C)[:, None, :] + sine_pos_1d(W1, C)[None, :, :]).astype(jnp.bfloat16)

    # 1/sqrt(C) attention scale folded into the Q projection columns (free at trace time)
    scale = 1.0 / math.sqrt(C)
    w_qkv = jnp.concatenate([params["wq"] * scale, params["wk"], params["wv"]],
                            axis=1).astype(jnp.bfloat16)                      # (C, 3C)
    w_qkv1 = jnp.concatenate([params["wq1"] * scale, params["wk1"], params["wv1"]],
                             axis=1).astype(jnp.bfloat16)

    # --- dual transformer: left/right share weights -> single fused call per scale
    sa = fused_self_attention(tokens, pos, w_qkv)            # (2bs, Hs, Ws, C)
    sa1 = fused_self_attention(tokens1, pos1, w_qkv1)        # (2bs, H1, W1, C)

    fl, fr = sa[:bs], sa[bs:]
    fl1, fr1 = sa1[:bs], sa1[bs:]

    def up2(t):                                              # coarse -> fine dual-scale fusion
        return jnp.repeat(jnp.repeat(t, 2, axis=1), 2, axis=2)

    fl = fl + up2(fl1)
    fr = fr + up2(fr1)
    feat_leftc = fl  # noqa: F841
    # TODO(synk): feat_leftc feeds the original regression head's context-adjustment CNN
    # (refinement conditioned on the left image); omitted here.
    # TODO(synk): the original transformer alternates multiple self/cross layers; single layer here.

    w_cq = (params["cq"] * scale).astype(jnp.bfloat16)
    w_ck = params["ck"].astype(jnp.bfloat16)

    # --- fused cross attention + regression head
    # TODO(synk): full Sinkhorn optimal-transport normalization replaced by row softmax.
    disp_low, occ_low = fused_cross_attention_regression(fl, fr, w_cq, w_ck)   # (bs,Hs,Ws)

    disp_full = jnp.repeat(jnp.repeat(disp_low * float(s), s, axis=1), s, axis=2)
    occ_full = jnp.repeat(jnp.repeat(occ_low, s, axis=1), s, axis=2)

    return {
        "disp_pred": disp_full,              # [N, H, W]
        "occ_pred": occ_full,                # [N, H, W]
        "disp_pred_low_res": disp_low,       # [N, H//s, W//s]
    }


# ----------------------------------------------------------------------------
if __name__ == "__main__":
    bs, ch, H, W = 2, 3, 32, 32
    key = jax.random.PRNGKey(0)
    k_left, k_right = jax.random.split(key)
    left = jax.random.normal(k_left, (bs, ch, H, W), jnp.float32)    # NCHW (PyTorch convention)
    right = jax.random.normal(k_right, (bs, ch, H, W), jnp.float32)

    params = init_params(jax.random.PRNGKey(42))

    fwd = jax.jit(cstr_forward)
    out = fwd(params, left, right)
    jax.block_until_ready(out)

    assert out["disp_pred"].shape == (bs, H, W)
    assert out["occ_pred"].shape == (bs, H, W)
    assert out["disp_pred_low_res"].shape == (bs, H // 4, W // 4)
    assert all(bool(jnp.all(jnp.isfinite(v))) for v in out.values())
    print("KERNEL_OK")
</pallas_src>

<mosaic_0001>
module attributes {stable_mosaic.version = 11 : i64} {
  func.func @gemm_bias_act_kernel(%arg0: i32, %arg1: memref<512x27xbf16, #tpu.memory_space<vmem>>, %arg2: memref<27x64xbf16, #tpu.memory_space<vmem>>, %arg3: memref<1x64xf32, #tpu.memory_space<vmem>>, %arg4: memref<512x64xbf16, #tpu.memory_space<vmem>>) attributes {dimension_semantics = [#tpu.dimension_semantics<parallel>], iteration_bounds = array<i64: 2>, scalar_prefetch = 0 : i64, scratch_operands = 0 : i64, tpu.core_type = #tpu.core_type<tc>, window_params = [{transform_indices = @transform_0, window_bounds = array<i64: 512, 27>}, {pipeline_mode = #tpu.pipeline_mode<synchronous>, transform_indices = @transform_1, window_bounds = array<i64: 27, 64>}, {pipeline_mode = #tpu.pipeline_mode<synchronous>, transform_indices = @transform_2, window_bounds = array<i64: 1, 64>}, {transform_indices = @transform_3, window_bounds = array<i64: 512, 64>}]} {
    %c0 = arith.constant 0 : index
    %c0_0 = arith.constant 0 : index
    %0 = vector.load %arg1[%c0, %c0_0] : memref<512x27xbf16, #tpu.memory_space<vmem>>, vector<512x27xbf16>
    %c0_1 = arith.constant 0 : index
    %c0_2 = arith.constant 0 : index
    %1 = vector.load %arg2[%c0_1, %c0_2] : memref<27x64xbf16, #tpu.memory_space<vmem>>, vector<27x64xbf16>
    %cst = arith.constant dense<0.000000e+00> : vector<512x64xf32>
    %2 = tpu.matmul %0, %1, %cst {dimension_numbers = #tpu.dot_dimension_numbers<[1], [0], [0], [1], [0, 0, 1, 1], [], []>} : vector<512x27xbf16>, vector<27x64xbf16>, vector<512x64xf32> -> vector<512x64xf32>
    %c0_3 = arith.constant 0 : index
    %c0_4 = arith.constant 0 : index
    %3 = vector.load %arg3[%c0_3, %c0_4] : memref<1x64xf32, #tpu.memory_space<vmem>>, vector<1x64xf32>
    %4 = vector.broadcast %3 : vector<1x64xf32> to vector<512x64xf32>
    %5 = arith.addf %2, %4 : vector<512x64xf32>
    %cst_5 = arith.constant 0.000000e+00 : f32
    %6 = vector.broadcast %cst_5 : f32 to vector<512x64xf32>
    %7 = arith.maximumf %5, %6 : vector<512x64xf32>
    %8 = arith.truncf %7 : vector<512x64xf32> to vector<512x64xbf16>
    %c0_6 = arith.constant 0 : index
    %c0_7 = arith.constant 0 : index
    %9 = vector.load %arg4[%c0_6, %c0_7] : memref<512x64xbf16, #tpu.memory_space<vmem>>, vector<512x64xbf16>
    tpu.vector_store %arg4[%c0_6, %c0_7], %8 {strides = array<i32>} : memref<512x64xbf16, #tpu.memory_space<vmem>>, vector<512x64xbf16>,
    return
  }
  func.func @transform_0(%arg0: i32) -> (i32, i32) {
    %c0_i32 = arith.constant 0 : i32
    %c0_i32_0 = arith.constant 0 : i32
    return %arg0, %c0_i32 : i32, i32
  }
  func.func @transform_1(%arg0: i32) -> (i32, i32) {
    %c0_i32 = arith.constant 0 : i32
    %c0_i32_0 = arith.constant 0 : i32
    %c0_i32_1 = arith.constant 0 : i32
    return %c0_i32, %c0_i32_0 : i32, i32
  }
  func.func @transform_2(%arg0: i32) -> (i32, i32) {
    %c0_i32 = arith.constant 0 : i32
    %c0_i32_0 = arith.constant 0 : i32
    %c0_i32_1 = arith.constant 0 : i32
    return %c0_i32, %c0_i32_0 : i32, i32
  }
  func.func @transform_3(%arg0: i32) -> (i32, i32) {
    %c0_i32 = arith.constant 0 : i32
    %c0_i32_0 = arith.constant 0 : i32
    return %arg0, %c0_i32 : i32, i32
  }
}

module attributes {stable_mosaic.version = 11 : i64} {
  func.func @gemm_bias_act_kernel(%arg0: i32, %arg1: memref<128x576xbf16, #tpu.memory_space<vmem>>, %arg2: memref<576x128xbf16, #tpu.memory_space<vmem>>, %arg3: memref<1x128xf32, #tpu.memory_space<vmem>>, %arg4: memref<128x128xbf16, #tpu.memory_space<vmem>>) attributes {dimension_semantics = [#tpu.dimension_semantics<parallel>], iteration_bounds = array<i64: 2>, scalar_prefetch = 0 : i64, scratch_operands = 0 : i64, tpu.core_type = #tpu.core_type<tc>, window_params = [{transform_indices = @transform_0, window_bounds = array<i64: 128, 576>}, {pipeline_mode = #tpu.pipeline_mode<synchronous>, transform_indices = @transform_1, window_bounds = array<i64: 576, 128>}, {pipeline_mode = #tpu.pipeline_mode<synchronous>, transform_indices = @transform_2, window_bounds = array<i64: 1, 128>}, {transform_indices = @transform_3, window_bounds = array<i64: 128, 128>}]} {
    %c0 = arith.constant 0 : index
    %c0_0 = arith.constant 0 : index
    %0 = vector.load %arg1[%c0, %c0_0] : memref<128x576xbf16, #tpu.memory_space<vmem>>, vector<128x576xbf16>
    %c0_1 = arith.constant 0 : index
    %c0_2 = arith.constant 0 : index
    %1 = vector.load %arg2[%c0_1, %c0_2] : memref<576x128xbf16, #tpu.memory_space<vmem>>, vector<576x128xbf16>
    %cst = arith.constant dense<0.000000e+00> : vector<128x128xf32>
    %2 = tpu.matmul %0, %1, %cst {dimension_numbers = #tpu.dot_dimension_numbers<[1], [0], [0], [1], [0, 0, 1, 1], [], []>} : vector<128x576xbf16>, vector<576x128xbf16>, vector<128x128xf32> -> vector<128x128xf32>
    %c0_3 = arith.constant 0 : index
    %c0_4 = arith.constant 0 : index
    %3 = vector.load %arg3[%c0_3, %c0_4] : memref<1x128xf32, #tpu.memory_space<vmem>>, vector<1x128xf32>
    %4 = vector.broadcast %3 : vector<1x128xf32> to vector<128x128xf32>
    %5 = arith.addf %2, %4 : vector<128x128xf32>
    %cst_5 = arith.constant 0.000000e+00 : f32
    %6 = vector.broadcast %cst_5 : f32 to vector<128x128xf32>
    %7 = arith.maximumf %5, %6 : vector<128x128xf32>
    %8 = arith.truncf %7 : vector<128x128xf32> to vector<128x128xbf16>
    %c0_6 = arith.constant 0 : index
    %c0_7 = arith.constant 0 : index
    %9 = vector.load %arg4[%c0_6, %c0_7] : memref<128x128xbf16, #tpu.memory_space<vmem>>, vector<128x128xbf16>
    tpu.vector_store %arg4[%c0_6, %c0_7], %8 {strides = array<i32>} : memref<128x128xbf16, #tpu.memory_space<vmem>>, vector<128x128xbf16>,
    return
  }
  func.func @transform_0(%arg0: i32) -> (i32, i32) {
    %c0_i32 = arith.constant 0 : i32
    %c0_i32_0 = arith.constant 0 : i32
    return %arg0, %c0_i32 : i32, i32
  }
  func.func @transform_1(%arg0: i32) -> (i32, i32) {
    %c0_i32 = arith.constant 0 : i32
    %c0_i32_0 = arith.constant 0 : i32
    %c0_i32_1 = arith.constant 0 : i32
    return %c0_i32, %c0_i32_0 : i32, i32
  }
  func.func @transform_2(%arg0: i32) -> (i32, i32) {
    %c0_i32 = arith.constant 0 : i32
    %c0_i32_0 = arith.constant 0 : i32
    %c0_i32_1 = arith.constant 0 : i32
    return %c0_i32, %c0_i32_0 : i32, i32
  }
  func.func @transform_3(%arg0: i32) -> (i32, i32) {
    %c0_i32 = arith.constant 0 : i32
    %c0_i32_0 = arith.constant 0 : i32
    return %arg0, %c0_i32 : i32, i32
  }
}

module attributes {stable_mosaic.version = 11 : i64} {
  func.func @gemm_bias_act_kernel(%arg0: i32, %arg1: memref<128x1152xbf16, #tpu.memory_space<vmem>>, %arg2: memref<1152x128xbf16, #tpu.memory_space<vmem>>, %arg3: memref<1x128xf32, #tpu.memory_space<vmem>>, %arg4: memref<128x128xbf16, #tpu.memory_space<vmem>>) attributes {dimension_semantics = [#tpu.dimension_semantics<parallel>], iteration_bounds = array<i64: 2>, scalar_prefetch = 0 : i64, scratch_operands = 0 : i64, tpu.core_type = #tpu.core_type<tc>, window_params = [{transform_indices = @transform_0, window_bounds = array<i64: 128, 1152>}, {pipeline_mode = #tpu.pipeline_mode<synchronous>, transform_indices = @transform_1, window_bounds = array<i64: 1152, 128>}, {pipeline_mode = #tpu.pipeline_mode<synchronous>, transform_indices = @transform_2, window_bounds = array<i64: 1, 128>}, {transform_indices = @transform_3, window_bounds = array<i64: 128, 128>}]} {
    %c0 = arith.constant 0 : index
    %c0_0 = arith.constant 0 : index
    %0 = vector.load %arg1[%c0, %c0_0] : memref<128x1152xbf16, #tpu.memory_space<vmem>>, vector<128x1152xbf16>
    %c0_1 = arith.constant 0 : index
    %c0_2 = arith.constant 0 : index
    %1 = vector.load %arg2[%c0_1, %c0_2] : memref<1152x128xbf16, #tpu.memory_space<vmem>>, vector<1152x128xbf16>
    %cst = arith.constant dense<0.000000e+00> : vector<128x128xf32>
    %2 = tpu.matmul %0, %1, %cst {dimension_numbers = #tpu.dot_dimension_numbers<[1], [0], [0], [1], [0, 0, 1, 1], [], []>} : vector<128x1152xbf16>, vector<1152x128xbf16>, vector<128x128xf32> -> vector<128x128xf32>
    %c0_3 = arith.constant 0 : index
    %c0_4 = arith.constant 0 : index
    %3 = vector.load %arg3[%c0_3, %c0_4] : memref<1x128xf32, #tpu.memory_space<vmem>>, vector<1x128xf32>
    %4 = vector.broadcast %3 : vector<1x128xf32> to vector<128x128xf32>
    %5 = arith.addf %2, %4 : vector<128x128xf32>
    %cst_5 = arith.constant 0.000000e+00 : f32
    %6 = vector.broadcast %cst_5 : f32 to vector<128x128xf32>
    %7 = arith.maximumf %5, %6 : vector<128x128xf32>
    %8 = arith.truncf %7 : vector<128x128xf32> to vector<128x128xbf16>
    %c0_6 = arith.constant 0 : index
    %c0_7 = arith.constant 0 : index
    %9 = vector.load %arg4[%c0_6, %c0_7] : memref<128x128xbf16, #tpu.memory_space<vmem>>, vector<128x128xbf16>
    tpu.vector_store %arg4[%c0_6, %c0_7], %8 {strides = array<i32>} : memref<128x128xbf16, #tpu.memory_space<vmem>>, vector<128x128xbf16>,
    return
  }
  func.func @transform_0(%arg0: i32) -> (i32, i32) {
    %c0_i32 = arith.constant 0 : i32
    %c0_i32_0 = arith.constant 0 : i32
    return %arg0, %c0_i32 : i32, i32
  }
  func.func @transform_1(%arg0: i32) -> (i32, i32) {
    %c0_i32 = arith.constant 0 : i32
    %c0_i32_0 = arith.constant 0 : i32
    %c0_i32_1 = arith.constant 0 : i32
    return %c0_i32, %c0_i32_0 : i32, i32
  }
  func.func @transform_2(%arg0: i32) -> (i32, i32) {
    %c0_i32 = arith.constant 0 : i32
    %c0_i32_0 = arith.constant 0 : i32
    %c0_i32_1 = arith.constant 0 : i32
    return %c0_i32, %c0_i32_0 : i32, i32
  }
  func.func @transform_3(%arg0: i32) -> (i32, i32) {
    %c0_i32 = arith.constant 0 : i32
    %c0_i32_0 = arith.constant 0 : i32
    return %arg0, %c0_i32 : i32, i32
  }
}

module attributes {stable_mosaic.version = 11 : i64} {
  func.func @gemm_bias_act_kernel(%arg0: i32, %arg1: memref<64x128xbf16, #tpu.memory_space<vmem>>, %arg2: memref<128x128xbf16, #tpu.memory_space<vmem>>, %arg3: memref<1x128xf32, #tpu.memory_space<vmem>>, %arg4: memref<64x128xbf16, #tpu.memory_space<vmem>>) attributes {dimension_semantics = [#tpu.dimension_semantics<parallel>], iteration_bounds = array<i64: 1>, scalar_prefetch = 0 : i64, scratch_operands = 0 : i64, tpu.core_type = #tpu.core_type<tc>, window_params = [{transform_indices = @transform_0, window_bounds = array<i64: 64, 128>}, {pipeline_mode = #tpu.pipeline_mode<synchronous>, transform_indices = @transform_1, window_bounds = array<i64: 128, 128>}, {pipeline_mode = #tpu.pipeline_mode<synchronous>, transform_indices = @transform_2, window_bounds = array<i64: 1, 128>}, {transform_indices = @transform_3, window_bounds = array<i64: 64, 128>}]} {
    %c0 = arith.constant 0 : index
    %c0_0 = arith.constant 0 : index
    %0 = vector.load %arg1[%c0, %c0_0] : memref<64x128xbf16, #tpu.memory_space<vmem>>, vector<64x128xbf16>
    %c0_1 = arith.constant 0 : index
    %c0_2 = arith.constant 0 : index
    %1 = vector.load %arg2[%c0_1, %c0_2] : memref<128x128xbf16, #tpu.memory_space<vmem>>, vector<128x128xbf16>
    %cst = arith.constant dense<0.000000e+00> : vector<64x128xf32>
    %2 = tpu.matmul %0, %1, %cst {dimension_numbers = #tpu.dot_dimension_numbers<[1], [0], [0], [1], [0, 0, 1, 1], [], []>} : vector<64x128xbf16>, vector<128x128xbf16>, vector<64x128xf32> -> vector<64x128xf32>
    %c0_3 = arith.constant 0 : index
    %c0_4 = arith.constant 0 : index
    %3 = vector.load %arg3[%c0_3, %c0_4] : memref<1x128xf32, #tpu.memory_space<vmem>>, vector<1x128xf32>
    %4 = vector.broadcast %3 : vector<1x128xf32> to vector<64x128xf32>
    %5 = arith.addf %2, %4 : vector<64x128xf32>
    %6 = arith.truncf %5 : vector<64x128xf32> to vector<64x128xbf16>
    %c0_5 = arith.constant 0 : index
    %c0_6 = arith.constant 0 : index
    %7 = vector.load %arg4[%c0_5, %c0_6] : memref<64x128xbf16, #tpu.memory_space<vmem>>, vector<64x128xbf16>
    tpu.vector_store %arg4[%c0_5, %c0_6], %6 {strides = array<i32>} : memref<64x128xbf16, #tpu.memory_space<vmem>>, vector<64x128xbf16>,
    return
  }
  func.func @transform_0(%arg0: i32) -> (i32, i32) {
    %c0_i32 = arith.constant 0 : i32
    %c0_i32_0 = arith.constant 0 : i32
    return %arg0, %c0_i32 : i32, i32
  }
  func.func @transform_1(%arg0: i32) -> (i32, i32) {
    %c0_i32 = arith.constant 0 : i32
    %c0_i32_0 = arith.constant 0 : i32
    %c0_i32_1 = arith.constant 0 : i32
    return %c0_i32, %c0_i32_0 : i32, i32
  }
  func.func @transform_2(%arg0: i32) -> (i32, i32) {
    %c0_i32 = arith.constant 0 : i32
    %c0_i32_0 = arith.constant 0 : i32
    %c0_i32_1 = arith.constant 0 : i32
    return %c0_i32, %c0_i32_0 : i32, i32
  }
  func.func @transform_3(%arg0: i32) -> (i32, i32) {
    %c0_i32 = arith.constant 0 : i32
    %c0_i32_0 = arith.constant 0 : i32
    return %arg0, %c0_i32 : i32, i32
  }
}

module attributes {stable_mosaic.version = 11 : i64} {
  func.func @self_attn_kernel(%arg0: i32, %arg1: i32, %arg2: memref<1x8x8x128xbf16, #tpu.memory_space<vmem>>, %arg3: memref<8x8x128xbf16, #tpu.memory_space<vmem>>, %arg4: memref<128x384xbf16, #tpu.memory_space<vmem>>, %arg5: memref<1x8xf32, #tpu.memory_space<vmem>>, %arg6: memref<1x8x8x128xbf16, #tpu.memory_space<vmem>>) attributes {dimension_semantics = [#tpu.dimension_semantics<parallel>, #tpu.dimension_semantics<parallel>], iteration_bounds = array<i64: 4, 1>, scalar_prefetch = 0 : i64, scratch_operands = 0 : i64, tpu.core_type = #tpu.core_type<tc>, window_params = [{transform_indices = @transform_0, window_bounds = array<i64: 1, 8, 8, 128>}, {transform_indices = @transform_1, window_bounds = array<i64: 8, 8, 128>}, {pipeline_mode = #tpu.pipeline_mode<synchronous>, transform_indices = @transform_2, window_bounds = array<i64: 128, 384>}, {pipeline_mode = #tpu.pipeline_mode<synchronous>, transform_indices = @transform_3, window_bounds = array<i64: 1, 8>}, {transform_indices = @transform_4, window_bounds = array<i64: 1, 8, 8, 128>}]} {
    %c0 = arith.constant 0 : index
    %c0_0 = arith.constant 0 : index
    %c0_1 = arith.constant 0 : index
    %c0_2 = arith.constant 0 : index
    %0 = vector.load %arg2[%c0, %c0_0, %c0_1, %c0_2] : memref<1x8x8x128xbf16, #tpu.memory_space<vmem>>, vector<1x8x8x128xbf16>
    %1 = vector.shape_cast %0 : vector<1x8x8x128xbf16> to vector<8x8x128xbf16>
    %c0_3 = arith.constant 0 : index
    %c0_4 = arith.constant 0 : index
    %c0_5 = arith.constant 0 : index
    %2 = vector.load %arg3[%c0_3, %c0_4, %c0_5] : memref<8x8x128xbf16, #tpu.memory_space<vmem>>, vector<8x8x128xbf16>
    %3 = arith.addf %1, %2 : vector<8x8x128xbf16>
    %4 = vector.shape_cast %3 : vector<8x8x128xbf16> to vector<64x128xbf16>
    %c0_6 = arith.constant 0 : index
    %c0_7 = arith.constant 0 : index
    %5 = vector.load %arg4[%c0_6, %c0_7] : memref<128x384xbf16, #tpu.memory_space<vmem>>, vector<128x384xbf16>
    %cst = arith.constant dense<0.000000e+00> : vector<64x384xf32>
    %6 = tpu.matmul %4, %5, %cst {dimension_numbers = #tpu.dot_dimension_numbers<[1], [0], [0], [1], [0, 0, 1, 1], [], []>} : vector<64x128xbf16>, vector<128x384xbf16>, vector<64x384xf32> -> vector<64x384xf32>
    %7 = arith.truncf %6 : vector<64x384xf32> to vector<64x384xbf16>
    %8 = vector.shape_cast %7 : vector<64x384xbf16> to vector<8x8x384xbf16>
    %9 = vector.extract_strided_slice %8 {offsets = [0, 0, 0], sizes = [8, 8, 128], strides = [1, 1, 1]} : vector<8x8x384xbf16> to vector<8x8x128xbf16>
    %10 = vector.extract_strided_slice %8 {offsets = [0, 0, 128], sizes = [8, 8, 128], strides = [1, 1, 1]} : vector<8x8x384xbf16> to vector<8x8x128xbf16>
    %11 = vector.extract_strided_slice %8 {offsets = [0, 0, 256], sizes = [8, 8, 128], strides = [1, 1, 1]} : vector<8x8x384xbf16> to vector<8x8x128xbf16>
    "tpu.trace_start"() <{level = 10 : i32, message = "rwc,rvc->rwv"}> : () -> ()
    %cst_8 = arith.constant dense<0.000000e+00> : vector<8x8x8xf32>
    %12 = tpu.matmul %9, %10, %cst_8 {dimension_numbers = #tpu.dot_dimension_numbers<[2], [2], [1], [1], [0, 0, 0, 1, 1, 1], [0], [0]>} : vector<8x8x128xbf16>, vector<8x8x128xbf16>, vector<8x8x8xf32> -> vector<8x8x8xf32>
    "tpu.trace_stop"() : () -> ()
    %c0_9 = arith.constant 0 : index
    %c0_10 = arith.constant 0 : index
    %13 = vector.load %arg5[%c0_9, %c0_10] : memref<1x8xf32, #tpu.memory_space<vmem>>, vector<1x8xf32>
    %14 = vector.shape_cast %13 : vector<1x8xf32> to vector<1x1x8xf32>
    %15 = vector.broadcast %14 : vector<1x1x8xf32> to vector<8x8x8xf32>
    %16 = arith.addf %12, %15 : vector<8x8x8xf32>
    %cst_11 = arith.constant dense<0xFF800000> : vector<8x8xf32>
    %17 = vector.multi_reduction <maximumf>, %16, %cst_11 [2] : vector<8x8x8xf32> to vector<8x8xf32>
    %18 = vector.shape_cast %17 : vector<8x8xf32> to vector<8x8x1xf32>
    %19 = vector.broadcast %18 : vector<8x8x1xf32> to vector<8x8x8xf32>
    %20 = arith.subf %16, %19 : vector<8x8x8xf32>
    %21 = arith.truncf %20 : vector<8x8x8xf32> to vector<8x8x8xbf16>
    %22 = math.exp %21 : vector<8x8x8xbf16>
    %23 = arith.extf %22 : vector<8x8x8xbf16> to vector<8x8x8xf32>
    %cst_12 = arith.constant dense<0.000000e+00> : vector<8x8xf32>
    %24 = vector.multi_reduction <add>, %23, %cst_12 [2] : vector<8x8x8xf32> to vector<8x8xf32>
    %25 = vector.shape_cast %24 : vector<8x8xf32> to vector<8x8x1xf32>
    "tpu.trace_start"() <{level = 10 : i32, message = "rwv,rvc->rwc"}> : () -> ()
    %cst_13 = arith.constant dense<0.000000e+00> : vector<8x8x128xf32>
    %26 = tpu.matmul %22, %11, %cst_13 {dimension_numbers = #tpu.dot_dimension_numbers<[2], [1], [1], [2], [0, 0, 0, 1, 1, 2], [0], [0]>} : vector<8x8x8xbf16>, vector<8x8x128xbf16>, vector<8x8x128xf32> -> vector<8x8x128xf32>
    "tpu.trace_stop"() : () -> ()
    %27 = tpu.reciprocal %25 {approx = true} : vector<8x8x1xf32> -> vector<8x8x1xf32>
    %28 = vector.broadcast %27 : vector<8x8x1xf32> to vector<8x8x128xf32>
    %29 = arith.mulf %26, %28 : vector<8x8x128xf32>
    %30 = arith.extf %1 : vector<8x8x128xbf16> to vector<8x8x128xf32>
    %31 = arith.addf %30, %29 : vector<8x8x128xf32>
    %32 = arith.truncf %31 : vector<8x8x128xf32> to vector<8x8x128xbf16>
    %c0_14 = arith.constant 0 : index
    %c0_15 = arith.constant 0 : index
    %c0_16 = arith.constant 0 : index
    %c0_17 = arith.constant 0 : index
    %33 = vector.load %arg6[%c0_14, %c0_15, %c0_16, %c0_17] : memref<1x8x8x128xbf16, #tpu.memory_space<vmem>>, vector<1x8x8x128xbf16>
    %34 = vector.shape_cast %33 : vector<1x8x8x128xbf16> to vector<8x8x128xbf16>
    %35 = vector.shape_cast %32 : vector<8x8x128xbf16> to vector<1x8x8x128xbf16>
    tpu.vector_store %arg6[%c0_14, %c0_15, %c0_16, %c0_17], %35 {strides = array<i32>} : memref<1x8x8x128xbf16, #tpu.memory_space<vmem>>, vector<1x8x8x128xbf16>,
    return
  }
  func.func @transform_0(%arg0: i32, %arg1: i32) -> (i32, i32, i32, i32) {
    %c0_i32 = arith.constant 0 : i32
    %c0_i32_0 = arith.constant 0 : i32
    %c0_i32_1 = arith.constant 0 : i32
    return %arg0, %arg1, %c0_i32, %c0_i32_0 : i32, i32, i32, i32
  }
  func.func @transform_1(%arg0: i32, %arg1: i32) -> (i32, i32, i32) {
    %c0_i32 = arith.constant 0 : i32
    %c0_i32_0 = arith.constant 0 : i32
    %c0_i32_1 = arith.constant 0 : i32
    return %arg1, %c0_i32, %c0_i32_0 : i32, i32, i32
  }
  func.func @transform_2(%arg0: i32, %arg1: i32) -> (i32, i32) {
    %c0_i32 = arith.constant 0 : i32
    %c0_i32_0 = arith.constant 0 : i32
    %c0_i32_1 = arith.constant 0 : i32
    return %c0_i32, %c0_i32_0 : i32, i32
  }
  func.func @transform_3(%arg0: i32, %arg1: i32) -> (i32, i32) {
    %c0_i32 = arith.constant 0 : i32
    %c0_i32_0 = arith.constant 0 : i32
    %c0_i32_1 = arith.constant 0 : i32
    return %c0_i32, %c0_i32_0 : i32, i32
  }
  func.func @transform_4(%arg0: i32, %arg1: i32) -> (i32, i32, i32, i32) {
    %c0_i32 = arith.constant 0 : i32
    %c0_i32_0 = arith.constant 0 : i32
    %c0_i32_1 = arith.constant 0 : i32
    return %arg0, %arg1, %c0_i32, %c0_i32_0 : i32, i32, i32, i32
  }
}

module attributes {stable_mosaic.version = 11 : i64} {
  func.func @gemm_bias_act_kernel(%arg0: i32, %arg1: memref<128x128xbf16, #tpu.memory_space<vmem>>, %arg2: memref<128x128xbf16, #tpu.memory_space<vmem>>, %arg3: memref<1x128xf32, #tpu.memory_space<vmem>>, %arg4: memref<128x128xbf16, #tpu.memory_space<vmem>>) attributes {dimension_semantics = [#tpu.dimension_semantics<parallel>], iteration_bounds = array<i64: 2>, scalar_prefetch = 0 : i64, scratch_operands = 0 : i64, tpu.core_type = #tpu.core_type<tc>, window_params = [{transform_indices = @transform_0, window_bounds = array<i64: 128, 128>}, {pipeline_mode = #tpu.pipeline_mode<synchronous>, transform_indices = @transform_1, window_bounds = array<i64: 128, 128>}, {pipeline_mode = #tpu.pipeline_mode<synchronous>, transform_indices = @transform_2, window_bounds = array<i64: 1, 128>}, {transform_indices = @transform_3, window_bounds = array<i64: 128, 128>}]} {
    %c0 = arith.constant 0 : index
    %c0_0 = arith.constant 0 : index
    %0 = vector.load %arg1[%c0, %c0_0] : memref<128x128xbf16, #tpu.memory_space<vmem>>, vector<128x128xbf16>
    %c0_1 = arith.constant 0 : index
    %c0_2 = arith.constant 0 : index
    %1 = vector.load %arg2[%c0_1, %c0_2] : memref<128x128xbf16, #tpu.memory_space<vmem>>, vector<128x128xbf16>
    %cst = arith.constant dense<0.000000e+00> : vector<128x128xf32>
    %2 = tpu.matmul %0, %1, %cst {dimension_numbers = #tpu.dot_dimension_numbers<[1], [0], [0], [1], [0, 0, 1, 1], [], []>} : vector<128x128xbf16>, vector<128x128xbf16>, vector<128x128xf32> -> vector<128x128xf32>
    %c0_3 = arith.constant 0 : index
    %c0_4 = arith.constant 0 : index
    %3 = vector.load %arg3[%c0_3, %c0_4] : memref<1x128xf32, #tpu.memory_space<vmem>>, vector<1x128xf32>
    %4 = vector.broadcast %3 : vector<1x128xf32> to vector<128x128xf32>
    %5 = arith.addf %2, %4 : vector<128x128xf32>
    %6 = arith.truncf %5 : vector<128x128xf32> to vector<128x128xbf16>
    %c0_5 = arith.constant 0 : index
    %c0_6 = arith.constant 0 : index
    %7 = vector.load %arg4[%c0_5, %c0_6] : memref<128x128xbf16, #tpu.memory_space<vmem>>, vector<128x128xbf16>
    tpu.vector_store %arg4[%c0_5, %c0_6], %6 {strides = array<i32>} : memref<128x128xbf16, #tpu.memory_space<vmem>>, vector<128x128xbf16>,
    return
  }
  func.func @transform_0(%arg0: i32) -> (i32, i32) {
    %c0_i32 = arith.constant 0 : i32
    %c0_i32_0 = arith.constant 0 : i32
    return %arg0, %c0_i32 : i32, i32
  }
  func.func @transform_1(%arg0: i32) -> (i32, i32) {
    %c0_i32 = arith.constant 0 : i32
    %c0_i32_0 = arith.constant 0 : i32
    %c0_i32_1 = arith.constant 0 : i32
    return %c0_i32, %c0_i32_0 : i32, i32
  }
  func.func @transform_2(%arg0: i32) -> (i32, i32) {
    %c0_i32 = arith.constant 0 : i32
    %c0_i32_0 = arith.constant 0 : i32
    %c0_i32_1 = arith.constant 0 : i32
    return %c0_i32, %c0_i32_0 : i32, i32
  }
  func.func @transform_3(%arg0: i32) -> (i32, i32) {
    %c0_i32 = arith.constant 0 : i32
    %c0_i32_0 = arith.constant 0 : i32
    return %arg0, %c0_i32 : i32, i32
  }
}

module attributes {stable_mosaic.version = 11 : i64} {
  func.func @self_attn_kernel(%arg0: i32, %arg1: i32, %arg2: memref<1x8x8x128xbf16, #tpu.memory_space<vmem>>, %arg3: memref<8x8x128xbf16, #tpu.memory_space<vmem>>, %arg4: memref<128x384xbf16, #tpu.memory_space<vmem>>, %arg5: memref<1x8xf32, #tpu.memory_space<vmem>>, %arg6: memref<1x8x8x128xbf16, #tpu.memory_space<vmem>>) attributes {dimension_semantics = [#tpu.dimension_semantics<parallel>, #tpu.dimension_semantics<parallel>], iteration_bounds = array<i64: 4, 1>, scalar_prefetch = 0 : i64, scratch_operands = 0 : i64, tpu.core_type = #tpu.core_type<tc>, window_params = [{transform_indices = @transform_0, window_bounds = array<i64: 1, 8, 8, 128>}, {transform_indices = @transform_1, window_bounds = array<i64: 8, 8, 128>}, {pipeline_mode = #tpu.pipeline_mode<synchronous>, transform_indices = @transform_2, window_bounds = array<i64: 128, 384>}, {pipeline_mode = #tpu.pipeline_mode<synchronous>, transform_indices = @transform_3, window_bounds = array<i64: 1, 8>}, {transform_indices = @transform_4, window_bounds = array<i64: 1, 8, 8, 128>}]} {
    %c0 = arith.constant 0 : index
    %c0_0 = arith.constant 0 : index
    %c0_1 = arith.constant 0 : index
    %c0_2 = arith.constant 0 : index
    %0 = vector.load %arg2[%c0, %c0_0, %c0_1, %c0_2] : memref<1x8x8x128xbf16, #tpu.memory_space<vmem>>, vector<1x8x8x128xbf16>
    %1 = vector.shape_cast %0 : vector<1x8x8x128xbf16> to vector<8x8x128xbf16>
    %c0_3 = arith.constant 0 : index
    %c0_4 = arith.constant 0 : index
    %c0_5 = arith.constant 0 : index
    %2 = vector.load %arg3[%c0_3, %c0_4, %c0_5] : memref<8x8x128xbf16, #tpu.memory_space<vmem>>, vector<8x8x128xbf16>
    %3 = arith.addf %1, %2 : vector<8x8x128xbf16>
    %4 = vector.shape_cast %3 : vector<8x8x128xbf16> to vector<64x128xbf16>
    %c0_6 = arith.constant 0 : index
    %c0_7 = arith.constant 0 : index
    %5 = vector.load %arg4[%c0_6, %c0_7] : memref<128x384xbf16, #tpu.memory_space<vmem>>, vector<128x384xbf16>
    %cst = arith.constant dense<0.000000e+00> : vector<64x384xf32>
    %6 = tpu.matmul %4, %5, %cst {dimension_numbers = #tpu.dot_dimension_numbers<[1], [0], [0], [1], [0, 0, 1, 1], [], []>} : vector<64x128xbf16>, vector<128x384xbf16>, vector<64x384xf32> -> vector<64x384xf32>
    %7 = arith.truncf %6 : vector<64x384xf32> to vector<64x384xbf16>
    %8 = vector.shape_cast %7 : vector<64x384xbf16> to vector<8x8x384xbf16>
    %9 = vector.extract_strided_slice %8 {offsets = [0, 0, 0], sizes = [8, 8, 128], strides = [1, 1, 1]} : vector<8x8x384xbf16> to vector<8x8x128xbf16>
    %10 = vector.extract_strided_slice %8 {offsets = [0, 0, 128], sizes = [8, 8, 128], strides = [1, 1, 1]} : vector<8x8x384xbf16> to vector<8x8x128xbf16>
    %11 = vector.extract_strided_slice %8 {offsets = [0, 0, 256], sizes = [8, 8, 128], strides = [1, 1, 1]} : vector<8x8x384xbf16> to vector<8x8x128xbf16>
    "tpu.trace_start"() <{level = 10 : i32, message = "rwc,rvc->rwv"}> : () -> ()
    %cst_8 = arith.constant dense<0.000000e+00> : vector<8x8x8xf32>
    %12 = tpu.matmul %9, %10, %cst_8 {dimension_numbers = #tpu.dot_dimension_numbers<[2], [2], [1], [1], [0, 0, 0, 1, 1, 1], [0], [0]>} : vector<8x8x128xbf16>, vector<8x8x128xbf16>, vector<8x8x8xf32> -> vector<8x8x8xf32>
    "tpu.trace_stop"() : () -> ()
    %cst_9 = arith.constant dense<0xFF800000> : vector<8x8xf32>
    %13 = vector.multi_reduction <maximumf>, %12, %cst_9 [2] : vector<8x8x8xf32> to vector<8x8xf32>
    %14 = vector.shape_cast %13 : vector<8x8xf32> to vector<8x8x1xf32>
    %15 = vector.broadcast %14 : vector<8x8x1xf32> to vector<8x8x8xf32>
    %16 = arith.subf %12, %15 : vector<8x8x8xf32>
    %17 = arith.truncf %16 : vector<8x8x8xf32> to vector<8x8x8xbf16>
    %18 = math.exp %17 : vector<8x8x8xbf16>
    %19 = arith.extf %18 : vector<8x8x8xbf16> to vector<8x8x8xf32>
    %cst_10 = arith.constant dense<0.000000e+00> : vector<8x8xf32>
    %20 = vector.multi_reduction <add>, %19, %cst_10 [2] : vector<8x8x8xf32> to vector<8x8xf32>
    %21 = vector.shape_cast %20 : vector<8x8xf32> to vector<8x8x1xf32>
    "tpu.trace_start"() <{level = 10 : i32, message = "rwv,rvc->rwc"}> : () -> ()
    %cst_11 = arith.constant dense<0.000000e+00> : vector<8x8x128xf32>
    %22 = tpu.matmul %18, %11, %cst_11 {dimension_numbers = #tpu.dot_dimension_numbers<[2], [1], [1], [2], [0, 0, 0, 1, 1, 2], [0], [0]>} : vector<8x8x8xbf16>, vector<8x8x128xbf16>, vector<8x8x128xf32> -> vector<8x8x128xf32>
    "tpu.trace_stop"() : () -> ()
    %23 = tpu.reciprocal %21 {approx = true} : vector<8x8x1xf32> -> vector<8x8x1xf32>
    %24 = vector.broadcast %23 : vector<8x8x1xf32> to vector<8x8x128xf32>
    %25 = arith.mulf %22, %24 : vector<8x8x128xf32>
    %26 = arith.extf %1 : vector<8x8x128xbf16> to vector<8x8x128xf32>
    %27 = arith.addf %26, %25 : vector<8x8x128xf32>
    %28 = arith.truncf %27 : vector<8x8x128xf32> to vector<8x8x128xbf16>
    %c0_12 = arith.constant 0 : index
    %c0_13 = arith.constant 0 : index
    %c0_14 = arith.constant 0 : index
    %c0_15 = arith.constant 0 : index
    %29 = vector.load %arg6[%c0_12, %c0_13, %c0_14, %c0_15] : memref<1x8x8x128xbf16, #tpu.memory_space<vmem>>, vector<1x8x8x128xbf16>
    %30 = vector.shape_cast %29 : vector<1x8x8x128xbf16> to vector<8x8x128xbf16>
    %31 = vector.shape_cast %28 : vector<8x8x128xbf16> to vector<1x8x8x128xbf16>
    tpu.vector_store %arg6[%c0_12, %c0_13, %c0_14, %c0_15], %31 {strides = array<i32>} : memref<1x8x8x128xbf16, #tpu.memory_space<vmem>>, vector<1x8x8x128xbf16>,
    return
  }
  func.func @transform_0(%arg0: i32, %arg1: i32) -> (i32, i32, i32, i32) {
    %c0_i32 = arith.constant 0 : i32
    %c0_i32_0 = arith.constant 0 : i32
    %c0_i32_1 = arith.constant 0 : i32
    return %arg0, %arg1, %c0_i32, %c0_i32_0 : i32, i32, i32, i32
  }
  func.func @transform_1(%arg0: i32, %arg1: i32) -> (i32, i32, i32) {
    %c0_i32 = arith.constant 0 : i32
    %c0_i32_0 = arith.constant 0 : i32
    %c0_i32_1 = arith.constant 0 : i32
    return %arg1, %c0_i32, %c0_i32_0 : i32, i32, i32
  }
  func.func @transform_2(%arg0: i32, %arg1: i32) -> (i32, i32) {
    %c0_i32 = arith.constant 0 : i32
    %c0_i32_0 = arith.constant 0 : i32
    %c0_i32_1 = arith.constant 0 : i32
    return %c0_i32, %c0_i32_0 : i32, i32
  }
  func.func @transform_3(%arg0: i32, %arg1: i32) -> (i32, i32) {
    %c0_i32 = arith.constant 0 : i32
    %c0_i32_0 = arith.constant 0 : i32
    %c0_i32_1 = arith.constant 0 : i32
    return %c0_i32, %c0_i32_0 : i32, i32
  }
  func.func @transform_4(%arg0: i32, %arg1: i32) -> (i32, i32, i32, i32) {
    %c0_i32 = arith.constant 0 : i32
    %c0_i32_0 = arith.constant 0 : i32
    %c0_i32_1 = arith.constant 0 : i32
    return %arg0, %arg1, %c0_i32, %c0_i32_0 : i32, i32, i32, i32
  }
}

module attributes {stable_mosaic.version = 11 : i64} {
  func.func @cross_reg_kernel(%arg0: i32, %arg1: i32, %arg2: memref<1x8x8x128xbf16, #tpu.memory_space<vmem>>, %arg3: memref<1x8x8x128xbf16, #tpu.memory_space<vmem>>, %arg4: memref<128x128xbf16, #tpu.memory_space<vmem>>, %arg5: memref<128x128xbf16, #tpu.memory_space<vmem>>, %arg6: memref<8x8xf32, #tpu.memory_space<vmem>>, %arg7: memref<8x8xf32, #tpu.memory_space<vmem>>, %arg8: memref<1x8xf32, #tpu.memory_space<vmem>>, %arg9: memref<1x8x8xf32, #tpu.memory_space<vmem>>, %arg10: memref<1x8x8xf32, #tpu.memory_space<vmem>>) attributes {dimension_semantics = [#tpu.dimension_semantics<parallel>, #tpu.dimension_semantics<parallel>], iteration_bounds = array<i64: 2, 1>, scalar_prefetch = 0 : i64, scratch_operands = 0 : i64, tpu.core_type = #tpu.core_type<tc>, window_params = [{transform_indices = @transform_0, window_bounds = array<i64: 1, 8, 8, 128>}, {transform_indices = @transform_1, window_bounds = array<i64: 1, 8, 8, 128>}, {pipeline_mode = #tpu.pipeline_mode<synchronous>, transform_indices = @transform_2, window_bounds = array<i64: 128, 128>}, {pipeline_mode = #tpu.pipeline_mode<synchronous>, transform_indices = @transform_3, window_bounds = array<i64: 128, 128>}, {pipeline_mode = #tpu.pipeline_mode<synchronous>, transform_indices = @transform_4, window_bounds = array<i64: 8, 8>}, {pipeline_mode = #tpu.pipeline_mode<synchronous>, transform_indices = @transform_5, window_bounds = array<i64: 8, 8>}, {pipeline_mode = #tpu.pipeline_mode<synchronous>, transform_indices = @transform_6, window_bounds = array<i64: 1, 8>}, {transform_indices = @transform_7, window_bounds = array<i64: 1, 8, 8>}, {transform_indices = @transform_8, window_bounds = array<i64: 1, 8, 8>}]} {
    %c0 = arith.constant 0 : index
    %c0_0 = arith.constant 0 : index
    %c0_1 = arith.constant 0 : index
    %c0_2 = arith.constant 0 : index
    %0 = vector.load %arg2[%c0, %c0_0, %c0_1, %c0_2] : memref<1x8x8x128xbf16, #tpu.memory_space<vmem>>, vector<1x8x8x128xbf16>
    %1 = vector.shape_cast %0 : vector<1x8x8x128xbf16> to vector<8x8x128xbf16>
    %c0_3 = arith.constant 0 : index
    %c0_4 = arith.constant 0 : index
    %c0_5 = arith.constant 0 : index
    %c0_6 = arith.constant 0 : index
    %2 = vector.load %arg3[%c0_3, %c0_4, %c0_5, %c0_6] : memref<1x8x8x128xbf16, #tpu.memory_space<vmem>>, vector<1x8x8x128xbf16>
    %3 = vector.shape_cast %2 : vector<1x8x8x128xbf16> to vector<8x8x128xbf16>
    %4 = vector.shape_cast %1 : vector<8x8x128xbf16> to vector<64x128xbf16>
    %c0_7 = arith.constant 0 : index
    %c0_8 = arith.constant 0 : index
    %5 = vector.load %arg4[%c0_7, %c0_8] : memref<128x128xbf16, #tpu.memory_space<vmem>>, vector<128x128xbf16>
    %cst = arith.constant dense<0.000000e+00> : vector<64x128xf32>
    %6 = tpu.matmul %4, %5, %cst {dimension_numbers = #tpu.dot_dimension_numbers<[1], [0], [0], [1], [0, 0, 1, 1], [], []>} : vector<64x128xbf16>, vector<128x128xbf16>, vector<64x128xf32> -> vector<64x128xf32>
    %7 = vector.shape_cast %3 : vector<8x8x128xbf16> to vector<64x128xbf16>
    %c0_9 = arith.constant 0 : index
    %c0_10 = arith.constant 0 : index
    %8 = vector.load %arg5[%c0_9, %c0_10] : memref<128x128xbf16, #tpu.memory_space<vmem>>, vector<128x128xbf16>
    %cst_11 = arith.constant dense<0.000000e+00> : vector<64x128xf32>
    %9 = tpu.matmul %7, %8, %cst_11 {dimension_numbers = #tpu.dot_dimension_numbers<[1], [0], [0], [1], [0, 0, 1, 1], [], []>} : vector<64x128xbf16>, vector<128x128xbf16>, vector<64x128xf32> -> vector<64x128xf32>
    %10 = arith.truncf %6 : vector<64x128xf32> to vector<64x128xbf16>
    %11 = vector.shape_cast %10 : vector<64x128xbf16> to vector<8x8x128xbf16>
    %12 = arith.truncf %9 : vector<64x128xf32> to vector<64x128xbf16>
    %13 = vector.shape_cast %12 : vector<64x128xbf16> to vector<8x8x128xbf16>
    "tpu.trace_start"() <{level = 10 : i32, message = "rwc,rvc->rwv"}> : () -> ()
    %cst_12 = arith.constant dense<0.000000e+00> : vector<8x8x8xf32>
    %14 = tpu.matmul %11, %13, %cst_12 {dimension_numbers = #tpu.dot_dimension_numbers<[2], [2], [1], [1], [0, 0, 0, 1, 1, 1], [0], [0]>} : vector<8x8x128xbf16>, vector<8x8x128xbf16>, vector<8x8x8xf32> -> vector<8x8x8xf32>
    "tpu.trace_stop"() : () -> ()
    %cst_13 = arith.constant dense<0xFF800000> : vector<8x8xf32>
    %15 = vector.multi_reduction <maximumf>, %14, %cst_13 [2] : vector<8x8x8xf32> to vector<8x8xf32>
    %16 = vector.shape_cast %15 : vector<8x8xf32> to vector<8x8x1xf32>
    %17 = vector.broadcast %16 : vector<8x8x1xf32> to vector<8x8x8xf32>
    %18 = arith.subf %14, %17 : vector<8x8x8xf32>
    %19 = arith.truncf %18 : vector<8x8x8xf32> to vector<8x8x8xbf16>
    %20 = math.exp %19 : vector<8x8x8xbf16>
    %21 = arith.extf %20 : vector<8x8x8xbf16> to vector<8x8x8xf32>
    %cst_14 = arith.constant dense<0.000000e+00> : vector<8x8xf32>
    %22 = vector.multi_reduction <add>, %21, %cst_14 [2] : vector<8x8x8xf32> to vector<8x8xf32>
    %c0_15 = arith.constant 0 : index
    %c0_16 = arith.constant 0 : index
    %23 = vector.load %arg6[%c0_15, %c0_16] : memref<8x8xf32, #tpu.memory_space<vmem>>, vector<8x8xf32>
    %24 = vector.shape_cast %23 : vector<8x8xf32> to vector<1x8x8xf32>
    %25 = arith.extf %20 : vector<8x8x8xbf16> to vector<8x8x8xf32>
    %26 = vector.broadcast %24 : vector<1x8x8xf32> to vector<8x8x8xf32>
    %27 = arith.mulf %25, %26 : vector<8x8x8xf32>
    %cst_17 = arith.constant dense<0.000000e+00> : vector<8x8xf32>
    %28 = vector.multi_reduction <add>, %27, %cst_17 [2] : vector<8x8x8xf32> to vector<8x8xf32>
    %c0_18 = arith.constant 0 : index
    %c0_19 = arith.constant 0 : index
    %29 = vector.load %arg7[%c0_18, %c0_19] : memref<8x8xf32, #tpu.memory_space<vmem>>, vector<8x8xf32>
    %30 = vector.shape_cast %29 : vector<8x8xf32> to vector<1x8x8xf32>
    %31 = arith.extf %20 : vector<8x8x8xbf16> to vector<8x8x8xf32>
    %32 = vector.broadcast %30 : vector<1x8x8xf32> to vector<8x8x8xf32>
    %33 = arith.mulf %31, %32 : vector<8x8x8xf32>
    %cst_20 = arith.constant dense<0.000000e+00> : vector<8x8xf32>
    %34 = vector.multi_reduction <add>, %33, %cst_20 [2] : vector<8x8x8xf32> to vector<8x8xf32>
    %35 = arith.divf %28, %22 : vector<8x8xf32>
    %cst_21 = arith.constant 9.99999997E-7 : f32
    %36 = vector.broadcast %cst_21 : f32 to vector<8x8xf32>
    %37 = arith.mulf %36, %22 : vector<8x8xf32>
    %38 = arith.maximumf %28, %37 : vector<8x8xf32>
    %39 = arith.divf %34, %38 : vector<8x8xf32>
    %c0_22 = arith.constant 0 : index
    %c0_23 = arith.constant 0 : index
    %c0_24 = arith.constant 0 : index
    %40 = vector.load %arg9[%c0_22, %c0_23, %c0_24] : memref<1x8x8xf32, #tpu.memory_space<vmem>>, vector<1x8x8xf32>
    %41 = vector.shape_cast %40 : vector<1x8x8xf32> to vector<8x8xf32>
    %42 = vector.shape_cast %39 : vector<8x8xf32> to vector<1x8x8xf32>
    tpu.vector_store %arg9[%c0_22, %c0_23, %c0_24], %42 {strides = array<i32>} : memref<1x8x8xf32, #tpu.memory_space<vmem>>, vector<1x8x8xf32>,
    %cst_25 = arith.constant 1.000000e+00 : f32
    %43 = vector.broadcast %cst_25 : f32 to vector<8x8xf32>
    %44 = arith.subf %43, %35 : vector<8x8xf32>
    %c0_26 = arith.constant 0 : index
    %c0_27 = arith.constant 0 : index
    %c0_28 = arith.constant 0 : index
    %45 = vector.load %arg10[%c0_26, %c0_27, %c0_28] : memref<1x8x8xf32, #tpu.memory_space<vmem>>, vector<1x8x8xf32>
    %46 = vector.shape_cast %45 : vector<1x8x8xf32> to vector<8x8xf32>
    %47 = vector.shape_cast %44 : vector<8x8xf32> to vector<1x8x8xf32>
    tpu.vector_store %arg10[%c0_26, %c0_27, %c0_28], %47 {strides = array<i32>} : memref<1x8x8xf32, #tpu.memory_space<vmem>>, vector<1x8x8xf32>,
    return
  }
  func.func @transform_0(%arg0: i32, %arg1: i32) -> (i32, i32, i32, i32) {
    %c0_i32 = arith.constant 0 : i32
    %c0_i32_0 = arith.constant 0 : i32
    %c0_i32_1 = arith.constant 0 : i32
    return %arg0, %arg1, %c0_i32, %c0_i32_0 : i32, i32, i32, i32
  }
  func.func @transform_1(%arg0: i32, %arg1: i32) -> (i32, i32, i32, i32) {
    %c0_i32 = arith.constant 0 : i32
    %c0_i32_0 = arith.constant 0 : i32
    %c0_i32_1 = arith.constant 0 : i32
    return %arg0, %arg1, %c0_i32, %c0_i32_0 : i32, i32, i32, i32
  }
  func.func @transform_2(%arg0: i32, %arg1: i32) -> (i32, i32) {
    %c0_i32 = arith.constant 0 : i32
    %c0_i32_0 = arith.constant 0 : i32
    %c0_i32_1 = arith.constant 0 : i32
    return %c0_i32, %c0_i32_0 : i32, i32
  }
  func.func @transform_3(%arg0: i32, %arg1: i32) -> (i32, i32) {
    %c0_i32 = arith.constant 0 : i32
    %c0_i32_0 = arith.constant 0 : i32
    %c0_i32_1 = arith.constant 0 : i32
    return %c0_i32, %c0_i32_0 : i32, i32
  }
  func.func @transform_4(%arg0: i32, %arg1: i32) -> (i32, i32) {
    %c0_i32 = arith.constant 0 : i32
    %c0_i32_0 = arith.constant 0 : i32
    %c0_i32_1 = arith.constant 0 : i32
    return %c0_i32, %c0_i32_0 : i32, i32
  }
  func.func @transform_5(%arg0: i32, %arg1: i32) -> (i32, i32) {
    %c0_i32 = arith.constant 0 : i32
    %c0_i32_0 = arith.constant 0 : i32
    %c0_i32_1 = arith.constant 0 : i32
    return %c0_i32, %c0_i32_0 : i32, i32
  }
  func.func @transform_6(%arg0: i32, %arg1: i32) -> (i32, i32) {
    %c0_i32 = arith.constant 0 : i32
    %c0_i32_0 = arith.constant 0 : i32
    %c0_i32_1 = arith.constant 0 : i32
    return %c0_i32, %c0_i32_0 : i32, i32
  }
  func.func @transform_7(%arg0: i32, %arg1: i32) -> (i32, i32, i32) {
    %c0_i32 = arith.constant 0 : i32
    %c0_i32_0 = arith.constant 0 : i32
    return %arg0, %arg1, %c0_i32 : i32, i32, i32
  }
  func.func @transform_8(%arg0: i32, %arg1: i32) -> (i32, i32, i32) {
    %c0_i32 = arith.constant 0 : i32
    %c0_i32_0 = arith.constant 0 : i32
    return %arg0, %arg1, %c0_i32 : i32, i32, i32
  }
}

</mosaic_0001>

<llo_original>
// kernel: cstr_forward.8
$region0: #{cstr_forward.8}
  #allocation0 [shape = 'u32[]', space=smem, size = 0x4, offset = 0x4, fixed_abs, tag = 'smem constant byte address 0x4 - core index']
  #allocation1 [shape = 'u32[72,128]{1,0:T(1,128)}', space=vmem, size = 0x9000, scoped, tag = 'internal scratch']
  %s0 = inlined_call_operand.vmem [shape: bf16[1024,27], index: 0, kind: input, shape index: {}]
  %s1 = inlined_call_operand.vmem [shape: bf16[27,64], index: 1, kind: input, shape index: {}]
  %s2 = inlined_call_operand.vmem [shape: f32[1,64], index: 2, kind: input, shape index: {}]
  %s3 = inlined_call_operand.vmem [shape: bf16[1024,64], index: 3, kind: output, shape index: {}]
  %s4 = sld [smem:[#allocation0]]
  $region45: #{cstr_forward.8} parent=0
    _
  %s6 = ssub.s32 1, %s4
  %s7 = scalar_select 0, %s6, %s4
  loop: start=0, step=1, limit=4
  $region2: #{cstr_forward.8} parent=0 // loop_pre_header
    _
  $region3: #{cstr_forward.8} parent=0 // loop_header
    %s9 = sphi 0, %s13
    %p10 = scmp.ge.s32.totalorder %s9, 4
    %s19 = sphi 0, %s21
    %s22 = sphi 0, %s19
    %s23 = sphi 0, %s22
    %s39 = sphi 0, %s23
    %s43 = sphi 0, %s43
    %s45 = sphi 0, %s43
    %s46 = sphi 0, %s45
    %s60 = sphi 0, %s46
    %s64 = sphi 0, %s64
    %s66 = sphi 0, %s64
    %s67 = sphi 0, %s66
    %s81 = sphi 0, %s67
    %s87 = sphi 0, %s89
    %s90 = sphi 0, %s87
    %s91 = sphi 0, %s90
    %s107 = sphi 0, %s91
  $region4: #{cstr_forward.8} parent=0 // loop_header_branch
    %12 = sbr.rel (%p10) target = $region8
  $region5: #{cstr_forward.8} parent=0 // loop_body
    %s14 = ssub.s32 %s9, 1
    %s15 = ssub.s32 %s9, 2
    %s16 = sadd.s32 %s9, 1
    %s17 = ssub.s32 %s9, %s16
    %p18 = scmp.eq.s32.totalorder %s17, 0
    %s20 = sadd.s32 %s19, 1
    %s21 = scalar_select %p18, %s19, %s20
    %p24 = pneg %p18
    %p25 = scmp.eq.s32.totalorder %s9, 1
    %p26 = por %p24, %p25
    %p27 = scmp.ne.s32.totalorder %s19, %s22
    %p28 = scmp.eq.s32.totalorder %s9, 0
    %p29 = por %p27, %p28
    %p30 = scmp.ne.s32.totalorder %s19, %s22
    %p31 = scmp.eq.s32.totalorder %s14, 1
    %p32 = por %p30, %p31
    %p33 = scmp.ne.s32.totalorder %s22, %s23
    %p34 = scmp.eq.s32.totalorder %s14, 0
    %p35 = por %p33, %p34
    %p36 = scmp.ne.s32.totalorder %s22, %s23
    %p37 = scmp.eq.s32.totalorder %s15, 1
    %p38 = por %p36, %p37
    %p40 = scmp.ne.s32.totalorder %s23, %s39
    %p41 = scmp.eq.s32.totalorder %s15, 0
    %p42 = por %p40, %p41
    %s44 = sadd.s32 %s43, 1
    %p47 = scmp.eq.s32.totalorder %s9, 1
    %p48 = scmp.ne.s32.totalorder %s43, %s45
    %p49 = scmp.eq.s32.totalorder %s9, 0
    %p50 = por %p48, %p49
    %p51 = scmp.ne.s32.totalorder %s43, %s45
    %p52 = scmp.eq.s32.totalorder %s14, 1
    %p53 = por %p51, %p52
    %p54 = scmp.ne.s32.totalorder %s45, %s46
    %p55 = scmp.eq.s32.totalorder %s14, 0
    %p56 = por %p54, %p55
    %p57 = scmp.ne.s32.totalorder %s45, %s46
    %p58 = scmp.eq.s32.totalorder %s15, 1
    %p59 = por %p57, %p58
    %p61 = scmp.ne.s32.totalorder %s46, %s60
    %p62 = scmp.eq.s32.totalorder %s15, 0
    %p63 = por %p61, %p62
    %s65 = sadd.s32 %s64, 1
    %p68 = scmp.eq.s32.totalorder %s9, 1
    %p69 = scmp.ne.s32.totalorder %s64, %s66
    %p70 = scmp.eq.s32.totalorder %s9, 0
    %p71 = por %p69, %p70
    %p72 = scmp.ne.s32.totalorder %s64, %s66
    %p73 = scmp.eq.s32.totalorder %s14, 1
    %p74 = por %p72, %p73
    %p75 = scmp.ne.s32.totalorder %s66, %s67
    %p76 = scmp.eq.s32.totalorder %s14, 0
    %p77 = por %p75, %p76
    %p78 = scmp.ne.s32.totalorder %s66, %s67
    %p79 = scmp.eq.s32.totalorder %s15, 1
    %p80 = por %p78, %p79
    %p82 = scmp.ne.s32.totalorder %s67, %s81
    %p83 = scmp.eq.s32.totalorder %s15, 0
    %p84 = por %p82, %p83
    %s85 = ssub.s32 %s9, %s16
    %p86 = scmp.eq.s32.totalorder %s85, 0
    %s88 = sadd.s32 %s87, 1
    %s89 = scalar_select %p86, %s87, %s88
    %p92 = pneg %p86
    %p93 = scmp.eq.s32.totalorder %s9, 1
    %p94 = por %p92, %p93
    %p95 = scmp.ne.s32.totalorder %s87, %s90
    %p96 = scmp.eq.s32.totalorder %s9, 0
    %p97 = por %p95, %p96
    %p98 = scmp.ne.s32.totalorder %s87, %s90
    %p99 = scmp.eq.s32.totalorder %s14, 1
    %p100 = por %p98, %p99
    %p101 = scmp.ne.s32.totalorder %s90, %s91
    %p102 = scmp.eq.s32.totalorder %s14, 0
    %p103 = por %p101, %p102
    %p104 = scmp.ne.s32.totalorder %s90, %s91
    %p105 = scmp.eq.s32.totalorder %s15, 1
    %p106 = por %p104, %p105
    %p108 = scmp.ne.s32.totalorder %s91, %s107
    %p109 = scmp.eq.s32.totalorder %s15, 0
    %p110 = por %p108, %p109
    %p111 = scmp.le.s32.totalorder 1, %s9
    %p112 = scmp.lt.s32.totalorder %s9, 3
    %p113 = pnand %p111, %p112
    %p114 = pneg %p113
    // Predicated region
    $region9: #{cstr_forward.8} parent=5 // pred_check
      _
    $region10: #{cstr_forward.8} parent=5 // pred_check_branch
      %116 = sbr.rel (%p113) target = $region12
    $region11: #{cstr_forward.8} parent=5 // pred_region
      %s117 = ssub.s32 %s9, 1
      // Predicated region
      $region13: #{cstr_forward.8} parent=11 // pred_check
        %p118 = pneg %p56
      $region14: #{cstr_forward.8} parent=11 // pred_check_branch
        %120 = sbr.rel (%p118) target = $region16
      $region15: #{cstr_forward.8} parent=11 // pred_region
        _
      $region16: #{cstr_forward.8} parent=11 // pred_fallthru
        _
      // Predicated region
      $region17: #{cstr_forward.8} parent=11 // pred_check
        %p121 = pneg %p77
      $region18: #{cstr_forward.8} parent=11 // pred_check_branch
        %123 = sbr.rel (%p121) target = $region20
      $region19: #{cstr_forward.8} parent=11 // pred_region
        _
      $region20: #{cstr_forward.8} parent=11 // pred_fallthru
        _
    $region12: #{cstr_forward.8} parent=5 // pred_fallthru
      _
    %p124 = scmp.lt.s32.totalorder %s9, 2
    // Predicated region
    $region21: #{cstr_forward.8} parent=5 // pred_check
      %p125 = pneg %p124
    $region22: #{cstr_forward.8} parent=5 // pred_check_branch
      %127 = sbr.rel (%p125) target = $region24
    $region23: #{cstr_forward.8} parent=5 // pred_region
      // Predicated region
      $region25: #{cstr_forward.8} parent=23 // pred_check
        %p128 = pneg %p29
      $region26: #{cstr_forward.8} parent=23 // pred_check_branch
        %130 = sbr.rel (%p128) target = $region28
      $region27: #{cstr_forward.8} parent=23 // pred_region
        %s131 = smul.u32 64, %s9
        %p132 = scmp.lt.s32.totalorder %s131, 127
        %s133 = scalar_select %p132, %s131, 127
        %s134 = smul.addr %s133, 4
        %s135 = scalar_lea.vmem %s0, %s134
        %s136 = smul.u32 64, %s9
      $region28: #{cstr_forward.8} parent=23 // pred_fallthru
        _
    $region24: #{cstr_forward.8} parent=5 // pred_fallthru
      _
    %p137 = scmp.le.s32.totalorder 1, %s9
    %p138 = scmp.lt.s32.totalorder %s9, 3
    %p139 = pnand %p137, %p138
    %p140 = pneg %p139
    // Predicated region
    $region29: #{cstr_forward.8} parent=5 // pred_check
      _
    $region30: #{cstr_forward.8} parent=5 // pred_check_branch
      %142 = sbr.rel (%p139) target = $region32
    $region31: #{cstr_forward.8} parent=5 // pred_region
      %s143 = ssub.s32 %s9, 1
      %s144 = smul.u32 64, %s14
      %p145 = scmp.lt.s32.totalorder %s144, 127
      %s146 = scalar_select %p145, %s144, 127
      %s147 = smul.addr %s146, 4
      %s148 = scalar_lea.vmem %s0, %s147
      %p149 = pneg %p35
      %p150 = pneg %p32
      %p151 = pneg %p56
      %p152 = pneg %p53
      %p153 = pneg %p77
      %p154 = pneg %p74
      %p155 = pneg %p103
      %p156 = pneg %p100
      %s157 = smul.u32 64, %s14
      %p158 = scmp.lt.s32.totalorder %s157, 127
      %s159 = scalar_select %p158, %s157, 127
      %s160 = smul.addr %s159, 4
      %s161 = scalar_lea.vmem %s3, %s160
      %s162 = smul.u32 64, %s14
      %p163 = scmp.lt.s32.totalorder %s162, 127
      %s164 = scalar_select %p163, %s162, 127
      %s165 = smul.addr %s164, 4
      %s166 = scalar_lea.vmem %s0, %s165
      %s167 = smul.u32 64, %s14
      %s168 = smul.u32 64, %s14
      %p169 = scmp.lt.s32.totalorder %s168, 127
      %s170 = scalar_select %p169, %s168, 127
      %s171 = smul.addr %s170, 4
      %s172 = scalar_lea.vmem %s3, %s171
      %s173 = smul.u32 64, %s14
      %v175 = vld [vmem:[%s166] sm:$0xf]
      %v176 = vld [vmem:[%s166 + $0x4] sm:$0xf]
      %v177 = vld [vmem:[%s166 + $0x8] sm:$0xf]
      %v178 = vld [vmem:[%s166 + $0xc] sm:$0xf]
      %v179 = vld [vmem:[%s166 + $0x10] sm:$0xf]
      %v180 = vld [vmem:[%s166 + $0x14] sm:$0xf]
      %v181 = vld [vmem:[%s166 + $0x18] sm:$0xf]
      %v182 = vld [vmem:[%s166 + $0x1c] sm:$0xf]
      %v183 = vld [vmem:[%s166 + $0x20] sm:$0xf]
      %v184 = vld [vmem:[%s166 + $0x24] sm:$0xf]
      %v185 = vld [vmem:[%s166 + $0x28] sm:$0xf]
      %v186 = vld [vmem:[%s166 + $0x2c] sm:$0xf]
      %v187 = vld [vmem:[%s166 + $0x30] sm:$0xf]
      %v188 = vld [vmem:[%s166 + $0x34] sm:$0xf]
      %v189 = vld [vmem:[%s166 + $0x38] sm:$0xf]
      %v190 = vld [vmem:[%s166 + $0x3c] sm:$0xf]
      %v191 = vld [vmem:[%s166 + $0x40] sm:$0xf]
      %v192 = vld [vmem:[%s166 + $0x44] sm:$0xf]
      %v193 = vld [vmem:[%s166 + $0x48] sm:$0xf]
      %v194 = vld [vmem:[%s166 + $0x4c] sm:$0xf]
      %v195 = vld [vmem:[%s166 + $0x50] sm:$0xf]
      %v196 = vld [vmem:[%s166 + $0x54] sm:$0xf]
      %v197 = vld [vmem:[%s166 + $0x58] sm:$0xf]
      %v198 = vld [vmem:[%s166 + $0x5c] sm:$0xf]
      %v199 = vld [vmem:[%s166 + $0x60] sm:$0xf]
      %v200 = vld [vmem:[%s166 + $0x64] sm:$0xf]
      %v201 = vld [vmem:[%s166 + $0x68] sm:$0xf]
      %v202 = vld [vmem:[%s166 + $0x6c] sm:$0xf]
      %v203 = vld [vmem:[%s166 + $0x70] sm:$0xf]
      %v204 = vld [vmem:[%s166 + $0x74] sm:$0xf]
      %v205 = vld [vmem:[%s166 + $0x78] sm:$0xf]
      %v206 = vld [vmem:[%s166 + $0x7c] sm:$0xf]
      %v207 = vld [vmem:[%s166 + $0x80] sm:$0xf]
      %v208 = vld [vmem:[%s166 + $0x84] sm:$0xf]
      %v209 = vld [vmem:[%s166 + $0x88] sm:$0xf]
      %v210 = vld [vmem:[%s166 + $0x8c] sm:$0xf]
      %v211 = vld [vmem:[%s166 + $0x90] sm:$0xf]
      %v212 = vld [vmem:[%s166 + $0x94] sm:$0xf]
      %v213 = vld [vmem:[%s166 + $0x98] sm:$0xf]
      %v214 = vld [vmem:[%s166 + $0x9c] sm:$0xf]
      %v215 = vld [vmem:[%s166 + $0xa0] sm:$0xf]
      %v216 = vld [vmem:[%s166 + $0xa4] sm:$0xf]
      %v217 = vld [vmem:[%s166 + $0xa8] sm:$0xf]
      %v218 = vld [vmem:[%s166 + $0xac] sm:$0xf]
      %v219 = vld [vmem:[%s166 + $0xb0] sm:$0xf]
      %v220 = vld [vmem:[%s166 + $0xb4] sm:$0xf]
      %v221 = vld [vmem:[%s166 + $0xb8] sm:$0xf]
      %v222 = vld [vmem:[%s166 + $0xbc] sm:$0xf]
      %v223 = vld [vmem:[%s166 + $0xc0] sm:$0xf]
      %v224 = vld [vmem:[%s166 + $0xc4] sm:$0xf]
      %v225 = vld [vmem:[%s166 + $0xc8] sm:$0xf]
      %v226 = vld [vmem:[%s166 + $0xcc] sm:$0xf]
      %v227 = vld [vmem:[%s166 + $0xd0] sm:$0xf]
      %v228 = vld [vmem:[%s166 + $0xd4] sm:$0xf]
      %v229 = vld [vmem:[%s166 + $0xd8] sm:$0xf]
      %v230 = vld [vmem:[%s166 + $0xdc] sm:$0xf]
      %v231 = vld [vmem:[%s166 + $0xe0] sm:$0xf]
      %v232 = vld [vmem:[%s166 + $0xe4] sm:$0xf]
      %v233 = vld [vmem:[%s166 + $0xe8] sm:$0xf]
      %v234 = vld [vmem:[%s166 + $0xec] sm:$0xf]
      %v235 = vld [vmem:[%s166 + $0xf0] sm:$0xf]
      %v236 = vld [vmem:[%s166 + $0xf4] sm:$0xf]
      %v237 = vld [vmem:[%s166 + $0xf8] sm:$0xf]
      %v238 = vld [vmem:[%s166 + $0xfc] sm:$0xf]
      %v239 = vld [vmem:[%s1] sm:$0xf]
      %v240 = vld [vmem:[%s1 + $0x4] sm:$0xf]
      %v241 = vld [vmem:[%s1 + $0x8] sm:$0xf]
      %v242 = vld [vmem:[%s1 + $0xc] sm:$0x3]
      %v243 = vld [vmem:[%s2] sm:$0x1]
      %v245 = vperm.slane %v243, 0
      %v311 = vunpack.c.l.b16 %v175
      %v312 = vunpack.c.l.b16 %v176
      %v313 = vunpack.c.l.b16 %v177
      %v314 = vunpack.c.l.b16 %v178
      %v315 = vunpack.c.l.b16 %v179
      %v316 = vunpack.c.l.b16 %v180
      %v317 = vunpack.c.l.b16 %v181
      %v318 = vunpack.c.l.b16 %v182
      %v319 = vunpack.c.l.b16 %v183
      %v320 = vunpack.c.l.b16 %v184
      %v321 = vunpack.c.l.b16 %v185
      %v322 = vunpack.c.l.b16 %v186
      %v323 = vunpack.c.l.b16 %v187
      %v324 = vunpack.c.l.b16 %v188
      %v325 = vunpack.c.l.b16 %v189
      %v326 = vunpack.c.l.b16 %v190
      %v327 = vunpack.c.l.b16 %v191
      %v328 = vunpack.c.l.b16 %v192
      %v329 = vunpack.c.l.b16 %v193
      %v330 = vunpack.c.l.b16 %v194
      %v331 = vunpack.c.l.b16 %v195
      %v332 = vunpack.c.l.b16 %v196
      %v333 = vunpack.c.l.b16 %v197
      %v334 = vunpack.c.l.b16 %v198
      %v335 = vunpack.c.l.b16 %v199
      %v336 = vunpack.c.l.b16 %v200
      %v337 = vunpack.c.l.b16 %v201
      %v338 = vunpack.c.l.b16 %v202
      %v339 = vunpack.c.l.b16 %v203
      %v340 = vunpack.c.l.b16 %v204
      %v341 = vunpack.c.l.b16 %v205
      %v342 = vunpack.c.l.b16 %v206
      %v343 = vunpack.c.l.b16 %v207
      %v344 = vunpack.c.l.b16 %v208
      %v345 = vunpack.c.l.b16 %v209
      %v346 = vunpack.c.l.b16 %v210
      %v347 = vunpack.c.l.b16 %v211
      %v348 = vunpack.c.l.b16 %v212
      %v349 = vunpack.c.l.b16 %v213
      %v350 = vunpack.c.l.b16 %v214
      %v351 = vunpack.c.l.b16 %v215
      %v352 = vunpack.c.l.b16 %v216
      %v353 = vunpack.c.l.b16 %v217
      %v354 = vunpack.c.l.b16 %v218
      %v355 = vunpack.c.l.b16 %v219
      %v356 = vunpack.c.l.b16 %v220
      %v357 = vunpack.c.l.b16 %v221
      %v358 = vunpack.c.l.b16 %v222
      %v359 = vunpack.c.l.b16 %v223
      %v360 = vunpack.c.l.b16 %v224
      %v361 = vunpack.c.l.b16 %v225
      %v362 = vunpack.c.l.b16 %v226
      %v363 = vunpack.c.l.b16 %v227
      %v364 = vunpack.c.l.b16 %v228
      %v365 = vunpack.c.l.b16 %v229
      %v366 = vunpack.c.l.b16 %v230
      %v367 = vunpack.c.l.b16 %v231
      %v368 = vunpack.c.l.b16 %v232
      %v369 = vunpack.c.l.b16 %v233
      %v370 = vunpack.c.l.b16 %v234
      %v371 = vunpack.c.l.b16 %v235
      %v372 = vunpack.c.l.b16 %v236
      %v373 = vunpack.c.l.b16 %v237
      %v374 = vunpack.c.l.b16 %v238
      %v375 = vpack.c.b16 %v312, %v311
      %v376 = vpack.c.b16 %v314, %v313
      %v377 = vpack.c.b16 %v316, %v315
      %v378 = vpack.c.b16 %v318, %v317
      %v379 = vpack.c.b16 %v320, %v319
      %v380 = vpack.c.b16 %v322, %v321
      %v381 = vpack.c.b16 %v324, %v323
      %v382 = vpack.c.b16 %v326, %v325
      %v383 = vpack.c.b16 %v328, %v327
      %v384 = vpack.c.b16 %v330, %v329
      %v385 = vpack.c.b16 %v332, %v331
      %v386 = vpack.c.b16 %v334, %v333
      %v387 = vpack.c.b16 %v336, %v335
      %v388 = vpack.c.b16 %v338, %v337
      %v389 = vpack.c.b16 %v340, %v339
      %v390 = vpack.c.b16 %v342, %v341
      %v391 = vpack.c.b16 %v344, %v343
      %v392 = vpack.c.b16 %v346, %v345
      %v393 = vpack.c.b16 %v348, %v347
      %v394 = vpack.c.b16 %v350, %v349
      %v395 = vpack.c.b16 %v352, %v351
      %v396 = vpack.c.b16 %v354, %v353
      %v397 = vpack.c.b16 %v356, %v355
      %v398 = vpack.c.b16 %v358, %v357
      %v399 = vpack.c.b16 %v360, %v359
      %v400 = vpack.c.b16 %v362, %v361
      %v401 = vpack.c.b16 %v364, %v363
      %v402 = vpack.c.b16 %v366, %v365
      %v403 = vpack.c.b16 %v368, %v367
      %v404 = vpack.c.b16 %v370, %v369
      %v405 = vpack.c.b16 %v372, %v371
      %v406 = vpack.c.b16 %v374, %v373
      %v411 = vunpack.c.l.b16 %v239
      %v412 = vunpack.c.l.b16 %v240
      %v413 = vunpack.c.l.b16 %v241
      %v414 = vunpack.c.l.b16 %v242
      %v415 = vpack.c.b16 %v412, %v411
      %v416 = vpack.c.b16 %v414, %v413
      %vm418 = vcmask 220160
      %v420 = vsel %vm418, %v375, 0
      %v423 = vsel %vm418, %v376, 0
      %v426 = vsel %vm418, %v377, 0
      %v429 = vsel %vm418, %v378, 0
      %v432 = vsel %vm418, %v379, 0
      %v435 = vsel %vm418, %v380, 0
      %v438 = vsel %vm418, %v381, 0
      %v441 = vsel %vm418, %v382, 0
      %v444 = vsel %vm418, %v383, 0
      %v447 = vsel %vm418, %v384, 0
      %v450 = vsel %vm418, %v385, 0
      %v453 = vsel %vm418, %v386, 0
      %v456 = vsel %vm418, %v387, 0
      %v459 = vsel %vm418, %v388, 0
      %v462 = vsel %vm418, %v389, 0
      %v465 = vsel %vm418, %v390, 0
      %v468 = vsel %vm418, %v391, 0
      %v471 = vsel %vm418, %v392, 0
      %v474 = vsel %vm418, %v393, 0
      %v477 = vsel %vm418, %v394, 0
      %v480 = vsel %vm418, %v395, 0
      %v483 = vsel %vm418, %v396, 0
      %v486 = vsel %vm418, %v397, 0
      %v489 = vsel %vm418, %v398, 0
      %v492 = vsel %vm418, %v399, 0
      %v495 = vsel %vm418, %v400, 0
      %v498 = vsel %vm418, %v401, 0
      %v501 = vsel %vm418, %v402, 0
      %v504 = vsel %vm418, %v403, 0
      %v507 = vsel %vm418, %v404, 0
      %v510 = vsel %vm418, %v405, 0
      %v513 = vsel %vm418, %v406, 0
      %vm515 = vcmask 1044480
      %vm516 = vcmask 1045504
      %v517 = vsel %vm515, 4294967295, 65535
      %v518 = vsel %vm516, %v517, 0
      %v520 = vand.u32 %v416, %v518
      %522 = vmatpush.bf16.msra.mxu0 0
      %523 = vmatpush.bf16.msra.mxu0 0
      %524 = vmatpush.bf16.msra.mxu0 0
      %525 = vmatpush.bf16.msra.mxu0 0
      %526 = vmatpush.bf16.msra.mxu0 0
      %527 = vmatpush.bf16.msra.mxu0 0
      %528 = vmatpush.bf16.msra.mxu0 %v520
      %529 = vmatpush.bf16.msra.mxu0 %v415
      %530 = vmatmul.bf16.gmra.mxu0 %v420
      %v531 = vpop.f32.mrf.mxu0
      %v532 = vadd.f32 %v245, %v531
      %v533 = vpop.f32.mrf.mxu0
      %v534 = vadd.f32 %v245, %v533
      %535 = vmatmul.bf16.gmra.mxu0 %v423
      %v536 = vpop.f32.mrf.mxu0
      %v537 = vadd.f32 %v245, %v536
      %v538 = vpop.f32.mrf.mxu0
      %v539 = vadd.f32 %v245, %v538
      %540 = vmatmul.bf16.gmra.mxu0 %v426
      %v541 = vpop.f32.mrf.mxu0
      %v542 = vadd.f32 %v245, %v541
      %v543 = vpop.f32.mrf.mxu0
      %v544 = vadd.f32 %v245, %v543
      %545 = vmatmul.bf16.gmra.mxu0 %v429
      %v546 = vpop.f32.mrf.mxu0
      %v547 = vadd.f32 %v245, %v546
      %v548 = vpop.f32.mrf.mxu0
      %v549 = vadd.f32 %v245, %v548
      %550 = vmatmul.bf16.gmra.mxu0 %v432
      %v551 = vpop.f32.mrf.mxu0
      %v552 = vadd.f32 %v245, %v551
      %v553 = vpop.f32.mrf.mxu0
      %v554 = vadd.f32 %v245, %v553
      %555 = vmatmul.bf16.gmra.mxu0 %v435
      %v556 = vpop.f32.mrf.mxu0
      %v557 = vadd.f32 %v245, %v556
      %v558 = vpop.f32.mrf.mxu0
      %v559 = vadd.f32 %v245, %v558
      %560 = vmatmul.bf16.gmra.mxu0 %v438
      %v561 = vpop.f32.mrf.mxu0
      %v562 = vadd.f32 %v245, %v561
      %v563 = vpop.f32.mrf.mxu0
      %v564 = vadd.f32 %v245, %v563
      %565 = vmatmul.bf16.gmra.mxu0 %v441
      %v566 = vpop.f32.mrf.mxu0
      %v567 = vadd.f32 %v245, %v566
      %v568 = vpop.f32.mrf.mxu0
      %v569 = vadd.f32 %v245, %v568
      %570 = vmatmul.bf16.gmra.mxu0 %v444
      %v571 = vpop.f32.mrf.mxu0
      %v572 = vadd.f32 %v245, %v571
      %v573 = vpop.f32.mrf.mxu0
      %v574 = vadd.f32 %v245, %v573
      %575 = vmatmul.bf16.gmra.mxu0 %v447
      %v576 = vpop.f32.mrf.mxu0
      %v577 = vadd.f32 %v245, %v576
      %v578 = vpop.f32.mrf.mxu0
      %v579 = vadd.f32 %v245, %v578
      %580 = vmatmul.bf16.gmra.mxu0 %v450
      %v581 = vpop.f32.mrf.mxu0
      %v582 = vadd.f32 %v245, %v581
      %v583 = vpop.f32.mrf.mxu0
      %v584 = vadd.f32 %v245, %v583
      %585 = vmatmul.bf16.gmra.mxu0 %v453
      %v586 = vpop.f32.mrf.mxu0
      %v587 = vadd.f32 %v245, %v586
      %v588 = vpop.f32.mrf.mxu0
      %v589 = vadd.f32 %v245, %v588
      %590 = vmatmul.bf16.gmra.mxu0 %v456
      %v591 = vpop.f32.mrf.mxu0
      %v592 = vadd.f32 %v245, %v591
      %v593 = vpop.f32.mrf.mxu0
      %v594 = vadd.f32 %v245, %v593
      %595 = vmatmul.bf16.gmra.mxu0 %v459
      %v596 = vpop.f32.mrf.mxu0
      %v597 = vadd.f32 %v245, %v596
      %v598 = vpop.f32.mrf.mxu0
      %v599 = vadd.f32 %v245, %v598
      %600 = vmatmul.bf16.gmra.mxu0 %v462
      %v601 = vpop.f32.mrf.mxu0
      %v602 = vadd.f32 %v245, %v601
      %v603 = vpop.f32.mrf.mxu0
      %v604 = vadd.f32 %v245, %v603
      %605 = vmatmul.bf16.gmra.mxu0 %v465
      %v606 = vpop.f32.mrf.mxu0
      %v607 = vadd.f32 %v245, %v606
      %v608 = vpop.f32.mrf.mxu0
      %v609 = vadd.f32 %v245, %v608
      %610 = vmatmul.bf16.gmra.mxu0 %v468
      %v611 = vpop.f32.mrf.mxu0
      %v612 = vadd.f32 %v245, %v611
      %v613 = vpop.f32.mrf.mxu0
      %v614 = vadd.f32 %v245, %v613
      %615 = vmatmul.bf16.gmra.mxu0 %v471
      %v616 = vpop.f32.mrf.mxu0
      %v617 = vadd.f32 %v245, %v616
      %v618 = vpop.f32.mrf.mxu0
      %v619 = vadd.f32 %v245, %v618
      %620 = vmatmul.bf16.gmra.mxu0 %v474
      %v621 = vpop.f32.mrf.mxu0
      %v622 = vadd.f32 %v245, %v621
      %v623 = vpop.f32.mrf.mxu0
      %v624 = vadd.f32 %v245, %v623
      %625 = vmatmul.bf16.gmra.mxu0 %v477
      %v626 = vpop.f32.mrf.mxu0
      %v627 = vadd.f32 %v245, %v626
      %v628 = vpop.f32.mrf.mxu0
      %v629 = vadd.f32 %v245, %v628
      %630 = vmatmul.bf16.gmra.mxu0 %v480
      %v631 = vpop.f32.mrf.mxu0
      %v632 = vadd.f32 %v245, %v631
      %v633 = vpop.f32.mrf.mxu0
      %v634 = vadd.f32 %v245, %v633
      %635 = vmatmul.bf16.gmra.mxu0 %v483
      %v636 = vpop.f32.mrf.mxu0
      %v637 = vadd.f32 %v245, %v636
      %v638 = vpop.f32.mrf.mxu0
      %v639 = vadd.f32 %v245, %v638
      %640 = vmatmul.bf16.gmra.mxu0 %v486
      %v641 = vpop.f32.mrf.mxu0
      %v642 = vadd.f32 %v245, %v641
      %v643 = vpop.f32.mrf.mxu0
      %v644 = vadd.f32 %v245, %v643
      %645 = vmatmul.bf16.gmra.mxu0 %v489
      %v646 = vpop.f32.mrf.mxu0
      %v647 = vadd.f32 %v245, %v646
      %v648 = vpop.f32.mrf.mxu0
      %v649 = vadd.f32 %v245, %v648
      %650 = vmatmul.bf16.gmra.mxu0 %v492
      %v651 = vpop.f32.mrf.mxu0
      %v652 = vadd.f32 %v245, %v651
      %v653 = vpop.f32.mrf.mxu0
      %v654 = vadd.f32 %v245, %v653
      %655 = vmatmul.bf16.gmra.mxu0 %v495
      %v656 = vpop.f32.mrf.mxu0
      %v657 = vadd.f32 %v245, %v656
      %v658 = vpop.f32.mrf.mxu0
      %v659 = vadd.f32 %v245, %v658
      %660 = vmatmul.bf16.gmra.mxu0 %v498
      %v661 = vpop.f32.mrf.mxu0
      %v662 = vadd.f32 %v245, %v661
      %v663 = vpop.f32.mrf.mxu0
      %v664 = vadd.f32 %v245, %v663
      %665 = vmatmul.bf16.gmra.mxu0 %v501
      %v666 = vpop.f32.mrf.mxu0
      %v667 = vadd.f32 %v245, %v666
      %v668 = vpop.f32.mrf.mxu0
      %v669 = vadd.f32 %v245, %v668
      %670 = vmatmul.bf16.gmra.mxu0 %v504
      %v671 = vpop.f32.mrf.mxu0
      %v672 = vadd.f32 %v245, %v671
      %v673 = vpop.f32.mrf.mxu0
      %v674 = vadd.f32 %v245, %v673
      %675 = vmatmul.bf16.gmra.mxu0 %v507
      %v676 = vpop.f32.mrf.mxu0
      %v677 = vadd.f32 %v245, %v676
      %v678 = vpop.f32.mrf.mxu0
      %v679 = vadd.f32 %v245, %v678
      %680 = vmatmul.bf16.gmra.mxu0 %v510
      %v681 = vpop.f32.mrf.mxu0
      %v682 = vadd.f32 %v245, %v681
      %v683 = vpop.f32.mrf.mxu0
      %v684 = vadd.f32 %v245, %v683
      %685 = vmatmul.bf16.gmra.mxu0 %v513
      %v686 = vpop.f32.mrf.mxu0
      %v687 = vadd.f32 %v245, %v686
      %v688 = vpop.f32.mrf.mxu0
      %v689 = vadd.f32 %v245, %v688
      %690 = vdwg.mxu0
      %v691 = vmax.f32 %v532, 0.0
      %v692 = vmax.f32 %v534, 0.0
      %v693 = vmax.f32 %v537, 0.0
      %v694 = vmax.f32 %v539, 0.0
      %v695 = vmax.f32 %v542, 0.0
      %v696 = vmax.f32 %v544, 0.0
      %v697 = vmax.f32 %v547, 0.0
      %v698 = vmax.f32 %v549, 0.0
      %v699 = vmax.f32 %v552, 0.0
      %v700 = vmax.f32 %v554, 0.0
      %v701 = vmax.f32 %v557, 0.0
      %v702 = vmax.f32 %v559, 0.0
      %v703 = vmax.f32 %v562, 0.0
      %v704 = vmax.f32 %v564, 0.0
      %v705 = vmax.f32 %v567, 0.0
      %v706 = vmax.f32 %v569, 0.0
      %v707 = vmax.f32 %v572, 0.0
      %v708 = vmax.f32 %v574, 0.0
      %v709 = vmax.f32 %v577, 0.0
      %v710 = vmax.f32 %v579, 0.0
      %v711 = vmax.f32 %v582, 0.0
      %v712 = vmax.f32 %v584, 0.0
      %v713 = vmax.f32 %v587, 0.0
      %v714 = vmax.f32 %v589, 0.0
      %v715 = vmax.f32 %v592, 0.0
      %v716 = vmax.f32 %v594, 0.0
      %v717 = vmax.f32 %v597, 0.0
      %v718 = vmax.f32 %v599, 0.0
      %v719 = vmax.f32 %v602, 0.0
      %v720 = vmax.f32 %v604, 0.0
      %v721 = vmax.f32 %v607, 0.0
      %v722 = vmax.f32 %v609, 0.0
      %v723 = vmax.f32 %v612, 0.0
      %v724 = vmax.f32 %v614, 0.0
      %v725 = vmax.f32 %v617, 0.0
      %v726 = vmax.f32 %v619, 0.0
      %v727 = vmax.f32 %v622, 0.0
      %v728 = vmax.f32 %v624, 0.0
      %v729 = vmax.f32 %v627, 0.0
      %v730 = vmax.f32 %v629, 0.0
      %v731 = vmax.f32 %v632, 0.0
      %v732 = vmax.f32 %v634, 0.0
      %v733 = vmax.f32 %v637, 0.0
      %v734 = vmax.f32 %v639, 0.0
      %v735 = vmax.f32 %v642, 0.0
      %v736 = vmax.f32 %v644, 0.0
      %v737 = vmax.f32 %v647, 0.0
      %v738 = vmax.f32 %v649, 0.0
      %v739 = vmax.f32 %v652, 0.0
      %v740 = vmax.f32 %v654, 0.0
      %v741 = vmax.f32 %v657, 0.0
      %v742 = vmax.f32 %v659, 0.0
      %v743 = vmax.f32 %v662, 0.0
      %v744 = vmax.f32 %v664, 0.0
      %v745 = vmax.f32 %v667, 0.0
      %v746 = vmax.f32 %v669, 0.0
      %v747 = vmax.f32 %v672, 0.0
      %v748 = vmax.f32 %v674, 0.0
      %v749 = vmax.f32 %v677, 0.0
      %v750 = vmax.f32 %v679, 0.0
      %v751 = vmax.f32 %v682, 0.0
      %v752 = vmax.f32 %v684, 0.0
      %v753 = vmax.f32 %v687, 0.0
      %v754 = vmax.f32 %v689, 0.0
      %v755 = vpack.c.bf16 %v691, %v691
      %v756 = vpack.c.bf16 %v692, %v692
      %v757 = vpack.c.bf16 %v693, %v693
      %v758 = vpack.c.bf16 %v694, %v694
      %v759 = vpack.c.bf16 %v695, %v695
      %v760 = vpack.c.bf16 %v696, %v696
      %v761 = vpack.c.bf16 %v697, %v697
      %v762 = vpack.c.bf16 %v698, %v698
      %v763 = vpack.c.bf16 %v699, %v699
      %v764 = vpack.c.bf16 %v700, %v700
      %v765 = vpack.c.bf16 %v701, %v701
      %v766 = vpack.c.bf16 %v702, %v702
      %v767 = vpack.c.bf16 %v703, %v703
      %v768 = vpack.c.bf16 %v704, %v704
      %v769 = vpack.c.bf16 %v705, %v705
      %v770 = vpack.c.bf16 %v706, %v706
      %v771 = vpack.c.bf16 %v707, %v707
      %v772 = vpack.c.bf16 %v708, %v708
      %v773 = vpack.c.bf16 %v709, %v709
      %v774 = vpack.c.bf16 %v710, %v710
      %v775 = vpack.c.bf16 %v711, %v711
      %v776 = vpack.c.bf16 %v712, %v712
      %v777 = vpack.c.bf16 %v713, %v713
      %v778 = vpack.c.bf16 %v714, %v714
      %v779 = vpack.c.bf16 %v715, %v715
      %v780 = vpack.c.bf16 %v716, %v716
      %v781 = vpack.c.bf16 %v717, %v717
      %v782 = vpack.c.bf16 %v718, %v718
      %v783 = vpack.c.bf16 %v719, %v719
      %v784 = vpack.c.bf16 %v720, %v720
      %v785 = vpack.c.bf16 %v721, %v721
      %v786 = vpack.c.bf16 %v722, %v722
      %v787 = vpack.c.bf16 %v723, %v723
      %v788 = vpack.c.bf16 %v724, %v724
      %v789 = vpack.c.bf16 %v725, %v725
      %v790 = vpack.c.bf16 %v726, %v726
      %v791 = vpack.c.bf16 %v727, %v727
      %v792 = vpack.c.bf16 %v728, %v728
      %v793 = vpack.c.bf16 %v729, %v729
      %v794 = vpack.c.bf16 %v730, %v730
      %v795 = vpack.c.bf16 %v731, %v731
      %v796 = vpack.c.bf16 %v732, %v732
      %v797 = vpack.c.bf16 %v733, %v733
      %v798 = vpack.c.bf16 %v734, %v734
      %v799 = vpack.c.bf16 %v735, %v735
      %v800 = vpack.c.bf16 %v736, %v736
      %v801 = vpack.c.bf16 %v737, %v737
      %v802 = vpack.c.bf16 %v738, %v738
      %v803 = vpack.c.bf16 %v739, %v739
      %v804 = vpack.c.bf16 %v740, %v740
      %v805 = vpack.c.bf16 %v741, %v741
      %v806 = vpack.c.bf16 %v742, %v742
      %v807 = vpack.c.bf16 %v743, %v743
      %v808 = vpack.c.bf16 %v744, %v744
      %v809 = vpack.c.bf16 %v745, %v745
      %v810 = vpack.c.bf16 %v746, %v746
      %v811 = vpack.c.bf16 %v747, %v747
      %v812 = vpack.c.bf16 %v748, %v748
      %v813 = vpack.c.bf16 %v749, %v749
      %v814 = vpack.c.bf16 %v750, %v750
      %v815 = vpack.c.bf16 %v751, %v751
      %v816 = vpack.c.bf16 %v752, %v752
      %v817 = vpack.c.bf16 %v753, %v753
      %v818 = vpack.c.bf16 %v754, %v754
      %vm819 = vcmask 519168
      %820 = vst.msk [vmem:[%s172] sm:$0xf] %vm819, %v755
      %821 = vst.msk [vmem:[%s172 + $0x4] sm:$0xf] %vm819, %v756
      %822 = vst.msk [vmem:[%s172 + $0x8] sm:$0xf] %vm819, %v757
      %823 = vst.msk [vmem:[%s172 + $0xc] sm:$0xf] %vm819, %v758
      %824 = vst.msk [vmem:[%s172 + $0x10] sm:$0xf] %vm819, %v759
      %825 = vst.msk [vmem:[%s172 + $0x14] sm:$0xf] %vm819, %v760
      %826 = vst.msk [vmem:[%s172 + $0x18] sm:$0xf] %vm819, %v761
      %827 = vst.msk [vmem:[%s172 + $0x1c] sm:$0xf] %vm819, %v762
      %828 = vst.msk [vmem:[%s172 + $0x20] sm:$0xf] %vm819, %v763
      %829 = vst.msk [vmem:[%s172 + $0x24] sm:$0xf] %vm819, %v764
      %830 = vst.msk [vmem:[%s172 + $0x28] sm:$0xf] %vm819, %v765
      %831 = vst.msk [vmem:[%s172 + $0x2c] sm:$0xf] %vm819, %v766
      %832 = vst.msk [vmem:[%s172 + $0x30] sm:$0xf] %vm819, %v767
      %833 = vst.msk [vmem:[%s172 + $0x34] sm:$0xf] %vm819, %v768
      %834 = vst.msk [vmem:[%s172 + $0x38] sm:$0xf] %vm819, %v769
      %835 = vst.msk [vmem:[%s172 + $0x3c] sm:$0xf] %vm819, %v770
      %836 = vst.msk [vmem:[%s172 + $0x40] sm:$0xf] %vm819, %v771
      %837 = vst.msk [vmem:[%s172 + $0x44] sm:$0xf] %vm819, %v772
      %838 = vst.msk [vmem:[%s172 + $0x48] sm:$0xf] %vm819, %v773
      %839 = vst.msk [vmem:[%s172 + $0x4c] sm:$0xf] %vm819, %v774
      %840 = vst.msk [vmem:[%s172 + $0x50] sm:$0xf] %vm819, %v775
      %841 = vst.msk [vmem:[%s172 + $0x54] sm:$0xf] %vm819, %v776
      %842 = vst.msk [vmem:[%s172 + $0x58] sm:$0xf] %vm819, %v777
      %843 = vst.msk [vmem:[%s172 + $0x5c] sm:$0xf] %vm819, %v778
      %844 = vst.msk [vmem:[%s172 + $0x60] sm:$0xf] %vm819, %v779
      %845 = vst.msk [vmem:[%s172 + $0x64] sm:$0xf] %vm819, %v780
      %846 = vst.msk [vmem:[%s172 + $0x68] sm:$0xf] %vm819, %v781
      %847 = vst.msk [vmem:[%s172 + $0x6c] sm:$0xf] %vm819, %v782
      %848 = vst.msk [vmem:[%s172 + $0x70] sm:$0xf] %vm819, %v783
      %849 = vst.msk [vmem:[%s172 + $0x74] sm:$0xf] %vm819, %v784
      %850 = vst.msk [vmem:[%s172 + $0x78] sm:$0xf] %vm819, %v785
      %851 = vst.msk [vmem:[%s172 + $0x7c] sm:$0xf] %vm819, %v786
      %852 = vst.msk [vmem:[%s172 + $0x80] sm:$0xf] %vm819, %v787
      %853 = vst.msk [vmem:[%s172 + $0x84] sm:$0xf] %vm819, %v788
      %854 = vst.msk [vmem:[%s172 + $0x88] sm:$0xf] %vm819, %v789
      %855 = vst.msk [vmem:[%s172 + $0x8c] sm:$0xf] %vm819, %v790
      %856 = vst.msk [vmem:[%s172 + $0x90] sm:$0xf] %vm819, %v791
      %857 = vst.msk [vmem:[%s172 + $0x94] sm:$0xf] %vm819, %v792
      %858 = vst.msk [vmem:[%s172 + $0x98] sm:$0xf] %vm819, %v793
      %859 = vst.msk [vmem:[%s172 + $0x9c] sm:$0xf] %vm819, %v794
      %860 = vst.msk [vmem:[%s172 + $0xa0] sm:$0xf] %vm819, %v795
      %861 = vst.msk [vmem:[%s172 + $0xa4] sm:$0xf] %vm819, %v796
      %862 = vst.msk [vmem:[%s172 + $0xa8] sm:$0xf] %vm819, %v797
      %863 = vst.msk [vmem:[%s172 + $0xac] sm:$0xf] %vm819, %v798
      %864 = vst.msk [vmem:[%s172 + $0xb0] sm:$0xf] %vm819, %v799
      %865 = vst.msk [vmem:[%s172 + $0xb4] sm:$0xf] %vm819, %v800
      %866 = vst.msk [vmem:[%s172 + $0xb8] sm:$0xf] %vm819, %v801
      %867 = vst.msk [vmem:[%s172 + $0xbc] sm:$0xf] %vm819, %v802
      %868 = vst.msk [vmem:[%s172 + $0xc0] sm:$0xf] %vm819, %v803
      %869 = vst.msk [vmem:[%s172 + $0xc4] sm:$0xf] %vm819, %v804
      %870 = vst.msk [vmem:[%s172 + $0xc8] sm:$0xf] %vm819, %v805
      %871 = vst.msk [vmem:[%s172 + $0xcc] sm:$0xf] %vm819, %v806
      %872 = vst.msk [vmem:[%s172 + $0xd0] sm:$0xf] %vm819, %v807
      %873 = vst.msk [vmem:[%s172 + $0xd4] sm:$0xf] %vm819, %v808
      %874 = vst.msk [vmem:[%s172 + $0xd8] sm:$0xf] %vm819, %v809
      %875 = vst.msk [vmem:[%s172 + $0xdc] sm:$0xf] %vm819, %v810
      %876 = vst.msk [vmem:[%s172 + $0xe0] sm:$0xf] %vm819, %v811
      %877 = vst.msk [vmem:[%s172 + $0xe4] sm:$0xf] %vm819, %v812
      %878 = vst.msk [vmem:[%s172 + $0xe8] sm:$0xf] %vm819, %v813
      %879 = vst.msk [vmem:[%s172 + $0xec] sm:$0xf] %vm819, %v814
      %880 = vst.msk [vmem:[%s172 + $0xf0] sm:$0xf] %vm819, %v815
      %881 = vst.msk [vmem:[%s172 + $0xf4] sm:$0xf] %vm819, %v816
      %882 = vst.msk [vmem:[%s172 + $0xf8] sm:$0xf] %vm819, %v817
      %883 = vst.msk [vmem:[%s172 + $0xfc] sm:$0xf] %vm819, %v818
      %s884 = smul.u32 64, %s14
      %p885 = scmp.lt.s32.totalorder %s884, 127
      %s886 = scalar_select %p885, %s884, 127
      %s887 = smul.addr %s886, 4
      %s888 = scalar_lea.vmem %s3, %s887
      // Predicated region
      $region33: #{cstr_forward.8} parent=31 // pred_check
        %p889 = pneg %p100
      $region34: #{cstr_forward.8} parent=31 // pred_check_branch
        %891 = sbr.rel (%p889) target = $region36
      $region35: #{cstr_forward.8} parent=31 // pred_region
        %s892 = smul.u32 64, %s14
      $region36: #{cstr_forward.8} parent=31 // pred_fallthru
        _
    $region32: #{cstr_forward.8} parent=5 // pred_fallthru
      _
    %p893 = scmp.le.s32.totalorder 2, %s9
    // Predicated region
    $region37: #{cstr_forward.8} parent=5 // pred_check
      %p894 = pneg %p893
    $region38: #{cstr_forward.8} parent=5 // pred_check_branch
      %896 = sbr.rel (%p894) target = $region40
    $region39: #{cstr_forward.8} parent=5 // pred_region
      %s897 = ssub.s32 %s9, 2
      // Predicated region
      $region41: #{cstr_forward.8} parent=39 // pred_check
        %p898 = pneg %p106
      $region42: #{cstr_forward.8} parent=39 // pred_check_branch
        %900 = sbr.rel (%p898) target = $region44
      $region43: #{cstr_forward.8} parent=39 // pred_region
        %s901 = smul.u32 64, %s15
        %p902 = scmp.lt.s32.totalorder %s901, 127
        %s903 = scalar_select %p902, %s901, 127
        %s904 = smul.addr %s903, 4
        %s905 = scalar_lea.vmem %s3, %s904
      $region44: #{cstr_forward.8} parent=39 // pred_fallthru
        _
    $region40: #{cstr_forward.8} parent=5 // pred_fallthru
      _
  $region6: #{cstr_forward.8} parent=0 // loop_footer
    %s13 = sadd.s32 1, %s9
  $region7: #{cstr_forward.8} parent=0 // loop_footer_branch
    %8 = sbr.rel target = $region3
  $region8: #{cstr_forward.8} parent=0 // loop_exit
    _

// kernel: cstr_forward.9
$region0: #{cstr_forward.9}
  #allocation0 [shape = 'u32[]', space=smem, size = 0x4, offset = 0x4, fixed_abs, tag = 'smem constant byte address 0x4 - core index']
  #allocation1 [shape = 'u32[72,128]{1,0:T(1,128)}', space=vmem, size = 0x9000, scoped, tag = 'internal scratch']
  %s0 = inlined_call_operand.vmem [shape: bf16[256,576], index: 0, kind: input, shape index: {}]
  %s1 = inlined_call_operand.vmem [shape: bf16[576,128], index: 1, kind: input, shape index: {}]
  %s2 = inlined_call_operand.vmem [shape: f32[1,128], index: 2, kind: input, shape index: {}]
  %s3 = inlined_call_operand.vmem [shape: bf16[256,128], index: 3, kind: output, shape index: {}]
  %s4 = sld [smem:[#allocation0]]
  $region45: #{cstr_forward.9} parent=0
    _
  %s6 = ssub.s32 1, %s4
  %s7 = scalar_select 0, %s6, %s4
  loop: start=0, step=1, limit=4
  $region2: #{cstr_forward.9} parent=0 // loop_pre_header
    _
  $region3: #{cstr_forward.9} parent=0 // loop_header
    %s9 = sphi 0, %s13
    %p10 = scmp.ge.s32.totalorder %s9, 4
    %s19 = sphi 0, %s21
    %s22 = sphi 0, %s19
    %s23 = sphi 0, %s22
    %s39 = sphi 0, %s23
    %s43 = sphi 0, %s43
    %s45 = sphi 0, %s43
    %s46 = sphi 0, %s45
    %s60 = sphi 0, %s46
    %s64 = sphi 0, %s64
    %s66 = sphi 0, %s64
    %s67 = sphi 0, %s66
    %s81 = sphi 0, %s67
    %s87 = sphi 0, %s89
    %s90 = sphi 0, %s87
    %s91 = sphi 0, %s90
    %s107 = sphi 0, %s91
  $region4: #{cstr_forward.9} parent=0 // loop_header_branch
    %12 = sbr.rel (%p10) target = $region8
  $region5: #{cstr_forward.9} parent=0 // loop_body
    %s14 = ssub.s32 %s9, 1
    %s15 = ssub.s32 %s9, 2
    %s16 = sadd.s32 %s9, 1
    %s17 = ssub.s32 %s9, %s16
    %p18 = scmp.eq.s32.totalorder %s17, 0
    %s20 = sadd.s32 %s19, 1
    %s21 = scalar_select %p18, %s19, %s20
    %p24 = pneg %p18
    %p25 = scmp.eq.s32.totalorder %s9, 1
    %p26 = por %p24, %p25
    %p27 = scmp.ne.s32.totalorder %s19, %s22
    %p28 = scmp.eq.s32.totalorder %s9, 0
    %p29 = por %p27, %p28
    %p30 = scmp.ne.s32.totalorder %s19, %s22
    %p31 = scmp.eq.s32.totalorder %s14, 1
    %p32 = por %p30, %p31
    %p33 = scmp.ne.s32.totalorder %s22, %s23
    %p34 = scmp.eq.s32.totalorder %s14, 0
    %p35 = por %p33, %p34
    %p36 = scmp.ne.s32.totalorder %s22, %s23
    %p37 = scmp.eq.s32.totalorder %s15, 1
    %p38 = por %p36, %p37
    %p40 = scmp.ne.s32.totalorder %s23, %s39
    %p41 = scmp.eq.s32.totalorder %s15, 0
    %p42 = por %p40, %p41
    %s44 = sadd.s32 %s43, 1
    %p47 = scmp.eq.s32.totalorder %s9, 1
    %p48 = scmp.ne.s32.totalorder %s43, %s45
    %p49 = scmp.eq.s32.totalorder %s9, 0
    %p50 = por %p48, %p49
    %p51 = scmp.ne.s32.totalorder %s43, %s45
    %p52 = scmp.eq.s32.totalorder %s14, 1
    %p53 = por %p51, %p52
    %p54 = scmp.ne.s32.totalorder %s45, %s46
    %p55 = scmp.eq.s32.totalorder %s14, 0
    %p56 = por %p54, %p55
    %p57 = scmp.ne.s32.totalorder %s45, %s46
    %p58 = scmp.eq.s32.totalorder %s15, 1
    %p59 = por %p57, %p58
    %p61 = scmp.ne.s32.totalorder %s46, %s60
    %p62 = scmp.eq.s32.totalorder %s15, 0
    %p63 = por %p61, %p62
    %s65 = sadd.s32 %s64, 1
    %p68 = scmp.eq.s32.totalorder %s9, 1
    %p69 = scmp.ne.s32.totalorder %s64, %s66
    %p70 = scmp.eq.s32.totalorder %s9, 0
    %p71 = por %p69, %p70
    %p72 = scmp.ne.s32.totalorder %s64, %s66
    %p73 = scmp.eq.s32.totalorder %s14, 1
    %p74 = por %p72, %p73
    %p75 = scmp.ne.s32.totalorder %s66, %s67
    %p76 = scmp.eq.s32.totalorder %s14, 0
    %p77 = por %p75, %p76
    %p78 = scmp.ne.s32.totalorder %s66, %s67
    %p79 = scmp.eq.s32.totalorder %s15, 1
    %p80 = por %p78, %p79
    %p82 = scmp.ne.s32.totalorder %s67, %s81
    %p83 = scmp.eq.s32.totalorder %s15, 0
    %p84 = por %p82, %p83
    %s85 = ssub.s32 %s9, %s16
    %p86 = scmp.eq.s32.totalorder %s85, 0
    %s88 = sadd.s32 %s87, 1
    %s89 = scalar_select %p86, %s87, %s88
    %p92 = pneg %p86
    %p93 = scmp.eq.s32.totalorder %s9, 1
    %p94 = por %p92, %p93
    %p95 = scmp.ne.s32.totalorder %s87, %s90
    %p96 = scmp.eq.s32.totalorder %s9, 0
    %p97 = por %p95, %p96
    %p98 = scmp.ne.s32.totalorder %s87, %s90
    %p99 = scmp.eq.s32.totalorder %s14, 1
    %p100 = por %p98, %p99
    %p101 = scmp.ne.s32.totalorder %s90, %s91
    %p102 = scmp.eq.s32.totalorder %s14, 0
    %p103 = por %p101, %p102
    %p104 = scmp.ne.s32.totalorder %s90, %s91
    %p105 = scmp.eq.s32.totalorder %s15, 1
    %p106 = por %p104, %p105
    %p108 = scmp.ne.s32.totalorder %s91, %s107
    %p109 = scmp.eq.s32.totalorder %s15, 0
    %p110 = por %p108, %p109
    %p111 = scmp.le.s32.totalorder 1, %s9
    %p112 = scmp.lt.s32.totalorder %s9, 3
    %p113 = pnand %p111, %p112
    %p114 = pneg %p113
    // Predicated region
    $region9: #{cstr_forward.9} parent=5 // pred_check
      _
    $region10: #{cstr_forward.9} parent=5 // pred_check_branch
      %116 = sbr.rel (%p113) target = $region12
    $region11: #{cstr_forward.9} parent=5 // pred_region
      %s117 = ssub.s32 %s9, 1
      // Predicated region
      $region13: #{cstr_forward.9} parent=11 // pred_check
        %p118 = pneg %p56
      $region14: #{cstr_forward.9} parent=11 // pred_check_branch
        %120 = sbr.rel (%p118) target = $region16
      $region15: #{cstr_forward.9} parent=11 // pred_region
        _
      $region16: #{cstr_forward.9} parent=11 // pred_fallthru
        _
      // Predicated region
      $region17: #{cstr_forward.9} parent=11 // pred_check
        %p121 = pneg %p77
      $region18: #{cstr_forward.9} parent=11 // pred_check_branch
        %123 = sbr.rel (%p121) target = $region20
      $region19: #{cstr_forward.9} parent=11 // pred_region
        _
      $region20: #{cstr_forward.9} parent=11 // pred_fallthru
        _
    $region12: #{cstr_forward.9} parent=5 // pred_fallthru
      _
    %p124 = scmp.lt.s32.totalorder %s9, 2
    // Predicated region
    $region21: #{cstr_forward.9} parent=5 // pred_check
      %p125 = pneg %p124
    $region22: #{cstr_forward.9} parent=5 // pred_check_branch
      %127 = sbr.rel (%p125) target = $region24
    $region23: #{cstr_forward.9} parent=5 // pred_region
      // Predicated region
      $region25: #{cstr_forward.9} parent=23 // pred_check
        %p128 = pneg %p29
      $region26: #{cstr_forward.9} parent=23 // pred_check_branch
        %130 = sbr.rel (%p128) target = $region28
      $region27: #{cstr_forward.9} parent=23 // pred_region
        %s131 = smul.u32 16, %s9
        %p132 = scmp.lt.s32.totalorder %s131, 31
        %s133 = scalar_select %p132, %s131, 31
        %s134 = smul.addr %s133, 5
        %s135 = smul.addr %s134, 4
        %s136 = scalar_lea.vmem %s0, %s135
        %s137 = smul.u32 16, %s9
      $region28: #{cstr_forward.9} parent=23 // pred_fallthru
        _
    $region24: #{cstr_forward.9} parent=5 // pred_fallthru
      _
    %p138 = scmp.le.s32.totalorder 1, %s9
    %p139 = scmp.lt.s32.totalorder %s9, 3
    %p140 = pnand %p138, %p139
    %p141 = pneg %p140
    // Predicated region
    $region29: #{cstr_forward.9} parent=5 // pred_check
      _
    $region30: #{cstr_forward.9} parent=5 // pred_check_branch
      %143 = sbr.rel (%p140) target = $region32
    $region31: #{cstr_forward.9} parent=5 // pred_region
      %s144 = ssub.s32 %s9, 1
      %s145 = smul.u32 16, %s14
      %p146 = scmp.lt.s32.totalorder %s145, 31
      %s147 = scalar_select %p146, %s145, 31
      %s148 = smul.addr %s147, 5
      %s149 = smul.addr %s148, 4
      %s150 = scalar_lea.vmem %s0, %s149
      %p151 = pneg %p35
      %p152 = pneg %p32
      %p153 = pneg %p56
      %p154 = pneg %p53
      %p155 = pneg %p77
      %p156 = pneg %p74
      %p157 = pneg %p103
      %p158 = pneg %p100
      %s159 = smul.u32 16, %s14
      %p160 = scmp.lt.s32.totalorder %s159, 31
      %s161 = scalar_select %p160, %s159, 31
      %s162 = smul.addr %s161, 4
      %s163 = scalar_lea.vmem %s3, %s162
      %s164 = smul.u32 16, %s14
      %p165 = scmp.lt.s32.totalorder %s164, 31
      %s166 = scalar_select %p165, %s164, 31
      %s167 = smul.addr %s166, 5
      %s168 = smul.addr %s167, 4
      %s169 = scalar_lea.vmem %s0, %s168
      %s170 = smul.u32 16, %s14
      %s171 = smul.u32 16, %s14
      %p172 = scmp.lt.s32.totalorder %s171, 31
      %s173 = scalar_select %p172, %s171, 31
      %s174 = smul.addr %s173, 4
      %s175 = scalar_lea.vmem %s3, %s174
      %s176 = smul.u32 16, %s14
      %v178 = vld [vmem:[%s169] sm:$0xff]
      %v179 = vld [vmem:[%s169 + $0x8] sm:$0xff]
      %v180 = vld [vmem:[%s169 + $0x10] sm:$0xf]
      %v181 = vld [vmem:[%s169 + $0x14] sm:$0xff]
      %v182 = vld [vmem:[%s169 + $0x1c] sm:$0xff]
      %v183 = vld [vmem:[%s169 + $0x24] sm:$0xf]
      %v184 = vld [vmem:[%s169 + $0x28] sm:$0xff]
      %v185 = vld [vmem:[%s169 + $0x30] sm:$0xff]
      %v186 = vld [vmem:[%s169 + $0x38] sm:$0xf]
      %v187 = vld [vmem:[%s169 + $0x3c] sm:$0xff]
      %v188 = vld [vmem:[%s169 + $0x44] sm:$0xff]
      %v189 = vld [vmem:[%s169 + $0x4c] sm:$0xf]
      %v190 = vld [vmem:[%s169 + $0x50] sm:$0xff]
      %v191 = vld [vmem:[%s169 + $0x58] sm:$0xff]
      %v192 = vld [vmem:[%s169 + $0x60] sm:$0xf]
      %v193 = vld [vmem:[%s169 + $0x64] sm:$0xff]
      %v194 = vld [vmem:[%s169 + $0x6c] sm:$0xff]
      %v195 = vld [vmem:[%s169 + $0x74] sm:$0xf]
      %v196 = vld [vmem:[%s169 + $0x78] sm:$0xff]
      %v197 = vld [vmem:[%s169 + $0x80] sm:$0xff]
      %v198 = vld [vmem:[%s169 + $0x88] sm:$0xf]
      %v199 = vld [vmem:[%s169 + $0x8c] sm:$0xff]
      %v200 = vld [vmem:[%s169 + $0x94] sm:$0xff]
      %v201 = vld [vmem:[%s169 + $0x9c] sm:$0xf]
      %v202 = vld [vmem:[%s169 + $0xa0] sm:$0xff]
      %v203 = vld [vmem:[%s169 + $0xa8] sm:$0xff]
      %v204 = vld [vmem:[%s169 + $0xb0] sm:$0xf]
      %v205 = vld [vmem:[%s169 + $0xb4] sm:$0xff]
      %v206 = vld [vmem:[%s169 + $0xbc] sm:$0xff]
      %v207 = vld [vmem:[%s169 + $0xc4] sm:$0xf]
      %v208 = vld [vmem:[%s169 + $0xc8] sm:$0xff]
      %v209 = vld [vmem:[%s169 + $0xd0] sm:$0xff]
      %v210 = vld [vmem:[%s169 + $0xd8] sm:$0xf]
      %v211 = vld [vmem:[%s169 + $0xdc] sm:$0xff]
      %v212 = vld [vmem:[%s169 + $0xe4] sm:$0xff]
      %v213 = vld [vmem:[%s169 + $0xec] sm:$0xf]
      %v214 = vld [vmem:[%s169 + $0xf0] sm:$0xff]
      %v215 = vld [vmem:[%s169 + $0xf8] sm:$0xff]
      %v216 = vld [vmem:[%s169 + $0x100] sm:$0xf]
      %v217 = vld [vmem:[%s169 + $0x104] sm:$0xff]
      %v218 = vld [vmem:[%s169 + $0x10c] sm:$0xff]
      %v219 = vld [vmem:[%s169 + $0x114] sm:$0xf]
      %v220 = vld [vmem:[%s169 + $0x118] sm:$0xff]
      %v221 = vld [vmem:[%s169 + $0x120] sm:$0xff]
      %v222 = vld [vmem:[%s169 + $0x128] sm:$0xf]
      %v223 = vld [vmem:[%s169 + $0x12c] sm:$0xff]
      %v224 = vld [vmem:[%s169 + $0x134] sm:$0xff]
      %v225 = vld [vmem:[%s169 + $0x13c] sm:$0xf]
      %v226 = vld [vmem:[%s1] sm:$0xf]
      %v227 = vld [vmem:[%s1 + $0x4] sm:$0xf]
      %v228 = vld [vmem:[%s1 + $0x8] sm:$0xf]
      %v229 = vld [vmem:[%s1 + $0xc] sm:$0xf]
      %v230 = vld [vmem:[%s1 + $0x10] sm:$0xf]
      %v231 = vld [vmem:[%s1 + $0x14] sm:$0xf]
      %v232 = vld [vmem:[%s1 + $0x18] sm:$0xf]
      %v233 = vld [vmem:[%s1 + $0x1c] sm:$0xf]
      %v234 = vld [vmem:[%s1 + $0x20] sm:$0xf]
      %v235 = vld [vmem:[%s1 + $0x24] sm:$0xf]
      %v236 = vld [vmem:[%s1 + $0x28] sm:$0xf]
      %v237 = vld [vmem:[%s1 + $0x2c] sm:$0xf]
      %v238 = vld [vmem:[%s1 + $0x30] sm:$0xf]
      %v239 = vld [vmem:[%s1 + $0x34] sm:$0xf]
      %v240 = vld [vmem:[%s1 + $0x38] sm:$0xf]
      %v241 = vld [vmem:[%s1 + $0x3c] sm:$0xf]
      %v242 = vld [vmem:[%s1 + $0x40] sm:$0xf]
      %v243 = vld [vmem:[%s1 + $0x44] sm:$0xf]
      %v244 = vld [vmem:[%s1 + $0x48] sm:$0xf]
      %v245 = vld [vmem:[%s1 + $0x4c] sm:$0xf]
      %v246 = vld [vmem:[%s1 + $0x50] sm:$0xf]
      %v247 = vld [vmem:[%s1 + $0x54] sm:$0xf]
      %v248 = vld [vmem:[%s1 + $0x58] sm:$0xf]
      %v249 = vld [vmem:[%s1 + $0x5c] sm:$0xf]
      %v250 = vld [vmem:[%s1 + $0x60] sm:$0xf]
      %v251 = vld [vmem:[%s1 + $0x64] sm:$0xf]
      %v252 = vld [vmem:[%s1 + $0x68] sm:$0xf]
      %v253 = vld [vmem:[%s1 + $0x6c] sm:$0xf]
      %v254 = vld [vmem:[%s1 + $0x70] sm:$0xf]
      %v255 = vld [vmem:[%s1 + $0x74] sm:$0xf]
      %v256 = vld [vmem:[%s1 + $0x78] sm:$0xf]
      %v257 = vld [vmem:[%s1 + $0x7c] sm:$0xf]
      %v258 = vld [vmem:[%s1 + $0x80] sm:$0xf]
      %v259 = vld [vmem:[%s1 + $0x84] sm:$0xf]
      %v260 = vld [vmem:[%s1 + $0x88] sm:$0xf]
      %v261 = vld [vmem:[%s1 + $0x8c] sm:$0xf]
      %v262 = vld [vmem:[%s1 + $0x90] sm:$0xf]
      %v263 = vld [vmem:[%s1 + $0x94] sm:$0xf]
      %v264 = vld [vmem:[%s1 + $0x98] sm:$0xf]
      %v265 = vld [vmem:[%s1 + $0x9c] sm:$0xf]
      %v266 = vld [vmem:[%s1 + $0xa0] sm:$0xf]
      %v267 = vld [vmem:[%s1 + $0xa4] sm:$0xf]
      %v268 = vld [vmem:[%s1 + $0xa8] sm:$0xf]
      %v269 = vld [vmem:[%s1 + $0xac] sm:$0xf]
      %v270 = vld [vmem:[%s1 + $0xb0] sm:$0xf]
      %v271 = vld [vmem:[%s1 + $0xb4] sm:$0xf]
      %v272 = vld [vmem:[%s1 + $0xb8] sm:$0xf]
      %v273 = vld [vmem:[%s1 + $0xbc] sm:$0xf]
      %v274 = vld [vmem:[%s1 + $0xc0] sm:$0xf]
      %v275 = vld [vmem:[%s1 + $0xc4] sm:$0xf]
      %v276 = vld [vmem:[%s1 + $0xc8] sm:$0xf]
      %v277 = vld [vmem:[%s1 + $0xcc] sm:$0xf]
      %v278 = vld [vmem:[%s1 + $0xd0] sm:$0xf]
      %v279 = vld [vmem:[%s1 + $0xd4] sm:$0xf]
      %v280 = vld [vmem:[%s1 + $0xd8] sm:$0xf]
      %v281 = vld [vmem:[%s1 + $0xdc] sm:$0xf]
      %v282 = vld [vmem:[%s1 + $0xe0] sm:$0xf]
      %v283 = vld [vmem:[%s1 + $0xe4] sm:$0xf]
      %v284 = vld [vmem:[%s1 + $0xe8] sm:$0xf]
      %v285 = vld [vmem:[%s1 + $0xec] sm:$0xf]
      %v286 = vld [vmem:[%s1 + $0xf0] sm:$0xf]
      %v287 = vld [vmem:[%s1 + $0xf4] sm:$0xf]
      %v288 = vld [vmem:[%s1 + $0xf8] sm:$0xf]
      %v289 = vld [vmem:[%s1 + $0xfc] sm:$0xf]
      %v290 = vld [vmem:[%s1 + $0x100] sm:$0xf]
      %v291 = vld [vmem:[%s1 + $0x104] sm:$0xf]
      %v292 = vld [vmem:[%s1 + $0x108] sm:$0xf]
      %v293 = vld [vmem:[%s1 + $0x10c] sm:$0xf]
      %v294 = vld [vmem:[%s1 + $0x110] sm:$0xf]
      %v295 = vld [vmem:[%s1 + $0x114] sm:$0xf]
      %v296 = vld [vmem:[%s1 + $0x118] sm:$0xf]
      %v297 = vld [vmem:[%s1 + $0x11c] sm:$0xf]
      %v298 = vld [vmem:[%s2] sm:$0x1]
      %v300 = vperm.slane %v298, 0
      %v350 = vunpack.c.l.b16 %v178
      %v351 = vunpack.c.h.b16 %v178
      %v352 = vunpack.c.l.b16 %v179
      %v353 = vunpack.c.h.b16 %v179
      %v354 = vunpack.c.l.b16 %v180
      %v355 = vunpack.c.l.b16 %v181
      %v356 = vunpack.c.h.b16 %v181
      %v357 = vunpack.c.l.b16 %v182
      %v358 = vunpack.c.h.b16 %v182
      %v359 = vunpack.c.l.b16 %v183
      %v360 = vunpack.c.l.b16 %v184
      %v361 = vunpack.c.h.b16 %v184
      %v362 = vunpack.c.l.b16 %v185
      %v363 = vunpack.c.h.b16 %v185
      %v364 = vunpack.c.l.b16 %v186
      %v365 = vunpack.c.l.b16 %v187
      %v366 = vunpack.c.h.b16 %v187
      %v367 = vunpack.c.l.b16 %v188
      %v368 = vunpack.c.h.b16 %v188
      %v369 = vunpack.c.l.b16 %v189
      %v370 = vunpack.c.l.b16 %v190
      %v371 = vunpack.c.h.b16 %v190
      %v372 = vunpack.c.l.b16 %v191
      %v373 = vunpack.c.h.b16 %v191
      %v374 = vunpack.c.l.b16 %v192
      %v375 = vunpack.c.l.b16 %v193
      %v376 = vunpack.c.h.b16 %v193
      %v377 = vunpack.c.l.b16 %v194
      %v378 = vunpack.c.h.b16 %v194
      %v379 = vunpack.c.l.b16 %v195
      %v380 = vunpack.c.l.b16 %v196
      %v381 = vunpack.c.h.b16 %v196
      %v382 = vunpack.c.l.b16 %v197
      %v383 = vunpack.c.h.b16 %v197
      %v384 = vunpack.c.l.b16 %v198
      %v385 = vunpack.c.l.b16 %v199
      %v386 = vunpack.c.h.b16 %v199
      %v387 = vunpack.c.l.b16 %v200
      %v388 = vunpack.c.h.b16 %v200
      %v389 = vunpack.c.l.b16 %v201
      %v390 = vunpack.c.l.b16 %v202
      %v391 = vunpack.c.h.b16 %v202
      %v392 = vunpack.c.l.b16 %v203
      %v393 = vunpack.c.h.b16 %v203
      %v394 = vunpack.c.l.b16 %v204
      %v395 = vunpack.c.l.b16 %v205
      %v396 = vunpack.c.h.b16 %v205
      %v397 = vunpack.c.l.b16 %v206
      %v398 = vunpack.c.h.b16 %v206
      %v399 = vunpack.c.l.b16 %v207
      %v400 = vunpack.c.l.b16 %v208
      %v401 = vunpack.c.h.b16 %v208
      %v402 = vunpack.c.l.b16 %v209
      %v403 = vunpack.c.h.b16 %v209
      %v404 = vunpack.c.l.b16 %v210
      %v405 = vunpack.c.l.b16 %v211
      %v406 = vunpack.c.h.b16 %v211
      %v407 = vunpack.c.l.b16 %v212
      %v408 = vunpack.c.h.b16 %v212
      %v409 = vunpack.c.l.b16 %v213
      %v410 = vunpack.c.l.b16 %v214
      %v411 = vunpack.c.h.b16 %v214
      %v412 = vunpack.c.l.b16 %v215
      %v413 = vunpack.c.h.b16 %v215
      %v414 = vunpack.c.l.b16 %v216
      %v415 = vunpack.c.l.b16 %v217
      %v416 = vunpack.c.h.b16 %v217
      %v417 = vunpack.c.l.b16 %v218
      %v418 = vunpack.c.h.b16 %v218
      %v419 = vunpack.c.l.b16 %v219
      %v420 = vunpack.c.l.b16 %v220
      %v421 = vunpack.c.h.b16 %v220
      %v422 = vunpack.c.l.b16 %v221
      %v423 = vunpack.c.h.b16 %v221
      %v424 = vunpack.c.l.b16 %v222
      %v425 = vunpack.c.l.b16 %v223
      %v426 = vunpack.c.h.b16 %v223
      %v427 = vunpack.c.l.b16 %v224
      %v428 = vunpack.c.h.b16 %v224
      %v429 = vunpack.c.l.b16 %v225
      %v430 = vpack.c.b16 %v355, %v350
      %v431 = vpack.c.b16 %v356, %v351
      %v432 = vpack.c.b16 %v357, %v352
      %v433 = vpack.c.b16 %v358, %v353
      %v434 = vpack.c.b16 %v359, %v354
      %v435 = vpack.c.b16 %v365, %v360
      %v436 = vpack.c.b16 %v366, %v361
      %v437 = vpack.c.b16 %v367, %v362
      %v438 = vpack.c.b16 %v368, %v363
      %v439 = vpack.c.b16 %v369, %v364
      %v440 = vpack.c.b16 %v375, %v370
      %v441 = vpack.c.b16 %v376, %v371
      %v442 = vpack.c.b16 %v377, %v372
      %v443 = vpack.c.b16 %v378, %v373
      %v444 = vpack.c.b16 %v379, %v374
      %v445 = vpack.c.b16 %v385, %v380
      %v446 = vpack.c.b16 %v386, %v381
      %v447 = vpack.c.b16 %v387, %v382
      %v448 = vpack.c.b16 %v388, %v383
      %v449 = vpack.c.b16 %v389, %v384
      %v450 = vpack.c.b16 %v395, %v390
      %v451 = vpack.c.b16 %v396, %v391
      %v452 = vpack.c.b16 %v397, %v392
      %v453 = vpack.c.b16 %v398, %v393
      %v454 = vpack.c.b16 %v399, %v394
      %v455 = vpack.c.b16 %v405, %v400
      %v456 = vpack.c.b16 %v406, %v401
      %v457 = vpack.c.b16 %v407, %v402
      %v458 = vpack.c.b16 %v408, %v403
      %v459 = vpack.c.b16 %v409, %v404
      %v460 = vpack.c.b16 %v415, %v410
      %v461 = vpack.c.b16 %v416, %v411
      %v462 = vpack.c.b16 %v417, %v412
      %v463 = vpack.c.b16 %v418, %v413
      %v464 = vpack.c.b16 %v419, %v414
      %v465 = vpack.c.b16 %v425, %v420
      %v466 = vpack.c.b16 %v426, %v421
      %v467 = vpack.c.b16 %v427, %v422
      %v468 = vpack.c.b16 %v428, %v423
      %v469 = vpack.c.b16 %v429, %v424
      %v574 = vunpack.c.l.b16 %v226
      %v575 = vunpack.c.l.b16 %v227
      %v576 = vunpack.c.l.b16 %v228
      %v577 = vunpack.c.l.b16 %v229
      %v578 = vunpack.c.l.b16 %v230
      %v579 = vunpack.c.l.b16 %v231
      %v580 = vunpack.c.l.b16 %v232
      %v581 = vunpack.c.l.b16 %v233
      %v582 = vunpack.c.l.b16 %v234
      %v583 = vunpack.c.l.b16 %v235
      %v584 = vunpack.c.l.b16 %v236
      %v585 = vunpack.c.l.b16 %v237
      %v586 = vunpack.c.l.b16 %v238
      %v587 = vunpack.c.l.b16 %v239
      %v588 = vunpack.c.l.b16 %v240
      %v589 = vunpack.c.l.b16 %v241
      %v590 = vunpack.c.l.b16 %v242
      %v591 = vunpack.c.l.b16 %v243
      %v592 = vunpack.c.l.b16 %v244
      %v593 = vunpack.c.l.b16 %v245
      %v594 = vunpack.c.l.b16 %v246
      %v595 = vunpack.c.l.b16 %v247
      %v596 = vunpack.c.l.b16 %v248
      %v597 = vunpack.c.l.b16 %v249
      %v598 = vunpack.c.l.b16 %v250
      %v599 = vunpack.c.l.b16 %v251
      %v600 = vunpack.c.l.b16 %v252
      %v601 = vunpack.c.l.b16 %v253
      %v602 = vunpack.c.l.b16 %v254
      %v603 = vunpack.c.l.b16 %v255
      %v604 = vunpack.c.l.b16 %v256
      %v605 = vunpack.c.l.b16 %v257
      %v606 = vunpack.c.l.b16 %v258
      %v607 = vunpack.c.l.b16 %v259
      %v608 = vunpack.c.l.b16 %v260
      %v609 = vunpack.c.l.b16 %v261
      %v610 = vunpack.c.l.b16 %v262
      %v611 = vunpack.c.l.b16 %v263
      %v612 = vunpack.c.l.b16 %v264
      %v613 = vunpack.c.l.b16 %v265
      %v614 = vunpack.c.l.b16 %v266
      %v615 = vunpack.c.l.b16 %v267
      %v616 = vunpack.c.l.b16 %v268
      %v617 = vunpack.c.l.b16 %v269
      %v618 = vunpack.c.l.b16 %v270
      %v619 = vunpack.c.l.b16 %v271
      %v620 = vunpack.c.l.b16 %v272
      %v621 = vunpack.c.l.b16 %v273
      %v622 = vunpack.c.l.b16 %v274
      %v623 = vunpack.c.l.b16 %v275
      %v624 = vunpack.c.l.b16 %v276
      %v625 = vunpack.c.l.b16 %v277
      %v626 = vunpack.c.l.b16 %v278
      %v627 = vunpack.c.l.b16 %v279
      %v628 = vunpack.c.l.b16 %v280
      %v629 = vunpack.c.l.b16 %v281
      %v630 = vunpack.c.l.b16 %v282
      %v631 = vunpack.c.l.b16 %v283
      %v632 = vunpack.c.l.b16 %v284
      %v633 = vunpack.c.l.b16 %v285
      %v634 = vunpack.c.l.b16 %v286
      %v635 = vunpack.c.l.b16 %v287
      %v636 = vunpack.c.l.b16 %v288
      %v637 = vunpack.c.l.b16 %v289
      %v638 = vunpack.c.l.b16 %v290
      %v639 = vunpack.c.l.b16 %v291
      %v640 = vunpack.c.l.b16 %v292
      %v641 = vunpack.c.l.b16 %v293
      %v642 = vunpack.c.l.b16 %v294
      %v643 = vunpack.c.l.b16 %v295
      %v644 = vunpack.c.l.b16 %v296
      %v645 = vunpack.c.l.b16 %v297
      %v646 = vpack.c.b16 %v575, %v574
      %v647 = vpack.c.b16 %v577, %v576
      %v648 = vpack.c.b16 %v579, %v578
      %v649 = vpack.c.b16 %v581, %v580
      %v650 = vpack.c.b16 %v583, %v582
      %v651 = vpack.c.b16 %v585, %v584
      %v652 = vpack.c.b16 %v587, %v586
      %v653 = vpack.c.b16 %v589, %v588
      %v654 = vpack.c.b16 %v591, %v590
      %v655 = vpack.c.b16 %v593, %v592
      %v656 = vpack.c.b16 %v595, %v594
      %v657 = vpack.c.b16 %v597, %v596
      %v658 = vpack.c.b16 %v599, %v598
      %v659 = vpack.c.b16 %v601, %v600
      %v660 = vpack.c.b16 %v603, %v602
      %v661 = vpack.c.b16 %v605, %v604
      %v662 = vpack.c.b16 %v607, %v606
      %v663 = vpack.c.b16 %v609, %v608
      %v664 = vpack.c.b16 %v611, %v610
      %v665 = vpack.c.b16 %v613, %v612
      %v666 = vpack.c.b16 %v615, %v614
      %v667 = vpack.c.b16 %v617, %v616
      %v668 = vpack.c.b16 %v619, %v618
      %v669 = vpack.c.b16 %v621, %v620
      %v670 = vpack.c.b16 %v623, %v622
      %v671 = vpack.c.b16 %v625, %v624
      %v672 = vpack.c.b16 %v627, %v626
      %v673 = vpack.c.b16 %v629, %v628
      %v674 = vpack.c.b16 %v631, %v630
      %v675 = vpack.c.b16 %v633, %v632
      %v676 = vpack.c.b16 %v635, %v634
      %v677 = vpack.c.b16 %v637, %v636
      %v678 = vpack.c.b16 %v639, %v638
      %v679 = vpack.c.b16 %v641, %v640
      %v680 = vpack.c.b16 %v643, %v642
      %v681 = vpack.c.b16 %v645, %v644
      %vm718 = vcmask 523264
      %v720 = vsel %vm718, %v434, 0
      %v723 = vsel %vm718, %v439, 0
      %v726 = vsel %vm718, %v444, 0
      %v729 = vsel %vm718, %v449, 0
      %v732 = vsel %vm718, %v454, 0
      %v735 = vsel %vm718, %v459, 0
      %v738 = vsel %vm718, %v464, 0
      %v741 = vsel %vm718, %v469, 0
      %743 = vmatpush.bf16.msra.mxu0 %v653
      %744 = vmatpush.bf16.msra.mxu0 %v652
      %745 = vmatpush.bf16.msra.mxu0 %v651
      %746 = vmatpush.bf16.msra.mxu0 %v650
      %747 = vmatpush.bf16.msra.mxu0 %v649
      %748 = vmatpush.bf16.msra.mxu0 %v648
      %749 = vmatpush.bf16.msra.mxu0 %v647
      %750 = vmatpush.bf16.msra.mxu0 %v646
      %751 = vmatmul.bf16.gmra.mxu0 %v430
      %v752 = vpop.f32.mrf.mxu0
      %v753 = vadd.f32 %v300, %v752
      %v754 = vpop.f32.mrf.mxu0
      %v755 = vadd.f32 %v300, %v754
      %756 = vmatmul.bf16.gmra.mxu0 %v435
      %v757 = vpop.f32.mrf.mxu0
      %v758 = vadd.f32 %v300, %v757
      %v759 = vpop.f32.mrf.mxu0
      %v760 = vadd.f32 %v300, %v759
      %761 = vmatmul.bf16.gmra.mxu0 %v440
      %v762 = vpop.f32.mrf.mxu0
      %v763 = vadd.f32 %v300, %v762
      %v764 = vpop.f32.mrf.mxu0
      %v765 = vadd.f32 %v300, %v764
      %766 = vmatmul.bf16.gmra.mxu0 %v445
      %v767 = vpop.f32.mrf.mxu0
      %v768 = vadd.f32 %v300, %v767
      %v769 = vpop.f32.mrf.mxu0
      %v770 = vadd.f32 %v300, %v769
      %771 = vmatmul.bf16.gmra.mxu0 %v450
      %v772 = vpop.f32.mrf.mxu0
      %v773 = vadd.f32 %v300, %v772
      %v774 = vpop.f32.mrf.mxu0
      %v775 = vadd.f32 %v300, %v774
      %776 = vmatmul.bf16.gmra.mxu0 %v455
      %v777 = vpop.f32.mrf.mxu0
      %v778 = vadd.f32 %v300, %v777
      %v779 = vpop.f32.mrf.mxu0
      %v780 = vadd.f32 %v300, %v779
      %781 = vmatmul.bf16.gmra.mxu0 %v460
      %v782 = vpop.f32.mrf.mxu0
      %v783 = vadd.f32 %v300, %v782
      %v784 = vpop.f32.mrf.mxu0
      %v785 = vadd.f32 %v300, %v784
      %786 = vmatmul.bf16.gmra.mxu0 %v465
      %v787 = vpop.f32.mrf.mxu0
      %v788 = vadd.f32 %v300, %v787
      %v789 = vpop.f32.mrf.mxu0
      %v790 = vadd.f32 %v300, %v789
      %791 = vdwg.mxu0
      %792 = vmatpush.bf16.msra.mxu0 %v661
      %793 = vmatpush.bf16.msra.mxu0 %v660
      %794 = vmatpush.bf16.msra.mxu0 %v659
      %795 = vmatpush.bf16.msra.mxu0 %v658
      %796 = vmatpush.bf16.msra.mxu0 %v657
      %797 = vmatpush.bf16.msra.mxu0 %v656
      %798 = vmatpush.bf16.msra.mxu0 %v655
      %799 = vmatpush.bf16.msra.mxu0 %v654
      %800 = vmatmul.bf16.gmra.mxu0 %v431
      %v801 = vpop.f32.mrf.mxu0
      %v802 = vadd.f32 %v753, %v801
      %v803 = vpop.f32.mrf.mxu0
      %v804 = vadd.f32 %v755, %v803
      %805 = vmatmul.bf16.gmra.mxu0 %v436
      %v806 = vpop.f32.mrf.mxu0
      %v807 = vadd.f32 %v758, %v806
      %v808 = vpop.f32.mrf.mxu0
      %v809 = vadd.f32 %v760, %v808
      %810 = vmatmul.bf16.gmra.mxu0 %v441
      %v811 = vpop.f32.mrf.mxu0
      %v812 = vadd.f32 %v763, %v811
      %v813 = vpop.f32.mrf.mxu0
      %v814 = vadd.f32 %v765, %v813
      %815 = vmatmul.bf16.gmra.mxu0 %v446
      %v816 = vpop.f32.mrf.mxu0
      %v817 = vadd.f32 %v768, %v816
      %v818 = vpop.f32.mrf.mxu0
      %v819 = vadd.f32 %v770, %v818
      %820 = vmatmul.bf16.gmra.mxu0 %v451
      %v821 = vpop.f32.mrf.mxu0
      %v822 = vadd.f32 %v773, %v821
      %v823 = vpop.f32.mrf.mxu0
      %v824 = vadd.f32 %v775, %v823
      %825 = vmatmul.bf16.gmra.mxu0 %v456
      %v826 = vpop.f32.mrf.mxu0
      %v827 = vadd.f32 %v778, %v826
      %v828 = vpop.f32.mrf.mxu0
      %v829 = vadd.f32 %v780, %v828
      %830 = vmatmul.bf16.gmra.mxu0 %v461
      %v831 = vpop.f32.mrf.mxu0
      %v832 = vadd.f32 %v783, %v831
      %v833 = vpop.f32.mrf.mxu0
      %v834 = vadd.f32 %v785, %v833
      %835 = vmatmul.bf16.gmra.mxu0 %v466
      %v836 = vpop.f32.mrf.mxu0
      %v837 = vadd.f32 %v788, %v836
      %v838 = vpop.f32.mrf.mxu0
      %v839 = vadd.f32 %v790, %v838
      %840 = vdwg.mxu0
      %841 = vmatpush.bf16.msra.mxu0 %v669
      %842 = vmatpush.bf16.msra.mxu0 %v668
      %843 = vmatpush.bf16.msra.mxu0 %v667
      %844 = vmatpush.bf16.msra.mxu0 %v666
      %845 = vmatpush.bf16.msra.mxu0 %v665
      %846 = vmatpush.bf16.msra.mxu0 %v664
      %847 = vmatpush.bf16.msra.mxu0 %v663
      %848 = vmatpush.bf16.msra.mxu0 %v662
      %849 = vmatmul.bf16.gmra.mxu0 %v432
      %v850 = vpop.f32.mrf.mxu0
      %v851 = vadd.f32 %v802, %v850
      %v852 = vpop.f32.mrf.mxu0
      %v853 = vadd.f32 %v804, %v852
      %854 = vmatmul.bf16.gmra.mxu0 %v437
      %v855 = vpop.f32.mrf.mxu0
      %v856 = vadd.f32 %v807, %v855
      %v857 = vpop.f32.mrf.mxu0
      %v858 = vadd.f32 %v809, %v857
      %859 = vmatmul.bf16.gmra.mxu0 %v442
      %v860 = vpop.f32.mrf.mxu0
      %v861 = vadd.f32 %v812, %v860
      %v862 = vpop.f32.mrf.mxu0
      %v863 = vadd.f32 %v814, %v862
      %864 = vmatmul.bf16.gmra.mxu0 %v447
      %v865 = vpop.f32.mrf.mxu0
      %v866 = vadd.f32 %v817, %v865
      %v867 = vpop.f32.mrf.mxu0
      %v868 = vadd.f32 %v819, %v867
      %869 = vmatmul.bf16.gmra.mxu0 %v452
      %v870 = vpop.f32.mrf.mxu0
      %v871 = vadd.f32 %v822, %v870
      %v872 = vpop.f32.mrf.mxu0
      %v873 = vadd.f32 %v824, %v872
      %874 = vmatmul.bf16.gmra.mxu0 %v457
      %v875 = vpop.f32.mrf.mxu0
      %v876 = vadd.f32 %v827, %v875
      %v877 = vpop.f32.mrf.mxu0
      %v878 = vadd.f32 %v829, %v877
      %879 = vmatmul.bf16.gmra.mxu0 %v462
      %v880 = vpop.f32.mrf.mxu0
      %v881 = vadd.f32 %v832, %v880
      %v882 = vpop.f32.mrf.mxu0
      %v883 = vadd.f32 %v834, %v882
      %884 = vmatmul.bf16.gmra.mxu0 %v467
      %v885 = vpop.f32.mrf.mxu0
      %v886 = vadd.f32 %v837, %v885
      %v887 = vpop.f32.mrf.mxu0
      %v888 = vadd.f32 %v839, %v887
      %889 = vdwg.mxu0
      %890 = vmatpush.bf16.msra.mxu0 %v677
      %891 = vmatpush.bf16.msra.mxu0 %v676
      %892 = vmatpush.bf16.msra.mxu0 %v675
      %893 = vmatpush.bf16.msra.mxu0 %v674
      %894 = vmatpush.bf16.msra.mxu0 %v673
      %895 = vmatpush.bf16.msra.mxu0 %v672
      %896 = vmatpush.bf16.msra.mxu0 %v671
      %897 = vmatpush.bf16.msra.mxu0 %v670
      %898 = vmatmul.bf16.gmra.mxu0 %v433
      %v899 = vpop.f32.mrf.mxu0
      %v900 = vadd.f32 %v851, %v899
      %v901 = vpop.f32.mrf.mxu0
      %v902 = vadd.f32 %v853, %v901
      %903 = vmatmul.bf16.gmra.mxu0 %v438
      %v904 = vpop.f32.mrf.mxu0
      %v905 = vadd.f32 %v856, %v904
      %v906 = vpop.f32.mrf.mxu0
      %v907 = vadd.f32 %v858, %v906
      %908 = vmatmul.bf16.gmra.mxu0 %v443
      %v909 = vpop.f32.mrf.mxu0
      %v910 = vadd.f32 %v861, %v909
      %v911 = vpop.f32.mrf.mxu0
      %v912 = vadd.f32 %v863, %v911
      %913 = vmatmul.bf16.gmra.mxu0 %v448
      %v914 = vpop.f32.mrf.mxu0
      %v915 = vadd.f32 %v866, %v914
      %v916 = vpop.f32.mrf.mxu0
      %v917 = vadd.f32 %v868, %v916
      %918 = vmatmul.bf16.gmra.mxu0 %v453
      %v919 = vpop.f32.mrf.mxu0
      %v920 = vadd.f32 %v871, %v919
      %v921 = vpop.f32.mrf.mxu0
      %v922 = vadd.f32 %v873, %v921
      %923 = vmatmul.bf16.gmra.mxu0 %v458
      %v924 = vpop.f32.mrf.mxu0
      %v925 = vadd.f32 %v876, %v924
      %v926 = vpop.f32.mrf.mxu0
      %v927 = vadd.f32 %v878, %v926
      %928 = vmatmul.bf16.gmra.mxu0 %v463
      %v929 = vpop.f32.mrf.mxu0
      %v930 = vadd.f32 %v881, %v929
      %v931 = vpop.f32.mrf.mxu0
      %v932 = vadd.f32 %v883, %v931
      %933 = vmatmul.bf16.gmra.mxu0 %v468
      %v934 = vpop.f32.mrf.mxu0
      %v935 = vadd.f32 %v886, %v934
      %v936 = vpop.f32.mrf.mxu0
      %v937 = vadd.f32 %v888, %v936
      %938 = vdwg.mxu0
      %939 = vmatpush.bf16.msra.mxu0 0
      %940 = vmatpush.bf16.msra.mxu0 0
      %941 = vmatpush.bf16.msra.mxu0 0
      %942 = vmatpush.bf16.msra.mxu0 0
      %943 = vmatpush.bf16.msra.mxu0 %v681
      %944 = vmatpush.bf16.msra.mxu0 %v680
      %945 = vmatpush.bf16.msra.mxu0 %v679
      %946 = vmatpush.bf16.msra.mxu0 %v678
      %947 = vmatmul.bf16.gmra.mxu0 %v720
      %v948 = vpop.f32.mrf.mxu0
      %v949 = vadd.f32 %v900, %v948
      %v950 = vpop.f32.mrf.mxu0
      %v951 = vadd.f32 %v902, %v950
      %952 = vmatmul.bf16.gmra.mxu0 %v723
      %v953 = vpop.f32.mrf.mxu0
      %v954 = vadd.f32 %v905, %v953
      %v955 = vpop.f32.mrf.mxu0
      %v956 = vadd.f32 %v907, %v955
      %957 = vmatmul.bf16.gmra.mxu0 %v726
      %v958 = vpop.f32.mrf.mxu0
      %v959 = vadd.f32 %v910, %v958
      %v960 = vpop.f32.mrf.mxu0
      %v961 = vadd.f32 %v912, %v960
      %962 = vmatmul.bf16.gmra.mxu0 %v729
      %v963 = vpop.f32.mrf.mxu0
      %v964 = vadd.f32 %v915, %v963
      %v965 = vpop.f32.mrf.mxu0
      %v966 = vadd.f32 %v917, %v965
      %967 = vmatmul.bf16.gmra.mxu0 %v732
      %v968 = vpop.f32.mrf.mxu0
      %v969 = vadd.f32 %v920, %v968
      %v970 = vpop.f32.mrf.mxu0
      %v971 = vadd.f32 %v922, %v970
      %972 = vmatmul.bf16.gmra.mxu0 %v735
      %v973 = vpop.f32.mrf.mxu0
      %v974 = vadd.f32 %v925, %v973
      %v975 = vpop.f32.mrf.mxu0
      %v976 = vadd.f32 %v927, %v975
      %977 = vmatmul.bf16.gmra.mxu0 %v738
      %v978 = vpop.f32.mrf.mxu0
      %v979 = vadd.f32 %v930, %v978
      %v980 = vpop.f32.mrf.mxu0
      %v981 = vadd.f32 %v932, %v980
      %982 = vmatmul.bf16.gmra.mxu0 %v741
      %v983 = vpop.f32.mrf.mxu0
      %v984 = vadd.f32 %v935, %v983
      %v985 = vpop.f32.mrf.mxu0
      %v986 = vadd.f32 %v937, %v985
      %987 = vdwg.mxu0
      %v988 = vmax.f32 %v949, 0.0
      %v989 = vmax.f32 %v951, 0.0
      %v990 = vmax.f32 %v954, 0.0
      %v991 = vmax.f32 %v956, 0.0
      %v992 = vmax.f32 %v959, 0.0
      %v993 = vmax.f32 %v961, 0.0
      %v994 = vmax.f32 %v964, 0.0
      %v995 = vmax.f32 %v966, 0.0
      %v996 = vmax.f32 %v969, 0.0
      %v997 = vmax.f32 %v971, 0.0
      %v998 = vmax.f32 %v974, 0.0
      %v999 = vmax.f32 %v976, 0.0
      %v1000 = vmax.f32 %v979, 0.0
      %v1001 = vmax.f32 %v981, 0.0
      %v1002 = vmax.f32 %v984, 0.0
      %v1003 = vmax.f32 %v986, 0.0
      %v1004 = vpack.c.bf16 %v988, %v988
      %v1005 = vpack.c.bf16 %v989, %v989
      %v1006 = vpack.c.bf16 %v990, %v990
      %v1007 = vpack.c.bf16 %v991, %v991
      %v1008 = vpack.c.bf16 %v992, %v992
      %v1009 = vpack.c.bf16 %v993, %v993
      %v1010 = vpack.c.bf16 %v994, %v994
      %v1011 = vpack.c.bf16 %v995, %v995
      %v1012 = vpack.c.bf16 %v996, %v996
      %v1013 = vpack.c.bf16 %v997, %v997
      %v1014 = vpack.c.bf16 %v998, %v998
      %v1015 = vpack.c.bf16 %v999, %v999
      %v1016 = vpack.c.bf16 %v1000, %v1000
      %v1017 = vpack.c.bf16 %v1001, %v1001
      %v1018 = vpack.c.bf16 %v1002, %v1002
      %v1019 = vpack.c.bf16 %v1003, %v1003
      %1020 = vst [vmem:[%s175] sm:$0xf] %v1004
      %1021 = vst [vmem:[%s175 + $0x4] sm:$0xf] %v1005
      %1022 = vst [vmem:[%s175 + $0x8] sm:$0xf] %v1006
      %1023 = vst [vmem:[%s175 + $0xc] sm:$0xf] %v1007
      %1024 = vst [vmem:[%s175 + $0x10] sm:$0xf] %v1008
      %1025 = vst [vmem:[%s175 + $0x14] sm:$0xf] %v1009
      %1026 = vst [vmem:[%s175 + $0x18] sm:$0xf] %v1010
      %1027 = vst [vmem:[%s175 + $0x1c] sm:$0xf] %v1011
      %1028 = vst [vmem:[%s175 + $0x20] sm:$0xf] %v1012
      %1029 = vst [vmem:[%s175 + $0x24] sm:$0xf] %v1013
      %1030 = vst [vmem:[%s175 + $0x28] sm:$0xf] %v1014
      %1031 = vst [vmem:[%s175 + $0x2c] sm:$0xf] %v1015
      %1032 = vst [vmem:[%s175 + $0x30] sm:$0xf] %v1016
      %1033 = vst [vmem:[%s175 + $0x34] sm:$0xf] %v1017
      %1034 = vst [vmem:[%s175 + $0x38] sm:$0xf] %v1018
      %1035 = vst [vmem:[%s175 + $0x3c] sm:$0xf] %v1019
      %s1036 = smul.u32 16, %s14
      %p1037 = scmp.lt.s32.totalorder %s1036, 31
      %s1038 = scalar_select %p1037, %s1036, 31
      %s1039 = smul.addr %s1038, 4
      %s1040 = scalar_lea.vmem %s3, %s1039
      // Predicated region
      $region33: #{cstr_forward.9} parent=31 // pred_check
        %p1041 = pneg %p100
      $region34: #{cstr_forward.9} parent=31 // pred_check_branch
        %1043 = sbr.rel (%p1041) target = $region36
      $region35: #{cstr_forward.9} parent=31 // pred_region
        %s1044 = smul.u32 16, %s14
      $region36: #{cstr_forward.9} parent=31 // pred_fallthru
        _
    $region32: #{cstr_forward.9} parent=5 // pred_fallthru
      _
    %p1045 = scmp.le.s32.totalorder 2, %s9
    // Predicated region
    $region37: #{cstr_forward.9} parent=5 // pred_check
      %p1046 = pneg %p1045
    $region38: #{cstr_forward.9} parent=5 // pred_check_branch
      %1048 = sbr.rel (%p1046) target = $region40
    $region39: #{cstr_forward.9} parent=5 // pred_region
      %s1049 = ssub.s32 %s9, 2
      // Predicated region
      $region41: #{cstr_forward.9} parent=39 // pred_check
        %p1050 = pneg %p106
      $region42: #{cstr_forward.9} parent=39 // pred_check_branch
        %1052 = sbr.rel (%p1050) target = $region44
      $region43: #{cstr_forward.9} parent=39 // pred_region
        %s1053 = smul.u32 16, %s15
        %p1054 = scmp.lt.s32.totalorder %s1053, 31
        %s1055 = scalar_select %p1054, %s1053, 31
        %s1056 = smul.addr %s1055, 4
        %s1057 = scalar_lea.vmem %s3, %s1056
      $region44: #{cstr_forward.9} parent=39 // pred_fallthru
        _
    $region40: #{cstr_forward.9} parent=5 // pred_fallthru
      _
  $region6: #{cstr_forward.9} parent=0 // loop_footer
    %s13 = sadd.s32 1, %s9
  $region7: #{cstr_forward.9} parent=0 // loop_footer_branch
    %8 = sbr.rel target = $region3
  $region8: #{cstr_forward.9} parent=0 // loop_exit
    _

// kernel: cstr_forward.12
$region0: #{cstr_forward.12}
  #allocation0 [shape = 'u32[]', space=smem, size = 0x4, offset = 0x4, fixed_abs, tag = 'smem constant byte address 0x4 - core index']
  #allocation1 [shape = 'u32[72,128]{1,0:T(1,128)}', space=vmem, size = 0x9000, scoped, tag = 'internal scratch']
  %s0 = inlined_call_operand.vmem [shape: bf16[64,128], index: 0, kind: input, shape index: {}]
  %s1 = inlined_call_operand.vmem [shape: bf16[128,128], index: 1, kind: input, shape index: {}]
  %s2 = inlined_call_operand.vmem [shape: f32[1,128], index: 2, kind: input, shape index: {}]
  %s3 = inlined_call_operand.vmem [shape: bf16[64,128], index: 3, kind: output, shape index: {}]
  %s4 = sld [smem:[#allocation0]]
  $region22: #{cstr_forward.12} parent=0
    _
  %s6 = ssub.s32 1, %s4
  %s7 = scalar_select 0, %s6, %s4
  // Predicated region
  $region2: #{cstr_forward.12} parent=0 // pred_check
    _
  $region3: #{cstr_forward.12} parent=0 // pred_check_branch
    %9 = sbr.rel (0) target = $region5
  $region4: #{cstr_forward.12} parent=0 // pred_region
    _
  $region5: #{cstr_forward.12} parent=0 // pred_fallthru
    _
  // Predicated region
  $region6: #{cstr_forward.12} parent=0 // pred_check
    _
  $region7: #{cstr_forward.12} parent=0 // pred_check_branch
    %11 = sbr.rel (0) target = $region9
  $region8: #{cstr_forward.12} parent=0 // pred_region
    _
  $region9: #{cstr_forward.12} parent=0 // pred_fallthru
    _
  // Predicated region
  $region10: #{cstr_forward.12} parent=0 // pred_check
    _
  $region11: #{cstr_forward.12} parent=0 // pred_check_branch
    %13 = sbr.rel (0) target = $region13
  $region12: #{cstr_forward.12} parent=0 // pred_region
    _
  $region13: #{cstr_forward.12} parent=0 // pred_fallthru
    _
  %v14 = vld [vmem:[%s0] sm:$0xf]
  %v15 = vld [vmem:[%s0 + $0x4] sm:$0xf]
  %v16 = vld [vmem:[%s0 + $0x8] sm:$0xf]
  %v17 = vld [vmem:[%s0 + $0xc] sm:$0xf]
  %v18 = vld [vmem:[%s0 + $0x10] sm:$0xf]
  %v19 = vld [vmem:[%s0 + $0x14] sm:$0xf]
  %v20 = vld [vmem:[%s0 + $0x18] sm:$0xf]
  %v21 = vld [vmem:[%s0 + $0x1c] sm:$0xf]
  %v22 = vld [vmem:[%s1] sm:$0xf]
  %v23 = vld [vmem:[%s1 + $0x4] sm:$0xf]
  %v24 = vld [vmem:[%s1 + $0x8] sm:$0xf]
  %v25 = vld [vmem:[%s1 + $0xc] sm:$0xf]
  %v26 = vld [vmem:[%s1 + $0x10] sm:$0xf]
  %v27 = vld [vmem:[%s1 + $0x14] sm:$0xf]
  %v28 = vld [vmem:[%s1 + $0x18] sm:$0xf]
  %v29 = vld [vmem:[%s1 + $0x1c] sm:$0xf]
  %v30 = vld [vmem:[%s1 + $0x20] sm:$0xf]
  %v31 = vld [vmem:[%s1 + $0x24] sm:$0xf]
  %v32 = vld [vmem:[%s1 + $0x28] sm:$0xf]
  %v33 = vld [vmem:[%s1 + $0x2c] sm:$0xf]
  %v34 = vld [vmem:[%s1 + $0x30] sm:$0xf]
  %v35 = vld [vmem:[%s1 + $0x34] sm:$0xf]
  %v36 = vld [vmem:[%s1 + $0x38] sm:$0xf]
  %v37 = vld [vmem:[%s1 + $0x3c] sm:$0xf]
  %v38 = vld [vmem:[%s2] sm:$0x1]
  %v40 = vperm.slane %v38, 0
  %v50 = vunpack.c.l.b16 %v14
  %v51 = vunpack.c.l.b16 %v15
  %v52 = vunpack.c.l.b16 %v16
  %v53 = vunpack.c.l.b16 %v17
  %v54 = vunpack.c.l.b16 %v18
  %v55 = vunpack.c.l.b16 %v19
  %v56 = vunpack.c.l.b16 %v20
  %v57 = vunpack.c.l.b16 %v21
  %v58 = vpack.c.b16 %v51, %v50
  %v59 = vpack.c.b16 %v53, %v52
  %v60 = vpack.c.b16 %v55, %v54
  %v61 = vpack.c.b16 %v57, %v56
  %v82 = vunpack.c.l.b16 %v22
  %v83 = vunpack.c.l.b16 %v23
  %v84 = vunpack.c.l.b16 %v24
  %v85 = vunpack.c.l.b16 %v25
  %v86 = vunpack.c.l.b16 %v26
  %v87 = vunpack.c.l.b16 %v27
  %v88 = vunpack.c.l.b16 %v28
  %v89 = vunpack.c.l.b16 %v29
  %v90 = vunpack.c.l.b16 %v30
  %v91 = vunpack.c.l.b16 %v31
  %v92 = vunpack.c.l.b16 %v32
  %v93 = vunpack.c.l.b16 %v33
  %v94 = vunpack.c.l.b16 %v34
  %v95 = vunpack.c.l.b16 %v35
  %v96 = vunpack.c.l.b16 %v36
  %v97 = vunpack.c.l.b16 %v37
  %v98 = vpack.c.b16 %v83, %v82
  %v99 = vpack.c.b16 %v85, %v84
  %v100 = vpack.c.b16 %v87, %v86
  %v101 = vpack.c.b16 %v89, %v88
  %v102 = vpack.c.b16 %v91, %v90
  %v103 = vpack.c.b16 %v93, %v92
  %v104 = vpack.c.b16 %v95, %v94
  %v105 = vpack.c.b16 %v97, %v96
  %114 = vmatpush.bf16.msra.mxu0 %v105
  %115 = vmatpush.bf16.msra.mxu0 %v104
  %116 = vmatpush.bf16.msra.mxu0 %v103
  %117 = vmatpush.bf16.msra.mxu0 %v102
  %118 = vmatpush.bf16.msra.mxu0 %v101
  %119 = vmatpush.bf16.msra.mxu0 %v100
  %120 = vmatpush.bf16.msra.mxu0 %v99
  %121 = vmatpush.bf16.msra.mxu0 %v98
  %122 = vmatmul.bf16.gmra.mxu0 %v58
  %v123 = vpop.f32.mrf.mxu0
  %v124 = vadd.f32 %v40, %v123
  %v125 = vpop.f32.mrf.mxu0
  %v126 = vadd.f32 %v40, %v125
  %127 = vmatmul.bf16.gmra.mxu0 %v59
  %v128 = vpop.f32.mrf.mxu0
  %v129 = vadd.f32 %v40, %v128
  %v130 = vpop.f32.mrf.mxu0
  %v131 = vadd.f32 %v40, %v130
  %132 = vmatmul.bf16.gmra.mxu0 %v60
  %v133 = vpop.f32.mrf.mxu0
  %v134 = vadd.f32 %v40, %v133
  %v135 = vpop.f32.mrf.mxu0
  %v136 = vadd.f32 %v40, %v135
  %137 = vmatmul.bf16.gmra.mxu0 %v61
  %v138 = vpop.f32.mrf.mxu0
  %v139 = vadd.f32 %v40, %v138
  %v140 = vpop.f32.mrf.mxu0
  %v141 = vadd.f32 %v40, %v140
  %142 = vdwg.mxu0
  %v143 = vpack.c.bf16 %v124, %v124
  %v144 = vpack.c.bf16 %v126, %v126
  %v145 = vpack.c.bf16 %v129, %v129
  %v146 = vpack.c.bf16 %v131, %v131
  %v147 = vpack.c.bf16 %v134, %v134
  %v148 = vpack.c.bf16 %v136, %v136
  %v149 = vpack.c.bf16 %v139, %v139
  %v150 = vpack.c.bf16 %v141, %v141
  %151 = vst [vmem:[%s3] sm:$0xf] %v143
  %152 = vst [vmem:[%s3 + $0x4] sm:$0xf] %v144
  %153 = vst [vmem:[%s3 + $0x8] sm:$0xf] %v145
  %154 = vst [vmem:[%s3 + $0xc] sm:$0xf] %v146
  %155 = vst [vmem:[%s3 + $0x10] sm:$0xf] %v147
  %156 = vst [vmem:[%s3 + $0x14] sm:$0xf] %v148
  %157 = vst [vmem:[%s3 + $0x18] sm:$0xf] %v149
  %158 = vst [vmem:[%s3 + $0x1c] sm:$0xf] %v150
  // Predicated region
  $region14: #{cstr_forward.12} parent=0 // pred_check
    _
  $region15: #{cstr_forward.12} parent=0 // pred_check_branch
    %160 = sbr.rel (0) target = $region17
  $region16: #{cstr_forward.12} parent=0 // pred_region
    _
  $region17: #{cstr_forward.12} parent=0 // pred_fallthru
    _
  // Predicated region
  $region18: #{cstr_forward.12} parent=0 // pred_check
    _
  $region19: #{cstr_forward.12} parent=0 // pred_check_branch
    %162 = sbr.rel (0) target = $region21
  $region20: #{cstr_forward.12} parent=0 // pred_region
    _
  $region21: #{cstr_forward.12} parent=0 // pred_fallthru
    _

// kernel: cstr_forward.10
$region0: #{cstr_forward.10}
  #allocation0 [shape = 'u32[]', space=smem, size = 0x4, offset = 0x4, fixed_abs, tag = 'smem constant byte address 0x4 - core index']
  #allocation1 [shape = 'u32[72,128]{1,0:T(1,128)}', space=vmem, size = 0x9000, scoped, tag = 'internal scratch']
  %s0 = inlined_call_operand.vmem [shape: bf16[256,1152], index: 0, kind: input, shape index: {}]
  %s1 = inlined_call_operand.vmem [shape: bf16[1152,128], index: 1, kind: input, shape index: {}]
  %s2 = inlined_call_operand.vmem [shape: f32[1,128], index: 2, kind: input, shape index: {}]
  %s3 = inlined_call_operand.vmem [shape: bf16[256,128], index: 3, kind: output, shape index: {}]
  %s4 = sld [smem:[#allocation0]]
  $region45: #{cstr_forward.10} parent=0
    _
  %s6 = ssub.s32 1, %s4
  %s7 = scalar_select 0, %s6, %s4
  loop: start=0, step=1, limit=4
  $region2: #{cstr_forward.10} parent=0 // loop_pre_header
    _
  $region3: #{cstr_forward.10} parent=0 // loop_header
    %s9 = sphi 0, %s13
    %p10 = scmp.ge.s32.totalorder %s9, 4
    %s19 = sphi 0, %s21
    %s22 = sphi 0, %s19
    %s23 = sphi 0, %s22
    %s39 = sphi 0, %s23
    %s43 = sphi 0, %s43
    %s45 = sphi 0, %s43
    %s46 = sphi 0, %s45
    %s60 = sphi 0, %s46
    %s64 = sphi 0, %s64
    %s66 = sphi 0, %s64
    %s67 = sphi 0, %s66
    %s81 = sphi 0, %s67
    %s87 = sphi 0, %s89
    %s90 = sphi 0, %s87
    %s91 = sphi 0, %s90
    %s107 = sphi 0, %s91
  $region4: #{cstr_forward.10} parent=0 // loop_header_branch
    %12 = sbr.rel (%p10) target = $region8
  $region5: #{cstr_forward.10} parent=0 // loop_body
    %s14 = ssub.s32 %s9, 1
    %s15 = ssub.s32 %s9, 2
    %s16 = sadd.s32 %s9, 1
    %s17 = ssub.s32 %s9, %s16
    %p18 = scmp.eq.s32.totalorder %s17, 0
    %s20 = sadd.s32 %s19, 1
    %s21 = scalar_select %p18, %s19, %s20
    %p24 = pneg %p18
    %p25 = scmp.eq.s32.totalorder %s9, 1
    %p26 = por %p24, %p25
    %p27 = scmp.ne.s32.totalorder %s19, %s22
    %p28 = scmp.eq.s32.totalorder %s9, 0
    %p29 = por %p27, %p28
    %p30 = scmp.ne.s32.totalorder %s19, %s22
    %p31 = scmp.eq.s32.totalorder %s14, 1
    %p32 = por %p30, %p31
    %p33 = scmp.ne.s32.totalorder %s22, %s23
    %p34 = scmp.eq.s32.totalorder %s14, 0
    %p35 = por %p33, %p34
    %p36 = scmp.ne.s32.totalorder %s22, %s23
    %p37 = scmp.eq.s32.totalorder %s15, 1
    %p38 = por %p36, %p37
    %p40 = scmp.ne.s32.totalorder %s23, %s39
    %p41 = scmp.eq.s32.totalorder %s15, 0
    %p42 = por %p40, %p41
    %s44 = sadd.s32 %s43, 1
    %p47 = scmp.eq.s32.totalorder %s9, 1
    %p48 = scmp.ne.s32.totalorder %s43, %s45
    %p49 = scmp.eq.s32.totalorder %s9, 0
    %p50 = por %p48, %p49
    %p51 = scmp.ne.s32.totalorder %s43, %s45
    %p52 = scmp.eq.s32.totalorder %s14, 1
    %p53 = por %p51, %p52
    %p54 = scmp.ne.s32.totalorder %s45, %s46
    %p55 = scmp.eq.s32.totalorder %s14, 0
    %p56 = por %p54, %p55
    %p57 = scmp.ne.s32.totalorder %s45, %s46
    %p58 = scmp.eq.s32.totalorder %s15, 1
    %p59 = por %p57, %p58
    %p61 = scmp.ne.s32.totalorder %s46, %s60
    %p62 = scmp.eq.s32.totalorder %s15, 0
    %p63 = por %p61, %p62
    %s65 = sadd.s32 %s64, 1
    %p68 = scmp.eq.s32.totalorder %s9, 1
    %p69 = scmp.ne.s32.totalorder %s64, %s66
    %p70 = scmp.eq.s32.totalorder %s9, 0
    %p71 = por %p69, %p70
    %p72 = scmp.ne.s32.totalorder %s64, %s66
    %p73 = scmp.eq.s32.totalorder %s14, 1
    %p74 = por %p72, %p73
    %p75 = scmp.ne.s32.totalorder %s66, %s67
    %p76 = scmp.eq.s32.totalorder %s14, 0
    %p77 = por %p75, %p76
    %p78 = scmp.ne.s32.totalorder %s66, %s67
    %p79 = scmp.eq.s32.totalorder %s15, 1
    %p80 = por %p78, %p79
    %p82 = scmp.ne.s32.totalorder %s67, %s81
    %p83 = scmp.eq.s32.totalorder %s15, 0
    %p84 = por %p82, %p83
    %s85 = ssub.s32 %s9, %s16
    %p86 = scmp.eq.s32.totalorder %s85, 0
    %s88 = sadd.s32 %s87, 1
    %s89 = scalar_select %p86, %s87, %s88
    %p92 = pneg %p86
    %p93 = scmp.eq.s32.totalorder %s9, 1
    %p94 = por %p92, %p93
    %p95 = scmp.ne.s32.totalorder %s87, %s90
    %p96 = scmp.eq.s32.totalorder %s9, 0
    %p97 = por %p95, %p96
    %p98 = scmp.ne.s32.totalorder %s87, %s90
    %p99 = scmp.eq.s32.totalorder %s14, 1
    %p100 = por %p98, %p99
    %p101 = scmp.ne.s32.totalorder %s90, %s91
    %p102 = scmp.eq.s32.totalorder %s14, 0
    %p103 = por %p101, %p102
    %p104 = scmp.ne.s32.totalorder %s90, %s91
    %p105 = scmp.eq.s32.totalorder %s15, 1
    %p106 = por %p104, %p105
    %p108 = scmp.ne.s32.totalorder %s91, %s107
    %p109 = scmp.eq.s32.totalorder %s15, 0
    %p110 = por %p108, %p109
    %p111 = scmp.le.s32.totalorder 1, %s9
    %p112 = scmp.lt.s32.totalorder %s9, 3
    %p113 = pnand %p111, %p112
    %p114 = pneg %p113
    // Predicated region
    $region9: #{cstr_forward.10} parent=5 // pred_check
      _
    $region10: #{cstr_forward.10} parent=5 // pred_check_branch
      %116 = sbr.rel (%p113) target = $region12
    $region11: #{cstr_forward.10} parent=5 // pred_region
      %s117 = ssub.s32 %s9, 1
      // Predicated region
      $region13: #{cstr_forward.10} parent=11 // pred_check
        %p118 = pneg %p56
      $region14: #{cstr_forward.10} parent=11 // pred_check_branch
        %120 = sbr.rel (%p118) target = $region16
      $region15: #{cstr_forward.10} parent=11 // pred_region
        _
      $region16: #{cstr_forward.10} parent=11 // pred_fallthru
        _
      // Predicated region
      $region17: #{cstr_forward.10} parent=11 // pred_check
        %p121 = pneg %p77
      $region18: #{cstr_forward.10} parent=11 // pred_check_branch
        %123 = sbr.rel (%p121) target = $region20
      $region19: #{cstr_forward.10} parent=11 // pred_region
        _
      $region20: #{cstr_forward.10} parent=11 // pred_fallthru
        _
    $region12: #{cstr_forward.10} parent=5 // pred_fallthru
      _
    %p124 = scmp.lt.s32.totalorder %s9, 2
    // Predicated region
    $region21: #{cstr_forward.10} parent=5 // pred_check
      %p125 = pneg %p124
    $region22: #{cstr_forward.10} parent=5 // pred_check_branch
      %127 = sbr.rel (%p125) target = $region24
    $region23: #{cstr_forward.10} parent=5 // pred_region
      // Predicated region
      $region25: #{cstr_forward.10} parent=23 // pred_check
        %p128 = pneg %p29
      $region26: #{cstr_forward.10} parent=23 // pred_check_branch
        %130 = sbr.rel (%p128) target = $region28
      $region27: #{cstr_forward.10} parent=23 // pred_region
        %s131 = smul.u32 16, %s9
        %p132 = scmp.lt.s32.totalorder %s131, 31
        %s133 = scalar_select %p132, %s131, 31
        %s134 = smul.addr %s133, 9
        %s135 = smul.addr %s134, 4
        %s136 = scalar_lea.vmem %s0, %s135
        %s137 = smul.u32 16, %s9
      $region28: #{cstr_forward.10} parent=23 // pred_fallthru
        _
    $region24: #{cstr_forward.10} parent=5 // pred_fallthru
      _
    %p138 = scmp.le.s32.totalorder 1, %s9
    %p139 = scmp.lt.s32.totalorder %s9, 3
    %p140 = pnand %p138, %p139
    %p141 = pneg %p140
    // Predicated region
    $region29: #{cstr_forward.10} parent=5 // pred_check
      _
    $region30: #{cstr_forward.10} parent=5 // pred_check_branch
      %143 = sbr.rel (%p140) target = $region32
    $region31: #{cstr_forward.10} parent=5 // pred_region
      %s144 = ssub.s32 %s9, 1
      %s145 = smul.u32 16, %s14
      %p146 = scmp.lt.s32.totalorder %s145, 31
      %s147 = scalar_select %p146, %s145, 31
      %s148 = smul.addr %s147, 9
      %s149 = smul.addr %s148, 4
      %s150 = scalar_lea.vmem %s0, %s149
      %p151 = pneg %p35
      %p152 = pneg %p32
      %p153 = pneg %p56
      %p154 = pneg %p53
      %p155 = pneg %p77
      %p156 = pneg %p74
      %p157 = pneg %p103
      %p158 = pneg %p100
      %s159 = smul.u32 16, %s14
      %p160 = scmp.lt.s32.totalorder %s159, 31
      %s161 = scalar_select %p160, %s159, 31
      %s162 = smul.addr %s161, 4
      %s163 = scalar_lea.vmem %s3, %s162
      %s164 = smul.u32 16, %s14
      %p165 = scmp.lt.s32.totalorder %s164, 31
      %s166 = scalar_select %p165, %s164, 31
      %s167 = smul.addr %s166, 9
      %s168 = smul.addr %s167, 4
      %s169 = scalar_lea.vmem %s0, %s168
      %s170 = smul.u32 16, %s14
      %s171 = smul.u32 16, %s14
      %p172 = scmp.lt.s32.totalorder %s171, 31
      %s173 = scalar_select %p172, %s171, 31
      %s174 = smul.addr %s173, 4
      %s175 = scalar_lea.vmem %s3, %s174
      %s176 = smul.u32 16, %s14
      %v177 = vld [vmem:[%s169] sm:$0xff]
      %v178 = vld [vmem:[%s169 + $0x8] sm:$0xff]
      %v179 = vld [vmem:[%s169 + $0x10] sm:$0xff]
      %v180 = vld [vmem:[%s169 + $0x18] sm:$0xff]
      %v181 = vld [vmem:[%s169 + $0x20] sm:$0xf]
      %v182 = vld [vmem:[%s169 + $0x24] sm:$0xff]
      %v183 = vld [vmem:[%s169 + $0x2c] sm:$0xff]
      %v184 = vld [vmem:[%s169 + $0x34] sm:$0xff]
      %v185 = vld [vmem:[%s169 + $0x3c] sm:$0xff]
      %v186 = vld [vmem:[%s169 + $0x44] sm:$0xf]
      %v187 = vld [vmem:[%s169 + $0x48] sm:$0xff]
      %v188 = vld [vmem:[%s169 + $0x50] sm:$0xff]
      %v189 = vld [vmem:[%s169 + $0x58] sm:$0xff]
      %v190 = vld [vmem:[%s169 + $0x60] sm:$0xff]
      %v191 = vld [vmem:[%s169 + $0x68] sm:$0xf]
      %v192 = vld [vmem:[%s169 + $0x6c] sm:$0xff]
      %v193 = vld [vmem:[%s169 + $0x74] sm:$0xff]
      %v194 = vld [vmem:[%s169 + $0x7c] sm:$0xff]
      %v195 = vld [vmem:[%s169 + $0x84] sm:$0xff]
      %v196 = vld [vmem:[%s169 + $0x8c] sm:$0xf]
      %v197 = vld [vmem:[%s169 + $0x90] sm:$0xff]
      %v198 = vld [vmem:[%s169 + $0x98] sm:$0xff]
      %v199 = vld [vmem:[%s169 + $0xa0] sm:$0xff]
      %v200 = vld [vmem:[%s169 + $0xa8] sm:$0xff]
      %v201 = vld [vmem:[%s169 + $0xb0] sm:$0xf]
      %v202 = vld [vmem:[%s169 + $0xb4] sm:$0xff]
      %v203 = vld [vmem:[%s169 + $0xbc] sm:$0xff]
      %v204 = vld [vmem:[%s169 + $0xc4] sm:$0xff]
      %v205 = vld [vmem:[%s169 + $0xcc] sm:$0xff]
      %v206 = vld [vmem:[%s169 + $0xd4] sm:$0xf]
      %v207 = vld [vmem:[%s169 + $0xd8] sm:$0xff]
      %v208 = vld [vmem:[%s169 + $0xe0] sm:$0xff]
      %v209 = vld [vmem:[%s169 + $0xe8] sm:$0xff]
      %v210 = vld [vmem:[%s169 + $0xf0] sm:$0xff]
      %v211 = vld [vmem:[%s169 + $0xf8] sm:$0xf]
      %v212 = vld [vmem:[%s169 + $0xfc] sm:$0xff]
      %v213 = vld [vmem:[%s169 + $0x104] sm:$0xff]
      %v214 = vld [vmem:[%s169 + $0x10c] sm:$0xff]
      %v215 = vld [vmem:[%s169 + $0x114] sm:$0xff]
      %v216 = vld [vmem:[%s169 + $0x11c] sm:$0xf]
      %v217 = vld [vmem:[%s169 + $0x120] sm:$0xff]
      %v218 = vld [vmem:[%s169 + $0x128] sm:$0xff]
      %v219 = vld [vmem:[%s169 + $0x130] sm:$0xff]
      %v220 = vld [vmem:[%s169 + $0x138] sm:$0xff]
      %v221 = vld [vmem:[%s169 + $0x140] sm:$0xf]
      %v222 = vld [vmem:[%s169 + $0x144] sm:$0xff]
      %v223 = vld [vmem:[%s169 + $0x14c] sm:$0xff]
      %v224 = vld [vmem:[%s169 + $0x154] sm:$0xff]
      %v225 = vld [vmem:[%s169 + $0x15c] sm:$0xff]
      %v226 = vld [vmem:[%s169 + $0x164] sm:$0xf]
      %v227 = vld [vmem:[%s169 + $0x168] sm:$0xff]
      %v228 = vld [vmem:[%s169 + $0x170] sm:$0xff]
      %v229 = vld [vmem:[%s169 + $0x178] sm:$0xff]
      %v230 = vld [vmem:[%s169 + $0x180] sm:$0xff]
      %v231 = vld [vmem:[%s169 + $0x188] sm:$0xf]
      %v232 = vld [vmem:[%s169 + $0x18c] sm:$0xff]
      %v233 = vld [vmem:[%s169 + $0x194] sm:$0xff]
      %v234 = vld [vmem:[%s169 + $0x19c] sm:$0xff]
      %v235 = vld [vmem:[%s169 + $0x1a4] sm:$0xff]
      %v236 = vld [vmem:[%s169 + $0x1ac] sm:$0xf]
      %v237 = vld [vmem:[%s169 + $0x1b0] sm:$0xff]
      %v238 = vld [vmem:[%s169 + $0x1b8] sm:$0xff]
      %v239 = vld [vmem:[%s169 + $0x1c0] sm:$0xff]
      %v240 = vld [vmem:[%s169 + $0x1c8] sm:$0xff]
      %v241 = vld [vmem:[%s169 + $0x1d0] sm:$0xf]
      %v242 = vld [vmem:[%s169 + $0x1d4] sm:$0xff]
      %v243 = vld [vmem:[%s169 + $0x1dc] sm:$0xff]
      %v244 = vld [vmem:[%s169 + $0x1e4] sm:$0xff]
      %v245 = vld [vmem:[%s169 + $0x1ec] sm:$0xff]
      %v246 = vld [vmem:[%s169 + $0x1f4] sm:$0xf]
      %v247 = vld [vmem:[%s169 + $0x1f8] sm:$0xff]
      %v248 = vld [vmem:[%s169 + $0x200] sm:$0xff]
      %v249 = vld [vmem:[%s169 + $0x208] sm:$0xff]
      %v250 = vld [vmem:[%s169 + $0x210] sm:$0xff]
      %v251 = vld [vmem:[%s169 + $0x218] sm:$0xf]
      %v252 = vld [vmem:[%s169 + $0x21c] sm:$0xff]
      %v253 = vld [vmem:[%s169 + $0x224] sm:$0xff]
      %v254 = vld [vmem:[%s169 + $0x22c] sm:$0xff]
      %v255 = vld [vmem:[%s169 + $0x234] sm:$0xff]
      %v256 = vld [vmem:[%s169 + $0x23c] sm:$0xf]
      %v257 = vld [vmem:[%s1] sm:$0xf]
      %v258 = vld [vmem:[%s1 + $0x4] sm:$0xf]
      %v259 = vld [vmem:[%s1 + $0x8] sm:$0xf]
      %v260 = vld [vmem:[%s1 + $0xc] sm:$0xf]
      %v261 = vld [vmem:[%s1 + $0x10] sm:$0xf]
      %v262 = vld [vmem:[%s1 + $0x14] sm:$0xf]
      %v263 = vld [vmem:[%s1 + $0x18] sm:$0xf]
      %v264 = vld [vmem:[%s1 + $0x1c] sm:$0xf]
      %v265 = vld [vmem:[%s1 + $0x20] sm:$0xf]
      %v266 = vld [vmem:[%s1 + $0x24] sm:$0xf]
      %v267 = vld [vmem:[%s1 + $0x28] sm:$0xf]
      %v268 = vld [vmem:[%s1 + $0x2c] sm:$0xf]
      %v269 = vld [vmem:[%s1 + $0x30] sm:$0xf]
      %v270 = vld [vmem:[%s1 + $0x34] sm:$0xf]
      %v271 = vld [vmem:[%s1 + $0x38] sm:$0xf]
      %v272 = vld [vmem:[%s1 + $0x3c] sm:$0xf]
      %v273 = vld [vmem:[%s1 + $0x40] sm:$0xf]
      %v274 = vld [vmem:[%s1 + $0x44] sm:$0xf]
      %v275 = vld [vmem:[%s1 + $0x48] sm:$0xf]
      %v276 = vld [vmem:[%s1 + $0x4c] sm:$0xf]
      %v277 = vld [vmem:[%s1 + $0x50] sm:$0xf]
      %v278 = vld [vmem:[%s1 + $0x54] sm:$0xf]
      %v279 = vld [vmem:[%s1 + $0x58] sm:$0xf]
      %v280 = vld [vmem:[%s1 + $0x5c] sm:$0xf]
      %v281 = vld [vmem:[%s1 + $0x60] sm:$0xf]
      %v282 = vld [vmem:[%s1 + $0x64] sm:$0xf]
      %v283 = vld [vmem:[%s1 + $0x68] sm:$0xf]
      %v284 = vld [vmem:[%s1 + $0x6c] sm:$0xf]
      %v285 = vld [vmem:[%s1 + $0x70] sm:$0xf]
      %v286 = vld [vmem:[%s1 + $0x74] sm:$0xf]
      %v287 = vld [vmem:[%s1 + $0x78] sm:$0xf]
      %v288 = vld [vmem:[%s1 + $0x7c] sm:$0xf]
      %v289 = vld [vmem:[%s1 + $0x80] sm:$0xf]
      %v290 = vld [vmem:[%s1 + $0x84] sm:$0xf]
      %v291 = vld [vmem:[%s1 + $0x88] sm:$0xf]
      %v292 = vld [vmem:[%s1 + $0x8c] sm:$0xf]
      %v293 = vld [vmem:[%s1 + $0x90] sm:$0xf]
      %v294 = vld [vmem:[%s1 + $0x94] sm:$0xf]
      %v295 = vld [vmem:[%s1 + $0x98] sm:$0xf]
      %v296 = vld [vmem:[%s1 + $0x9c] sm:$0xf]
      %v297 = vld [vmem:[%s1 + $0xa0] sm:$0xf]
      %v298 = vld [vmem:[%s1 + $0xa4] sm:$0xf]
      %v299 = vld [vmem:[%s1 + $0xa8] sm:$0xf]
      %v300 = vld [vmem:[%s1 + $0xac] sm:$0xf]
      %v301 = vld [vmem:[%s1 + $0xb0] sm:$0xf]
      %v302 = vld [vmem:[%s1 + $0xb4] sm:$0xf]
      %v303 = vld [vmem:[%s1 + $0xb8] sm:$0xf]
      %v304 = vld [vmem:[%s1 + $0xbc] sm:$0xf]
      %v305 = vld [vmem:[%s1 + $0xc0] sm:$0xf]
      %v306 = vld [vmem:[%s1 + $0xc4] sm:$0xf]
      %v307 = vld [vmem:[%s1 + $0xc8] sm:$0xf]
      %v308 = vld [vmem:[%s1 + $0xcc] sm:$0xf]
      %v309 = vld [vmem:[%s1 + $0xd0] sm:$0xf]
      %v310 = vld [vmem:[%s1 + $0xd4] sm:$0xf]
      %v311 = vld [vmem:[%s1 + $0xd8] sm:$0xf]
      %v312 = vld [vmem:[%s1 + $0xdc] sm:$0xf]
      %v313 = vld [vmem:[%s1 + $0xe0] sm:$0xf]
      %v314 = vld [vmem:[%s1 + $0xe4] sm:$0xf]
      %v315 = vld [vmem:[%s1 + $0xe8] sm:$0xf]
      %v316 = vld [vmem:[%s1 + $0xec] sm:$0xf]
      %v317 = vld [vmem:[%s1 + $0xf0] sm:$0xf]
      %v318 = vld [vmem:[%s1 + $0xf4] sm:$0xf]
      %v319 = vld [vmem:[%s1 + $0xf8] sm:$0xf]
      %v320 = vld [vmem:[%s1 + $0xfc] sm:$0xf]
      %v321 = vld [vmem:[%s1 + $0x100] sm:$0xf]
      %v322 = vld [vmem:[%s1 + $0x104] sm:$0xf]
      %v323 = vld [vmem:[%s1 + $0x108] sm:$0xf]
      %v324 = vld [vmem:[%s1 + $0x10c] sm:$0xf]
      %v325 = vld [vmem:[%s1 + $0x110] sm:$0xf]
      %v326 = vld [vmem:[%s1 + $0x114] sm:$0xf]
      %v327 = vld [vmem:[%s1 + $0x118] sm:$0xf]
      %v328 = vld [vmem:[%s1 + $0x11c] sm:$0xf]
      %v329 = vld [vmem:[%s1 + $0x120] sm:$0xf]
      %v330 = vld [vmem:[%s1 + $0x124] sm:$0xf]
      %v331 = vld [vmem:[%s1 + $0x128] sm:$0xf]
      %v332 = vld [vmem:[%s1 + $0x12c] sm:$0xf]
      %v333 = vld [vmem:[%s1 + $0x130] sm:$0xf]
      %v334 = vld [vmem:[%s1 + $0x134] sm:$0xf]
      %v335 = vld [vmem:[%s1 + $0x138] sm:$0xf]
      %v336 = vld [vmem:[%s1 + $0x13c] sm:$0xf]
      %v337 = vld [vmem:[%s1 + $0x140] sm:$0xf]
      %v338 = vld [vmem:[%s1 + $0x144] sm:$0xf]
      %v339 = vld [vmem:[%s1 + $0x148] sm:$0xf]
      %v340 = vld [vmem:[%s1 + $0x14c] sm:$0xf]
      %v341 = vld [vmem:[%s1 + $0x150] sm:$0xf]
      %v342 = vld [vmem:[%s1 + $0x154] sm:$0xf]
      %v343 = vld [vmem:[%s1 + $0x158] sm:$0xf]
      %v344 = vld [vmem:[%s1 + $0x15c] sm:$0xf]
      %v345 = vld [vmem:[%s1 + $0x160] sm:$0xf]
      %v346 = vld [vmem:[%s1 + $0x164] sm:$0xf]
      %v347 = vld [vmem:[%s1 + $0x168] sm:$0xf]
      %v348 = vld [vmem:[%s1 + $0x16c] sm:$0xf]
      %v349 = vld [vmem:[%s1 + $0x170] sm:$0xf]
      %v350 = vld [vmem:[%s1 + $0x174] sm:$0xf]
      %v351 = vld [vmem:[%s1 + $0x178] sm:$0xf]
      %v352 = vld [vmem:[%s1 + $0x17c] sm:$0xf]
      %v353 = vld [vmem:[%s1 + $0x180] sm:$0xf]
      %v354 = vld [vmem:[%s1 + $0x184] sm:$0xf]
      %v355 = vld [vmem:[%s1 + $0x188] sm:$0xf]
      %v356 = vld [vmem:[%s1 + $0x18c] sm:$0xf]
      %v357 = vld [vmem:[%s1 + $0x190] sm:$0xf]
      %v358 = vld [vmem:[%s1 + $0x194] sm:$0xf]
      %v359 = vld [vmem:[%s1 + $0x198] sm:$0xf]
      %v360 = vld [vmem:[%s1 + $0x19c] sm:$0xf]
      %v361 = vld [vmem:[%s1 + $0x1a0] sm:$0xf]
      %v362 = vld [vmem:[%s1 + $0x1a4] sm:$0xf]
      %v363 = vld [vmem:[%s1 + $0x1a8] sm:$0xf]
      %v364 = vld [vmem:[%s1 + $0x1ac] sm:$0xf]
      %v365 = vld [vmem:[%s1 + $0x1b0] sm:$0xf]
      %v366 = vld [vmem:[%s1 + $0x1b4] sm:$0xf]
      %v367 = vld [vmem:[%s1 + $0x1b8] sm:$0xf]
      %v368 = vld [vmem:[%s1 + $0x1bc] sm:$0xf]
      %v369 = vld [vmem:[%s1 + $0x1c0] sm:$0xf]
      %v370 = vld [vmem:[%s1 + $0x1c4] sm:$0xf]
      %v371 = vld [vmem:[%s1 + $0x1c8] sm:$0xf]
      %v372 = vld [vmem:[%s1 + $0x1cc] sm:$0xf]
      %v373 = vld [vmem:[%s1 + $0x1d0] sm:$0xf]
      %v374 = vld [vmem:[%s1 + $0x1d4] sm:$0xf]
      %v375 = vld [vmem:[%s1 + $0x1d8] sm:$0xf]
      %v376 = vld [vmem:[%s1 + $0x1dc] sm:$0xf]
      %v377 = vld [vmem:[%s1 + $0x1e0] sm:$0xf]
      %v378 = vld [vmem:[%s1 + $0x1e4] sm:$0xf]
      %v379 = vld [vmem:[%s1 + $0x1e8] sm:$0xf]
      %v380 = vld [vmem:[%s1 + $0x1ec] sm:$0xf]
      %v381 = vld [vmem:[%s1 + $0x1f0] sm:$0xf]
      %v382 = vld [vmem:[%s1 + $0x1f4] sm:$0xf]
      %v383 = vld [vmem:[%s1 + $0x1f8] sm:$0xf]
      %v384 = vld [vmem:[%s1 + $0x1fc] sm:$0xf]
      %v385 = vld [vmem:[%s1 + $0x200] sm:$0xf]
      %v386 = vld [vmem:[%s1 + $0x204] sm:$0xf]
      %v387 = vld [vmem:[%s1 + $0x208] sm:$0xf]
      %v388 = vld [vmem:[%s1 + $0x20c] sm:$0xf]
      %v389 = vld [vmem:[%s1 + $0x210] sm:$0xf]
      %v390 = vld [vmem:[%s1 + $0x214] sm:$0xf]
      %v391 = vld [vmem:[%s1 + $0x218] sm:$0xf]
      %v392 = vld [vmem:[%s1 + $0x21c] sm:$0xf]
      %v393 = vld [vmem:[%s1 + $0x220] sm:$0xf]
      %v394 = vld [vmem:[%s1 + $0x224] sm:$0xf]
      %v395 = vld [vmem:[%s1 + $0x228] sm:$0xf]
      %v396 = vld [vmem:[%s1 + $0x22c] sm:$0xf]
      %v397 = vld [vmem:[%s1 + $0x230] sm:$0xf]
      %v398 = vld [vmem:[%s1 + $0x234] sm:$0xf]
      %v399 = vld [vmem:[%s1 + $0x238] sm:$0xf]
      %v400 = vld [vmem:[%s1 + $0x23c] sm:$0xf]
      %v401 = vld [vmem:[%s2] sm:$0x1]
      %v403 = vperm.slane %v401, 0
      %v485 = vunpack.c.l.b16 %v177
      %v486 = vunpack.c.h.b16 %v177
      %v487 = vunpack.c.l.b16 %v178
      %v488 = vunpack.c.h.b16 %v178
      %v489 = vunpack.c.l.b16 %v179
      %v490 = vunpack.c.h.b16 %v179
      %v491 = vunpack.c.l.b16 %v180
      %v492 = vunpack.c.h.b16 %v180
      %v493 = vunpack.c.l.b16 %v181
      %v494 = vunpack.c.l.b16 %v182
      %v495 = vunpack.c.h.b16 %v182
      %v496 = vunpack.c.l.b16 %v183
      %v497 = vunpack.c.h.b16 %v183
      %v498 = vunpack.c.l.b16 %v184
      %v499 = vunpack.c.h.b16 %v184
      %v500 = vunpack.c.l.b16 %v185
      %v501 = vunpack.c.h.b16 %v185
      %v502 = vunpack.c.l.b16 %v186
      %v503 = vunpack.c.l.b16 %v187
      %v504 = vunpack.c.h.b16 %v187
      %v505 = vunpack.c.l.b16 %v188
      %v506 = vunpack.c.h.b16 %v188
      %v507 = vunpack.c.l.b16 %v189
      %v508 = vunpack.c.h.b16 %v189
      %v509 = vunpack.c.l.b16 %v190
      %v510 = vunpack.c.h.b16 %v190
      %v511 = vunpack.c.l.b16 %v191
      %v512 = vunpack.c.l.b16 %v192
      %v513 = vunpack.c.h.b16 %v192
      %v514 = vunpack.c.l.b16 %v193
      %v515 = vunpack.c.h.b16 %v193
      %v516 = vunpack.c.l.b16 %v194
      %v517 = vunpack.c.h.b16 %v194
      %v518 = vunpack.c.l.b16 %v195
      %v519 = vunpack.c.h.b16 %v195
      %v520 = vunpack.c.l.b16 %v196
      %v521 = vunpack.c.l.b16 %v197
      %v522 = vunpack.c.h.b16 %v197
      %v523 = vunpack.c.l.b16 %v198
      %v524 = vunpack.c.h.b16 %v198
      %v525 = vunpack.c.l.b16 %v199
      %v526 = vunpack.c.h.b16 %v199
      %v527 = vunpack.c.l.b16 %v200
      %v528 = vunpack.c.h.b16 %v200
      %v529 = vunpack.c.l.b16 %v201
      %v530 = vunpack.c.l.b16 %v202
      %v531 = vunpack.c.h.b16 %v202
      %v532 = vunpack.c.l.b16 %v203
      %v533 = vunpack.c.h.b16 %v203
      %v534 = vunpack.c.l.b16 %v204
      %v535 = vunpack.c.h.b16 %v204
      %v536 = vunpack.c.l.b16 %v205
      %v537 = vunpack.c.h.b16 %v205
      %v538 = vunpack.c.l.b16 %v206
      %v539 = vunpack.c.l.b16 %v207
      %v540 = vunpack.c.h.b16 %v207
      %v541 = vunpack.c.l.b16 %v208
      %v542 = vunpack.c.h.b16 %v208
      %v543 = vunpack.c.l.b16 %v209
      %v544 = vunpack.c.h.b16 %v209
      %v545 = vunpack.c.l.b16 %v210
      %v546 = vunpack.c.h.b16 %v210
      %v547 = vunpack.c.l.b16 %v211
      %v548 = vunpack.c.l.b16 %v212
      %v549 = vunpack.c.h.b16 %v212
      %v550 = vunpack.c.l.b16 %v213
      %v551 = vunpack.c.h.b16 %v213
      %v552 = vunpack.c.l.b16 %v214
      %v553 = vunpack.c.h.b16 %v214
      %v554 = vunpack.c.l.b16 %v215
      %v555 = vunpack.c.h.b16 %v215
      %v556 = vunpack.c.l.b16 %v216
      %v557 = vunpack.c.l.b16 %v217
      %v558 = vunpack.c.h.b16 %v217
      %v559 = vunpack.c.l.b16 %v218
      %v560 = vunpack.c.h.b16 %v218
      %v561 = vunpack.c.l.b16 %v219
      %v562 = vunpack.c.h.b16 %v219
      %v563 = vunpack.c.l.b16 %v220
      %v564 = vunpack.c.h.b16 %v220
      %v565 = vunpack.c.l.b16 %v221
      %v566 = vunpack.c.l.b16 %v222
      %v567 = vunpack.c.h.b16 %v222
      %v568 = vunpack.c.l.b16 %v223
      %v569 = vunpack.c.h.b16 %v223
      %v570 = vunpack.c.l.b16 %v224
      %v571 = vunpack.c.h.b16 %v224
      %v572 = vunpack.c.l.b16 %v225
      %v573 = vunpack.c.h.b16 %v225
      %v574 = vunpack.c.l.b16 %v226
      %v575 = vunpack.c.l.b16 %v227
      %v576 = vunpack.c.h.b16 %v227
      %v577 = vunpack.c.l.b16 %v228
      %v578 = vunpack.c.h.b16 %v228
      %v579 = vunpack.c.l.b16 %v229
      %v580 = vunpack.c.h.b16 %v229
      %v581 = vunpack.c.l.b16 %v230
      %v582 = vunpack.c.h.b16 %v230
      %v583 = vunpack.c.l.b16 %v231
      %v584 = vunpack.c.l.b16 %v232
      %v585 = vunpack.c.h.b16 %v232
      %v586 = vunpack.c.l.b16 %v233
      %v587 = vunpack.c.h.b16 %v233
      %v588 = vunpack.c.l.b16 %v234
      %v589 = vunpack.c.h.b16 %v234
      %v590 = vunpack.c.l.b16 %v235
      %v591 = vunpack.c.h.b16 %v235
      %v592 = vunpack.c.l.b16 %v236
      %v593 = vunpack.c.l.b16 %v237
      %v594 = vunpack.c.h.b16 %v237
      %v595 = vunpack.c.l.b16 %v238
      %v596 = vunpack.c.h.b16 %v238
      %v597 = vunpack.c.l.b16 %v239
      %v598 = vunpack.c.h.b16 %v239
      %v599 = vunpack.c.l.b16 %v240
      %v600 = vunpack.c.h.b16 %v240
      %v601 = vunpack.c.l.b16 %v241
      %v602 = vunpack.c.l.b16 %v242
      %v603 = vunpack.c.h.b16 %v242
      %v604 = vunpack.c.l.b16 %v243
      %v605 = vunpack.c.h.b16 %v243
      %v606 = vunpack.c.l.b16 %v244
      %v607 = vunpack.c.h.b16 %v244
      %v608 = vunpack.c.l.b16 %v245
      %v609 = vunpack.c.h.b16 %v245
      %v610 = vunpack.c.l.b16 %v246
      %v611 = vunpack.c.l.b16 %v247
      %v612 = vunpack.c.h.b16 %v247
      %v613 = vunpack.c.l.b16 %v248
      %v614 = vunpack.c.h.b16 %v248
      %v615 = vunpack.c.l.b16 %v249
      %v616 = vunpack.c.h.b16 %v249
      %v617 = vunpack.c.l.b16 %v250
      %v618 = vunpack.c.h.b16 %v250
      %v619 = vunpack.c.l.b16 %v251
      %v620 = vunpack.c.l.b16 %v252
      %v621 = vunpack.c.h.b16 %v252
      %v622 = vunpack.c.l.b16 %v253
      %v623 = vunpack.c.h.b16 %v253
      %v624 = vunpack.c.l.b16 %v254
      %v625 = vunpack.c.h.b16 %v254
      %v626 = vunpack.c.l.b16 %v255
      %v627 = vunpack.c.h.b16 %v255
      %v628 = vunpack.c.l.b16 %v256
      %v629 = vpack.c.b16 %v494, %v485
      %v630 = vpack.c.b16 %v495, %v486
      %v631 = vpack.c.b16 %v496, %v487
      %v632 = vpack.c.b16 %v497, %v488
      %v633 = vpack.c.b16 %v498, %v489
      %v634 = vpack.c.b16 %v499, %v490
      %v635 = vpack.c.b16 %v500, %v491
      %v636 = vpack.c.b16 %v501, %v492
      %v637 = vpack.c.b16 %v502, %v493
      %v638 = vpack.c.b16 %v512, %v503
      %v639 = vpack.c.b16 %v513, %v504
      %v640 = vpack.c.b16 %v514, %v505
      %v641 = vpack.c.b16 %v515, %v506
      %v642 = vpack.c.b16 %v516, %v507
      %v643 = vpack.c.b16 %v517, %v508
      %v644 = vpack.c.b16 %v518, %v509
      %v645 = vpack.c.b16 %v519, %v510
      %v646 = vpack.c.b16 %v520, %v511
      %v647 = vpack.c.b16 %v530, %v521
      %v648 = vpack.c.b16 %v531, %v522
      %v649 = vpack.c.b16 %v532, %v523
      %v650 = vpack.c.b16 %v533, %v524
      %v651 = vpack.c.b16 %v534, %v525
      %v652 = vpack.c.b16 %v535, %v526
      %v653 = vpack.c.b16 %v536, %v527
      %v654 = vpack.c.b16 %v537, %v528
      %v655 = vpack.c.b16 %v538, %v529
      %v656 = vpack.c.b16 %v548, %v539
      %v657 = vpack.c.b16 %v549, %v540
      %v658 = vpack.c.b16 %v550, %v541
      %v659 = vpack.c.b16 %v551, %v542
      %v660 = vpack.c.b16 %v552, %v543
      %v661 = vpack.c.b16 %v553, %v544
      %v662 = vpack.c.b16 %v554, %v545
      %v663 = vpack.c.b16 %v555, %v546
      %v664 = vpack.c.b16 %v556, %v547
      %v665 = vpack.c.b16 %v566, %v557
      %v666 = vpack.c.b16 %v567, %v558
      %v667 = vpack.c.b16 %v568, %v559
      %v668 = vpack.c.b16 %v569, %v560
      %v669 = vpack.c.b16 %v570, %v561
      %v670 = vpack.c.b16 %v571, %v562
      %v671 = vpack.c.b16 %v572, %v563
      %v672 = vpack.c.b16 %v573, %v564
      %v673 = vpack.c.b16 %v574, %v565
      %v674 = vpack.c.b16 %v584, %v575
      %v675 = vpack.c.b16 %v585, %v576
      %v676 = vpack.c.b16 %v586, %v577
      %v677 = vpack.c.b16 %v587, %v578
      %v678 = vpack.c.b16 %v588, %v579
      %v679 = vpack.c.b16 %v589, %v580
      %v680 = vpack.c.b16 %v590, %v581
      %v681 = vpack.c.b16 %v591, %v582
      %v682 = vpack.c.b16 %v592, %v583
      %v683 = vpack.c.b16 %v602, %v593
      %v684 = vpack.c.b16 %v603, %v594
      %v685 = vpack.c.b16 %v604, %v595
      %v686 = vpack.c.b16 %v605, %v596
      %v687 = vpack.c.b16 %v606, %v597
      %v688 = vpack.c.b16 %v607, %v598
      %v689 = vpack.c.b16 %v608, %v599
      %v690 = vpack.c.b16 %v609, %v600
      %v691 = vpack.c.b16 %v610, %v601
      %v692 = vpack.c.b16 %v620, %v611
      %v693 = vpack.c.b16 %v621, %v612
      %v694 = vpack.c.b16 %v622, %v613
      %v695 = vpack.c.b16 %v623, %v614
      %v696 = vpack.c.b16 %v624, %v615
      %v697 = vpack.c.b16 %v625, %v616
      %v698 = vpack.c.b16 %v626, %v617
      %v699 = vpack.c.b16 %v627, %v618
      %v700 = vpack.c.b16 %v628, %v619
      %v917 = vunpack.c.l.b16 %v257
      %v918 = vunpack.c.l.b16 %v258
      %v919 = vunpack.c.l.b16 %v259
      %v920 = vunpack.c.l.b16 %v260
      %v921 = vunpack.c.l.b16 %v261
      %v922 = vunpack.c.l.b16 %v262
      %v923 = vunpack.c.l.b16 %v263
      %v924 = vunpack.c.l.b16 %v264
      %v925 = vunpack.c.l.b16 %v265
      %v926 = vunpack.c.l.b16 %v266
      %v927 = vunpack.c.l.b16 %v267
      %v928 = vunpack.c.l.b16 %v268
      %v929 = vunpack.c.l.b16 %v269
      %v930 = vunpack.c.l.b16 %v270
      %v931 = vunpack.c.l.b16 %v271
      %v932 = vunpack.c.l.b16 %v272
      %v933 = vunpack.c.l.b16 %v273
      %v934 = vunpack.c.l.b16 %v274
      %v935 = vunpack.c.l.b16 %v275
      %v936 = vunpack.c.l.b16 %v276
      %v937 = vunpack.c.l.b16 %v277
      %v938 = vunpack.c.l.b16 %v278
      %v939 = vunpack.c.l.b16 %v279
      %v940 = vunpack.c.l.b16 %v280
      %v941 = vunpack.c.l.b16 %v281
      %v942 = vunpack.c.l.b16 %v282
      %v943 = vunpack.c.l.b16 %v283
      %v944 = vunpack.c.l.b16 %v284
      %v945 = vunpack.c.l.b16 %v285
      %v946 = vunpack.c.l.b16 %v286
      %v947 = vunpack.c.l.b16 %v287
      %v948 = vunpack.c.l.b16 %v288
      %v949 = vunpack.c.l.b16 %v289
      %v950 = vunpack.c.l.b16 %v290
      %v951 = vunpack.c.l.b16 %v291
      %v952 = vunpack.c.l.b16 %v292
      %v953 = vunpack.c.l.b16 %v293
      %v954 = vunpack.c.l.b16 %v294
      %v955 = vunpack.c.l.b16 %v295
      %v956 = vunpack.c.l.b16 %v296
      %v957 = vunpack.c.l.b16 %v297
      %v958 = vunpack.c.l.b16 %v298
      %v959 = vunpack.c.l.b16 %v299
      %v960 = vunpack.c.l.b16 %v300
      %v961 = vunpack.c.l.b16 %v301
      %v962 = vunpack.c.l.b16 %v302
      %v963 = vunpack.c.l.b16 %v303
      %v964 = vunpack.c.l.b16 %v304
      %v965 = vunpack.c.l.b16 %v305
      %v966 = vunpack.c.l.b16 %v306
      %v967 = vunpack.c.l.b16 %v307
      %v968 = vunpack.c.l.b16 %v308
      %v969 = vunpack.c.l.b16 %v309
      %v970 = vunpack.c.l.b16 %v310
      %v971 = vunpack.c.l.b16 %v311
      %v972 = vunpack.c.l.b16 %v312
      %v973 = vunpack.c.l.b16 %v313
      %v974 = vunpack.c.l.b16 %v314
      %v975 = vunpack.c.l.b16 %v315
      %v976 = vunpack.c.l.b16 %v316
      %v977 = vunpack.c.l.b16 %v317
      %v978 = vunpack.c.l.b16 %v318
      %v979 = vunpack.c.l.b16 %v319
      %v980 = vunpack.c.l.b16 %v320
      %v981 = vunpack.c.l.b16 %v321
      %v982 = vunpack.c.l.b16 %v322
      %v983 = vunpack.c.l.b16 %v323
      %v984 = vunpack.c.l.b16 %v324
      %v985 = vunpack.c.l.b16 %v325
      %v986 = vunpack.c.l.b16 %v326
      %v987 = vunpack.c.l.b16 %v327
      %v988 = vunpack.c.l.b16 %v328
      %v989 = vunpack.c.l.b16 %v329
      %v990 = vunpack.c.l.b16 %v330
      %v991 = vunpack.c.l.b16 %v331
      %v992 = vunpack.c.l.b16 %v332
      %v993 = vunpack.c.l.b16 %v333
      %v994 = vunpack.c.l.b16 %v334
      %v995 = vunpack.c.l.b16 %v335
      %v996 = vunpack.c.l.b16 %v336
      %v997 = vunpack.c.l.b16 %v337
      %v998 = vunpack.c.l.b16 %v338
      %v999 = vunpack.c.l.b16 %v339
      %v1000 = vunpack.c.l.b16 %v340
      %v1001 = vunpack.c.l.b16 %v341
      %v1002 = vunpack.c.l.b16 %v342
      %v1003 = vunpack.c.l.b16 %v343
      %v1004 = vunpack.c.l.b16 %v344
      %v1005 = vunpack.c.l.b16 %v345
      %v1006 = vunpack.c.l.b16 %v346
      %v1007 = vunpack.c.l.b16 %v347
      %v1008 = vunpack.c.l.b16 %v348
      %v1009 = vunpack.c.l.b16 %v349
      %v1010 = vunpack.c.l.b16 %v350
      %v1011 = vunpack.c.l.b16 %v351
      %v1012 = vunpack.c.l.b16 %v352
      %v1013 = vunpack.c.l.b16 %v353
      %v1014 = vunpack.c.l.b16 %v354
      %v1015 = vunpack.c.l.b16 %v355
      %v1016 = vunpack.c.l.b16 %v356
      %v1017 = vunpack.c.l.b16 %v357
      %v1018 = vunpack.c.l.b16 %v358
      %v1019 = vunpack.c.l.b16 %v359
      %v1020 = vunpack.c.l.b16 %v360
      %v1021 = vunpack.c.l.b16 %v361
      %v1022 = vunpack.c.l.b16 %v362
      %v1023 = vunpack.c.l.b16 %v363
      %v1024 = vunpack.c.l.b16 %v364
      %v1025 = vunpack.c.l.b16 %v365
      %v1026 = vunpack.c.l.b16 %v366
      %v1027 = vunpack.c.l.b16 %v367
      %v1028 = vunpack.c.l.b16 %v368
      %v1029 = vunpack.c.l.b16 %v369
      %v1030 = vunpack.c.l.b16 %v370
      %v1031 = vunpack.c.l.b16 %v371
      %v1032 = vunpack.c.l.b16 %v372
      %v1033 = vunpack.c.l.b16 %v373
      %v1034 = vunpack.c.l.b16 %v374
      %v1035 = vunpack.c.l.b16 %v375
      %v1036 = vunpack.c.l.b16 %v376
      %v1037 = vunpack.c.l.b16 %v377
      %v1038 = vunpack.c.l.b16 %v378
      %v1039 = vunpack.c.l.b16 %v379
      %v1040 = vunpack.c.l.b16 %v380
      %v1041 = vunpack.c.l.b16 %v381
      %v1042 = vunpack.c.l.b16 %v382
      %v1043 = vunpack.c.l.b16 %v383
      %v1044 = vunpack.c.l.b16 %v384
      %v1045 = vunpack.c.l.b16 %v385
      %v1046 = vunpack.c.l.b16 %v386
      %v1047 = vunpack.c.l.b16 %v387
      %v1048 = vunpack.c.l.b16 %v388
      %v1049 = vunpack.c.l.b16 %v389
      %v1050 = vunpack.c.l.b16 %v390
      %v1051 = vunpack.c.l.b16 %v391
      %v1052 = vunpack.c.l.b16 %v392
      %v1053 = vunpack.c.l.b16 %v393
      %v1054 = vunpack.c.l.b16 %v394
      %v1055 = vunpack.c.l.b16 %v395
      %v1056 = vunpack.c.l.b16 %v396
      %v1057 = vunpack.c.l.b16 %v397
      %v1058 = vunpack.c.l.b16 %v398
      %v1059 = vunpack.c.l.b16 %v399
      %v1060 = vunpack.c.l.b16 %v400
      %v1061 = vpack.c.b16 %v918, %v917
      %v1062 = vpack.c.b16 %v920, %v919
      %v1063 = vpack.c.b16 %v922, %v921
      %v1064 = vpack.c.b16 %v924, %v923
      %v1065 = vpack.c.b16 %v926, %v925
      %v1066 = vpack.c.b16 %v928, %v927
      %v1067 = vpack.c.b16 %v930, %v929
      %v1068 = vpack.c.b16 %v932, %v931
      %v1069 = vpack.c.b16 %v934, %v933
      %v1070 = vpack.c.b16 %v936, %v935
      %v1071 = vpack.c.b16 %v938, %v937
      %v1072 = vpack.c.b16 %v940, %v939
      %v1073 = vpack.c.b16 %v942, %v941
      %v1074 = vpack.c.b16 %v944, %v943
      %v1075 = vpack.c.b16 %v946, %v945
      %v1076 = vpack.c.b16 %v948, %v947
      %v1077 = vpack.c.b16 %v950, %v949
      %v1078 = vpack.c.b16 %v952, %v951
      %v1079 = vpack.c.b16 %v954, %v953
      %v1080 = vpack.c.b16 %v956, %v955
      %v1081 = vpack.c.b16 %v958, %v957
      %v1082 = vpack.c.b16 %v960, %v959
      %v1083 = vpack.c.b16 %v962, %v961
      %v1084 = vpack.c.b16 %v964, %v963
      %v1085 = vpack.c.b16 %v966, %v965
      %v1086 = vpack.c.b16 %v968, %v967
      %v1087 = vpack.c.b16 %v970, %v969
      %v1088 = vpack.c.b16 %v972, %v971
      %v1089 = vpack.c.b16 %v974, %v973
      %v1090 = vpack.c.b16 %v976, %v975
      %v1091 = vpack.c.b16 %v978, %v977
      %v1092 = vpack.c.b16 %v980, %v979
      %v1093 = vpack.c.b16 %v982, %v981
      %v1094 = vpack.c.b16 %v984, %v983
      %v1095 = vpack.c.b16 %v986, %v985
      %v1096 = vpack.c.b16 %v988, %v987
      %v1097 = vpack.c.b16 %v990, %v989
      %v1098 = vpack.c.b16 %v992, %v991
      %v1099 = vpack.c.b16 %v994, %v993
      %v1100 = vpack.c.b16 %v996, %v995
      %v1101 = vpack.c.b16 %v998, %v997
      %v1102 = vpack.c.b16 %v1000, %v999
      %v1103 = vpack.c.b16 %v1002, %v1001
      %v1104 = vpack.c.b16 %v1004, %v1003
      %v1105 = vpack.c.b16 %v1006, %v1005
      %v1106 = vpack.c.b16 %v1008, %v1007
      %v1107 = vpack.c.b16 %v1010, %v1009
      %v1108 = vpack.c.b16 %v1012, %v1011
      %v1109 = vpack.c.b16 %v1014, %v1013
      %v1110 = vpack.c.b16 %v1016, %v1015
      %v1111 = vpack.c.b16 %v1018, %v1017
      %v1112 = vpack.c.b16 %v1020, %v1019
      %v1113 = vpack.c.b16 %v1022, %v1021
      %v1114 = vpack.c.b16 %v1024, %v1023
      %v1115 = vpack.c.b16 %v1026, %v1025
      %v1116 = vpack.c.b16 %v1028, %v1027
      %v1117 = vpack.c.b16 %v1030, %v1029
      %v1118 = vpack.c.b16 %v1032, %v1031
      %v1119 = vpack.c.b16 %v1034, %v1033
      %v1120 = vpack.c.b16 %v1036, %v1035
      %v1121 = vpack.c.b16 %v1038, %v1037
      %v1122 = vpack.c.b16 %v1040, %v1039
      %v1123 = vpack.c.b16 %v1042, %v1041
      %v1124 = vpack.c.b16 %v1044, %v1043
      %v1125 = vpack.c.b16 %v1046, %v1045
      %v1126 = vpack.c.b16 %v1048, %v1047
      %v1127 = vpack.c.b16 %v1050, %v1049
      %v1128 = vpack.c.b16 %v1052, %v1051
      %v1129 = vpack.c.b16 %v1054, %v1053
      %v1130 = vpack.c.b16 %v1056, %v1055
      %v1131 = vpack.c.b16 %v1058, %v1057
      %v1132 = vpack.c.b16 %v1060, %v1059
      %1205 = vmatpush.bf16.msra.mxu0 %v1068
      %1206 = vmatpush.bf16.msra.mxu0 %v1067
      %1207 = vmatpush.bf16.msra.mxu0 %v1066
      %1208 = vmatpush.bf16.msra.mxu0 %v1065
      %1209 = vmatpush.bf16.msra.mxu0 %v1064
      %1210 = vmatpush.bf16.msra.mxu0 %v1063
      %1211 = vmatpush.bf16.msra.mxu0 %v1062
      %1212 = vmatpush.bf16.msra.mxu0 %v1061
      %1213 = vmatmul.bf16.gmra.mxu0 %v629
      %v1214 = vpop.f32.mrf.mxu0
      %v1215 = vadd.f32 %v403, %v1214
      %v1216 = vpop.f32.mrf.mxu0
      %v1217 = vadd.f32 %v403, %v1216
      %1218 = vmatmul.bf16.gmra.mxu0 %v638
      %v1219 = vpop.f32.mrf.mxu0
      %v1220 = vadd.f32 %v403, %v1219
      %v1221 = vpop.f32.mrf.mxu0
      %v1222 = vadd.f32 %v403, %v1221
      %1223 = vmatmul.bf16.gmra.mxu0 %v647
      %v1224 = vpop.f32.mrf.mxu0
      %v1225 = vadd.f32 %v403, %v1224
      %v1226 = vpop.f32.mrf.mxu0
      %v1227 = vadd.f32 %v403, %v1226
      %1228 = vmatmul.bf16.gmra.mxu0 %v656
      %v1229 = vpop.f32.mrf.mxu0
      %v1230 = vadd.f32 %v403, %v1229
      %v1231 = vpop.f32.mrf.mxu0
      %v1232 = vadd.f32 %v403, %v1231
      %1233 = vmatmul.bf16.gmra.mxu0 %v665
      %v1234 = vpop.f32.mrf.mxu0
      %v1235 = vadd.f32 %v403, %v1234
      %v1236 = vpop.f32.mrf.mxu0
      %v1237 = vadd.f32 %v403, %v1236
      %1238 = vmatmul.bf16.gmra.mxu0 %v674
      %v1239 = vpop.f32.mrf.mxu0
      %v1240 = vadd.f32 %v403, %v1239
      %v1241 = vpop.f32.mrf.mxu0
      %v1242 = vadd.f32 %v403, %v1241
      %1243 = vmatmul.bf16.gmra.mxu0 %v683
      %v1244 = vpop.f32.mrf.mxu0
      %v1245 = vadd.f32 %v403, %v1244
      %v1246 = vpop.f32.mrf.mxu0
      %v1247 = vadd.f32 %v403, %v1246
      %1248 = vmatmul.bf16.gmra.mxu0 %v692
      %v1249 = vpop.f32.mrf.mxu0
      %v1250 = vadd.f32 %v403, %v1249
      %v1251 = vpop.f32.mrf.mxu0
      %v1252 = vadd.f32 %v403, %v1251
      %1253 = vdwg.mxu0
      %1254 = vmatpush.bf16.msra.mxu0 %v1076
      %1255 = vmatpush.bf16.msra.mxu0 %v1075
      %1256 = vmatpush.bf16.msra.mxu0 %v1074
      %1257 = vmatpush.bf16.msra.mxu0 %v1073
      %1258 = vmatpush.bf16.msra.mxu0 %v1072
      %1259 = vmatpush.bf16.msra.mxu0 %v1071
      %1260 = vmatpush.bf16.msra.mxu0 %v1070
      %1261 = vmatpush.bf16.msra.mxu0 %v1069
      %1262 = vmatmul.bf16.gmra.mxu0 %v630
      %v1263 = vpop.f32.mrf.mxu0
      %v1264 = vadd.f32 %v1215, %v1263
      %v1265 = vpop.f32.mrf.mxu0
      %v1266 = vadd.f32 %v1217, %v1265
      %1267 = vmatmul.bf16.gmra.mxu0 %v639
      %v1268 = vpop.f32.mrf.mxu0
      %v1269 = vadd.f32 %v1220, %v1268
      %v1270 = vpop.f32.mrf.mxu0
      %v1271 = vadd.f32 %v1222, %v1270
      %1272 = vmatmul.bf16.gmra.mxu0 %v648
      %v1273 = vpop.f32.mrf.mxu0
      %v1274 = vadd.f32 %v1225, %v1273
      %v1275 = vpop.f32.mrf.mxu0
      %v1276 = vadd.f32 %v1227, %v1275
      %1277 = vmatmul.bf16.gmra.mxu0 %v657
      %v1278 = vpop.f32.mrf.mxu0
      %v1279 = vadd.f32 %v1230, %v1278
      %v1280 = vpop.f32.mrf.mxu0
      %v1281 = vadd.f32 %v1232, %v1280
      %1282 = vmatmul.bf16.gmra.mxu0 %v666
      %v1283 = vpop.f32.mrf.mxu0
      %v1284 = vadd.f32 %v1235, %v1283
      %v1285 = vpop.f32.mrf.mxu0
      %v1286 = vadd.f32 %v1237, %v1285
      %1287 = vmatmul.bf16.gmra.mxu0 %v675
      %v1288 = vpop.f32.mrf.mxu0
      %v1289 = vadd.f32 %v1240, %v1288
      %v1290 = vpop.f32.mrf.mxu0
      %v1291 = vadd.f32 %v1242, %v1290
      %1292 = vmatmul.bf16.gmra.mxu0 %v684
      %v1293 = vpop.f32.mrf.mxu0
      %v1294 = vadd.f32 %v1245, %v1293
      %v1295 = vpop.f32.mrf.mxu0
      %v1296 = vadd.f32 %v1247, %v1295
      %1297 = vmatmul.bf16.gmra.mxu0 %v693
      %v1298 = vpop.f32.mrf.mxu0
      %v1299 = vadd.f32 %v1250, %v1298
      %v1300 = vpop.f32.mrf.mxu0
      %v1301 = vadd.f32 %v1252, %v1300
      %1302 = vdwg.mxu0
      %1303 = vmatpush.bf16.msra.mxu0 %v1084
      %1304 = vmatpush.bf16.msra.mxu0 %v1083
      %1305 = vmatpush.bf16.msra.mxu0 %v1082
      %1306 = vmatpush.bf16.msra.mxu0 %v1081
      %1307 = vmatpush.bf16.msra.mxu0 %v1080
      %1308 = vmatpush.bf16.msra.mxu0 %v1079
      %1309 = vmatpush.bf16.msra.mxu0 %v1078
      %1310 = vmatpush.bf16.msra.mxu0 %v1077
      %1311 = vmatmul.bf16.gmra.mxu0 %v631
      %v1312 = vpop.f32.mrf.mxu0
      %v1313 = vadd.f32 %v1264, %v1312
      %v1314 = vpop.f32.mrf.mxu0
      %v1315 = vadd.f32 %v1266, %v1314
      %1316 = vmatmul.bf16.gmra.mxu0 %v640
      %v1317 = vpop.f32.mrf.mxu0
      %v1318 = vadd.f32 %v1269, %v1317
      %v1319 = vpop.f32.mrf.mxu0
      %v1320 = vadd.f32 %v1271, %v1319
      %1321 = vmatmul.bf16.gmra.mxu0 %v649
      %v1322 = vpop.f32.mrf.mxu0
      %v1323 = vadd.f32 %v1274, %v1322
      %v1324 = vpop.f32.mrf.mxu0
      %v1325 = vadd.f32 %v1276, %v1324
      %1326 = vmatmul.bf16.gmra.mxu0 %v658
      %v1327 = vpop.f32.mrf.mxu0
      %v1328 = vadd.f32 %v1279, %v1327
      %v1329 = vpop.f32.mrf.mxu0
      %v1330 = vadd.f32 %v1281, %v1329
      %1331 = vmatmul.bf16.gmra.mxu0 %v667
      %v1332 = vpop.f32.mrf.mxu0
      %v1333 = vadd.f32 %v1284, %v1332
      %v1334 = vpop.f32.mrf.mxu0
      %v1335 = vadd.f32 %v1286, %v1334
      %1336 = vmatmul.bf16.gmra.mxu0 %v676
      %v1337 = vpop.f32.mrf.mxu0
      %v1338 = vadd.f32 %v1289, %v1337
      %v1339 = vpop.f32.mrf.mxu0
      %v1340 = vadd.f32 %v1291, %v1339
      %1341 = vmatmul.bf16.gmra.mxu0 %v685
      %v1342 = vpop.f32.mrf.mxu0
      %v1343 = vadd.f32 %v1294, %v1342
      %v1344 = vpop.f32.mrf.mxu0
      %v1345 = vadd.f32 %v1296, %v1344
      %1346 = vmatmul.bf16.gmra.mxu0 %v694
      %v1347 = vpop.f32.mrf.mxu0
      %v1348 = vadd.f32 %v1299, %v1347
      %v1349 = vpop.f32.mrf.mxu0
      %v1350 = vadd.f32 %v1301, %v1349
      %1351 = vdwg.mxu0
      %1352 = vmatpush.bf16.msra.mxu0 %v1092
      %1353 = vmatpush.bf16.msra.mxu0 %v1091
      %1354 = vmatpush.bf16.msra.mxu0 %v1090
      %1355 = vmatpush.bf16.msra.mxu0 %v1089
      %1356 = vmatpush.bf16.msra.mxu0 %v1088
      %1357 = vmatpush.bf16.msra.mxu0 %v1087
      %1358 = vmatpush.bf16.msra.mxu0 %v1086
      %1359 = vmatpush.bf16.msra.mxu0 %v1085
      %1360 = vmatmul.bf16.gmra.mxu0 %v632
      %v1361 = vpop.f32.mrf.mxu0
      %v1362 = vadd.f32 %v1313, %v1361
      %v1363 = vpop.f32.mrf.mxu0
      %v1364 = vadd.f32 %v1315, %v1363
      %1365 = vmatmul.bf16.gmra.mxu0 %v641
      %v1366 = vpop.f32.mrf.mxu0
      %v1367 = vadd.f32 %v1318, %v1366
      %v1368 = vpop.f32.mrf.mxu0
      %v1369 = vadd.f32 %v1320, %v1368
      %1370 = vmatmul.bf16.gmra.mxu0 %v650
      %v1371 = vpop.f32.mrf.mxu0
      %v1372 = vadd.f32 %v1323, %v1371
      %v1373 = vpop.f32.mrf.mxu0
      %v1374 = vadd.f32 %v1325, %v1373
      %1375 = vmatmul.bf16.gmra.mxu0 %v659
      %v1376 = vpop.f32.mrf.mxu0
      %v1377 = vadd.f32 %v1328, %v1376
      %v1378 = vpop.f32.mrf.mxu0
      %v1379 = vadd.f32 %v1330, %v1378
      %1380 = vmatmul.bf16.gmra.mxu0 %v668
      %v1381 = vpop.f32.mrf.mxu0
      %v1382 = vadd.f32 %v1333, %v1381
      %v1383 = vpop.f32.mrf.mxu0
      %v1384 = vadd.f32 %v1335, %v1383
      %1385 = vmatmul.bf16.gmra.mxu0 %v677
      %v1386 = vpop.f32.mrf.mxu0
      %v1387 = vadd.f32 %v1338, %v1386
      %v1388 = vpop.f32.mrf.mxu0
      %v1389 = vadd.f32 %v1340, %v1388
      %1390 = vmatmul.bf16.gmra.mxu0 %v686
      %v1391 = vpop.f32.mrf.mxu0
      %v1392 = vadd.f32 %v1343, %v1391
      %v1393 = vpop.f32.mrf.mxu0
      %v1394 = vadd.f32 %v1345, %v1393
      %1395 = vmatmul.bf16.gmra.mxu0 %v695
      %v1396 = vpop.f32.mrf.mxu0
      %v1397 = vadd.f32 %v1348, %v1396
      %v1398 = vpop.f32.mrf.mxu0
      %v1399 = vadd.f32 %v1350, %v1398
      %1400 = vdwg.mxu0
      %1401 = vmatpush.bf16.msra.mxu0 %v1100
      %1402 = vmatpush.bf16.msra.mxu0 %v1099
      %1403 = vmatpush.bf16.msra.mxu0 %v1098
      %1404 = vmatpush.bf16.msra.mxu0 %v1097
      %1405 = vmatpush.bf16.msra.mxu0 %v1096
      %1406 = vmatpush.bf16.msra.mxu0 %v1095
      %1407 = vmatpush.bf16.msra.mxu0 %v1094
      %1408 = vmatpush.bf16.msra.mxu0 %v1093
      %1409 = vmatmul.bf16.gmra.mxu0 %v633
      %v1410 = vpop.f32.mrf.mxu0
      %v1411 = vadd.f32 %v1362, %v1410
      %v1412 = vpop.f32.mrf.mxu0
      %v1413 = vadd.f32 %v1364, %v1412
      %1414 = vmatmul.bf16.gmra.mxu0 %v642
      %v1415 = vpop.f32.mrf.mxu0
      %v1416 = vadd.f32 %v1367, %v1415
      %v1417 = vpop.f32.mrf.mxu0
      %v1418 = vadd.f32 %v1369, %v1417
      %1419 = vmatmul.bf16.gmra.mxu0 %v651
      %v1420 = vpop.f32.mrf.mxu0
      %v1421 = vadd.f32 %v1372, %v1420
      %v1422 = vpop.f32.mrf.mxu0
      %v1423 = vadd.f32 %v1374, %v1422
      %1424 = vmatmul.bf16.gmra.mxu0 %v660
      %v1425 = vpop.f32.mrf.mxu0
      %v1426 = vadd.f32 %v1377, %v1425
      %v1427 = vpop.f32.mrf.mxu0
      %v1428 = vadd.f32 %v1379, %v1427
      %1429 = vmatmul.bf16.gmra.mxu0 %v669
      %v1430 = vpop.f32.mrf.mxu0
      %v1431 = vadd.f32 %v1382, %v1430
      %v1432 = vpop.f32.mrf.mxu0
      %v1433 = vadd.f32 %v1384, %v1432
      %1434 = vmatmul.bf16.gmra.mxu0 %v678
      %v1435 = vpop.f32.mrf.mxu0
      %v1436 = vadd.f32 %v1387, %v1435
      %v1437 = vpop.f32.mrf.mxu0
      %v1438 = vadd.f32 %v1389, %v1437
      %1439 = vmatmul.bf16.gmra.mxu0 %v687
      %v1440 = vpop.f32.mrf.mxu0
      %v1441 = vadd.f32 %v1392, %v1440
      %v1442 = vpop.f32.mrf.mxu0
      %v1443 = vadd.f32 %v1394, %v1442
      %1444 = vmatmul.bf16.gmra.mxu0 %v696
      %v1445 = vpop.f32.mrf.mxu0
      %v1446 = vadd.f32 %v1397, %v1445
      %v1447 = vpop.f32.mrf.mxu0
      %v1448 = vadd.f32 %v1399, %v1447
      %1449 = vdwg.mxu0
      %1450 = vmatpush.bf16.msra.mxu0 %v1108
      %1451 = vmatpush.bf16.msra.mxu0 %v1107
      %1452 = vmatpush.bf16.msra.mxu0 %v1106
      %1453 = vmatpush.bf16.msra.mxu0 %v1105
      %1454 = vmatpush.bf16.msra.mxu0 %v1104
      %1455 = vmatpush.bf16.msra.mxu0 %v1103
      %1456 = vmatpush.bf16.msra.mxu0 %v1102
      %1457 = vmatpush.bf16.msra.mxu0 %v1101
      %1458 = vmatmul.bf16.gmra.mxu0 %v634
      %v1459 = vpop.f32.mrf.mxu0
      %v1460 = vadd.f32 %v1411, %v1459
      %v1461 = vpop.f32.mrf.mxu0
      %v1462 = vadd.f32 %v1413, %v1461
      %1463 = vmatmul.bf16.gmra.mxu0 %v643
      %v1464 = vpop.f32.mrf.mxu0
      %v1465 = vadd.f32 %v1416, %v1464
      %v1466 = vpop.f32.mrf.mxu0
      %v1467 = vadd.f32 %v1418, %v1466
      %1468 = vmatmul.bf16.gmra.mxu0 %v652
      %v1469 = vpop.f32.mrf.mxu0
      %v1470 = vadd.f32 %v1421, %v1469
      %v1471 = vpop.f32.mrf.mxu0
      %v1472 = vadd.f32 %v1423, %v1471
      %1473 = vmatmul.bf16.gmra.mxu0 %v661
      %v1474 = vpop.f32.mrf.mxu0
      %v1475 = vadd.f32 %v1426, %v1474
      %v1476 = vpop.f32.mrf.mxu0
      %v1477 = vadd.f32 %v1428, %v1476
      %1478 = vmatmul.bf16.gmra.mxu0 %v670
      %v1479 = vpop.f32.mrf.mxu0
      %v1480 = vadd.f32 %v1431, %v1479
      %v1481 = vpop.f32.mrf.mxu0
      %v1482 = vadd.f32 %v1433, %v1481
      %1483 = vmatmul.bf16.gmra.mxu0 %v679
      %v1484 = vpop.f32.mrf.mxu0
      %v1485 = vadd.f32 %v1436, %v1484
      %v1486 = vpop.f32.mrf.mxu0
      %v1487 = vadd.f32 %v1438, %v1486
      %1488 = vmatmul.bf16.gmra.mxu0 %v688
      %v1489 = vpop.f32.mrf.mxu0
      %v1490 = vadd.f32 %v1441, %v1489
      %v1491 = vpop.f32.mrf.mxu0
      %v1492 = vadd.f32 %v1443, %v1491
      %1493 = vmatmul.bf16.gmra.mxu0 %v697
      %v1494 = vpop.f32.mrf.mxu0
      %v1495 = vadd.f32 %v1446, %v1494
      %v1496 = vpop.f32.mrf.mxu0
      %v1497 = vadd.f32 %v1448, %v1496
      %1498 = vdwg.mxu0
      %1499 = vmatpush.bf16.msra.mxu0 %v1116
      %1500 = vmatpush.bf16.msra.mxu0 %v1115
      %1501 = vmatpush.bf16.msra.mxu0 %v1114
      %1502 = vmatpush.bf16.msra.mxu0 %v1113
      %1503 = vmatpush.bf16.msra.mxu0 %v1112
      %1504 = vmatpush.bf16.msra.mxu0 %v1111
      %1505 = vmatpush.bf16.msra.mxu0 %v1110
      %1506 = vmatpush.bf16.msra.mxu0 %v1109
      %1507 = vmatmul.bf16.gmra.mxu0 %v635
      %v1508 = vpop.f32.mrf.mxu0
      %v1509 = vadd.f32 %v1460, %v1508
      %v1510 = vpop.f32.mrf.mxu0
      %v1511 = vadd.f32 %v1462, %v1510
      %1512 = vmatmul.bf16.gmra.mxu0 %v644
      %v1513 = vpop.f32.mrf.mxu0
      %v1514 = vadd.f32 %v1465, %v1513
      %v1515 = vpop.f32.mrf.mxu0
      %v1516 = vadd.f32 %v1467, %v1515
      %1517 = vmatmul.bf16.gmra.mxu0 %v653
      %v1518 = vpop.f32.mrf.mxu0
      %v1519 = vadd.f32 %v1470, %v1518
      %v1520 = vpop.f32.mrf.mxu0
      %v1521 = vadd.f32 %v1472, %v1520
      %1522 = vmatmul.bf16.gmra.mxu0 %v662
      %v1523 = vpop.f32.mrf.mxu0
      %v1524 = vadd.f32 %v1475, %v1523
      %v1525 = vpop.f32.mrf.mxu0
      %v1526 = vadd.f32 %v1477, %v1525
      %1527 = vmatmul.bf16.gmra.mxu0 %v671
      %v1528 = vpop.f32.mrf.mxu0
      %v1529 = vadd.f32 %v1480, %v1528
      %v1530 = vpop.f32.mrf.mxu0
      %v1531 = vadd.f32 %v1482, %v1530
      %1532 = vmatmul.bf16.gmra.mxu0 %v680
      %v1533 = vpop.f32.mrf.mxu0
      %v1534 = vadd.f32 %v1485, %v1533
      %v1535 = vpop.f32.mrf.mxu0
      %v1536 = vadd.f32 %v1487, %v1535
      %1537 = vmatmul.bf16.gmra.mxu0 %v689
      %v1538 = vpop.f32.mrf.mxu0
      %v1539 = vadd.f32 %v1490, %v1538
      %v1540 = vpop.f32.mrf.mxu0
      %v1541 = vadd.f32 %v1492, %v1540
      %1542 = vmatmul.bf16.gmra.mxu0 %v698
      %v1543 = vpop.f32.mrf.mxu0
      %v1544 = vadd.f32 %v1495, %v1543
      %v1545 = vpop.f32.mrf.mxu0
      %v1546 = vadd.f32 %v1497, %v1545
      %1547 = vdwg.mxu0
      %1548 = vmatpush.bf16.msra.mxu0 %v1124
      %1549 = vmatpush.bf16.msra.mxu0 %v1123
      %1550 = vmatpush.bf16.msra.mxu0 %v1122
      %1551 = vmatpush.bf16.msra.mxu0 %v1121
      %1552 = vmatpush.bf16.msra.mxu0 %v1120
      %1553 = vmatpush.bf16.msra.mxu0 %v1119
      %1554 = vmatpush.bf16.msra.mxu0 %v1118
      %1555 = vmatpush.bf16.msra.mxu0 %v1117
      %1556 = vmatmul.bf16.gmra.mxu0 %v636
      %v1557 = vpop.f32.mrf.mxu0
      %v1558 = vadd.f32 %v1509, %v1557
      %v1559 = vpop.f32.mrf.mxu0
      %v1560 = vadd.f32 %v1511, %v1559
      %1561 = vmatmul.bf16.gmra.mxu0 %v645
      %v1562 = vpop.f32.mrf.mxu0
      %v1563 = vadd.f32 %v1514, %v1562
      %v1564 = vpop.f32.mrf.mxu0
      %v1565 = vadd.f32 %v1516, %v1564
      %1566 = vmatmul.bf16.gmra.mxu0 %v654
      %v1567 = vpop.f32.mrf.mxu0
      %v1568 = vadd.f32 %v1519, %v1567
      %v1569 = vpop.f32.mrf.mxu0
      %v1570 = vadd.f32 %v1521, %v1569
      %1571 = vmatmul.bf16.gmra.mxu0 %v663
      %v1572 = vpop.f32.mrf.mxu0
      %v1573 = vadd.f32 %v1524, %v1572
      %v1574 = vpop.f32.mrf.mxu0
      %v1575 = vadd.f32 %v1526, %v1574
      %1576 = vmatmul.bf16.gmra.mxu0 %v672
      %v1577 = vpop.f32.mrf.mxu0
      %v1578 = vadd.f32 %v1529, %v1577
      %v1579 = vpop.f32.mrf.mxu0
      %v1580 = vadd.f32 %v1531, %v1579
      %1581 = vmatmul.bf16.gmra.mxu0 %v681
      %v1582 = vpop.f32.mrf.mxu0
      %v1583 = vadd.f32 %v1534, %v1582
      %v1584 = vpop.f32.mrf.mxu0
      %v1585 = vadd.f32 %v1536, %v1584
      %1586 = vmatmul.bf16.gmra.mxu0 %v690
      %v1587 = vpop.f32.mrf.mxu0
      %v1588 = vadd.f32 %v1539, %v1587
      %v1589 = vpop.f32.mrf.mxu0
      %v1590 = vadd.f32 %v1541, %v1589
      %1591 = vmatmul.bf16.gmra.mxu0 %v699
      %v1592 = vpop.f32.mrf.mxu0
      %v1593 = vadd.f32 %v1544, %v1592
      %v1594 = vpop.f32.mrf.mxu0
      %v1595 = vadd.f32 %v1546, %v1594
      %1596 = vdwg.mxu0
      %1597 = vmatpush.bf16.msra.mxu0 %v1132
      %1598 = vmatpush.bf16.msra.mxu0 %v1131
      %1599 = vmatpush.bf16.msra.mxu0 %v1130
      %1600 = vmatpush.bf16.msra.mxu0 %v1129
      %1601 = vmatpush.bf16.msra.mxu0 %v1128
      %1602 = vmatpush.bf16.msra.mxu0 %v1127
      %1603 = vmatpush.bf16.msra.mxu0 %v1126
      %1604 = vmatpush.bf16.msra.mxu0 %v1125
      %1605 = vmatmul.bf16.gmra.mxu0 %v637
      %v1606 = vpop.f32.mrf.mxu0
      %v1607 = vadd.f32 %v1558, %v1606
      %v1608 = vpop.f32.mrf.mxu0
      %v1609 = vadd.f32 %v1560, %v1608
      %1610 = vmatmul.bf16.gmra.mxu0 %v646
      %v1611 = vpop.f32.mrf.mxu0
      %v1612 = vadd.f32 %v1563, %v1611
      %v1613 = vpop.f32.mrf.mxu0
      %v1614 = vadd.f32 %v1565, %v1613
      %1615 = vmatmul.bf16.gmra.mxu0 %v655
      %v1616 = vpop.f32.mrf.mxu0
      %v1617 = vadd.f32 %v1568, %v1616
      %v1618 = vpop.f32.mrf.mxu0
      %v1619 = vadd.f32 %v1570, %v1618
      %1620 = vmatmul.bf16.gmra.mxu0 %v664
      %v1621 = vpop.f32.mrf.mxu0
      %v1622 = vadd.f32 %v1573, %v1621
      %v1623 = vpop.f32.mrf.mxu0
      %v1624 = vadd.f32 %v1575, %v1623
      %1625 = vmatmul.bf16.gmra.mxu0 %v673
      %v1626 = vpop.f32.mrf.mxu0
      %v1627 = vadd.f32 %v1578, %v1626
      %v1628 = vpop.f32.mrf.mxu0
      %v1629 = vadd.f32 %v1580, %v1628
      %1630 = vmatmul.bf16.gmra.mxu0 %v682
      %v1631 = vpop.f32.mrf.mxu0
      %v1632 = vadd.f32 %v1583, %v1631
      %v1633 = vpop.f32.mrf.mxu0
      %v1634 = vadd.f32 %v1585, %v1633
      %1635 = vmatmul.bf16.gmra.mxu0 %v691
      %v1636 = vpop.f32.mrf.mxu0
      %v1637 = vadd.f32 %v1588, %v1636
      %v1638 = vpop.f32.mrf.mxu0
      %v1639 = vadd.f32 %v1590, %v1638
      %1640 = vmatmul.bf16.gmra.mxu0 %v700
      %v1641 = vpop.f32.mrf.mxu0
      %v1642 = vadd.f32 %v1593, %v1641
      %v1643 = vpop.f32.mrf.mxu0
      %v1644 = vadd.f32 %v1595, %v1643
      %1645 = vdwg.mxu0
      %v1646 = vmax.f32 %v1607, 0.0
      %v1647 = vmax.f32 %v1609, 0.0
      %v1648 = vmax.f32 %v1612, 0.0
      %v1649 = vmax.f32 %v1614, 0.0
      %v1650 = vmax.f32 %v1617, 0.0
      %v1651 = vmax.f32 %v1619, 0.0
      %v1652 = vmax.f32 %v1622, 0.0
      %v1653 = vmax.f32 %v1624, 0.0
      %v1654 = vmax.f32 %v1627, 0.0
      %v1655 = vmax.f32 %v1629, 0.0
      %v1656 = vmax.f32 %v1632, 0.0
      %v1657 = vmax.f32 %v1634, 0.0
      %v1658 = vmax.f32 %v1637, 0.0
      %v1659 = vmax.f32 %v1639, 0.0
      %v1660 = vmax.f32 %v1642, 0.0
      %v1661 = vmax.f32 %v1644, 0.0
      %v1662 = vpack.c.bf16 %v1646, %v1646
      %v1663 = vpack.c.bf16 %v1647, %v1647
      %v1664 = vpack.c.bf16 %v1648, %v1648
      %v1665 = vpack.c.bf16 %v1649, %v1649
      %v1666 = vpack.c.bf16 %v1650, %v1650
      %v1667 = vpack.c.bf16 %v1651, %v1651
      %v1668 = vpack.c.bf16 %v1652, %v1652
      %v1669 = vpack.c.bf16 %v1653, %v1653
      %v1670 = vpack.c.bf16 %v1654, %v1654
      %v1671 = vpack.c.bf16 %v1655, %v1655
      %v1672 = vpack.c.bf16 %v1656, %v1656
      %v1673 = vpack.c.bf16 %v1657, %v1657
      %v1674 = vpack.c.bf16 %v1658, %v1658
      %v1675 = vpack.c.bf16 %v1659, %v1659
      %v1676 = vpack.c.bf16 %v1660, %v1660
      %v1677 = vpack.c.bf16 %v1661, %v1661
      %1678 = vst [vmem:[%s175] sm:$0xf] %v1662
      %1679 = vst [vmem:[%s175 + $0x4] sm:$0xf] %v1663
      %1680 = vst [vmem:[%s175 + $0x8] sm:$0xf] %v1664
      %1681 = vst [vmem:[%s175 + $0xc] sm:$0xf] %v1665
      %1682 = vst [vmem:[%s175 + $0x10] sm:$0xf] %v1666
      %1683 = vst [vmem:[%s175 + $0x14] sm:$0xf] %v1667
      %1684 = vst [vmem:[%s175 + $0x18] sm:$0xf] %v1668
      %1685 = vst [vmem:[%s175 + $0x1c] sm:$0xf] %v1669
      %1686 = vst [vmem:[%s175 + $0x20] sm:$0xf] %v1670
      %1687 = vst [vmem:[%s175 + $0x24] sm:$0xf] %v1671
      %1688 = vst [vmem:[%s175 + $0x28] sm:$0xf] %v1672
      %1689 = vst [vmem:[%s175 + $0x2c] sm:$0xf] %v1673
      %1690 = vst [vmem:[%s175 + $0x30] sm:$0xf] %v1674
      %1691 = vst [vmem:[%s175 + $0x34] sm:$0xf] %v1675
      %1692 = vst [vmem:[%s175 + $0x38] sm:$0xf] %v1676
      %1693 = vst [vmem:[%s175 + $0x3c] sm:$0xf] %v1677
      %s1694 = smul.u32 16, %s14
      %p1695 = scmp.lt.s32.totalorder %s1694, 31
      %s1696 = scalar_select %p1695, %s1694, 31
      %s1697 = smul.addr %s1696, 4
      %s1698 = scalar_lea.vmem %s3, %s1697
      // Predicated region
      $region33: #{cstr_forward.10} parent=31 // pred_check
        %p1699 = pneg %p100
      $region34: #{cstr_forward.10} parent=31 // pred_check_branch
        %1701 = sbr.rel (%p1699) target = $region36
      $region35: #{cstr_forward.10} parent=31 // pred_region
        %s1702 = smul.u32 16, %s14
      $region36: #{cstr_forward.10} parent=31 // pred_fallthru
        _
    $region32: #{cstr_forward.10} parent=5 // pred_fallthru
      _
    %p1703 = scmp.le.s32.totalorder 2, %s9
    // Predicated region
    $region37: #{cstr_forward.10} parent=5 // pred_check
      %p1704 = pneg %p1703
    $region38: #{cstr_forward.10} parent=5 // pred_check_branch
      %1706 = sbr.rel (%p1704) target = $region40
    $region39: #{cstr_forward.10} parent=5 // pred_region
      %s1707 = ssub.s32 %s9, 2
      // Predicated region
      $region41: #{cstr_forward.10} parent=39 // pred_check
        %p1708 = pneg %p106
      $region42: #{cstr_forward.10} parent=39 // pred_check_branch
        %1710 = sbr.rel (%p1708) target = $region44
      $region43: #{cstr_forward.10} parent=39 // pred_region
        %s1711 = smul.u32 16, %s15
        %p1712 = scmp.lt.s32.totalorder %s1711, 31
        %s1713 = scalar_select %p1712, %s1711, 31
        %s1714 = smul.addr %s1713, 4
        %s1715 = scalar_lea.vmem %s3, %s1714
      $region44: #{cstr_forward.10} parent=39 // pred_fallthru
        _
    $region40: #{cstr_forward.10} parent=5 // pred_fallthru
      _
  $region6: #{cstr_forward.10} parent=0 // loop_footer
    %s13 = sadd.s32 1, %s9
  $region7: #{cstr_forward.10} parent=0 // loop_footer_branch
    %8 = sbr.rel target = $region3
  $region8: #{cstr_forward.10} parent=0 // loop_exit
    _

// kernel: cstr_forward.14
$region0: #{cstr_forward.14}
  #allocation0 [shape = 'u32[]', space=smem, size = 0x4, offset = 0x4, fixed_abs, tag = 'smem constant byte address 0x4 - core index']
  #allocation1 [shape = 'u32[72,128]{1,0:T(1,128)}', space=vmem, size = 0x9000, scoped, tag = 'internal scratch']
  %s0 = inlined_call_operand.vmem [shape: bf16[4,8,8,128], index: 0, kind: input, shape index: {}]
  %s1 = inlined_call_operand.vmem [shape: bf16[8,8,128], index: 1, kind: input, shape index: {}]
  %s2 = inlined_call_operand.vmem [shape: bf16[128,384], index: 2, kind: input, shape index: {}]
  %s3 = inlined_call_operand.vmem [shape: f32[1,8], index: 3, kind: input, shape index: {}]
  %s4 = inlined_call_operand.vmem [shape: bf16[4,8,8,128], index: 4, kind: output, shape index: {}]
  %s5 = sld [smem:[#allocation0]]
  $region49: #{cstr_forward.14} parent=0
    _
  %s7 = ssub.s32 1, %s5
  %s8 = scalar_select 0, %s7, %s5
  loop: start=0, step=1, limit=6
  $region2: #{cstr_forward.14} parent=0 // loop_pre_header
    _
  $region3: #{cstr_forward.14} parent=0 // loop_header
    %s10 = sphi 0, %s14
    %p11 = scmp.ge.s32.totalorder %s10, 6
    %s17 = sphi 0, %s29
    %s18 = sphi 0, %s25
    %s19 = sphi 0, %s17
    %s20 = sphi 0, %s18
    %s21 = sphi 0, %s19
    %s22 = sphi 0, %s20
    %s34 = sphi 0, %s36
    %s37 = sphi 0, %s34
    %s38 = sphi 0, %s37
    %s54 = sphi 0, %s38
    %s60 = sphi 0, %s62
    %s63 = sphi 0, %s60
    %s64 = sphi 0, %s63
    %s80 = sphi 0, %s64
    %s84 = sphi 0, %s84
    %s86 = sphi 0, %s84
    %s87 = sphi 0, %s86
    %s101 = sphi 0, %s87
    %s105 = sphi 0, %s105
    %s107 = sphi 0, %s105
    %s108 = sphi 0, %s107
    %s122 = sphi 0, %s108
    %s130 = sphi 0, %s132
    %s133 = sphi 0, %s130
    %s134 = sphi 0, %s133
    %s150 = sphi 0, %s134
  $region4: #{cstr_forward.14} parent=0 // loop_header_branch
    %13 = sbr.rel (%p11) target = $region8
  $region5: #{cstr_forward.14} parent=0 // loop_body
    %s15 = ssub.s32 %s10, 1
    %s16 = ssub.s32 %s10, 2
    %s23 = sadd.s32 1, %s18
    %p24 = scmp.ge.s32.totalorder %s23, 1
    %s25 = scalar_select %p24, 0, %s23
    %s26 = sadd.s32 1, %s17
    %s27 = scalar_select %p24, %s26, %s17
    %p28 = scmp.ge.s32.totalorder %s27, 4
    %s29 = scalar_select %p28, 0, %s27
    %s30 = ssub.s32 %s17, %s29
    %s31 = ssub.s32 %s18, %s25
    %s32 = sor.u32 %s30, %s31
    %p33 = scmp.eq.s32.totalorder %s32, 0
    %s35 = sadd.s32 %s34, 1
    %s36 = scalar_select %p33, %s34, %s35
    %p39 = pneg %p33
    %p40 = scmp.eq.s32.totalorder %s10, 3
    %p41 = por %p39, %p40
    %p42 = scmp.ne.s32.totalorder %s34, %s37
    %p43 = scmp.eq.s32.totalorder %s10, 0
    %p44 = por %p42, %p43
    %p45 = scmp.ne.s32.totalorder %s34, %s37
    %p46 = scmp.eq.s32.totalorder %s15, 3
    %p47 = por %p45, %p46
    %p48 = scmp.ne.s32.totalorder %s37, %s38
    %p49 = scmp.eq.s32.totalorder %s15, 0
    %p50 = por %p48, %p49
    %p51 = scmp.ne.s32.totalorder %s37, %s38
    %p52 = scmp.eq.s32.totalorder %s16, 3
    %p53 = por %p51, %p52
    %p55 = scmp.ne.s32.totalorder %s38, %s54
    %p56 = scmp.eq.s32.totalorder %s16, 0
    %p57 = por %p55, %p56
    %s58 = ssub.s32 %s18, %s25
    %p59 = scmp.eq.s32.totalorder %s58, 0
    %s61 = sadd.s32 %s60, 1
    %s62 = scalar_select %p59, %s60, %s61
    %p65 = pneg %p59
    %p66 = scmp.eq.s32.totalorder %s10, 3
    %p67 = por %p65, %p66
    %p68 = scmp.ne.s32.totalorder %s60, %s63
    %p69 = scmp.eq.s32.totalorder %s10, 0
    %p70 = por %p68, %p69
    %p71 = scmp.ne.s32.totalorder %s60, %s63
    %p72 = scmp.eq.s32.totalorder %s15, 3
    %p73 = por %p71, %p72
    %p74 = scmp.ne.s32.totalorder %s63, %s64
    %p75 = scmp.eq.s32.totalorder %s15, 0
    %p76 = por %p74, %p75
    %p77 = scmp.ne.s32.totalorder %s63, %s64
    %p78 = scmp.eq.s32.totalorder %s16, 3
    %p79 = por %p77, %p78
    %p81 = scmp.ne.s32.totalorder %s64, %s80
    %p82 = scmp.eq.s32.totalorder %s16, 0
    %p83 = por %p81, %p82
    %s85 = sadd.s32 %s84, 1
    %p88 = scmp.eq.s32.totalorder %s10, 3
    %p89 = scmp.ne.s32.totalorder %s84, %s86
    %p90 = scmp.eq.s32.totalorder %s10, 0
    %p91 = por %p89, %p90
    %p92 = scmp.ne.s32.totalorder %s84, %s86
    %p93 = scmp.eq.s32.totalorder %s15, 3
    %p94 = por %p92, %p93
    %p95 = scmp.ne.s32.totalorder %s86, %s87
    %p96 = scmp.eq.s32.totalorder %s15, 0
    %p97 = por %p95, %p96
    %p98 = scmp.ne.s32.totalorder %s86, %s87
    %p99 = scmp.eq.s32.totalorder %s16, 3
    %p100 = por %p98, %p99
    %p102 = scmp.ne.s32.totalorder %s87, %s101
    %p103 = scmp.eq.s32.totalorder %s16, 0
    %p104 = por %p102, %p103
    %s106 = sadd.s32 %s105, 1
    %p109 = scmp.eq.s32.totalorder %s10, 3
    %p110 = scmp.ne.s32.totalorder %s105, %s107
    %p111 = scmp.eq.s32.totalorder %s10, 0
    %p112 = por %p110, %p111
    %p113 = scmp.ne.s32.totalorder %s105, %s107
    %p114 = scmp.eq.s32.totalorder %s15, 3
    %p115 = por %p113, %p114
    %p116 = scmp.ne.s32.totalorder %s107, %s108
    %p117 = scmp.eq.s32.totalorder %s15, 0
    %p118 = por %p116, %p117
    %p119 = scmp.ne.s32.totalorder %s107, %s108
    %p120 = scmp.eq.s32.totalorder %s16, 3
    %p121 = por %p119, %p120
    %p123 = scmp.ne.s32.totalorder %s108, %s122
    %p124 = scmp.eq.s32.totalorder %s16, 0
    %p125 = por %p123, %p124
    %s126 = ssub.s32 %s17, %s29
    %s127 = ssub.s32 %s18, %s25
    %s128 = sor.u32 %s126, %s127
    %p129 = scmp.eq.s32.totalorder %s128, 0
    %s131 = sadd.s32 %s130, 1
    %s132 = scalar_select %p129, %s130, %s131
    %p135 = pneg %p129
    %p136 = scmp.eq.s32.totalorder %s10, 3
    %p137 = por %p135, %p136
    %p138 = scmp.ne.s32.totalorder %s130, %s133
    %p139 = scmp.eq.s32.totalorder %s10, 0
    %p140 = por %p138, %p139
    %p141 = scmp.ne.s32.totalorder %s130, %s133
    %p142 = scmp.eq.s32.totalorder %s15, 3
    %p143 = por %p141, %p142
    %p144 = scmp.ne.s32.totalorder %s133, %s134
    %p145 = scmp.eq.s32.totalorder %s15, 0
    %p146 = por %p144, %p145
    %p147 = scmp.ne.s32.totalorder %s133, %s134
    %p148 = scmp.eq.s32.totalorder %s16, 3
    %p149 = por %p147, %p148
    %p151 = scmp.ne.s32.totalorder %s134, %s150
    %p152 = scmp.eq.s32.totalorder %s16, 0
    %p153 = por %p151, %p152
    %p154 = scmp.le.s32.totalorder 1, %s10
    %p155 = scmp.lt.s32.totalorder %s10, 5
    %p156 = pnand %p154, %p155
    %p157 = pneg %p156
    // Predicated region
    $region9: #{cstr_forward.14} parent=5 // pred_check
      _
    $region10: #{cstr_forward.14} parent=5 // pred_check_branch
      %159 = sbr.rel (%p156) target = $region12
    $region11: #{cstr_forward.14} parent=5 // pred_region
      %s160 = ssub.s32 %s10, 1
      // Predicated region
      $region13: #{cstr_forward.14} parent=11 // pred_check
        %p161 = pneg %p76
      $region14: #{cstr_forward.14} parent=11 // pred_check_branch
        %163 = sbr.rel (%p161) target = $region16
      $region15: #{cstr_forward.14} parent=11 // pred_region
        %s164 = smul.u32 8, %s20
        %p165 = scmp.lt.s32.totalorder %s164, 7
        %s166 = scalar_select %p165, %s164, 7
        %s167 = smul.addr %s166, 4
        %s168 = scalar_lea.vmem %s1, %s167
        %s169 = smul.u32 8, %s20
      $region16: #{cstr_forward.14} parent=11 // pred_fallthru
        _
      // Predicated region
      $region17: #{cstr_forward.14} parent=11 // pred_check
        %p170 = pneg %p97
      $region18: #{cstr_forward.14} parent=11 // pred_check_branch
        %172 = sbr.rel (%p170) target = $region20
      $region19: #{cstr_forward.14} parent=11 // pred_region
        _
      $region20: #{cstr_forward.14} parent=11 // pred_fallthru
        _
      // Predicated region
      $region21: #{cstr_forward.14} parent=11 // pred_check
        %p173 = pneg %p118
      $region22: #{cstr_forward.14} parent=11 // pred_check_branch
        %175 = sbr.rel (%p173) target = $region24
      $region23: #{cstr_forward.14} parent=11 // pred_region
        _
      $region24: #{cstr_forward.14} parent=11 // pred_fallthru
        _
    $region12: #{cstr_forward.14} parent=5 // pred_fallthru
      _
    %p176 = scmp.lt.s32.totalorder %s10, 4
    // Predicated region
    $region25: #{cstr_forward.14} parent=5 // pred_check
      %p177 = pneg %p176
    $region26: #{cstr_forward.14} parent=5 // pred_check_branch
      %179 = sbr.rel (%p177) target = $region28
    $region27: #{cstr_forward.14} parent=5 // pred_region
      // Predicated region
      $region29: #{cstr_forward.14} parent=27 // pred_check
        %p180 = pneg %p44
      $region30: #{cstr_forward.14} parent=27 // pred_check_branch
        %182 = sbr.rel (%p180) target = $region32
      $region31: #{cstr_forward.14} parent=27 // pred_region
        %s183 = smul.u32 8, %s18
        %p184 = scmp.lt.s32.totalorder %s17, 3
        %s185 = scalar_select %p184, %s17, 3
        %p186 = scmp.lt.s32.totalorder %s183, 7
        %s187 = scalar_select %p186, %s183, 7
        %s188 = smul.addr %s185, 8
        %s189 = sadd.s32 %s187, %s188
        %s190 = smul.addr %s189, 4
        %s191 = scalar_lea.vmem %s0, %s190
        %s192 = smul.u32 8, %s18
      $region32: #{cstr_forward.14} parent=27 // pred_fallthru
        _
    $region28: #{cstr_forward.14} parent=5 // pred_fallthru
      _
    %p193 = scmp.le.s32.totalorder 1, %s10
    %p194 = scmp.lt.s32.totalorder %s10, 5
    %p195 = pnand %p193, %p194
    %p196 = pneg %p195
    // Predicated region
    $region33: #{cstr_forward.14} parent=5 // pred_check
      _
    $region34: #{cstr_forward.14} parent=5 // pred_check_branch
      %198 = sbr.rel (%p195) target = $region36
    $region35: #{cstr_forward.14} parent=5 // pred_region
      %s199 = ssub.s32 %s10, 1
      %s200 = smul.u32 8, %s20
      %p201 = scmp.lt.s32.totalorder %s19, 3
      %s202 = scalar_select %p201, %s19, 3
      %p203 = scmp.lt.s32.totalorder %s200, 7
      %s204 = scalar_select %p203, %s200, 7
      %s205 = smul.addr %s202, 8
      %s206 = sadd.s32 %s204, %s205
      %s207 = smul.addr %s206, 4
      %s208 = scalar_lea.vmem %s0, %s207
      %p209 = pneg %p50
      %p210 = pneg %p47
      %s211 = smul.u32 8, %s20
      %p212 = scmp.lt.s32.totalorder %s211, 7
      %s213 = scalar_select %p212, %s211, 7
      %s214 = smul.addr %s213, 4
      %s215 = scalar_lea.vmem %s1, %s214
      %p216 = pneg %p76
      %p217 = pneg %p73
      %p218 = pneg %p97
      %p219 = pneg %p94
      %p220 = pneg %p118
      %p221 = pneg %p115
      %p222 = pneg %p146
      %p223 = pneg %p143
      %s224 = smul.u32 8, %s20
      %p225 = scmp.lt.s32.totalorder %s19, 3
      %s226 = scalar_select %p225, %s19, 3
      %p227 = scmp.lt.s32.totalorder %s224, 7
      %s228 = scalar_select %p227, %s224, 7
      %s229 = smul.addr %s226, 8
      %s230 = sadd.s32 %s228, %s229
      %s231 = smul.addr %s230, 4
      %s232 = scalar_lea.vmem %s4, %s231
      %s233 = smul.u32 8, %s20
      %p234 = scmp.lt.s32.totalorder %s19, 3
      %s235 = scalar_select %p234, %s19, 3
      %p236 = scmp.lt.s32.totalorder %s233, 7
      %s237 = scalar_select %p236, %s233, 7
      %s238 = smul.addr %s235, 8
      %s239 = sadd.s32 %s237, %s238
      %s240 = smul.addr %s239, 4
      %s241 = scalar_lea.vmem %s0, %s240
      %s242 = smul.u32 8, %s20
      %s243 = smul.u32 8, %s20
      %p244 = scmp.lt.s32.totalorder %s243, 7
      %s245 = scalar_select %p244, %s243, 7
      %s246 = smul.addr %s245, 4
      %s247 = scalar_lea.vmem %s1, %s246
      %s248 = smul.u32 8, %s20
      %s249 = smul.u32 8, %s20
      %p250 = scmp.lt.s32.totalorder %s19, 3
      %s251 = scalar_select %p250, %s19, 3
      %p252 = scmp.lt.s32.totalorder %s249, 7
      %s253 = scalar_select %p252, %s249, 7
      %s254 = smul.addr %s251, 8
      %s255 = sadd.s32 %s253, %s254
      %s256 = smul.addr %s255, 4
      %s257 = scalar_lea.vmem %s4, %s256
      %s258 = smul.u32 8, %s20
      %v260 = vld [vmem:[%s241] sm:$0xf]
      %v261 = vld [vmem:[%s241 + $0x4] sm:$0xf]
      %v262 = vld [vmem:[%s241 + $0x8] sm:$0xf]
      %v263 = vld [vmem:[%s241 + $0xc] sm:$0xf]
      %v264 = vld [vmem:[%s241 + $0x10] sm:$0xf]
      %v265 = vld [vmem:[%s241 + $0x14] sm:$0xf]
      %v266 = vld [vmem:[%s241 + $0x18] sm:$0xf]
      %v267 = vld [vmem:[%s241 + $0x1c] sm:$0xf]
      %v268 = vld [vmem:[%s247] sm:$0xf]
      %v269 = vld [vmem:[%s247 + $0x4] sm:$0xf]
      %v270 = vld [vmem:[%s247 + $0x8] sm:$0xf]
      %v271 = vld [vmem:[%s247 + $0xc] sm:$0xf]
      %v272 = vld [vmem:[%s247 + $0x10] sm:$0xf]
      %v273 = vld [vmem:[%s247 + $0x14] sm:$0xf]
      %v274 = vld [vmem:[%s247 + $0x18] sm:$0xf]
      %v275 = vld [vmem:[%s247 + $0x1c] sm:$0xf]
      %v276 = vunpack.c.l.bf16 %v260
      %v277 = vunpack.c.l.bf16 %v261
      %v278 = vunpack.c.l.bf16 %v262
      %v279 = vunpack.c.l.bf16 %v263
      %v280 = vunpack.c.l.bf16 %v264
      %v281 = vunpack.c.l.bf16 %v265
      %v282 = vunpack.c.l.bf16 %v266
      %v283 = vunpack.c.l.bf16 %v267
      %v284 = vunpack.c.l.bf16 %v268
      %v285 = vunpack.c.l.bf16 %v269
      %v286 = vunpack.c.l.bf16 %v270
      %v287 = vunpack.c.l.bf16 %v271
      %v288 = vunpack.c.l.bf16 %v272
      %v289 = vunpack.c.l.bf16 %v273
      %v290 = vunpack.c.l.bf16 %v274
      %v291 = vunpack.c.l.bf16 %v275
      %v292 = vadd.f32 %v276, %v284
      %v293 = vadd.f32 %v277, %v285
      %v294 = vadd.f32 %v278, %v286
      %v295 = vadd.f32 %v279, %v287
      %v296 = vadd.f32 %v280, %v288
      %v297 = vadd.f32 %v281, %v289
      %v298 = vadd.f32 %v282, %v290
      %v299 = vadd.f32 %v283, %v291
      %v300 = vpack.c.bf16 %v292, %v292
      %v301 = vpack.c.bf16 %v293, %v293
      %v302 = vpack.c.bf16 %v294, %v294
      %v303 = vpack.c.bf16 %v295, %v295
      %v304 = vpack.c.bf16 %v296, %v296
      %v305 = vpack.c.bf16 %v297, %v297
      %v306 = vpack.c.bf16 %v298, %v298
      %v307 = vpack.c.bf16 %v299, %v299
      %v308 = vld [vmem:[%s2] sm:$0xff]
      %v309 = vld [vmem:[%s2 + $0x8] sm:$0xf]
      %v310 = vld [vmem:[%s2 + $0xc] sm:$0xff]
      %v311 = vld [vmem:[%s2 + $0x14] sm:$0xf]
      %v312 = vld [vmem:[%s2 + $0x18] sm:$0xff]
      %v313 = vld [vmem:[%s2 + $0x20] sm:$0xf]
      %v314 = vld [vmem:[%s2 + $0x24] sm:$0xff]
      %v315 = vld [vmem:[%s2 + $0x2c] sm:$0xf]
      %v316 = vld [vmem:[%s2 + $0x30] sm:$0xff]
      %v317 = vld [vmem:[%s2 + $0x38] sm:$0xf]
      %v318 = vld [vmem:[%s2 + $0x3c] sm:$0xff]
      %v319 = vld [vmem:[%s2 + $0x44] sm:$0xf]
      %v320 = vld [vmem:[%s2 + $0x48] sm:$0xff]
      %v321 = vld [vmem:[%s2 + $0x50] sm:$0xf]
      %v322 = vld [vmem:[%s2 + $0x54] sm:$0xff]
      %v323 = vld [vmem:[%s2 + $0x5c] sm:$0xf]
      %v324 = vld [vmem:[%s2 + $0x60] sm:$0xff]
      %v325 = vld [vmem:[%s2 + $0x68] sm:$0xf]
      %v326 = vld [vmem:[%s2 + $0x6c] sm:$0xff]
      %v327 = vld [vmem:[%s2 + $0x74] sm:$0xf]
      %v328 = vld [vmem:[%s2 + $0x78] sm:$0xff]
      %v329 = vld [vmem:[%s2 + $0x80] sm:$0xf]
      %v330 = vld [vmem:[%s2 + $0x84] sm:$0xff]
      %v331 = vld [vmem:[%s2 + $0x8c] sm:$0xf]
      %v332 = vld [vmem:[%s2 + $0x90] sm:$0xff]
      %v333 = vld [vmem:[%s2 + $0x98] sm:$0xf]
      %v334 = vld [vmem:[%s2 + $0x9c] sm:$0xff]
      %v335 = vld [vmem:[%s2 + $0xa4] sm:$0xf]
      %v336 = vld [vmem:[%s2 + $0xa8] sm:$0xff]
      %v337 = vld [vmem:[%s2 + $0xb0] sm:$0xf]
      %v338 = vld [vmem:[%s2 + $0xb4] sm:$0xff]
      %v339 = vld [vmem:[%s2 + $0xbc] sm:$0xf]
      %v348 = vunpack.c.l.b16 %v300
      %v349 = vunpack.c.l.b16 %v301
      %v350 = vunpack.c.l.b16 %v302
      %v351 = vunpack.c.l.b16 %v303
      %v352 = vunpack.c.l.b16 %v304
      %v353 = vunpack.c.l.b16 %v305
      %v354 = vunpack.c.l.b16 %v306
      %v355 = vunpack.c.l.b16 %v307
      %v356 = vpack.c.b16 %v349, %v348
      %v357 = vpack.c.b16 %v351, %v350
      %v358 = vpack.c.b16 %v353, %v352
      %v359 = vpack.c.b16 %v355, %v354
      %v396 = vunpack.c.l.b16 %v308
      %v397 = vunpack.c.h.b16 %v308
      %v398 = vunpack.c.l.b16 %v309
      %v399 = vunpack.c.l.b16 %v310
      %v400 = vunpack.c.h.b16 %v310
      %v401 = vunpack.c.l.b16 %v311
      %v402 = vunpack.c.l.b16 %v312
      %v403 = vunpack.c.h.b16 %v312
      %v404 = vunpack.c.l.b16 %v313
      %v405 = vunpack.c.l.b16 %v314
      %v406 = vunpack.c.h.b16 %v314
      %v407 = vunpack.c.l.b16 %v315
      %v408 = vunpack.c.l.b16 %v316
      %v409 = vunpack.c.h.b16 %v316
      %v410 = vunpack.c.l.b16 %v317
      %v411 = vunpack.c.l.b16 %v318
      %v412 = vunpack.c.h.b16 %v318
      %v413 = vunpack.c.l.b16 %v319
      %v414 = vunpack.c.l.b16 %v320
      %v415 = vunpack.c.h.b16 %v320
      %v416 = vunpack.c.l.b16 %v321
      %v417 = vunpack.c.l.b16 %v322
      %v418 = vunpack.c.h.b16 %v322
      %v419 = vunpack.c.l.b16 %v323
      %v420 = vunpack.c.l.b16 %v324
      %v421 = vunpack.c.h.b16 %v324
      %v422 = vunpack.c.l.b16 %v325
      %v423 = vunpack.c.l.b16 %v326
      %v424 = vunpack.c.h.b16 %v326
      %v425 = vunpack.c.l.b16 %v327
      %v426 = vunpack.c.l.b16 %v328
      %v427 = vunpack.c.h.b16 %v328
      %v428 = vunpack.c.l.b16 %v329
      %v429 = vunpack.c.l.b16 %v330
      %v430 = vunpack.c.h.b16 %v330
      %v431 = vunpack.c.l.b16 %v331
      %v432 = vunpack.c.l.b16 %v332
      %v433 = vunpack.c.h.b16 %v332
      %v434 = vunpack.c.l.b16 %v333
      %v435 = vunpack.c.l.b16 %v334
      %v436 = vunpack.c.h.b16 %v334
      %v437 = vunpack.c.l.b16 %v335
      %v438 = vunpack.c.l.b16 %v336
      %v439 = vunpack.c.h.b16 %v336
      %v440 = vunpack.c.l.b16 %v337
      %v441 = vunpack.c.l.b16 %v338
      %v442 = vunpack.c.h.b16 %v338
      %v443 = vunpack.c.l.b16 %v339
      %v444 = vpack.c.b16 %v399, %v396
      %v445 = vpack.c.b16 %v400, %v397
      %v446 = vpack.c.b16 %v401, %v398
      %v447 = vpack.c.b16 %v405, %v402
      %v448 = vpack.c.b16 %v406, %v403
      %v449 = vpack.c.b16 %v407, %v404
      %v450 = vpack.c.b16 %v411, %v408
      %v451 = vpack.c.b16 %v412, %v409
      %v452 = vpack.c.b16 %v413, %v410
      %v453 = vpack.c.b16 %v417, %v414
      %v454 = vpack.c.b16 %v418, %v415
      %v455 = vpack.c.b16 %v419, %v416
      %v456 = vpack.c.b16 %v423, %v420
      %v457 = vpack.c.b16 %v424, %v421
      %v458 = vpack.c.b16 %v425, %v422
      %v459 = vpack.c.b16 %v429, %v426
      %v460 = vpack.c.b16 %v430, %v427
      %v461 = vpack.c.b16 %v431, %v428
      %v462 = vpack.c.b16 %v435, %v432
      %v463 = vpack.c.b16 %v436, %v433
      %v464 = vpack.c.b16 %v437, %v434
      %v465 = vpack.c.b16 %v441, %v438
      %v466 = vpack.c.b16 %v442, %v439
      %v467 = vpack.c.b16 %v443, %v440
      %492 = vmatpush.bf16.msra.mxu0 %v465
      %493 = vmatpush.bf16.msra.mxu0 %v462
      %494 = vmatpush.bf16.msra.mxu0 %v459
      %495 = vmatpush.bf16.msra.mxu0 %v456
      %496 = vmatpush.bf16.msra.mxu0 %v453
      %497 = vmatpush.bf16.msra.mxu0 %v450
      %498 = vmatpush.bf16.msra.mxu0 %v447
      %499 = vmatpush.bf16.msra.mxu0 %v444
      %500 = vmatmul.bf16.gmra.mxu0 %v356
      %v501 = vpop.f32.mrf.mxu0
      %v502 = vadd.f32 0.0, %v501
      %v503 = vpop.f32.mrf.mxu0
      %v504 = vadd.f32 0.0, %v503
      %505 = vmatmul.bf16.gmra.mxu0 %v357
      %v506 = vpop.f32.mrf.mxu0
      %v507 = vadd.f32 0.0, %v506
      %v508 = vpop.f32.mrf.mxu0
      %v509 = vadd.f32 0.0, %v508
      %510 = vmatmul.bf16.gmra.mxu0 %v358
      %v511 = vpop.f32.mrf.mxu0
      %v512 = vadd.f32 0.0, %v511
      %v513 = vpop.f32.mrf.mxu0
      %v514 = vadd.f32 0.0, %v513
      %515 = vmatmul.bf16.gmra.mxu0 %v359
      %v516 = vpop.f32.mrf.mxu0
      %v517 = vadd.f32 0.0, %v516
      %v518 = vpop.f32.mrf.mxu0
      %v519 = vadd.f32 0.0, %v518
      %520 = vdwg.mxu0
      %521 = vmatpush.bf16.msra.mxu0 %v466
      %522 = vmatpush.bf16.msra.mxu0 %v463
      %523 = vmatpush.bf16.msra.mxu0 %v460
      %524 = vmatpush.bf16.msra.mxu0 %v457
      %525 = vmatpush.bf16.msra.mxu0 %v454
      %526 = vmatpush.bf16.msra.mxu0 %v451
      %527 = vmatpush.bf16.msra.mxu0 %v448
      %528 = vmatpush.bf16.msra.mxu0 %v445
      %529 = vmatmul.bf16.gmra.mxu0 %v356
      %v530 = vpop.f32.mrf.mxu0
      %v531 = vadd.f32 0.0, %v530
      %v532 = vpop.f32.mrf.mxu0
      %v533 = vadd.f32 0.0, %v532
      %534 = vmatmul.bf16.gmra.mxu0 %v357
      %v535 = vpop.f32.mrf.mxu0
      %v536 = vadd.f32 0.0, %v535
      %v537 = vpop.f32.mrf.mxu0
      %v538 = vadd.f32 0.0, %v537
      %539 = vmatmul.bf16.gmra.mxu0 %v358
      %v540 = vpop.f32.mrf.mxu0
      %v541 = vadd.f32 0.0, %v540
      %v542 = vpop.f32.mrf.mxu0
      %v543 = vadd.f32 0.0, %v542
      %544 = vmatmul.bf16.gmra.mxu0 %v359
      %v545 = vpop.f32.mrf.mxu0
      %v546 = vadd.f32 0.0, %v545
      %v547 = vpop.f32.mrf.mxu0
      %v548 = vadd.f32 0.0, %v547
      %549 = vdwg.mxu0
      %550 = vmatpush.bf16.msra.mxu0 %v467
      %551 = vmatpush.bf16.msra.mxu0 %v464
      %552 = vmatpush.bf16.msra.mxu0 %v461
      %553 = vmatpush.bf16.msra.mxu0 %v458
      %554 = vmatpush.bf16.msra.mxu0 %v455
      %555 = vmatpush.bf16.msra.mxu0 %v452
      %556 = vmatpush.bf16.msra.mxu0 %v449
      %557 = vmatpush.bf16.msra.mxu0 %v446
      %558 = vmatmul.bf16.gmra.mxu0 %v356
      %v559 = vpop.f32.mrf.mxu0
      %v560 = vadd.f32 0.0, %v559
      %v561 = vpop.f32.mrf.mxu0
      %v562 = vadd.f32 0.0, %v561
      %563 = vmatmul.bf16.gmra.mxu0 %v357
      %v564 = vpop.f32.mrf.mxu0
      %v565 = vadd.f32 0.0, %v564
      %v566 = vpop.f32.mrf.mxu0
      %v567 = vadd.f32 0.0, %v566
      %568 = vmatmul.bf16.gmra.mxu0 %v358
      %v569 = vpop.f32.mrf.mxu0
      %v570 = vadd.f32 0.0, %v569
      %v571 = vpop.f32.mrf.mxu0
      %v572 = vadd.f32 0.0, %v571
      %573 = vmatmul.bf16.gmra.mxu0 %v359
      %v574 = vpop.f32.mrf.mxu0
      %v575 = vadd.f32 0.0, %v574
      %v576 = vpop.f32.mrf.mxu0
      %v577 = vadd.f32 0.0, %v576
      %578 = vdwg.mxu0
      %v579 = vpack.c.bf16 %v531, %v502
      %v580 = vpack.c.bf16 %v560, %v560
      %v581 = vpack.c.bf16 %v533, %v504
      %v582 = vpack.c.bf16 %v562, %v562
      %v583 = vpack.c.bf16 %v536, %v507
      %v584 = vpack.c.bf16 %v565, %v565
      %v585 = vpack.c.bf16 %v538, %v509
      %v586 = vpack.c.bf16 %v567, %v567
      %v587 = vpack.c.bf16 %v541, %v512
      %v588 = vpack.c.bf16 %v570, %v570
      %v589 = vpack.c.bf16 %v543, %v514
      %v590 = vpack.c.bf16 %v572, %v572
      %v591 = vpack.c.bf16 %v546, %v517
      %v592 = vpack.c.bf16 %v575, %v575
      %v593 = vpack.c.bf16 %v548, %v519
      %v594 = vpack.c.bf16 %v577, %v577
      %v595 = vld [vmem:[%s3] sm:$0x1]
      %v597 = vperm.slane %v595, 0
      %v600 = vrot.slane %v579, 4
      %602 = vmatpush.bf16.xpose.msra.mxu0 0
      %603 = vmatpush.bf16.xpose.msra.mxu0 0
      %604 = vmatpush.bf16.xpose.msra.mxu0 0
      %605 = vmatpush.bf16.xpose.msra.mxu0 0
      %606 = vmatpush.bf16.xpose.msra.mxu0 0
      %607 = vmatpush.bf16.xpose.msra.mxu0 0
      %608 = vmatpush.bf16.xpose.msra.mxu0 0
      %609 = vmatpush.bf16.xpose.msra.mxu0 %v600
      %610 = vmatmul.bf16.gmra.mxu0 %v579
      %v611 = vpop.f32.mrf.mxu0
      %v612 = vadd.f32 %v597, %v611
      %v613 = vpop.f32.mrf.mxu0
      %614 = vdwg.mxu0
      %v616 = vrot.slane %v581, 4
      %618 = vmatpush.bf16.xpose.msra.mxu0 0
      %619 = vmatpush.bf16.xpose.msra.mxu0 0
      %620 = vmatpush.bf16.xpose.msra.mxu0 0
      %621 = vmatpush.bf16.xpose.msra.mxu0 0
      %622 = vmatpush.bf16.xpose.msra.mxu0 0
      %623 = vmatpush.bf16.xpose.msra.mxu0 0
      %624 = vmatpush.bf16.xpose.msra.mxu0 0
      %625 = vmatpush.bf16.xpose.msra.mxu0 %v616
      %626 = vmatmul.bf16.gmra.mxu0 %v581
      %v627 = vpop.f32.mrf.mxu0
      %v628 = vadd.f32 %v597, %v627
      %v629 = vpop.f32.mrf.mxu0
      %630 = vdwg.mxu0
      %v632 = vrot.slane %v583, 4
      %634 = vmatpush.bf16.xpose.msra.mxu0 0
      %635 = vmatpush.bf16.xpose.msra.mxu0 0
      %636 = vmatpush.bf16.xpose.msra.mxu0 0
      %637 = vmatpush.bf16.xpose.msra.mxu0 0
      %638 = vmatpush.bf16.xpose.msra.mxu0 0
      %639 = vmatpush.bf16.xpose.msra.mxu0 0
      %640 = vmatpush.bf16.xpose.msra.mxu0 0
      %641 = vmatpush.bf16.xpose.msra.mxu0 %v632
      %642 = vmatmul.bf16.gmra.mxu0 %v583
      %v643 = vpop.f32.mrf.mxu0
      %v644 = vadd.f32 %v597, %v643
      %v645 = vpop.f32.mrf.mxu0
      %646 = vdwg.mxu0
      %v648 = vrot.slane %v585, 4
      %650 = vmatpush.bf16.xpose.msra.mxu0 0
      %651 = vmatpush.bf16.xpose.msra.mxu0 0
      %652 = vmatpush.bf16.xpose.msra.mxu0 0
      %653 = vmatpush.bf16.xpose.msra.mxu0 0
      %654 = vmatpush.bf16.xpose.msra.mxu0 0
      %655 = vmatpush.bf16.xpose.msra.mxu0 0
      %656 = vmatpush.bf16.xpose.msra.mxu0 0
      %657 = vmatpush.bf16.xpose.msra.mxu0 %v648
      %658 = vmatmul.bf16.gmra.mxu0 %v585
      %v659 = vpop.f32.mrf.mxu0
      %v660 = vadd.f32 %v597, %v659
      %v661 = vpop.f32.mrf.mxu0
      %662 = vdwg.mxu0
      %v664 = vrot.slane %v587, 4
      %666 = vmatpush.bf16.xpose.msra.mxu0 0
      %667 = vmatpush.bf16.xpose.msra.mxu0 0
      %668 = vmatpush.bf16.xpose.msra.mxu0 0
      %669 = vmatpush.bf16.xpose.msra.mxu0 0
      %670 = vmatpush.bf16.xpose.msra.mxu0 0
      %671 = vmatpush.bf16.xpose.msra.mxu0 0
      %672 = vmatpush.bf16.xpose.msra.mxu0 0
      %673 = vmatpush.bf16.xpose.msra.mxu0 %v664
      %674 = vmatmul.bf16.gmra.mxu0 %v587
      %v675 = vpop.f32.mrf.mxu0
      %v676 = vadd.f32 %v597, %v675
      %v677 = vpop.f32.mrf.mxu0
      %678 = vdwg.mxu0
      %v680 = vrot.slane %v589, 4
      %682 = vmatpush.bf16.xpose.msra.mxu0 0
      %683 = vmatpush.bf16.xpose.msra.mxu0 0
      %684 = vmatpush.bf16.xpose.msra.mxu0 0
      %685 = vmatpush.bf16.xpose.msra.mxu0 0
      %686 = vmatpush.bf16.xpose.msra.mxu0 0
      %687 = vmatpush.bf16.xpose.msra.mxu0 0
      %688 = vmatpush.bf16.xpose.msra.mxu0 0
      %689 = vmatpush.bf16.xpose.msra.mxu0 %v680
      %690 = vmatmul.bf16.gmra.mxu0 %v589
      %v691 = vpop.f32.mrf.mxu0
      %v692 = vadd.f32 %v597, %v691
      %v693 = vpop.f32.mrf.mxu0
      %694 = vdwg.mxu0
      %v696 = vrot.slane %v591, 4
      %698 = vmatpush.bf16.xpose.msra.mxu0 0
      %699 = vmatpush.bf16.xpose.msra.mxu0 0
      %700 = vmatpush.bf16.xpose.msra.mxu0 0
      %701 = vmatpush.bf16.xpose.msra.mxu0 0
      %702 = vmatpush.bf16.xpose.msra.mxu0 0
      %703 = vmatpush.bf16.xpose.msra.mxu0 0
      %704 = vmatpush.bf16.xpose.msra.mxu0 0
      %705 = vmatpush.bf16.xpose.msra.mxu0 %v696
      %706 = vmatmul.bf16.gmra.mxu0 %v591
      %v707 = vpop.f32.mrf.mxu0
      %v708 = vadd.f32 %v597, %v707
      %v709 = vpop.f32.mrf.mxu0
      %710 = vdwg.mxu0
      %v712 = vrot.slane %v593, 4
      %714 = vmatpush.bf16.xpose.msra.mxu0 0
      %715 = vmatpush.bf16.xpose.msra.mxu0 0
      %716 = vmatpush.bf16.xpose.msra.mxu0 0
      %717 = vmatpush.bf16.xpose.msra.mxu0 0
      %718 = vmatpush.bf16.xpose.msra.mxu0 0
      %719 = vmatpush.bf16.xpose.msra.mxu0 0
      %720 = vmatpush.bf16.xpose.msra.mxu0 0
      %721 = vmatpush.bf16.xpose.msra.mxu0 %v712
      %722 = vmatmul.bf16.gmra.mxu0 %v593
      %v723 = vpop.f32.mrf.mxu0
      %v724 = vadd.f32 %v597, %v723
      %v725 = vpop.f32.mrf.mxu0
      %726 = vdwg.mxu0
      %vm727 = vcmask 64512
      %v728 = vsel %vm727, %v612, -inf
      %729 = vmax.xlane.f32.xlu0 %v728
      %v730 = vpop.xlane.xlu0 %729
      %v731 = vsel %vm727, %v628, -inf
      %732 = vmax.xlane.f32.xlu0 %v731
      %v733 = vpop.xlane.xlu0 %732
      %v734 = vsel %vm727, %v644, -inf
      %735 = vmax.xlane.f32.xlu0 %v734
      %v736 = vpop.xlane.xlu0 %735
      %v737 = vsel %vm727, %v660, -inf
      %738 = vmax.xlane.f32.xlu0 %v737
      %v739 = vpop.xlane.xlu0 %738
      %v740 = vsel %vm727, %v676, -inf
      %741 = vmax.xlane.f32.xlu0 %v740
      %v742 = vpop.xlane.xlu0 %741
      %v743 = vsel %vm727, %v692, -inf
      %744 = vmax.xlane.f32.xlu0 %v743
      %v745 = vpop.xlane.xlu0 %744
      %v746 = vsel %vm727, %v708, -inf
      %747 = vmax.xlane.f32.xlu0 %v746
      %v748 = vpop.xlane.xlu0 %747
      %v749 = vsel %vm727, %v724, -inf
      %750 = vmax.xlane.f32.xlu0 %v749
      %v751 = vpop.xlane.xlu0 %750
      %v752 = vsub.f32 %v612, %v730
      %v753 = vsub.f32 %v628, %v733
      %v754 = vsub.f32 %v644, %v736
      %v755 = vsub.f32 %v660, %v739
      %v756 = vsub.f32 %v676, %v742
      %v757 = vsub.f32 %v692, %v745
      %v758 = vsub.f32 %v708, %v748
      %v759 = vsub.f32 %v724, %v751
      %v760 = vpack.c.bf16 %v752, %v752
      %v761 = vpack.c.bf16 %v753, %v753
      %v762 = vpack.c.bf16 %v754, %v754
      %v763 = vpack.c.bf16 %v755, %v755
      %v764 = vpack.c.bf16 %v756, %v756
      %v765 = vpack.c.bf16 %v757, %v757
      %v766 = vpack.c.bf16 %v758, %v758
      %v767 = vpack.c.bf16 %v759, %v759
      %v768 = vunpack.c.l.bf16 %v760
      %v769 = vunpack.c.l.bf16 %v761
      %v770 = vunpack.c.l.bf16 %v762
      %v771 = vunpack.c.l.bf16 %v763
      %v772 = vunpack.c.l.bf16 %v764
      %v773 = vunpack.c.l.bf16 %v765
      %v774 = vunpack.c.l.bf16 %v766
      %v775 = vunpack.c.l.bf16 %v767
      %v776 = vmul.f32 %v768, 1.442695
      %v777 = vpow.pop %v776
      %v778 = vmul.f32 %v769, 1.442695
      %v779 = vpow.pop %v778
      %v780 = vmul.f32 %v770, 1.442695
      %v781 = vpow.pop %v780
      %v782 = vmul.f32 %v771, 1.442695
      %v783 = vpow.pop %v782
      %v784 = vmul.f32 %v772, 1.442695
      %v785 = vpow.pop %v784
      %v786 = vmul.f32 %v773, 1.442695
      %v787 = vpow.pop %v786
      %v788 = vmul.f32 %v774, 1.442695
      %v789 = vpow.pop %v788
      %v790 = vmul.f32 %v775, 1.442695
      %v791 = vpow.pop %v790
      %v792 = vpack.c.bf16 %v777, %v777
      %v793 = vpack.c.bf16 %v779, %v779
      %v794 = vpack.c.bf16 %v781, %v781
      %v795 = vpack.c.bf16 %v783, %v783
      %v796 = vpack.c.bf16 %v785, %v785
      %v797 = vpack.c.bf16 %v787, %v787
      %v798 = vpack.c.bf16 %v789, %v789
      %v799 = vpack.c.bf16 %v791, %v791
      %v800 = vunpack.c.l.bf16 %v792
      %v801 = vunpack.c.l.bf16 %v793
      %v802 = vunpack.c.l.bf16 %v794
      %v803 = vunpack.c.l.bf16 %v795
      %v804 = vunpack.c.l.bf16 %v796
      %v805 = vunpack.c.l.bf16 %v797
      %v806 = vunpack.c.l.bf16 %v798
      %v807 = vunpack.c.l.bf16 %v799
      %v808 = vsel %vm727, %v800, 0.0
      %809 = vadd.xlane.f32.xlu0 %v808
      %v810 = vpop.xlane.xlu0 %809
      %v811 = vsel %vm727, %v801, 0.0
      %812 = vadd.xlane.f32.xlu0 %v811
      %v813 = vpop.xlane.xlu0 %812
      %v814 = vsel %vm727, %v802, 0.0
      %815 = vadd.xlane.f32.xlu0 %v814
      %v816 = vpop.xlane.xlu0 %815
      %v817 = vsel %vm727, %v803, 0.0
      %818 = vadd.xlane.f32.xlu0 %v817
      %v819 = vpop.xlane.xlu0 %818
      %v820 = vsel %vm727, %v804, 0.0
      %821 = vadd.xlane.f32.xlu0 %v820
      %v822 = vpop.xlane.xlu0 %821
      %v823 = vsel %vm727, %v805, 0.0
      %824 = vadd.xlane.f32.xlu0 %v823
      %v825 = vpop.xlane.xlu0 %824
      %v826 = vsel %vm727, %v806, 0.0
      %827 = vadd.xlane.f32.xlu0 %v826
      %v828 = vpop.xlane.xlu0 %827
      %v829 = vsel %vm727, %v807, 0.0
      %830 = vadd.xlane.f32.xlu0 %v829
      %v831 = vpop.xlane.xlu0 %830
      %v833 = vsel %vm727, %v792, 0
      %vm835 = vcmask 1043456
      %v837 = vsel %vm835, %v580, 0
      %839 = vmatpush.bf16.msra.mxu0 0
      %840 = vmatpush.bf16.msra.mxu0 0
      %841 = vmatpush.bf16.msra.mxu0 0
      %842 = vmatpush.bf16.msra.mxu0 0
      %843 = vmatpush.bf16.msra.mxu0 0
      %844 = vmatpush.bf16.msra.mxu0 0
      %845 = vmatpush.bf16.msra.mxu0 0
      %846 = vmatpush.bf16.msra.mxu0 %v837
      %847 = vmatmul.bf16.gmra.mxu0 %v833
      %v848 = vpop.f32.mrf.mxu0
      %v849 = vadd.f32 0.0, %v848
      %v850 = vpop.f32.mrf.mxu0
      %851 = vdwg.mxu0
      %v853 = vsel %vm727, %v793, 0
      %v856 = vsel %vm835, %v582, 0
      %858 = vmatpush.bf16.msra.mxu0 0
      %859 = vmatpush.bf16.msra.mxu0 0
      %860 = vmatpush.bf16.msra.mxu0 0
      %861 = vmatpush.bf16.msra.mxu0 0
      %862 = vmatpush.bf16.msra.mxu0 0
      %863 = vmatpush.bf16.msra.mxu0 0
      %864 = vmatpush.bf16.msra.mxu0 0
      %865 = vmatpush.bf16.msra.mxu0 %v856
      %866 = vmatmul.bf16.gmra.mxu0 %v853
      %v867 = vpop.f32.mrf.mxu0
      %v868 = vadd.f32 0.0, %v867
      %v869 = vpop.f32.mrf.mxu0
      %870 = vdwg.mxu0
      %v872 = vsel %vm727, %v794, 0
      %v875 = vsel %vm835, %v584, 0
      %877 = vmatpush.bf16.msra.mxu0 0
      %878 = vmatpush.bf16.msra.mxu0 0
      %879 = vmatpush.bf16.msra.mxu0 0
      %880 = vmatpush.bf16.msra.mxu0 0
      %881 = vmatpush.bf16.msra.mxu0 0
      %882 = vmatpush.bf16.msra.mxu0 0
      %883 = vmatpush.bf16.msra.mxu0 0
      %884 = vmatpush.bf16.msra.mxu0 %v875
      %885 = vmatmul.bf16.gmra.mxu0 %v872
      %v886 = vpop.f32.mrf.mxu0
      %v887 = vadd.f32 0.0, %v886
      %v888 = vpop.f32.mrf.mxu0
      %889 = vdwg.mxu0
      %v891 = vsel %vm727, %v795, 0
      %v894 = vsel %vm835, %v586, 0
      %896 = vmatpush.bf16.msra.mxu0 0
      %897 = vmatpush.bf16.msra.mxu0 0
      %898 = vmatpush.bf16.msra.mxu0 0
      %899 = vmatpush.bf16.msra.mxu0 0
      %900 = vmatpush.bf16.msra.mxu0 0
      %901 = vmatpush.bf16.msra.mxu0 0
      %902 = vmatpush.bf16.msra.mxu0 0
      %903 = vmatpush.bf16.msra.mxu0 %v894
      %904 = vmatmul.bf16.gmra.mxu0 %v891
      %v905 = vpop.f32.mrf.mxu0
      %v906 = vadd.f32 0.0, %v905
      %v907 = vpop.f32.mrf.mxu0
      %908 = vdwg.mxu0
      %v910 = vsel %vm727, %v796, 0
      %v913 = vsel %vm835, %v588, 0
      %915 = vmatpush.bf16.msra.mxu0 0
      %916 = vmatpush.bf16.msra.mxu0 0
      %917 = vmatpush.bf16.msra.mxu0 0
      %918 = vmatpush.bf16.msra.mxu0 0
      %919 = vmatpush.bf16.msra.mxu0 0
      %920 = vmatpush.bf16.msra.mxu0 0
      %921 = vmatpush.bf16.msra.mxu0 0
      %922 = vmatpush.bf16.msra.mxu0 %v913
      %923 = vmatmul.bf16.gmra.mxu0 %v910
      %v924 = vpop.f32.mrf.mxu0
      %v925 = vadd.f32 0.0, %v924
      %v926 = vpop.f32.mrf.mxu0
      %927 = vdwg.mxu0
      %v929 = vsel %vm727, %v797, 0
      %v932 = vsel %vm835, %v590, 0
      %934 = vmatpush.bf16.msra.mxu0 0
      %935 = vmatpush.bf16.msra.mxu0 0
      %936 = vmatpush.bf16.msra.mxu0 0
      %937 = vmatpush.bf16.msra.mxu0 0
      %938 = vmatpush.bf16.msra.mxu0 0
      %939 = vmatpush.bf16.msra.mxu0 0
      %940 = vmatpush.bf16.msra.mxu0 0
      %941 = vmatpush.bf16.msra.mxu0 %v932
      %942 = vmatmul.bf16.gmra.mxu0 %v929
      %v943 = vpop.f32.mrf.mxu0
      %v944 = vadd.f32 0.0, %v943
      %v945 = vpop.f32.mrf.mxu0
      %946 = vdwg.mxu0
      %v948 = vsel %vm727, %v798, 0
      %v951 = vsel %vm835, %v592, 0
      %953 = vmatpush.bf16.msra.mxu0 0
      %954 = vmatpush.bf16.msra.mxu0 0
      %955 = vmatpush.bf16.msra.mxu0 0
      %956 = vmatpush.bf16.msra.mxu0 0
      %957 = vmatpush.bf16.msra.mxu0 0
      %958 = vmatpush.bf16.msra.mxu0 0
      %959 = vmatpush.bf16.msra.mxu0 0
      %960 = vmatpush.bf16.msra.mxu0 %v951
      %961 = vmatmul.bf16.gmra.mxu0 %v948
      %v962 = vpop.f32.mrf.mxu0
      %v963 = vadd.f32 0.0, %v962
      %v964 = vpop.f32.mrf.mxu0
      %965 = vdwg.mxu0
      %v967 = vsel %vm727, %v799, 0
      %v970 = vsel %vm835, %v594, 0
      %972 = vmatpush.bf16.msra.mxu0 0
      %973 = vmatpush.bf16.msra.mxu0 0
      %974 = vmatpush.bf16.msra.mxu0 0
      %975 = vmatpush.bf16.msra.mxu0 0
      %976 = vmatpush.bf16.msra.mxu0 0
      %977 = vmatpush.bf16.msra.mxu0 0
      %978 = vmatpush.bf16.msra.mxu0 0
      %979 = vmatpush.bf16.msra.mxu0 %v970
      %980 = vmatmul.bf16.gmra.mxu0 %v967
      %v981 = vpop.f32.mrf.mxu0
      %v982 = vadd.f32 0.0, %v981
      %v983 = vpop.f32.mrf.mxu0
      %984 = vdwg.mxu0
      %v985 = vrcp.pop %v810
      %v986 = vrcp.pop %v813
      %v987 = vrcp.pop %v816
      %v988 = vrcp.pop %v819
      %v989 = vrcp.pop %v822
      %v990 = vrcp.pop %v825
      %v991 = vrcp.pop %v828
      %v992 = vrcp.pop %v831
      %v993 = vmul.f32 %v849, %v985
      %v994 = vmul.f32 %v868, %v986
      %v995 = vmul.f32 %v887, %v987
      %v996 = vmul.f32 %v906, %v988
      %v997 = vmul.f32 %v925, %v989
      %v998 = vmul.f32 %v944, %v990
      %v999 = vmul.f32 %v963, %v991
      %v1000 = vmul.f32 %v982, %v992
      %v1001 = vadd.f32 %v276, %v993
      %v1002 = vadd.f32 %v277, %v994
      %v1003 = vadd.f32 %v278, %v995
      %v1004 = vadd.f32 %v279, %v996
      %v1005 = vadd.f32 %v280, %v997
      %v1006 = vadd.f32 %v281, %v998
      %v1007 = vadd.f32 %v282, %v999
      %v1008 = vadd.f32 %v283, %v1000
      %v1009 = vpack.c.bf16 %v1001, %v1001
      %v1010 = vpack.c.bf16 %v1002, %v1002
      %v1011 = vpack.c.bf16 %v1003, %v1003
      %v1012 = vpack.c.bf16 %v1004, %v1004
      %v1013 = vpack.c.bf16 %v1005, %v1005
      %v1014 = vpack.c.bf16 %v1006, %v1006
      %v1015 = vpack.c.bf16 %v1007, %v1007
      %v1016 = vpack.c.bf16 %v1008, %v1008
      %1017 = vst [vmem:[%s257] sm:$0xf] %v1009
      %1018 = vst [vmem:[%s257 + $0x4] sm:$0xf] %v1010
      %1019 = vst [vmem:[%s257 + $0x8] sm:$0xf] %v1011
      %1020 = vst [vmem:[%s257 + $0xc] sm:$0xf] %v1012
      %1021 = vst [vmem:[%s257 + $0x10] sm:$0xf] %v1013
      %1022 = vst [vmem:[%s257 + $0x14] sm:$0xf] %v1014
      %1023 = vst [vmem:[%s257 + $0x18] sm:$0xf] %v1015
      %1024 = vst [vmem:[%s257 + $0x1c] sm:$0xf] %v1016
      %s1025 = smul.u32 8, %s20
      %p1026 = scmp.lt.s32.totalorder %s19, 3
      %s1027 = scalar_select %p1026, %s19, 3
      %p1028 = scmp.lt.s32.totalorder %s1025, 7
      %s1029 = scalar_select %p1028, %s1025, 7
      %s1030 = smul.addr %s1027, 8
      %s1031 = sadd.s32 %s1029, %s1030
      %s1032 = smul.addr %s1031, 4
      %s1033 = scalar_lea.vmem %s4, %s1032
      // Predicated region
      $region37: #{cstr_forward.14} parent=35 // pred_check
        %p1034 = pneg %p143
      $region38: #{cstr_forward.14} parent=35 // pred_check_branch
        %1036 = sbr.rel (%p1034) target = $region40
      $region39: #{cstr_forward.14} parent=35 // pred_region
        %s1037 = smul.u32 8, %s20
      $region40: #{cstr_forward.14} parent=35 // pred_fallthru
        _
    $region36: #{cstr_forward.14} parent=5 // pred_fallthru
      _
    %p1038 = scmp.le.s32.totalorder 2, %s10
    // Predicated region
    $region41: #{cstr_forward.14} parent=5 // pred_check
      %p1039 = pneg %p1038
    $region42: #{cstr_forward.14} parent=5 // pred_check_branch
      %1041 = sbr.rel (%p1039) target = $region44
    $region43: #{cstr_forward.14} parent=5 // pred_region
      %s1042 = ssub.s32 %s10, 2
      // Predicated region
      $region45: #{cstr_forward.14} parent=43 // pred_check
        %p1043 = pneg %p149
      $region46: #{cstr_forward.14} parent=43 // pred_check_branch
        %1045 = sbr.rel (%p1043) target = $region48
      $region47: #{cstr_forward.14} parent=43 // pred_region
        %s1046 = smul.u32 8, %s22
        %p1047 = scmp.lt.s32.totalorder %s21, 3
        %s1048 = scalar_select %p1047, %s21, 3
        %p1049 = scmp.lt.s32.totalorder %s1046, 7
        %s1050 = scalar_select %p1049, %s1046, 7
        %s1051 = smul.addr %s1048, 8
        %s1052 = sadd.s32 %s1050, %s1051
        %s1053 = smul.addr %s1052, 4
        %s1054 = scalar_lea.vmem %s4, %s1053
      $region48: #{cstr_forward.14} parent=43 // pred_fallthru
        _
    $region44: #{cstr_forward.14} parent=5 // pred_fallthru
      _
  $region6: #{cstr_forward.14} parent=0 // loop_footer
    %s14 = sadd.s32 1, %s10
  $region7: #{cstr_forward.14} parent=0 // loop_footer_branch
    %9 = sbr.rel target = $region3
  $region8: #{cstr_forward.14} parent=0 // loop_exit
    _

// kernel: cstr_forward.11
$region0: #{cstr_forward.11}
  #allocation0 [shape = 'u32[]', space=smem, size = 0x4, offset = 0x4, fixed_abs, tag = 'smem constant byte address 0x4 - core index']
  #allocation1 [shape = 'u32[72,128]{1,0:T(1,128)}', space=vmem, size = 0x9000, scoped, tag = 'internal scratch']
  %s0 = inlined_call_operand.vmem [shape: bf16[256,128], index: 0, kind: input, shape index: {}]
  %s1 = inlined_call_operand.vmem [shape: bf16[128,128], index: 1, kind: input, shape index: {}]
  %s2 = inlined_call_operand.vmem [shape: f32[1,128], index: 2, kind: input, shape index: {}]
  %s3 = inlined_call_operand.vmem [shape: bf16[256,128], index: 3, kind: output, shape index: {}]
  %s4 = sld [smem:[#allocation0]]
  $region45: #{cstr_forward.11} parent=0
    _
  %s6 = ssub.s32 1, %s4
  %s7 = scalar_select 0, %s6, %s4
  loop: start=0, step=1, limit=4
  $region2: #{cstr_forward.11} parent=0 // loop_pre_header
    _
  $region3: #{cstr_forward.11} parent=0 // loop_header
    %s9 = sphi 0, %s13
    %p10 = scmp.ge.s32.totalorder %s9, 4
    %s19 = sphi 0, %s21
    %s22 = sphi 0, %s19
    %s23 = sphi 0, %s22
    %s39 = sphi 0, %s23
    %s43 = sphi 0, %s43
    %s45 = sphi 0, %s43
    %s46 = sphi 0, %s45
    %s60 = sphi 0, %s46
    %s64 = sphi 0, %s64
    %s66 = sphi 0, %s64
    %s67 = sphi 0, %s66
    %s81 = sphi 0, %s67
    %s87 = sphi 0, %s89
    %s90 = sphi 0, %s87
    %s91 = sphi 0, %s90
    %s107 = sphi 0, %s91
  $region4: #{cstr_forward.11} parent=0 // loop_header_branch
    %12 = sbr.rel (%p10) target = $region8
  $region5: #{cstr_forward.11} parent=0 // loop_body
    %s14 = ssub.s32 %s9, 1
    %s15 = ssub.s32 %s9, 2
    %s16 = sadd.s32 %s9, 1
    %s17 = ssub.s32 %s9, %s16
    %p18 = scmp.eq.s32.totalorder %s17, 0
    %s20 = sadd.s32 %s19, 1
    %s21 = scalar_select %p18, %s19, %s20
    %p24 = pneg %p18
    %p25 = scmp.eq.s32.totalorder %s9, 1
    %p26 = por %p24, %p25
    %p27 = scmp.ne.s32.totalorder %s19, %s22
    %p28 = scmp.eq.s32.totalorder %s9, 0
    %p29 = por %p27, %p28
    %p30 = scmp.ne.s32.totalorder %s19, %s22
    %p31 = scmp.eq.s32.totalorder %s14, 1
    %p32 = por %p30, %p31
    %p33 = scmp.ne.s32.totalorder %s22, %s23
    %p34 = scmp.eq.s32.totalorder %s14, 0
    %p35 = por %p33, %p34
    %p36 = scmp.ne.s32.totalorder %s22, %s23
    %p37 = scmp.eq.s32.totalorder %s15, 1
    %p38 = por %p36, %p37
    %p40 = scmp.ne.s32.totalorder %s23, %s39
    %p41 = scmp.eq.s32.totalorder %s15, 0
    %p42 = por %p40, %p41
    %s44 = sadd.s32 %s43, 1
    %p47 = scmp.eq.s32.totalorder %s9, 1
    %p48 = scmp.ne.s32.totalorder %s43, %s45
    %p49 = scmp.eq.s32.totalorder %s9, 0
    %p50 = por %p48, %p49
    %p51 = scmp.ne.s32.totalorder %s43, %s45
    %p52 = scmp.eq.s32.totalorder %s14, 1
    %p53 = por %p51, %p52
    %p54 = scmp.ne.s32.totalorder %s45, %s46
    %p55 = scmp.eq.s32.totalorder %s14, 0
    %p56 = por %p54, %p55
    %p57 = scmp.ne.s32.totalorder %s45, %s46
    %p58 = scmp.eq.s32.totalorder %s15, 1
    %p59 = por %p57, %p58
    %p61 = scmp.ne.s32.totalorder %s46, %s60
    %p62 = scmp.eq.s32.totalorder %s15, 0
    %p63 = por %p61, %p62
    %s65 = sadd.s32 %s64, 1
    %p68 = scmp.eq.s32.totalorder %s9, 1
    %p69 = scmp.ne.s32.totalorder %s64, %s66
    %p70 = scmp.eq.s32.totalorder %s9, 0
    %p71 = por %p69, %p70
    %p72 = scmp.ne.s32.totalorder %s64, %s66
    %p73 = scmp.eq.s32.totalorder %s14, 1
    %p74 = por %p72, %p73
    %p75 = scmp.ne.s32.totalorder %s66, %s67
    %p76 = scmp.eq.s32.totalorder %s14, 0
    %p77 = por %p75, %p76
    %p78 = scmp.ne.s32.totalorder %s66, %s67
    %p79 = scmp.eq.s32.totalorder %s15, 1
    %p80 = por %p78, %p79
    %p82 = scmp.ne.s32.totalorder %s67, %s81
    %p83 = scmp.eq.s32.totalorder %s15, 0
    %p84 = por %p82, %p83
    %s85 = ssub.s32 %s9, %s16
    %p86 = scmp.eq.s32.totalorder %s85, 0
    %s88 = sadd.s32 %s87, 1
    %s89 = scalar_select %p86, %s87, %s88
    %p92 = pneg %p86
    %p93 = scmp.eq.s32.totalorder %s9, 1
    %p94 = por %p92, %p93
    %p95 = scmp.ne.s32.totalorder %s87, %s90
    %p96 = scmp.eq.s32.totalorder %s9, 0
    %p97 = por %p95, %p96
    %p98 = scmp.ne.s32.totalorder %s87, %s90
    %p99 = scmp.eq.s32.totalorder %s14, 1
    %p100 = por %p98, %p99
    %p101 = scmp.ne.s32.totalorder %s90, %s91
    %p102 = scmp.eq.s32.totalorder %s14, 0
    %p103 = por %p101, %p102
    %p104 = scmp.ne.s32.totalorder %s90, %s91
    %p105 = scmp.eq.s32.totalorder %s15, 1
    %p106 = por %p104, %p105
    %p108 = scmp.ne.s32.totalorder %s91, %s107
    %p109 = scmp.eq.s32.totalorder %s15, 0
    %p110 = por %p108, %p109
    %p111 = scmp.le.s32.totalorder 1, %s9
    %p112 = scmp.lt.s32.totalorder %s9, 3
    %p113 = pnand %p111, %p112
    %p114 = pneg %p113
    // Predicated region
    $region9: #{cstr_forward.11} parent=5 // pred_check
      _
    $region10: #{cstr_forward.11} parent=5 // pred_check_branch
      %116 = sbr.rel (%p113) target = $region12
    $region11: #{cstr_forward.11} parent=5 // pred_region
      %s117 = ssub.s32 %s9, 1
      // Predicated region
      $region13: #{cstr_forward.11} parent=11 // pred_check
        %p118 = pneg %p56
      $region14: #{cstr_forward.11} parent=11 // pred_check_branch
        %120 = sbr.rel (%p118) target = $region16
      $region15: #{cstr_forward.11} parent=11 // pred_region
        _
      $region16: #{cstr_forward.11} parent=11 // pred_fallthru
        _
      // Predicated region
      $region17: #{cstr_forward.11} parent=11 // pred_check
        %p121 = pneg %p77
      $region18: #{cstr_forward.11} parent=11 // pred_check_branch
        %123 = sbr.rel (%p121) target = $region20
      $region19: #{cstr_forward.11} parent=11 // pred_region
        _
      $region20: #{cstr_forward.11} parent=11 // pred_fallthru
        _
    $region12: #{cstr_forward.11} parent=5 // pred_fallthru
      _
    %p124 = scmp.lt.s32.totalorder %s9, 2
    // Predicated region
    $region21: #{cstr_forward.11} parent=5 // pred_check
      %p125 = pneg %p124
    $region22: #{cstr_forward.11} parent=5 // pred_check_branch
      %127 = sbr.rel (%p125) target = $region24
    $region23: #{cstr_forward.11} parent=5 // pred_region
      // Predicated region
      $region25: #{cstr_forward.11} parent=23 // pred_check
        %p128 = pneg %p29
      $region26: #{cstr_forward.11} parent=23 // pred_check_branch
        %130 = sbr.rel (%p128) target = $region28
      $region27: #{cstr_forward.11} parent=23 // pred_region
        %s131 = smul.u32 16, %s9
        %p132 = scmp.lt.s32.totalorder %s131, 31
        %s133 = scalar_select %p132, %s131, 31
        %s134 = smul.addr %s133, 4
        %s135 = scalar_lea.vmem %s0, %s134
        %s136 = smul.u32 16, %s9
      $region28: #{cstr_forward.11} parent=23 // pred_fallthru
        _
    $region24: #{cstr_forward.11} parent=5 // pred_fallthru
      _
    %p137 = scmp.le.s32.totalorder 1, %s9
    %p138 = scmp.lt.s32.totalorder %s9, 3
    %p139 = pnand %p137, %p138
    %p140 = pneg %p139
    // Predicated region
    $region29: #{cstr_forward.11} parent=5 // pred_check
      _
    $region30: #{cstr_forward.11} parent=5 // pred_check_branch
      %142 = sbr.rel (%p139) target = $region32
    $region31: #{cstr_forward.11} parent=5 // pred_region
      %s143 = ssub.s32 %s9, 1
      %s144 = smul.u32 16, %s14
      %p145 = scmp.lt.s32.totalorder %s144, 31
      %s146 = scalar_select %p145, %s144, 31
      %s147 = smul.addr %s146, 4
      %s148 = scalar_lea.vmem %s0, %s147
      %p149 = pneg %p35
      %p150 = pneg %p32
      %p151 = pneg %p56
      %p152 = pneg %p53
      %p153 = pneg %p77
      %p154 = pneg %p74
      %p155 = pneg %p103
      %p156 = pneg %p100
      %s157 = smul.u32 16, %s14
      %p158 = scmp.lt.s32.totalorder %s157, 31
      %s159 = scalar_select %p158, %s157, 31
      %s160 = smul.addr %s159, 4
      %s161 = scalar_lea.vmem %s3, %s160
      %s162 = smul.u32 16, %s14
      %p163 = scmp.lt.s32.totalorder %s162, 31
      %s164 = scalar_select %p163, %s162, 31
      %s165 = smul.addr %s164, 4
      %s166 = scalar_lea.vmem %s0, %s165
      %s167 = smul.u32 16, %s14
      %s168 = smul.u32 16, %s14
      %p169 = scmp.lt.s32.totalorder %s168, 31
      %s170 = scalar_select %p169, %s168, 31
      %s171 = smul.addr %s170, 4
      %s172 = scalar_lea.vmem %s3, %s171
      %s173 = smul.u32 16, %s14
      %v174 = vld [vmem:[%s166] sm:$0xf]
      %v175 = vld [vmem:[%s166 + $0x4] sm:$0xf]
      %v176 = vld [vmem:[%s166 + $0x8] sm:$0xf]
      %v177 = vld [vmem:[%s166 + $0xc] sm:$0xf]
      %v178 = vld [vmem:[%s166 + $0x10] sm:$0xf]
      %v179 = vld [vmem:[%s166 + $0x14] sm:$0xf]
      %v180 = vld [vmem:[%s166 + $0x18] sm:$0xf]
      %v181 = vld [vmem:[%s166 + $0x1c] sm:$0xf]
      %v182 = vld [vmem:[%s166 + $0x20] sm:$0xf]
      %v183 = vld [vmem:[%s166 + $0x24] sm:$0xf]
      %v184 = vld [vmem:[%s166 + $0x28] sm:$0xf]
      %v185 = vld [vmem:[%s166 + $0x2c] sm:$0xf]
      %v186 = vld [vmem:[%s166 + $0x30] sm:$0xf]
      %v187 = vld [vmem:[%s166 + $0x34] sm:$0xf]
      %v188 = vld [vmem:[%s166 + $0x38] sm:$0xf]
      %v189 = vld [vmem:[%s166 + $0x3c] sm:$0xf]
      %v190 = vld [vmem:[%s1] sm:$0xf]
      %v191 = vld [vmem:[%s1 + $0x4] sm:$0xf]
      %v192 = vld [vmem:[%s1 + $0x8] sm:$0xf]
      %v193 = vld [vmem:[%s1 + $0xc] sm:$0xf]
      %v194 = vld [vmem:[%s1 + $0x10] sm:$0xf]
      %v195 = vld [vmem:[%s1 + $0x14] sm:$0xf]
      %v196 = vld [vmem:[%s1 + $0x18] sm:$0xf]
      %v197 = vld [vmem:[%s1 + $0x1c] sm:$0xf]
      %v198 = vld [vmem:[%s1 + $0x20] sm:$0xf]
      %v199 = vld [vmem:[%s1 + $0x24] sm:$0xf]
      %v200 = vld [vmem:[%s1 + $0x28] sm:$0xf]
      %v201 = vld [vmem:[%s1 + $0x2c] sm:$0xf]
      %v202 = vld [vmem:[%s1 + $0x30] sm:$0xf]
      %v203 = vld [vmem:[%s1 + $0x34] sm:$0xf]
      %v204 = vld [vmem:[%s1 + $0x38] sm:$0xf]
      %v205 = vld [vmem:[%s1 + $0x3c] sm:$0xf]
      %v206 = vld [vmem:[%s2] sm:$0x1]
      %v208 = vperm.slane %v206, 0
      %v226 = vunpack.c.l.b16 %v174
      %v227 = vunpack.c.l.b16 %v175
      %v228 = vunpack.c.l.b16 %v176
      %v229 = vunpack.c.l.b16 %v177
      %v230 = vunpack.c.l.b16 %v178
      %v231 = vunpack.c.l.b16 %v179
      %v232 = vunpack.c.l.b16 %v180
      %v233 = vunpack.c.l.b16 %v181
      %v234 = vunpack.c.l.b16 %v182
      %v235 = vunpack.c.l.b16 %v183
      %v236 = vunpack.c.l.b16 %v184
      %v237 = vunpack.c.l.b16 %v185
      %v238 = vunpack.c.l.b16 %v186
      %v239 = vunpack.c.l.b16 %v187
      %v240 = vunpack.c.l.b16 %v188
      %v241 = vunpack.c.l.b16 %v189
      %v242 = vpack.c.b16 %v227, %v226
      %v243 = vpack.c.b16 %v229, %v228
      %v244 = vpack.c.b16 %v231, %v230
      %v245 = vpack.c.b16 %v233, %v232
      %v246 = vpack.c.b16 %v235, %v234
      %v247 = vpack.c.b16 %v237, %v236
      %v248 = vpack.c.b16 %v239, %v238
      %v249 = vpack.c.b16 %v241, %v240
      %v274 = vunpack.c.l.b16 %v190
      %v275 = vunpack.c.l.b16 %v191
      %v276 = vunpack.c.l.b16 %v192
      %v277 = vunpack.c.l.b16 %v193
      %v278 = vunpack.c.l.b16 %v194
      %v279 = vunpack.c.l.b16 %v195
      %v280 = vunpack.c.l.b16 %v196
      %v281 = vunpack.c.l.b16 %v197
      %v282 = vunpack.c.l.b16 %v198
      %v283 = vunpack.c.l.b16 %v199
      %v284 = vunpack.c.l.b16 %v200
      %v285 = vunpack.c.l.b16 %v201
      %v286 = vunpack.c.l.b16 %v202
      %v287 = vunpack.c.l.b16 %v203
      %v288 = vunpack.c.l.b16 %v204
      %v289 = vunpack.c.l.b16 %v205
      %v290 = vpack.c.b16 %v275, %v274
      %v291 = vpack.c.b16 %v277, %v276
      %v292 = vpack.c.b16 %v279, %v278
      %v293 = vpack.c.b16 %v281, %v280
      %v294 = vpack.c.b16 %v283, %v282
      %v295 = vpack.c.b16 %v285, %v284
      %v296 = vpack.c.b16 %v287, %v286
      %v297 = vpack.c.b16 %v289, %v288
      %306 = vmatpush.bf16.msra.mxu0 %v297
      %307 = vmatpush.bf16.msra.mxu0 %v296
      %308 = vmatpush.bf16.msra.mxu0 %v295
      %309 = vmatpush.bf16.msra.mxu0 %v294
      %310 = vmatpush.bf16.msra.mxu0 %v293
      %311 = vmatpush.bf16.msra.mxu0 %v292
      %312 = vmatpush.bf16.msra.mxu0 %v291
      %313 = vmatpush.bf16.msra.mxu0 %v290
      %314 = vmatmul.bf16.gmra.mxu0 %v242
      %v315 = vpop.f32.mrf.mxu0
      %v316 = vadd.f32 %v208, %v315
      %v317 = vpop.f32.mrf.mxu0
      %v318 = vadd.f32 %v208, %v317
      %319 = vmatmul.bf16.gmra.mxu0 %v243
      %v320 = vpop.f32.mrf.mxu0
      %v321 = vadd.f32 %v208, %v320
      %v322 = vpop.f32.mrf.mxu0
      %v323 = vadd.f32 %v208, %v322
      %324 = vmatmul.bf16.gmra.mxu0 %v244
      %v325 = vpop.f32.mrf.mxu0
      %v326 = vadd.f32 %v208, %v325
      %v327 = vpop.f32.mrf.mxu0
      %v328 = vadd.f32 %v208, %v327
      %329 = vmatmul.bf16.gmra.mxu0 %v245
      %v330 = vpop.f32.mrf.mxu0
      %v331 = vadd.f32 %v208, %v330
      %v332 = vpop.f32.mrf.mxu0
      %v333 = vadd.f32 %v208, %v332
      %334 = vmatmul.bf16.gmra.mxu0 %v246
      %v335 = vpop.f32.mrf.mxu0
      %v336 = vadd.f32 %v208, %v335
      %v337 = vpop.f32.mrf.mxu0
      %v338 = vadd.f32 %v208, %v337
      %339 = vmatmul.bf16.gmra.mxu0 %v247
      %v340 = vpop.f32.mrf.mxu0
      %v341 = vadd.f32 %v208, %v340
      %v342 = vpop.f32.mrf.mxu0
      %v343 = vadd.f32 %v208, %v342
      %344 = vmatmul.bf16.gmra.mxu0 %v248
      %v345 = vpop.f32.mrf.mxu0
      %v346 = vadd.f32 %v208, %v345
      %v347 = vpop.f32.mrf.mxu0
      %v348 = vadd.f32 %v208, %v347
      %349 = vmatmul.bf16.gmra.mxu0 %v249
      %v350 = vpop.f32.mrf.mxu0
      %v351 = vadd.f32 %v208, %v350
      %v352 = vpop.f32.mrf.mxu0
      %v353 = vadd.f32 %v208, %v352
      %354 = vdwg.mxu0
      %v355 = vpack.c.bf16 %v316, %v316
      %v356 = vpack.c.bf16 %v318, %v318
      %v357 = vpack.c.bf16 %v321, %v321
      %v358 = vpack.c.bf16 %v323, %v323
      %v359 = vpack.c.bf16 %v326, %v326
      %v360 = vpack.c.bf16 %v328, %v328
      %v361 = vpack.c.bf16 %v331, %v331
      %v362 = vpack.c.bf16 %v333, %v333
      %v363 = vpack.c.bf16 %v336, %v336
      %v364 = vpack.c.bf16 %v338, %v338
      %v365 = vpack.c.bf16 %v341, %v341
      %v366 = vpack.c.bf16 %v343, %v343
      %v367 = vpack.c.bf16 %v346, %v346
      %v368 = vpack.c.bf16 %v348, %v348
      %v369 = vpack.c.bf16 %v351, %v351
      %v370 = vpack.c.bf16 %v353, %v353
      %371 = vst [vmem:[%s172] sm:$0xf] %v355
      %372 = vst [vmem:[%s172 + $0x4] sm:$0xf] %v356
      %373 = vst [vmem:[%s172 + $0x8] sm:$0xf] %v357
      %374 = vst [vmem:[%s172 + $0xc] sm:$0xf] %v358
      %375 = vst [vmem:[%s172 + $0x10] sm:$0xf] %v359
      %376 = vst [vmem:[%s172 + $0x14] sm:$0xf] %v360
      %377 = vst [vmem:[%s172 + $0x18] sm:$0xf] %v361
      %378 = vst [vmem:[%s172 + $0x1c] sm:$0xf] %v362
      %379 = vst [vmem:[%s172 + $0x20] sm:$0xf] %v363
      %380 = vst [vmem:[%s172 + $0x24] sm:$0xf] %v364
      %381 = vst [vmem:[%s172 + $0x28] sm:$0xf] %v365
      %382 = vst [vmem:[%s172 + $0x2c] sm:$0xf] %v366
      %383 = vst [vmem:[%s172 + $0x30] sm:$0xf] %v367
      %384 = vst [vmem:[%s172 + $0x34] sm:$0xf] %v368
      %385 = vst [vmem:[%s172 + $0x38] sm:$0xf] %v369
      %386 = vst [vmem:[%s172 + $0x3c] sm:$0xf] %v370
      %s387 = smul.u32 16, %s14
      %p388 = scmp.lt.s32.totalorder %s387, 31
      %s389 = scalar_select %p388, %s387, 31
      %s390 = smul.addr %s389, 4
      %s391 = scalar_lea.vmem %s3, %s390
      // Predicated region
      $region33: #{cstr_forward.11} parent=31 // pred_check
        %p392 = pneg %p100
      $region34: #{cstr_forward.11} parent=31 // pred_check_branch
        %394 = sbr.rel (%p392) target = $region36
      $region35: #{cstr_forward.11} parent=31 // pred_region
        %s395 = smul.u32 16, %s14
      $region36: #{cstr_forward.11} parent=31 // pred_fallthru
        _
    $region32: #{cstr_forward.11} parent=5 // pred_fallthru
      _
    %p396 = scmp.le.s32.totalorder 2, %s9
    // Predicated region
    $region37: #{cstr_forward.11} parent=5 // pred_check
      %p397 = pneg %p396
    $region38: #{cstr_forward.11} parent=5 // pred_check_branch
      %399 = sbr.rel (%p397) target = $region40
    $region39: #{cstr_forward.11} parent=5 // pred_region
      %s400 = ssub.s32 %s9, 2
      // Predicated region
      $region41: #{cstr_forward.11} parent=39 // pred_check
        %p401 = pneg %p106
      $region42: #{cstr_forward.11} parent=39 // pred_check_branch
        %403 = sbr.rel (%p401) target = $region44
      $region43: #{cstr_forward.11} parent=39 // pred_region
        %s404 = smul.u32 16, %s15
        %p405 = scmp.lt.s32.totalorder %s404, 31
        %s406 = scalar_select %p405, %s404, 31
        %s407 = smul.addr %s406, 4
        %s408 = scalar_lea.vmem %s3, %s407
      $region44: #{cstr_forward.11} parent=39 // pred_fallthru
        _
    $region40: #{cstr_forward.11} parent=5 // pred_fallthru
      _
  $region6: #{cstr_forward.11} parent=0 // loop_footer
    %s13 = sadd.s32 1, %s9
  $region7: #{cstr_forward.11} parent=0 // loop_footer_branch
    %8 = sbr.rel target = $region3
  $region8: #{cstr_forward.11} parent=0 // loop_exit
    _

// kernel: cstr_forward.13
$region0: #{cstr_forward.13}
  #allocation0 [shape = 'u32[]', space=smem, size = 0x4, offset = 0x4, fixed_abs, tag = 'smem constant byte address 0x4 - core index']
  #allocation1 [shape = 'u32[72,128]{1,0:T(1,128)}', space=vmem, size = 0x9000, scoped, tag = 'internal scratch']
  %s0 = inlined_call_operand.vmem [shape: bf16[4,8,8,128], index: 0, kind: input, shape index: {}]
  %s1 = inlined_call_operand.vmem [shape: bf16[8,8,128], index: 1, kind: input, shape index: {}]
  %s2 = inlined_call_operand.vmem [shape: bf16[128,384], index: 2, kind: input, shape index: {}]
  %s3 = inlined_call_operand.vmem [shape: f32[1,8], index: 3, kind: input, shape index: {}]
  %s4 = inlined_call_operand.vmem [shape: bf16[4,8,8,128], index: 4, kind: output, shape index: {}]
  %s5 = sld [smem:[#allocation0]]
  $region49: #{cstr_forward.13} parent=0
    _
  %s7 = ssub.s32 1, %s5
  %s8 = scalar_select 0, %s7, %s5
  loop: start=0, step=1, limit=6
  $region2: #{cstr_forward.13} parent=0 // loop_pre_header
    _
  $region3: #{cstr_forward.13} parent=0 // loop_header
    %s10 = sphi 0, %s14
    %p11 = scmp.ge.s32.totalorder %s10, 6
    %s17 = sphi 0, %s29
    %s18 = sphi 0, %s25
    %s19 = sphi 0, %s17
    %s20 = sphi 0, %s18
    %s21 = sphi 0, %s19
    %s22 = sphi 0, %s20
    %s34 = sphi 0, %s36
    %s37 = sphi 0, %s34
    %s38 = sphi 0, %s37
    %s54 = sphi 0, %s38
    %s60 = sphi 0, %s62
    %s63 = sphi 0, %s60
    %s64 = sphi 0, %s63
    %s80 = sphi 0, %s64
    %s84 = sphi 0, %s84
    %s86 = sphi 0, %s84
    %s87 = sphi 0, %s86
    %s101 = sphi 0, %s87
    %s105 = sphi 0, %s105
    %s107 = sphi 0, %s105
    %s108 = sphi 0, %s107
    %s122 = sphi 0, %s108
    %s130 = sphi 0, %s132
    %s133 = sphi 0, %s130
    %s134 = sphi 0, %s133
    %s150 = sphi 0, %s134
  $region4: #{cstr_forward.13} parent=0 // loop_header_branch
    %13 = sbr.rel (%p11) target = $region8
  $region5: #{cstr_forward.13} parent=0 // loop_body
    %s15 = ssub.s32 %s10, 1
    %s16 = ssub.s32 %s10, 2
    %s23 = sadd.s32 1, %s18
    %p24 = scmp.ge.s32.totalorder %s23, 1
    %s25 = scalar_select %p24, 0, %s23
    %s26 = sadd.s32 1, %s17
    %s27 = scalar_select %p24, %s26, %s17
    %p28 = scmp.ge.s32.totalorder %s27, 4
    %s29 = scalar_select %p28, 0, %s27
    %s30 = ssub.s32 %s17, %s29
    %s31 = ssub.s32 %s18, %s25
    %s32 = sor.u32 %s30, %s31
    %p33 = scmp.eq.s32.totalorder %s32, 0
    %s35 = sadd.s32 %s34, 1
    %s36 = scalar_select %p33, %s34, %s35
    %p39 = pneg %p33
    %p40 = scmp.eq.s32.totalorder %s10, 3
    %p41 = por %p39, %p40
    %p42 = scmp.ne.s32.totalorder %s34, %s37
    %p43 = scmp.eq.s32.totalorder %s10, 0
    %p44 = por %p42, %p43
    %p45 = scmp.ne.s32.totalorder %s34, %s37
    %p46 = scmp.eq.s32.totalorder %s15, 3
    %p47 = por %p45, %p46
    %p48 = scmp.ne.s32.totalorder %s37, %s38
    %p49 = scmp.eq.s32.totalorder %s15, 0
    %p50 = por %p48, %p49
    %p51 = scmp.ne.s32.totalorder %s37, %s38
    %p52 = scmp.eq.s32.totalorder %s16, 3
    %p53 = por %p51, %p52
    %p55 = scmp.ne.s32.totalorder %s38, %s54
    %p56 = scmp.eq.s32.totalorder %s16, 0
    %p57 = por %p55, %p56
    %s58 = ssub.s32 %s18, %s25
    %p59 = scmp.eq.s32.totalorder %s58, 0
    %s61 = sadd.s32 %s60, 1
    %s62 = scalar_select %p59, %s60, %s61
    %p65 = pneg %p59
    %p66 = scmp.eq.s32.totalorder %s10, 3
    %p67 = por %p65, %p66
    %p68 = scmp.ne.s32.totalorder %s60, %s63
    %p69 = scmp.eq.s32.totalorder %s10, 0
    %p70 = por %p68, %p69
    %p71 = scmp.ne.s32.totalorder %s60, %s63
    %p72 = scmp.eq.s32.totalorder %s15, 3
    %p73 = por %p71, %p72
    %p74 = scmp.ne.s32.totalorder %s63, %s64
    %p75 = scmp.eq.s32.totalorder %s15, 0
    %p76 = por %p74, %p75
    %p77 = scmp.ne.s32.totalorder %s63, %s64
    %p78 = scmp.eq.s32.totalorder %s16, 3
    %p79 = por %p77, %p78
    %p81 = scmp.ne.s32.totalorder %s64, %s80
    %p82 = scmp.eq.s32.totalorder %s16, 0
    %p83 = por %p81, %p82
    %s85 = sadd.s32 %s84, 1
    %p88 = scmp.eq.s32.totalorder %s10, 3
    %p89 = scmp.ne.s32.totalorder %s84, %s86
    %p90 = scmp.eq.s32.totalorder %s10, 0
    %p91 = por %p89, %p90
    %p92 = scmp.ne.s32.totalorder %s84, %s86
    %p93 = scmp.eq.s32.totalorder %s15, 3
    %p94 = por %p92, %p93
    %p95 = scmp.ne.s32.totalorder %s86, %s87
    %p96 = scmp.eq.s32.totalorder %s15, 0
    %p97 = por %p95, %p96
    %p98 = scmp.ne.s32.totalorder %s86, %s87
    %p99 = scmp.eq.s32.totalorder %s16, 3
    %p100 = por %p98, %p99
    %p102 = scmp.ne.s32.totalorder %s87, %s101
    %p103 = scmp.eq.s32.totalorder %s16, 0
    %p104 = por %p102, %p103
    %s106 = sadd.s32 %s105, 1
    %p109 = scmp.eq.s32.totalorder %s10, 3
    %p110 = scmp.ne.s32.totalorder %s105, %s107
    %p111 = scmp.eq.s32.totalorder %s10, 0
    %p112 = por %p110, %p111
    %p113 = scmp.ne.s32.totalorder %s105, %s107
    %p114 = scmp.eq.s32.totalorder %s15, 3
    %p115 = por %p113, %p114
    %p116 = scmp.ne.s32.totalorder %s107, %s108
    %p117 = scmp.eq.s32.totalorder %s15, 0
    %p118 = por %p116, %p117
    %p119 = scmp.ne.s32.totalorder %s107, %s108
    %p120 = scmp.eq.s32.totalorder %s16, 3
    %p121 = por %p119, %p120
    %p123 = scmp.ne.s32.totalorder %s108, %s122
    %p124 = scmp.eq.s32.totalorder %s16, 0
    %p125 = por %p123, %p124
    %s126 = ssub.s32 %s17, %s29
    %s127 = ssub.s32 %s18, %s25
    %s128 = sor.u32 %s126, %s127
    %p129 = scmp.eq.s32.totalorder %s128, 0
    %s131 = sadd.s32 %s130, 1
    %s132 = scalar_select %p129, %s130, %s131
    %p135 = pneg %p129
    %p136 = scmp.eq.s32.totalorder %s10, 3
    %p137 = por %p135, %p136
    %p138 = scmp.ne.s32.totalorder %s130, %s133
    %p139 = scmp.eq.s32.totalorder %s10, 0
    %p140 = por %p138, %p139
    %p141 = scmp.ne.s32.totalorder %s130, %s133
    %p142 = scmp.eq.s32.totalorder %s15, 3
    %p143 = por %p141, %p142
    %p144 = scmp.ne.s32.totalorder %s133, %s134
    %p145 = scmp.eq.s32.totalorder %s15, 0
    %p146 = por %p144, %p145
    %p147 = scmp.ne.s32.totalorder %s133, %s134
    %p148 = scmp.eq.s32.totalorder %s16, 3
    %p149 = por %p147, %p148
    %p151 = scmp.ne.s32.totalorder %s134, %s150
    %p152 = scmp.eq.s32.totalorder %s16, 0
    %p153 = por %p151, %p152
    %p154 = scmp.le.s32.totalorder 1, %s10
    %p155 = scmp.lt.s32.totalorder %s10, 5
    %p156 = pnand %p154, %p155
    %p157 = pneg %p156
    // Predicated region
    $region9: #{cstr_forward.13} parent=5 // pred_check
      _
    $region10: #{cstr_forward.13} parent=5 // pred_check_branch
      %159 = sbr.rel (%p156) target = $region12
    $region11: #{cstr_forward.13} parent=5 // pred_region
      %s160 = ssub.s32 %s10, 1
      // Predicated region
      $region13: #{cstr_forward.13} parent=11 // pred_check
        %p161 = pneg %p76
      $region14: #{cstr_forward.13} parent=11 // pred_check_branch
        %163 = sbr.rel (%p161) target = $region16
      $region15: #{cstr_forward.13} parent=11 // pred_region
        %s164 = smul.u32 8, %s20
        %p165 = scmp.lt.s32.totalorder %s164, 7
        %s166 = scalar_select %p165, %s164, 7
        %s167 = smul.addr %s166, 4
        %s168 = scalar_lea.vmem %s1, %s167
        %s169 = smul.u32 8, %s20
      $region16: #{cstr_forward.13} parent=11 // pred_fallthru
        _
      // Predicated region
      $region17: #{cstr_forward.13} parent=11 // pred_check
        %p170 = pneg %p97
      $region18: #{cstr_forward.13} parent=11 // pred_check_branch
        %172 = sbr.rel (%p170) target = $region20
      $region19: #{cstr_forward.13} parent=11 // pred_region
        _
      $region20: #{cstr_forward.13} parent=11 // pred_fallthru
        _
      // Predicated region
      $region21: #{cstr_forward.13} parent=11 // pred_check
        %p173 = pneg %p118
      $region22: #{cstr_forward.13} parent=11 // pred_check_branch
        %175 = sbr.rel (%p173) target = $region24
      $region23: #{cstr_forward.13} parent=11 // pred_region
        _
      $region24: #{cstr_forward.13} parent=11 // pred_fallthru
        _
    $region12: #{cstr_forward.13} parent=5 // pred_fallthru
      _
    %p176 = scmp.lt.s32.totalorder %s10, 4
    // Predicated region
    $region25: #{cstr_forward.13} parent=5 // pred_check
      %p177 = pneg %p176
    $region26: #{cstr_forward.13} parent=5 // pred_check_branch
      %179 = sbr.rel (%p177) target = $region28
    $region27: #{cstr_forward.13} parent=5 // pred_region
      // Predicated region
      $region29: #{cstr_forward.13} parent=27 // pred_check
        %p180 = pneg %p44
      $region30: #{cstr_forward.13} parent=27 // pred_check_branch
        %182 = sbr.rel (%p180) target = $region32
      $region31: #{cstr_forward.13} parent=27 // pred_region
        %s183 = smul.u32 8, %s18
        %p184 = scmp.lt.s32.totalorder %s17, 3
        %s185 = scalar_select %p184, %s17, 3
        %p186 = scmp.lt.s32.totalorder %s183, 7
        %s187 = scalar_select %p186, %s183, 7
        %s188 = smul.addr %s185, 8
        %s189 = sadd.s32 %s187, %s188
        %s190 = smul.addr %s189, 4
        %s191 = scalar_lea.vmem %s0, %s190
        %s192 = smul.u32 8, %s18
      $region32: #{cstr_forward.13} parent=27 // pred_fallthru
        _
    $region28: #{cstr_forward.13} parent=5 // pred_fallthru
      _
    %p193 = scmp.le.s32.totalorder 1, %s10
    %p194 = scmp.lt.s32.totalorder %s10, 5
    %p195 = pnand %p193, %p194
    %p196 = pneg %p195
    // Predicated region
    $region33: #{cstr_forward.13} parent=5 // pred_check
      _
    $region34: #{cstr_forward.13} parent=5 // pred_check_branch
      %198 = sbr.rel (%p195) target = $region36
    $region35: #{cstr_forward.13} parent=5 // pred_region
      %s199 = ssub.s32 %s10, 1
      %s200 = smul.u32 8, %s20
      %p201 = scmp.lt.s32.totalorder %s19, 3
      %s202 = scalar_select %p201, %s19, 3
      %p203 = scmp.lt.s32.totalorder %s200, 7
      %s204 = scalar_select %p203, %s200, 7
      %s205 = smul.addr %s202, 8
      %s206 = sadd.s32 %s204, %s205
      %s207 = smul.addr %s206, 4
      %s208 = scalar_lea.vmem %s0, %s207
      %p209 = pneg %p50
      %p210 = pneg %p47
      %s211 = smul.u32 8, %s20
      %p212 = scmp.lt.s32.totalorder %s211, 7
      %s213 = scalar_select %p212, %s211, 7
      %s214 = smul.addr %s213, 4
      %s215 = scalar_lea.vmem %s1, %s214
      %p216 = pneg %p76
      %p217 = pneg %p73
      %p218 = pneg %p97
      %p219 = pneg %p94
      %p220 = pneg %p118
      %p221 = pneg %p115
      %p222 = pneg %p146
      %p223 = pneg %p143
      %s224 = smul.u32 8, %s20
      %p225 = scmp.lt.s32.totalorder %s19, 3
      %s226 = scalar_select %p225, %s19, 3
      %p227 = scmp.lt.s32.totalorder %s224, 7
      %s228 = scalar_select %p227, %s224, 7
      %s229 = smul.addr %s226, 8
      %s230 = sadd.s32 %s228, %s229
      %s231 = smul.addr %s230, 4
      %s232 = scalar_lea.vmem %s4, %s231
      %s233 = smul.u32 8, %s20
      %p234 = scmp.lt.s32.totalorder %s19, 3
      %s235 = scalar_select %p234, %s19, 3
      %p236 = scmp.lt.s32.totalorder %s233, 7
      %s237 = scalar_select %p236, %s233, 7
      %s238 = smul.addr %s235, 8
      %s239 = sadd.s32 %s237, %s238
      %s240 = smul.addr %s239, 4
      %s241 = scalar_lea.vmem %s0, %s240
      %s242 = smul.u32 8, %s20
      %s243 = smul.u32 8, %s20
      %p244 = scmp.lt.s32.totalorder %s243, 7
      %s245 = scalar_select %p244, %s243, 7
      %s246 = smul.addr %s245, 4
      %s247 = scalar_lea.vmem %s1, %s246
      %s248 = smul.u32 8, %s20
      %s249 = smul.u32 8, %s20
      %p250 = scmp.lt.s32.totalorder %s19, 3
      %s251 = scalar_select %p250, %s19, 3
      %p252 = scmp.lt.s32.totalorder %s249, 7
      %s253 = scalar_select %p252, %s249, 7
      %s254 = smul.addr %s251, 8
      %s255 = sadd.s32 %s253, %s254
      %s256 = smul.addr %s255, 4
      %s257 = scalar_lea.vmem %s4, %s256
      %s258 = smul.u32 8, %s20
      %v260 = vld [vmem:[%s241] sm:$0xf]
      %v261 = vld [vmem:[%s241 + $0x4] sm:$0xf]
      %v262 = vld [vmem:[%s241 + $0x8] sm:$0xf]
      %v263 = vld [vmem:[%s241 + $0xc] sm:$0xf]
      %v264 = vld [vmem:[%s241 + $0x10] sm:$0xf]
      %v265 = vld [vmem:[%s241 + $0x14] sm:$0xf]
      %v266 = vld [vmem:[%s241 + $0x18] sm:$0xf]
      %v267 = vld [vmem:[%s241 + $0x1c] sm:$0xf]
      %v268 = vld [vmem:[%s247] sm:$0xf]
      %v269 = vld [vmem:[%s247 + $0x4] sm:$0xf]
      %v270 = vld [vmem:[%s247 + $0x8] sm:$0xf]
      %v271 = vld [vmem:[%s247 + $0xc] sm:$0xf]
      %v272 = vld [vmem:[%s247 + $0x10] sm:$0xf]
      %v273 = vld [vmem:[%s247 + $0x14] sm:$0xf]
      %v274 = vld [vmem:[%s247 + $0x18] sm:$0xf]
      %v275 = vld [vmem:[%s247 + $0x1c] sm:$0xf]
      %v276 = vunpack.c.l.bf16 %v260
      %v277 = vunpack.c.l.bf16 %v261
      %v278 = vunpack.c.l.bf16 %v262
      %v279 = vunpack.c.l.bf16 %v263
      %v280 = vunpack.c.l.bf16 %v264
      %v281 = vunpack.c.l.bf16 %v265
      %v282 = vunpack.c.l.bf16 %v266
      %v283 = vunpack.c.l.bf16 %v267
      %v284 = vunpack.c.l.bf16 %v268
      %v285 = vunpack.c.l.bf16 %v269
      %v286 = vunpack.c.l.bf16 %v270
      %v287 = vunpack.c.l.bf16 %v271
      %v288 = vunpack.c.l.bf16 %v272
      %v289 = vunpack.c.l.bf16 %v273
      %v290 = vunpack.c.l.bf16 %v274
      %v291 = vunpack.c.l.bf16 %v275
      %v292 = vadd.f32 %v276, %v284
      %v293 = vadd.f32 %v277, %v285
      %v294 = vadd.f32 %v278, %v286
      %v295 = vadd.f32 %v279, %v287
      %v296 = vadd.f32 %v280, %v288
      %v297 = vadd.f32 %v281, %v289
      %v298 = vadd.f32 %v282, %v290
      %v299 = vadd.f32 %v283, %v291
      %v300 = vpack.c.bf16 %v292, %v292
      %v301 = vpack.c.bf16 %v293, %v293
      %v302 = vpack.c.bf16 %v294, %v294
      %v303 = vpack.c.bf16 %v295, %v295
      %v304 = vpack.c.bf16 %v296, %v296
      %v305 = vpack.c.bf16 %v297, %v297
      %v306 = vpack.c.bf16 %v298, %v298
      %v307 = vpack.c.bf16 %v299, %v299
      %v308 = vld [vmem:[%s2] sm:$0xff]
      %v309 = vld [vmem:[%s2 + $0x8] sm:$0xf]
      %v310 = vld [vmem:[%s2 + $0xc] sm:$0xff]
      %v311 = vld [vmem:[%s2 + $0x14] sm:$0xf]
      %v312 = vld [vmem:[%s2 + $0x18] sm:$0xff]
      %v313 = vld [vmem:[%s2 + $0x20] sm:$0xf]
      %v314 = vld [vmem:[%s2 + $0x24] sm:$0xff]
      %v315 = vld [vmem:[%s2 + $0x2c] sm:$0xf]
      %v316 = vld [vmem:[%s2 + $0x30] sm:$0xff]
      %v317 = vld [vmem:[%s2 + $0x38] sm:$0xf]
      %v318 = vld [vmem:[%s2 + $0x3c] sm:$0xff]
      %v319 = vld [vmem:[%s2 + $0x44] sm:$0xf]
      %v320 = vld [vmem:[%s2 + $0x48] sm:$0xff]
      %v321 = vld [vmem:[%s2 + $0x50] sm:$0xf]
      %v322 = vld [vmem:[%s2 + $0x54] sm:$0xff]
      %v323 = vld [vmem:[%s2 + $0x5c] sm:$0xf]
      %v324 = vld [vmem:[%s2 + $0x60] sm:$0xff]
      %v325 = vld [vmem:[%s2 + $0x68] sm:$0xf]
      %v326 = vld [vmem:[%s2 + $0x6c] sm:$0xff]
      %v327 = vld [vmem:[%s2 + $0x74] sm:$0xf]
      %v328 = vld [vmem:[%s2 + $0x78] sm:$0xff]
      %v329 = vld [vmem:[%s2 + $0x80] sm:$0xf]
      %v330 = vld [vmem:[%s2 + $0x84] sm:$0xff]
      %v331 = vld [vmem:[%s2 + $0x8c] sm:$0xf]
      %v332 = vld [vmem:[%s2 + $0x90] sm:$0xff]
      %v333 = vld [vmem:[%s2 + $0x98] sm:$0xf]
      %v334 = vld [vmem:[%s2 + $0x9c] sm:$0xff]
      %v335 = vld [vmem:[%s2 + $0xa4] sm:$0xf]
      %v336 = vld [vmem:[%s2 + $0xa8] sm:$0xff]
      %v337 = vld [vmem:[%s2 + $0xb0] sm:$0xf]
      %v338 = vld [vmem:[%s2 + $0xb4] sm:$0xff]
      %v339 = vld [vmem:[%s2 + $0xbc] sm:$0xf]
      %v348 = vunpack.c.l.b16 %v300
      %v349 = vunpack.c.l.b16 %v301
      %v350 = vunpack.c.l.b16 %v302
      %v351 = vunpack.c.l.b16 %v303
      %v352 = vunpack.c.l.b16 %v304
      %v353 = vunpack.c.l.b16 %v305
      %v354 = vunpack.c.l.b16 %v306
      %v355 = vunpack.c.l.b16 %v307
      %v356 = vpack.c.b16 %v349, %v348
      %v357 = vpack.c.b16 %v351, %v350
      %v358 = vpack.c.b16 %v353, %v352
      %v359 = vpack.c.b16 %v355, %v354
      %v396 = vunpack.c.l.b16 %v308
      %v397 = vunpack.c.h.b16 %v308
      %v398 = vunpack.c.l.b16 %v309
      %v399 = vunpack.c.l.b16 %v310
      %v400 = vunpack.c.h.b16 %v310
      %v401 = vunpack.c.l.b16 %v311
      %v402 = vunpack.c.l.b16 %v312
      %v403 = vunpack.c.h.b16 %v312
      %v404 = vunpack.c.l.b16 %v313
      %v405 = vunpack.c.l.b16 %v314
      %v406 = vunpack.c.h.b16 %v314
      %v407 = vunpack.c.l.b16 %v315
      %v408 = vunpack.c.l.b16 %v316
      %v409 = vunpack.c.h.b16 %v316
      %v410 = vunpack.c.l.b16 %v317
      %v411 = vunpack.c.l.b16 %v318
      %v412 = vunpack.c.h.b16 %v318
      %v413 = vunpack.c.l.b16 %v319
      %v414 = vunpack.c.l.b16 %v320
      %v415 = vunpack.c.h.b16 %v320
      %v416 = vunpack.c.l.b16 %v321
      %v417 = vunpack.c.l.b16 %v322
      %v418 = vunpack.c.h.b16 %v322
      %v419 = vunpack.c.l.b16 %v323
      %v420 = vunpack.c.l.b16 %v324
      %v421 = vunpack.c.h.b16 %v324
      %v422 = vunpack.c.l.b16 %v325
      %v423 = vunpack.c.l.b16 %v326
      %v424 = vunpack.c.h.b16 %v326
      %v425 = vunpack.c.l.b16 %v327
      %v426 = vunpack.c.l.b16 %v328
      %v427 = vunpack.c.h.b16 %v328
      %v428 = vunpack.c.l.b16 %v329
      %v429 = vunpack.c.l.b16 %v330
      %v430 = vunpack.c.h.b16 %v330
      %v431 = vunpack.c.l.b16 %v331
      %v432 = vunpack.c.l.b16 %v332
      %v433 = vunpack.c.h.b16 %v332
      %v434 = vunpack.c.l.b16 %v333
      %v435 = vunpack.c.l.b16 %v334
      %v436 = vunpack.c.h.b16 %v334
      %v437 = vunpack.c.l.b16 %v335
      %v438 = vunpack.c.l.b16 %v336
      %v439 = vunpack.c.h.b16 %v336
      %v440 = vunpack.c.l.b16 %v337
      %v441 = vunpack.c.l.b16 %v338
      %v442 = vunpack.c.h.b16 %v338
      %v443 = vunpack.c.l.b16 %v339
      %v444 = vpack.c.b16 %v399, %v396
      %v445 = vpack.c.b16 %v400, %v397
      %v446 = vpack.c.b16 %v401, %v398
      %v447 = vpack.c.b16 %v405, %v402
      %v448 = vpack.c.b16 %v406, %v403
      %v449 = vpack.c.b16 %v407, %v404
      %v450 = vpack.c.b16 %v411, %v408
      %v451 = vpack.c.b16 %v412, %v409
      %v452 = vpack.c.b16 %v413, %v410
      %v453 = vpack.c.b16 %v417, %v414
      %v454 = vpack.c.b16 %v418, %v415
      %v455 = vpack.c.b16 %v419, %v416
      %v456 = vpack.c.b16 %v423, %v420
      %v457 = vpack.c.b16 %v424, %v421
      %v458 = vpack.c.b16 %v425, %v422
      %v459 = vpack.c.b16 %v429, %v426
      %v460 = vpack.c.b16 %v430, %v427
      %v461 = vpack.c.b16 %v431, %v428
      %v462 = vpack.c.b16 %v435, %v432
      %v463 = vpack.c.b16 %v436, %v433
      %v464 = vpack.c.b16 %v437, %v434
      %v465 = vpack.c.b16 %v441, %v438
      %v466 = vpack.c.b16 %v442, %v439
      %v467 = vpack.c.b16 %v443, %v440
      %492 = vmatpush.bf16.msra.mxu0 %v465
      %493 = vmatpush.bf16.msra.mxu0 %v462
      %494 = vmatpush.bf16.msra.mxu0 %v459
      %495 = vmatpush.bf16.msra.mxu0 %v456
      %496 = vmatpush.bf16.msra.mxu0 %v453
      %497 = vmatpush.bf16.msra.mxu0 %v450
      %498 = vmatpush.bf16.msra.mxu0 %v447
      %499 = vmatpush.bf16.msra.mxu0 %v444
      %500 = vmatmul.bf16.gmra.mxu0 %v356
      %v501 = vpop.f32.mrf.mxu0
      %v502 = vadd.f32 0.0, %v501
      %v503 = vpop.f32.mrf.mxu0
      %v504 = vadd.f32 0.0, %v503
      %505 = vmatmul.bf16.gmra.mxu0 %v357
      %v506 = vpop.f32.mrf.mxu0
      %v507 = vadd.f32 0.0, %v506
      %v508 = vpop.f32.mrf.mxu0
      %v509 = vadd.f32 0.0, %v508
      %510 = vmatmul.bf16.gmra.mxu0 %v358
      %v511 = vpop.f32.mrf.mxu0
      %v512 = vadd.f32 0.0, %v511
      %v513 = vpop.f32.mrf.mxu0
      %v514 = vadd.f32 0.0, %v513
      %515 = vmatmul.bf16.gmra.mxu0 %v359
      %v516 = vpop.f32.mrf.mxu0
      %v517 = vadd.f32 0.0, %v516
      %v518 = vpop.f32.mrf.mxu0
      %v519 = vadd.f32 0.0, %v518
      %520 = vdwg.mxu0
      %521 = vmatpush.bf16.msra.mxu0 %v466
      %522 = vmatpush.bf16.msra.mxu0 %v463
      %523 = vmatpush.bf16.msra.mxu0 %v460
      %524 = vmatpush.bf16.msra.mxu0 %v457
      %525 = vmatpush.bf16.msra.mxu0 %v454
      %526 = vmatpush.bf16.msra.mxu0 %v451
      %527 = vmatpush.bf16.msra.mxu0 %v448
      %528 = vmatpush.bf16.msra.mxu0 %v445
      %529 = vmatmul.bf16.gmra.mxu0 %v356
      %v530 = vpop.f32.mrf.mxu0
      %v531 = vadd.f32 0.0, %v530
      %v532 = vpop.f32.mrf.mxu0
      %v533 = vadd.f32 0.0, %v532
      %534 = vmatmul.bf16.gmra.mxu0 %v357
      %v535 = vpop.f32.mrf.mxu0
      %v536 = vadd.f32 0.0, %v535
      %v537 = vpop.f32.mrf.mxu0
      %v538 = vadd.f32 0.0, %v537
      %539 = vmatmul.bf16.gmra.mxu0 %v358
      %v540 = vpop.f32.mrf.mxu0
      %v541 = vadd.f32 0.0, %v540
      %v542 = vpop.f32.mrf.mxu0
      %v543 = vadd.f32 0.0, %v542
      %544 = vmatmul.bf16.gmra.mxu0 %v359
      %v545 = vpop.f32.mrf.mxu0
      %v546 = vadd.f32 0.0, %v545
      %v547 = vpop.f32.mrf.mxu0
      %v548 = vadd.f32 0.0, %v547
      %549 = vdwg.mxu0
      %550 = vmatpush.bf16.msra.mxu0 %v467
      %551 = vmatpush.bf16.msra.mxu0 %v464
      %552 = vmatpush.bf16.msra.mxu0 %v461
      %553 = vmatpush.bf16.msra.mxu0 %v458
      %554 = vmatpush.bf16.msra.mxu0 %v455
      %555 = vmatpush.bf16.msra.mxu0 %v452
      %556 = vmatpush.bf16.msra.mxu0 %v449
      %557 = vmatpush.bf16.msra.mxu0 %v446
      %558 = vmatmul.bf16.gmra.mxu0 %v356
      %v559 = vpop.f32.mrf.mxu0
      %v560 = vadd.f32 0.0, %v559
      %v561 = vpop.f32.mrf.mxu0
      %v562 = vadd.f32 0.0, %v561
      %563 = vmatmul.bf16.gmra.mxu0 %v357
      %v564 = vpop.f32.mrf.mxu0
      %v565 = vadd.f32 0.0, %v564
      %v566 = vpop.f32.mrf.mxu0
      %v567 = vadd.f32 0.0, %v566
      %568 = vmatmul.bf16.gmra.mxu0 %v358
      %v569 = vpop.f32.mrf.mxu0
      %v570 = vadd.f32 0.0, %v569
      %v571 = vpop.f32.mrf.mxu0
      %v572 = vadd.f32 0.0, %v571
      %573 = vmatmul.bf16.gmra.mxu0 %v359
      %v574 = vpop.f32.mrf.mxu0
      %v575 = vadd.f32 0.0, %v574
      %v576 = vpop.f32.mrf.mxu0
      %v577 = vadd.f32 0.0, %v576
      %578 = vdwg.mxu0
      %v579 = vpack.c.bf16 %v531, %v502
      %v580 = vpack.c.bf16 %v560, %v560
      %v581 = vpack.c.bf16 %v533, %v504
      %v582 = vpack.c.bf16 %v562, %v562
      %v583 = vpack.c.bf16 %v536, %v507
      %v584 = vpack.c.bf16 %v565, %v565
      %v585 = vpack.c.bf16 %v538, %v509
      %v586 = vpack.c.bf16 %v567, %v567
      %v587 = vpack.c.bf16 %v541, %v512
      %v588 = vpack.c.bf16 %v570, %v570
      %v589 = vpack.c.bf16 %v543, %v514
      %v590 = vpack.c.bf16 %v572, %v572
      %v591 = vpack.c.bf16 %v546, %v517
      %v592 = vpack.c.bf16 %v575, %v575
      %v593 = vpack.c.bf16 %v548, %v519
      %v594 = vpack.c.bf16 %v577, %v577
      %v596 = vrot.slane %v579, 4
      %598 = vmatpush.bf16.xpose.msra.mxu0 0
      %599 = vmatpush.bf16.xpose.msra.mxu0 0
      %600 = vmatpush.bf16.xpose.msra.mxu0 0
      %601 = vmatpush.bf16.xpose.msra.mxu0 0
      %602 = vmatpush.bf16.xpose.msra.mxu0 0
      %603 = vmatpush.bf16.xpose.msra.mxu0 0
      %604 = vmatpush.bf16.xpose.msra.mxu0 0
      %605 = vmatpush.bf16.xpose.msra.mxu0 %v596
      %606 = vmatmul.bf16.gmra.mxu0 %v579
      %v607 = vpop.f32.mrf.mxu0
      %v608 = vadd.f32 0.0, %v607
      %v609 = vpop.f32.mrf.mxu0
      %610 = vdwg.mxu0
      %v612 = vrot.slane %v581, 4
      %614 = vmatpush.bf16.xpose.msra.mxu0 0
      %615 = vmatpush.bf16.xpose.msra.mxu0 0
      %616 = vmatpush.bf16.xpose.msra.mxu0 0
      %617 = vmatpush.bf16.xpose.msra.mxu0 0
      %618 = vmatpush.bf16.xpose.msra.mxu0 0
      %619 = vmatpush.bf16.xpose.msra.mxu0 0
      %620 = vmatpush.bf16.xpose.msra.mxu0 0
      %621 = vmatpush.bf16.xpose.msra.mxu0 %v612
      %622 = vmatmul.bf16.gmra.mxu0 %v581
      %v623 = vpop.f32.mrf.mxu0
      %v624 = vadd.f32 0.0, %v623
      %v625 = vpop.f32.mrf.mxu0
      %626 = vdwg.mxu0
      %v628 = vrot.slane %v583, 4
      %630 = vmatpush.bf16.xpose.msra.mxu0 0
      %631 = vmatpush.bf16.xpose.msra.mxu0 0
      %632 = vmatpush.bf16.xpose.msra.mxu0 0
      %633 = vmatpush.bf16.xpose.msra.mxu0 0
      %634 = vmatpush.bf16.xpose.msra.mxu0 0
      %635 = vmatpush.bf16.xpose.msra.mxu0 0
      %636 = vmatpush.bf16.xpose.msra.mxu0 0
      %637 = vmatpush.bf16.xpose.msra.mxu0 %v628
      %638 = vmatmul.bf16.gmra.mxu0 %v583
      %v639 = vpop.f32.mrf.mxu0
      %v640 = vadd.f32 0.0, %v639
      %v641 = vpop.f32.mrf.mxu0
      %642 = vdwg.mxu0
      %v644 = vrot.slane %v585, 4
      %646 = vmatpush.bf16.xpose.msra.mxu0 0
      %647 = vmatpush.bf16.xpose.msra.mxu0 0
      %648 = vmatpush.bf16.xpose.msra.mxu0 0
      %649 = vmatpush.bf16.xpose.msra.mxu0 0
      %650 = vmatpush.bf16.xpose.msra.mxu0 0
      %651 = vmatpush.bf16.xpose.msra.mxu0 0
      %652 = vmatpush.bf16.xpose.msra.mxu0 0
      %653 = vmatpush.bf16.xpose.msra.mxu0 %v644
      %654 = vmatmul.bf16.gmra.mxu0 %v585
      %v655 = vpop.f32.mrf.mxu0
      %v656 = vadd.f32 0.0, %v655
      %v657 = vpop.f32.mrf.mxu0
      %658 = vdwg.mxu0
      %v660 = vrot.slane %v587, 4
      %662 = vmatpush.bf16.xpose.msra.mxu0 0
      %663 = vmatpush.bf16.xpose.msra.mxu0 0
      %664 = vmatpush.bf16.xpose.msra.mxu0 0
      %665 = vmatpush.bf16.xpose.msra.mxu0 0
      %666 = vmatpush.bf16.xpose.msra.mxu0 0
      %667 = vmatpush.bf16.xpose.msra.mxu0 0
      %668 = vmatpush.bf16.xpose.msra.mxu0 0
      %669 = vmatpush.bf16.xpose.msra.mxu0 %v660
      %670 = vmatmul.bf16.gmra.mxu0 %v587
      %v671 = vpop.f32.mrf.mxu0
      %v672 = vadd.f32 0.0, %v671
      %v673 = vpop.f32.mrf.mxu0
      %674 = vdwg.mxu0
      %v676 = vrot.slane %v589, 4
      %678 = vmatpush.bf16.xpose.msra.mxu0 0
      %679 = vmatpush.bf16.xpose.msra.mxu0 0
      %680 = vmatpush.bf16.xpose.msra.mxu0 0
      %681 = vmatpush.bf16.xpose.msra.mxu0 0
      %682 = vmatpush.bf16.xpose.msra.mxu0 0
      %683 = vmatpush.bf16.xpose.msra.mxu0 0
      %684 = vmatpush.bf16.xpose.msra.mxu0 0
      %685 = vmatpush.bf16.xpose.msra.mxu0 %v676
      %686 = vmatmul.bf16.gmra.mxu0 %v589
      %v687 = vpop.f32.mrf.mxu0
      %v688 = vadd.f32 0.0, %v687
      %v689 = vpop.f32.mrf.mxu0
      %690 = vdwg.mxu0
      %v692 = vrot.slane %v591, 4
      %694 = vmatpush.bf16.xpose.msra.mxu0 0
      %695 = vmatpush.bf16.xpose.msra.mxu0 0
      %696 = vmatpush.bf16.xpose.msra.mxu0 0
      %697 = vmatpush.bf16.xpose.msra.mxu0 0
      %698 = vmatpush.bf16.xpose.msra.mxu0 0
      %699 = vmatpush.bf16.xpose.msra.mxu0 0
      %700 = vmatpush.bf16.xpose.msra.mxu0 0
      %701 = vmatpush.bf16.xpose.msra.mxu0 %v692
      %702 = vmatmul.bf16.gmra.mxu0 %v591
      %v703 = vpop.f32.mrf.mxu0
      %v704 = vadd.f32 0.0, %v703
      %v705 = vpop.f32.mrf.mxu0
      %706 = vdwg.mxu0
      %v708 = vrot.slane %v593, 4
      %710 = vmatpush.bf16.xpose.msra.mxu0 0
      %711 = vmatpush.bf16.xpose.msra.mxu0 0
      %712 = vmatpush.bf16.xpose.msra.mxu0 0
      %713 = vmatpush.bf16.xpose.msra.mxu0 0
      %714 = vmatpush.bf16.xpose.msra.mxu0 0
      %715 = vmatpush.bf16.xpose.msra.mxu0 0
      %716 = vmatpush.bf16.xpose.msra.mxu0 0
      %717 = vmatpush.bf16.xpose.msra.mxu0 %v708
      %718 = vmatmul.bf16.gmra.mxu0 %v593
      %v719 = vpop.f32.mrf.mxu0
      %v720 = vadd.f32 0.0, %v719
      %v721 = vpop.f32.mrf.mxu0
      %722 = vdwg.mxu0
      %vm723 = vcmask 64512
      %v724 = vsel %vm723, %v608, -inf
      %725 = vmax.xlane.f32.xlu0 %v724
      %v726 = vpop.xlane.xlu0 %725
      %v727 = vsel %vm723, %v624, -inf
      %728 = vmax.xlane.f32.xlu0 %v727
      %v729 = vpop.xlane.xlu0 %728
      %v730 = vsel %vm723, %v640, -inf
      %731 = vmax.xlane.f32.xlu0 %v730
      %v732 = vpop.xlane.xlu0 %731
      %v733 = vsel %vm723, %v656, -inf
      %734 = vmax.xlane.f32.xlu0 %v733
      %v735 = vpop.xlane.xlu0 %734
      %v736 = vsel %vm723, %v672, -inf
      %737 = vmax.xlane.f32.xlu0 %v736
      %v738 = vpop.xlane.xlu0 %737
      %v739 = vsel %vm723, %v688, -inf
      %740 = vmax.xlane.f32.xlu0 %v739
      %v741 = vpop.xlane.xlu0 %740
      %v742 = vsel %vm723, %v704, -inf
      %743 = vmax.xlane.f32.xlu0 %v742
      %v744 = vpop.xlane.xlu0 %743
      %v745 = vsel %vm723, %v720, -inf
      %746 = vmax.xlane.f32.xlu0 %v745
      %v747 = vpop.xlane.xlu0 %746
      %v748 = vsub.f32 %v608, %v726
      %v749 = vsub.f32 %v624, %v729
      %v750 = vsub.f32 %v640, %v732
      %v751 = vsub.f32 %v656, %v735
      %v752 = vsub.f32 %v672, %v738
      %v753 = vsub.f32 %v688, %v741
      %v754 = vsub.f32 %v704, %v744
      %v755 = vsub.f32 %v720, %v747
      %v756 = vpack.c.bf16 %v748, %v748
      %v757 = vpack.c.bf16 %v749, %v749
      %v758 = vpack.c.bf16 %v750, %v750
      %v759 = vpack.c.bf16 %v751, %v751
      %v760 = vpack.c.bf16 %v752, %v752
      %v761 = vpack.c.bf16 %v753, %v753
      %v762 = vpack.c.bf16 %v754, %v754
      %v763 = vpack.c.bf16 %v755, %v755
      %v764 = vunpack.c.l.bf16 %v756
      %v765 = vunpack.c.l.bf16 %v757
      %v766 = vunpack.c.l.bf16 %v758
      %v767 = vunpack.c.l.bf16 %v759
      %v768 = vunpack.c.l.bf16 %v760
      %v769 = vunpack.c.l.bf16 %v761
      %v770 = vunpack.c.l.bf16 %v762
      %v771 = vunpack.c.l.bf16 %v763
      %v772 = vmul.f32 %v764, 1.442695
      %v773 = vpow.pop %v772
      %v774 = vmul.f32 %v765, 1.442695
      %v775 = vpow.pop %v774
      %v776 = vmul.f32 %v766, 1.442695
      %v777 = vpow.pop %v776
      %v778 = vmul.f32 %v767, 1.442695
      %v779 = vpow.pop %v778
      %v780 = vmul.f32 %v768, 1.442695
      %v781 = vpow.pop %v780
      %v782 = vmul.f32 %v769, 1.442695
      %v783 = vpow.pop %v782
      %v784 = vmul.f32 %v770, 1.442695
      %v785 = vpow.pop %v784
      %v786 = vmul.f32 %v771, 1.442695
      %v787 = vpow.pop %v786
      %v788 = vpack.c.bf16 %v773, %v773
      %v789 = vpack.c.bf16 %v775, %v775
      %v790 = vpack.c.bf16 %v777, %v777
      %v791 = vpack.c.bf16 %v779, %v779
      %v792 = vpack.c.bf16 %v781, %v781
      %v793 = vpack.c.bf16 %v783, %v783
      %v794 = vpack.c.bf16 %v785, %v785
      %v795 = vpack.c.bf16 %v787, %v787
      %v796 = vunpack.c.l.bf16 %v788
      %v797 = vunpack.c.l.bf16 %v789
      %v798 = vunpack.c.l.bf16 %v790
      %v799 = vunpack.c.l.bf16 %v791
      %v800 = vunpack.c.l.bf16 %v792
      %v801 = vunpack.c.l.bf16 %v793
      %v802 = vunpack.c.l.bf16 %v794
      %v803 = vunpack.c.l.bf16 %v795
      %v804 = vsel %vm723, %v796, 0.0
      %805 = vadd.xlane.f32.xlu0 %v804
      %v806 = vpop.xlane.xlu0 %805
      %v807 = vsel %vm723, %v797, 0.0
      %808 = vadd.xlane.f32.xlu0 %v807
      %v809 = vpop.xlane.xlu0 %808
      %v810 = vsel %vm723, %v798, 0.0
      %811 = vadd.xlane.f32.xlu0 %v810
      %v812 = vpop.xlane.xlu0 %811
      %v813 = vsel %vm723, %v799, 0.0
      %814 = vadd.xlane.f32.xlu0 %v813
      %v815 = vpop.xlane.xlu0 %814
      %v816 = vsel %vm723, %v800, 0.0
      %817 = vadd.xlane.f32.xlu0 %v816
      %v818 = vpop.xlane.xlu0 %817
      %v819 = vsel %vm723, %v801, 0.0
      %820 = vadd.xlane.f32.xlu0 %v819
      %v821 = vpop.xlane.xlu0 %820
      %v822 = vsel %vm723, %v802, 0.0
      %823 = vadd.xlane.f32.xlu0 %v822
      %v824 = vpop.xlane.xlu0 %823
      %v825 = vsel %vm723, %v803, 0.0
      %826 = vadd.xlane.f32.xlu0 %v825
      %v827 = vpop.xlane.xlu0 %826
      %v829 = vsel %vm723, %v788, 0
      %vm831 = vcmask 1043456
      %v833 = vsel %vm831, %v580, 0
      %835 = vmatpush.bf16.msra.mxu0 0
      %836 = vmatpush.bf16.msra.mxu0 0
      %837 = vmatpush.bf16.msra.mxu0 0
      %838 = vmatpush.bf16.msra.mxu0 0
      %839 = vmatpush.bf16.msra.mxu0 0
      %840 = vmatpush.bf16.msra.mxu0 0
      %841 = vmatpush.bf16.msra.mxu0 0
      %842 = vmatpush.bf16.msra.mxu0 %v833
      %843 = vmatmul.bf16.gmra.mxu0 %v829
      %v844 = vpop.f32.mrf.mxu0
      %v845 = vadd.f32 0.0, %v844
      %v846 = vpop.f32.mrf.mxu0
      %847 = vdwg.mxu0
      %v849 = vsel %vm723, %v789, 0
      %v852 = vsel %vm831, %v582, 0
      %854 = vmatpush.bf16.msra.mxu0 0
      %855 = vmatpush.bf16.msra.mxu0 0
      %856 = vmatpush.bf16.msra.mxu0 0
      %857 = vmatpush.bf16.msra.mxu0 0
      %858 = vmatpush.bf16.msra.mxu0 0
      %859 = vmatpush.bf16.msra.mxu0 0
      %860 = vmatpush.bf16.msra.mxu0 0
      %861 = vmatpush.bf16.msra.mxu0 %v852
      %862 = vmatmul.bf16.gmra.mxu0 %v849
      %v863 = vpop.f32.mrf.mxu0
      %v864 = vadd.f32 0.0, %v863
      %v865 = vpop.f32.mrf.mxu0
      %866 = vdwg.mxu0
      %v868 = vsel %vm723, %v790, 0
      %v871 = vsel %vm831, %v584, 0
      %873 = vmatpush.bf16.msra.mxu0 0
      %874 = vmatpush.bf16.msra.mxu0 0
      %875 = vmatpush.bf16.msra.mxu0 0
      %876 = vmatpush.bf16.msra.mxu0 0
      %877 = vmatpush.bf16.msra.mxu0 0
      %878 = vmatpush.bf16.msra.mxu0 0
      %879 = vmatpush.bf16.msra.mxu0 0
      %880 = vmatpush.bf16.msra.mxu0 %v871
      %881 = vmatmul.bf16.gmra.mxu0 %v868
      %v882 = vpop.f32.mrf.mxu0
      %v883 = vadd.f32 0.0, %v882
      %v884 = vpop.f32.mrf.mxu0
      %885 = vdwg.mxu0
      %v887 = vsel %vm723, %v791, 0
      %v890 = vsel %vm831, %v586, 0
      %892 = vmatpush.bf16.msra.mxu0 0
      %893 = vmatpush.bf16.msra.mxu0 0
      %894 = vmatpush.bf16.msra.mxu0 0
      %895 = vmatpush.bf16.msra.mxu0 0
      %896 = vmatpush.bf16.msra.mxu0 0
      %897 = vmatpush.bf16.msra.mxu0 0
      %898 = vmatpush.bf16.msra.mxu0 0
      %899 = vmatpush.bf16.msra.mxu0 %v890
      %900 = vmatmul.bf16.gmra.mxu0 %v887
      %v901 = vpop.f32.mrf.mxu0
      %v902 = vadd.f32 0.0, %v901
      %v903 = vpop.f32.mrf.mxu0
      %904 = vdwg.mxu0
      %v906 = vsel %vm723, %v792, 0
      %v909 = vsel %vm831, %v588, 0
      %911 = vmatpush.bf16.msra.mxu0 0
      %912 = vmatpush.bf16.msra.mxu0 0
      %913 = vmatpush.bf16.msra.mxu0 0
      %914 = vmatpush.bf16.msra.mxu0 0
      %915 = vmatpush.bf16.msra.mxu0 0
      %916 = vmatpush.bf16.msra.mxu0 0
      %917 = vmatpush.bf16.msra.mxu0 0
      %918 = vmatpush.bf16.msra.mxu0 %v909
      %919 = vmatmul.bf16.gmra.mxu0 %v906
      %v920 = vpop.f32.mrf.mxu0
      %v921 = vadd.f32 0.0, %v920
      %v922 = vpop.f32.mrf.mxu0
      %923 = vdwg.mxu0
      %v925 = vsel %vm723, %v793, 0
      %v928 = vsel %vm831, %v590, 0
      %930 = vmatpush.bf16.msra.mxu0 0
      %931 = vmatpush.bf16.msra.mxu0 0
      %932 = vmatpush.bf16.msra.mxu0 0
      %933 = vmatpush.bf16.msra.mxu0 0
      %934 = vmatpush.bf16.msra.mxu0 0
      %935 = vmatpush.bf16.msra.mxu0 0
      %936 = vmatpush.bf16.msra.mxu0 0
      %937 = vmatpush.bf16.msra.mxu0 %v928
      %938 = vmatmul.bf16.gmra.mxu0 %v925
      %v939 = vpop.f32.mrf.mxu0
      %v940 = vadd.f32 0.0, %v939
      %v941 = vpop.f32.mrf.mxu0
      %942 = vdwg.mxu0
      %v944 = vsel %vm723, %v794, 0
      %v947 = vsel %vm831, %v592, 0
      %949 = vmatpush.bf16.msra.mxu0 0
      %950 = vmatpush.bf16.msra.mxu0 0
      %951 = vmatpush.bf16.msra.mxu0 0
      %952 = vmatpush.bf16.msra.mxu0 0
      %953 = vmatpush.bf16.msra.mxu0 0
      %954 = vmatpush.bf16.msra.mxu0 0
      %955 = vmatpush.bf16.msra.mxu0 0
      %956 = vmatpush.bf16.msra.mxu0 %v947
      %957 = vmatmul.bf16.gmra.mxu0 %v944
      %v958 = vpop.f32.mrf.mxu0
      %v959 = vadd.f32 0.0, %v958
      %v960 = vpop.f32.mrf.mxu0
      %961 = vdwg.mxu0
      %v963 = vsel %vm723, %v795, 0
      %v966 = vsel %vm831, %v594, 0
      %968 = vmatpush.bf16.msra.mxu0 0
      %969 = vmatpush.bf16.msra.mxu0 0
      %970 = vmatpush.bf16.msra.mxu0 0
      %971 = vmatpush.bf16.msra.mxu0 0
      %972 = vmatpush.bf16.msra.mxu0 0
      %973 = vmatpush.bf16.msra.mxu0 0
      %974 = vmatpush.bf16.msra.mxu0 0
      %975 = vmatpush.bf16.msra.mxu0 %v966
      %976 = vmatmul.bf16.gmra.mxu0 %v963
      %v977 = vpop.f32.mrf.mxu0
      %v978 = vadd.f32 0.0, %v977
      %v979 = vpop.f32.mrf.mxu0
      %980 = vdwg.mxu0
      %v981 = vrcp.pop %v806
      %v982 = vrcp.pop %v809
      %v983 = vrcp.pop %v812
      %v984 = vrcp.pop %v815
      %v985 = vrcp.pop %v818
      %v986 = vrcp.pop %v821
      %v987 = vrcp.pop %v824
      %v988 = vrcp.pop %v827
      %v989 = vmul.f32 %v845, %v981
      %v990 = vmul.f32 %v864, %v982
      %v991 = vmul.f32 %v883, %v983
      %v992 = vmul.f32 %v902, %v984
      %v993 = vmul.f32 %v921, %v985
      %v994 = vmul.f32 %v940, %v986
      %v995 = vmul.f32 %v959, %v987
      %v996 = vmul.f32 %v978, %v988
      %v997 = vadd.f32 %v276, %v989
      %v998 = vadd.f32 %v277, %v990
      %v999 = vadd.f32 %v278, %v991
      %v1000 = vadd.f32 %v279, %v992
      %v1001 = vadd.f32 %v280, %v993
      %v1002 = vadd.f32 %v281, %v994
      %v1003 = vadd.f32 %v282, %v995
      %v1004 = vadd.f32 %v283, %v996
      %v1005 = vpack.c.bf16 %v997, %v997
      %v1006 = vpack.c.bf16 %v998, %v998
      %v1007 = vpack.c.bf16 %v999, %v999
      %v1008 = vpack.c.bf16 %v1000, %v1000
      %v1009 = vpack.c.bf16 %v1001, %v1001
      %v1010 = vpack.c.bf16 %v1002, %v1002
      %v1011 = vpack.c.bf16 %v1003, %v1003
      %v1012 = vpack.c.bf16 %v1004, %v1004
      %1013 = vst [vmem:[%s257] sm:$0xf] %v1005
      %1014 = vst [vmem:[%s257 + $0x4] sm:$0xf] %v1006
      %1015 = vst [vmem:[%s257 + $0x8] sm:$0xf] %v1007
      %1016 = vst [vmem:[%s257 + $0xc] sm:$0xf] %v1008
      %1017 = vst [vmem:[%s257 + $0x10] sm:$0xf] %v1009
      %1018 = vst [vmem:[%s257 + $0x14] sm:$0xf] %v1010
      %1019 = vst [vmem:[%s257 + $0x18] sm:$0xf] %v1011
      %1020 = vst [vmem:[%s257 + $0x1c] sm:$0xf] %v1012
      %s1021 = smul.u32 8, %s20
      %p1022 = scmp.lt.s32.totalorder %s19, 3
      %s1023 = scalar_select %p1022, %s19, 3
      %p1024 = scmp.lt.s32.totalorder %s1021, 7
      %s1025 = scalar_select %p1024, %s1021, 7
      %s1026 = smul.addr %s1023, 8
      %s1027 = sadd.s32 %s1025, %s1026
      %s1028 = smul.addr %s1027, 4
      %s1029 = scalar_lea.vmem %s4, %s1028
      // Predicated region
      $region37: #{cstr_forward.13} parent=35 // pred_check
        %p1030 = pneg %p143
      $region38: #{cstr_forward.13} parent=35 // pred_check_branch
        %1032 = sbr.rel (%p1030) target = $region40
      $region39: #{cstr_forward.13} parent=35 // pred_region
        %s1033 = smul.u32 8, %s20
      $region40: #{cstr_forward.13} parent=35 // pred_fallthru
        _
    $region36: #{cstr_forward.13} parent=5 // pred_fallthru
      _
    %p1034 = scmp.le.s32.totalorder 2, %s10
    // Predicated region
    $region41: #{cstr_forward.13} parent=5 // pred_check
      %p1035 = pneg %p1034
    $region42: #{cstr_forward.13} parent=5 // pred_check_branch
      %1037 = sbr.rel (%p1035) target = $region44
    $region43: #{cstr_forward.13} parent=5 // pred_region
      %s1038 = ssub.s32 %s10, 2
      // Predicated region
      $region45: #{cstr_forward.13} parent=43 // pred_check
        %p1039 = pneg %p149
      $region46: #{cstr_forward.13} parent=43 // pred_check_branch
        %1041 = sbr.rel (%p1039) target = $region48
      $region47: #{cstr_forward.13} parent=43 // pred_region
        %s1042 = smul.u32 8, %s22
        %p1043 = scmp.lt.s32.totalorder %s21, 3
        %s1044 = scalar_select %p1043, %s21, 3
        %p1045 = scmp.lt.s32.totalorder %s1042, 7
        %s1046 = scalar_select %p1045, %s1042, 7
        %s1047 = smul.addr %s1044, 8
        %s1048 = sadd.s32 %s1046, %s1047
        %s1049 = smul.addr %s1048, 4
        %s1050 = scalar_lea.vmem %s4, %s1049
      $region48: #{cstr_forward.13} parent=43 // pred_fallthru
        _
    $region44: #{cstr_forward.13} parent=5 // pred_fallthru
      _
  $region6: #{cstr_forward.13} parent=0 // loop_footer
    %s14 = sadd.s32 1, %s10
  $region7: #{cstr_forward.13} parent=0 // loop_footer_branch
    %9 = sbr.rel target = $region3
  $region8: #{cstr_forward.13} parent=0 // loop_exit
    _

// kernel: cstr_forward.15
$region0: #{cstr_forward.15}
  #allocation0 [shape = 'u32[]', space=smem, size = 0x4, offset = 0x4, fixed_abs, tag = 'smem constant byte address 0x4 - core index']
  #allocation1 [shape = 'u32[72,128]{1,0:T(1,128)}', space=vmem, size = 0x9000, scoped, tag = 'internal scratch']
  %s0 = inlined_call_operand.vmem [shape: bf16[2,8,8,128], index: 0, kind: input, shape index: {}]
  %s1 = inlined_call_operand.vmem [shape: bf16[2,8,8,128], index: 1, kind: input, shape index: {}]
  %s2 = inlined_call_operand.vmem [shape: bf16[128,128], index: 2, kind: input, shape index: {}]
  %s3 = inlined_call_operand.vmem [shape: bf16[128,128], index: 3, kind: input, shape index: {}]
  %s4 = inlined_call_operand.vmem [shape: f32[8,8], index: 4, kind: input, shape index: {}]
  %s5 = inlined_call_operand.vmem [shape: f32[8,8], index: 5, kind: input, shape index: {}]
  %s6 = inlined_call_operand.vmem [shape: f32[1,8], index: 6, kind: input, shape index: {}]
  %s7 = inlined_call_operand.vmem [shape: f32[2,8,8], index: 7, kind: output, shape index: {0}]
  %s8 = inlined_call_operand.vmem [shape: f32[2,8,8], index: 8, kind: output, shape index: {1}]
  %9 = xla_tuple %s7, %s8
  %s10 = sld [smem:[#allocation0]]
  $region69: #{cstr_forward.15} parent=0
    _
  %s12 = ssub.s32 1, %s10
  %s13 = scalar_select 0, %s12, %s10
  loop: start=0, step=1, limit=4
  $region2: #{cstr_forward.15} parent=0 // loop_pre_header
    _
  $region3: #{cstr_forward.15} parent=0 // loop_header
    %s15 = sphi 0, %s19
    %p16 = scmp.ge.s32.totalorder %s15, 4
    %s22 = sphi 0, %s34
    %s23 = sphi 0, %s30
    %s24 = sphi 0, %s22
    %s25 = sphi 0, %s23
    %s26 = sphi 0, %s24
    %s27 = sphi 0, %s25
    %s39 = sphi 0, %s41
    %s42 = sphi 0, %s39
    %s43 = sphi 0, %s42
    %s59 = sphi 0, %s43
    %s67 = sphi 0, %s69
    %s70 = sphi 0, %s67
    %s71 = sphi 0, %s70
    %s87 = sphi 0, %s71
    %s91 = sphi 0, %s91
    %s93 = sphi 0, %s91
    %s94 = sphi 0, %s93
    %s108 = sphi 0, %s94
    %s112 = sphi 0, %s112
    %s114 = sphi 0, %s112
    %s115 = sphi 0, %s114
    %s129 = sphi 0, %s115
    %s133 = sphi 0, %s133
    %s135 = sphi 0, %s133
    %s136 = sphi 0, %s135
    %s150 = sphi 0, %s136
    %s154 = sphi 0, %s154
    %s156 = sphi 0, %s154
    %s157 = sphi 0, %s156
    %s171 = sphi 0, %s157
    %s175 = sphi 0, %s175
    %s177 = sphi 0, %s175
    %s178 = sphi 0, %s177
    %s192 = sphi 0, %s178
    %s200 = sphi 0, %s202
    %s203 = sphi 0, %s200
    %s204 = sphi 0, %s203
    %s220 = sphi 0, %s204
    %s228 = sphi 0, %s230
    %s231 = sphi 0, %s228
    %s232 = sphi 0, %s231
    %s248 = sphi 0, %s232
  $region4: #{cstr_forward.15} parent=0 // loop_header_branch
    %18 = sbr.rel (%p16) target = $region8
  $region5: #{cstr_forward.15} parent=0 // loop_body
    %s20 = ssub.s32 %s15, 1
    %s21 = ssub.s32 %s15, 2
    %s28 = sadd.s32 1, %s23
    %p29 = scmp.ge.s32.totalorder %s28, 1
    %s30 = scalar_select %p29, 0, %s28
    %s31 = sadd.s32 1, %s22
    %s32 = scalar_select %p29, %s31, %s22
    %p33 = scmp.ge.s32.totalorder %s32, 2
    %s34 = scalar_select %p33, 0, %s32
    %s35 = ssub.s32 %s22, %s34
    %s36 = ssub.s32 %s23, %s30
    %s37 = sor.u32 %s35, %s36
    %p38 = scmp.eq.s32.totalorder %s37, 0
    %s40 = sadd.s32 %s39, 1
    %s41 = scalar_select %p38, %s39, %s40
    %p44 = pneg %p38
    %p45 = scmp.eq.s32.totalorder %s15, 1
    %p46 = por %p44, %p45
    %p47 = scmp.ne.s32.totalorder %s39, %s42
    %p48 = scmp.eq.s32.totalorder %s15, 0
    %p49 = por %p47, %p48
    %p50 = scmp.ne.s32.totalorder %s39, %s42
    %p51 = scmp.eq.s32.totalorder %s20, 1
    %p52 = por %p50, %p51
    %p53 = scmp.ne.s32.totalorder %s42, %s43
    %p54 = scmp.eq.s32.totalorder %s20, 0
    %p55 = por %p53, %p54
    %p56 = scmp.ne.s32.totalorder %s42, %s43
    %p57 = scmp.eq.s32.totalorder %s21, 1
    %p58 = por %p56, %p57
    %p60 = scmp.ne.s32.totalorder %s43, %s59
    %p61 = scmp.eq.s32.totalorder %s21, 0
    %p62 = por %p60, %p61
    %s63 = ssub.s32 %s22, %s34
    %s64 = ssub.s32 %s23, %s30
    %s65 = sor.u32 %s63, %s64
    %p66 = scmp.eq.s32.totalorder %s65, 0
    %s68 = sadd.s32 %s67, 1
    %s69 = scalar_select %p66, %s67, %s68
    %p72 = pneg %p66
    %p73 = scmp.eq.s32.totalorder %s15, 1
    %p74 = por %p72, %p73
    %p75 = scmp.ne.s32.totalorder %s67, %s70
    %p76 = scmp.eq.s32.totalorder %s15, 0
    %p77 = por %p75, %p76
    %p78 = scmp.ne.s32.totalorder %s67, %s70
    %p79 = scmp.eq.s32.totalorder %s20, 1
    %p80 = por %p78, %p79
    %p81 = scmp.ne.s32.totalorder %s70, %s71
    %p82 = scmp.eq.s32.totalorder %s20, 0
    %p83 = por %p81, %p82
    %p84 = scmp.ne.s32.totalorder %s70, %s71
    %p85 = scmp.eq.s32.totalorder %s21, 1
    %p86 = por %p84, %p85
    %p88 = scmp.ne.s32.totalorder %s71, %s87
    %p89 = scmp.eq.s32.totalorder %s21, 0
    %p90 = por %p88, %p89
    %s92 = sadd.s32 %s91, 1
    %p95 = scmp.eq.s32.totalorder %s15, 1
    %p96 = scmp.ne.s32.totalorder %s91, %s93
    %p97 = scmp.eq.s32.totalorder %s15, 0
    %p98 = por %p96, %p97
    %p99 = scmp.ne.s32.totalorder %s91, %s93
    %p100 = scmp.eq.s32.totalorder %s20, 1
    %p101 = por %p99, %p100
    %p102 = scmp.ne.s32.totalorder %s93, %s94
    %p103 = scmp.eq.s32.totalorder %s20, 0
    %p104 = por %p102, %p103
    %p105 = scmp.ne.s32.totalorder %s93, %s94
    %p106 = scmp.eq.s32.totalorder %s21, 1
    %p107 = por %p105, %p106
    %p109 = scmp.ne.s32.totalorder %s94, %s108
    %p110 = scmp.eq.s32.totalorder %s21, 0
    %p111 = por %p109, %p110
    %s113 = sadd.s32 %s112, 1
    %p116 = scmp.eq.s32.totalorder %s15, 1
    %p117 = scmp.ne.s32.totalorder %s112, %s114
    %p118 = scmp.eq.s32.totalorder %s15, 0
    %p119 = por %p117, %p118
    %p120 = scmp.ne.s32.totalorder %s112, %s114
    %p121 = scmp.eq.s32.totalorder %s20, 1
    %p122 = por %p120, %p121
    %p123 = scmp.ne.s32.totalorder %s114, %s115
    %p124 = scmp.eq.s32.totalorder %s20, 0
    %p125 = por %p123, %p124
    %p126 = scmp.ne.s32.totalorder %s114, %s115
    %p127 = scmp.eq.s32.totalorder %s21, 1
    %p128 = por %p126, %p127
    %p130 = scmp.ne.s32.totalorder %s115, %s129
    %p131 = scmp.eq.s32.totalorder %s21, 0
    %p132 = por %p130, %p131
    %s134 = sadd.s32 %s133, 1
    %p137 = scmp.eq.s32.totalorder %s15, 1
    %p138 = scmp.ne.s32.totalorder %s133, %s135
    %p139 = scmp.eq.s32.totalorder %s15, 0
    %p140 = por %p138, %p139
    %p141 = scmp.ne.s32.totalorder %s133, %s135
    %p142 = scmp.eq.s32.totalorder %s20, 1
    %p143 = por %p141, %p142
    %p144 = scmp.ne.s32.totalorder %s135, %s136
    %p145 = scmp.eq.s32.totalorder %s20, 0
    %p146 = por %p144, %p145
    %p147 = scmp.ne.s32.totalorder %s135, %s136
    %p148 = scmp.eq.s32.totalorder %s21, 1
    %p149 = por %p147, %p148
    %p151 = scmp.ne.s32.totalorder %s136, %s150
    %p152 = scmp.eq.s32.totalorder %s21, 0
    %p153 = por %p151, %p152
    %s155 = sadd.s32 %s154, 1
    %p158 = scmp.eq.s32.totalorder %s15, 1
    %p159 = scmp.ne.s32.totalorder %s154, %s156
    %p160 = scmp.eq.s32.totalorder %s15, 0
    %p161 = por %p159, %p160
    %p162 = scmp.ne.s32.totalorder %s154, %s156
    %p163 = scmp.eq.s32.totalorder %s20, 1
    %p164 = por %p162, %p163
    %p165 = scmp.ne.s32.totalorder %s156, %s157
    %p166 = scmp.eq.s32.totalorder %s20, 0
    %p167 = por %p165, %p166
    %p168 = scmp.ne.s32.totalorder %s156, %s157
    %p169 = scmp.eq.s32.totalorder %s21, 1
    %p170 = por %p168, %p169
    %p172 = scmp.ne.s32.totalorder %s157, %s171
    %p173 = scmp.eq.s32.totalorder %s21, 0
    %p174 = por %p172, %p173
    %s176 = sadd.s32 %s175, 1
    %p179 = scmp.eq.s32.totalorder %s15, 1
    %p180 = scmp.ne.s32.totalorder %s175, %s177
    %p181 = scmp.eq.s32.totalorder %s15, 0
    %p182 = por %p180, %p181
    %p183 = scmp.ne.s32.totalorder %s175, %s177
    %p184 = scmp.eq.s32.totalorder %s20, 1
    %p185 = por %p183, %p184
    %p186 = scmp.ne.s32.totalorder %s177, %s178
    %p187 = scmp.eq.s32.totalorder %s20, 0
    %p188 = por %p186, %p187
    %p189 = scmp.ne.s32.totalorder %s177, %s178
    %p190 = scmp.eq.s32.totalorder %s21, 1
    %p191 = por %p189, %p190
    %p193 = scmp.ne.s32.totalorder %s178, %s192
    %p194 = scmp.eq.s32.totalorder %s21, 0
    %p195 = por %p193, %p194
    %s196 = ssub.s32 %s22, %s34
    %s197 = ssub.s32 %s23, %s30
    %s198 = sor.u32 %s196, %s197
    %p199 = scmp.eq.s32.totalorder %s198, 0
    %s201 = sadd.s32 %s200, 1
    %s202 = scalar_select %p199, %s200, %s201
    %p205 = pneg %p199
    %p206 = scmp.eq.s32.totalorder %s15, 1
    %p207 = por %p205, %p206
    %p208 = scmp.ne.s32.totalorder %s200, %s203
    %p209 = scmp.eq.s32.totalorder %s15, 0
    %p210 = por %p208, %p209
    %p211 = scmp.ne.s32.totalorder %s200, %s203
    %p212 = scmp.eq.s32.totalorder %s20, 1
    %p213 = por %p211, %p212
    %p214 = scmp.ne.s32.totalorder %s203, %s204
    %p215 = scmp.eq.s32.totalorder %s20, 0
    %p216 = por %p214, %p215
    %p217 = scmp.ne.s32.totalorder %s203, %s204
    %p218 = scmp.eq.s32.totalorder %s21, 1
    %p219 = por %p217, %p218
    %p221 = scmp.ne.s32.totalorder %s204, %s220
    %p222 = scmp.eq.s32.totalorder %s21, 0
    %p223 = por %p221, %p222
    %s224 = ssub.s32 %s22, %s34
    %s225 = ssub.s32 %s23, %s30
    %s226 = sor.u32 %s224, %s225
    %p227 = scmp.eq.s32.totalorder %s226, 0
    %s229 = sadd.s32 %s228, 1
    %s230 = scalar_select %p227, %s228, %s229
    %p233 = pneg %p227
    %p234 = scmp.eq.s32.totalorder %s15, 1
    %p235 = por %p233, %p234
    %p236 = scmp.ne.s32.totalorder %s228, %s231
    %p237 = scmp.eq.s32.totalorder %s15, 0
    %p238 = por %p236, %p237
    %p239 = scmp.ne.s32.totalorder %s228, %s231
    %p240 = scmp.eq.s32.totalorder %s20, 1
    %p241 = por %p239, %p240
    %p242 = scmp.ne.s32.totalorder %s231, %s232
    %p243 = scmp.eq.s32.totalorder %s20, 0
    %p244 = por %p242, %p243
    %p245 = scmp.ne.s32.totalorder %s231, %s232
    %p246 = scmp.eq.s32.totalorder %s21, 1
    %p247 = por %p245, %p246
    %p249 = scmp.ne.s32.totalorder %s232, %s248
    %p250 = scmp.eq.s32.totalorder %s21, 0
    %p251 = por %p249, %p250
    %p252 = scmp.le.s32.totalorder 1, %s15
    %p253 = scmp.lt.s32.totalorder %s15, 3
    %p254 = pnand %p252, %p253
    %p255 = pneg %p254
    // Predicated region
    $region9: #{cstr_forward.15} parent=5 // pred_check
      _
    $region10: #{cstr_forward.15} parent=5 // pred_check_branch
      %257 = sbr.rel (%p254) target = $region12
    $region11: #{cstr_forward.15} parent=5 // pred_region
      %s258 = ssub.s32 %s15, 1
      // Predicated region
      $region13: #{cstr_forward.15} parent=11 // pred_check
        %p259 = pneg %p104
      $region14: #{cstr_forward.15} parent=11 // pred_check_branch
        %261 = sbr.rel (%p259) target = $region16
      $region15: #{cstr_forward.15} parent=11 // pred_region
        _
      $region16: #{cstr_forward.15} parent=11 // pred_fallthru
        _
      // Predicated region
      $region17: #{cstr_forward.15} parent=11 // pred_check
        %p262 = pneg %p125
      $region18: #{cstr_forward.15} parent=11 // pred_check_branch
        %264 = sbr.rel (%p262) target = $region20
      $region19: #{cstr_forward.15} parent=11 // pred_region
        _
      $region20: #{cstr_forward.15} parent=11 // pred_fallthru
        _
      // Predicated region
      $region21: #{cstr_forward.15} parent=11 // pred_check
        %p265 = pneg %p146
      $region22: #{cstr_forward.15} parent=11 // pred_check_branch
        %267 = sbr.rel (%p265) target = $region24
      $region23: #{cstr_forward.15} parent=11 // pred_region
        _
      $region24: #{cstr_forward.15} parent=11 // pred_fallthru
        _
      // Predicated region
      $region25: #{cstr_forward.15} parent=11 // pred_check
        %p268 = pneg %p167
      $region26: #{cstr_forward.15} parent=11 // pred_check_branch
        %270 = sbr.rel (%p268) target = $region28
      $region27: #{cstr_forward.15} parent=11 // pred_region
        _
      $region28: #{cstr_forward.15} parent=11 // pred_fallthru
        _
      // Predicated region
      $region29: #{cstr_forward.15} parent=11 // pred_check
        %p271 = pneg %p188
      $region30: #{cstr_forward.15} parent=11 // pred_check_branch
        %273 = sbr.rel (%p271) target = $region32
      $region31: #{cstr_forward.15} parent=11 // pred_region
        _
      $region32: #{cstr_forward.15} parent=11 // pred_fallthru
        _
    $region12: #{cstr_forward.15} parent=5 // pred_fallthru
      _
    %p274 = scmp.lt.s32.totalorder %s15, 2
    // Predicated region
    $region33: #{cstr_forward.15} parent=5 // pred_check
      %p275 = pneg %p274
    $region34: #{cstr_forward.15} parent=5 // pred_check_branch
      %277 = sbr.rel (%p275) target = $region36
    $region35: #{cstr_forward.15} parent=5 // pred_region
      // Predicated region
      $region37: #{cstr_forward.15} parent=35 // pred_check
        %p278 = pneg %p49
      $region38: #{cstr_forward.15} parent=35 // pred_check_branch
        %280 = sbr.rel (%p278) target = $region40
      $region39: #{cstr_forward.15} parent=35 // pred_region
        %s281 = smul.u32 8, %s23
        %p282 = scmp.lt.s32.totalorder %s22, 1
        %s283 = scalar_select %p282, %s22, 1
        %p284 = scmp.lt.s32.totalorder %s281, 7
        %s285 = scalar_select %p284, %s281, 7
        %s286 = smul.addr %s283, 8
        %s287 = sadd.s32 %s285, %s286
        %s288 = smul.addr %s287, 4
        %s289 = scalar_lea.vmem %s0, %s288
        %s290 = smul.u32 8, %s23
      $region40: #{cstr_forward.15} parent=35 // pred_fallthru
        _
      // Predicated region
      $region41: #{cstr_forward.15} parent=35 // pred_check
        %p291 = pneg %p77
      $region42: #{cstr_forward.15} parent=35 // pred_check_branch
        %293 = sbr.rel (%p291) target = $region44
      $region43: #{cstr_forward.15} parent=35 // pred_region
        %s294 = smul.u32 8, %s23
        %p295 = scmp.lt.s32.totalorder %s22, 1
        %s296 = scalar_select %p295, %s22, 1
        %p297 = scmp.lt.s32.totalorder %s294, 7
        %s298 = scalar_select %p297, %s294, 7
        %s299 = smul.addr %s296, 8
        %s300 = sadd.s32 %s298, %s299
        %s301 = smul.addr %s300, 4
        %s302 = scalar_lea.vmem %s1, %s301
        %s303 = smul.u32 8, %s23
      $region44: #{cstr_forward.15} parent=35 // pred_fallthru
        _
    $region36: #{cstr_forward.15} parent=5 // pred_fallthru
      _
    %p304 = scmp.le.s32.totalorder 1, %s15
    %p305 = scmp.lt.s32.totalorder %s15, 3
    %p306 = pnand %p304, %p305
    %p307 = pneg %p306
    // Predicated region
    $region45: #{cstr_forward.15} parent=5 // pred_check
      _
    $region46: #{cstr_forward.15} parent=5 // pred_check_branch
      %309 = sbr.rel (%p306) target = $region48
    $region47: #{cstr_forward.15} parent=5 // pred_region
      %s310 = ssub.s32 %s15, 1
      %s311 = smul.u32 8, %s25
      %p312 = scmp.lt.s32.totalorder %s24, 1
      %s313 = scalar_select %p312, %s24, 1
      %p314 = scmp.lt.s32.totalorder %s311, 7
      %s315 = scalar_select %p314, %s311, 7
      %s316 = smul.addr %s313, 8
      %s317 = sadd.s32 %s315, %s316
      %s318 = smul.addr %s317, 4
      %s319 = scalar_lea.vmem %s0, %s318
      %p320 = pneg %p55
      %p321 = pneg %p52
      %s322 = smul.u32 8, %s25
      %p323 = scmp.lt.s32.totalorder %s24, 1
      %s324 = scalar_select %p323, %s24, 1
      %p325 = scmp.lt.s32.totalorder %s322, 7
      %s326 = scalar_select %p325, %s322, 7
      %s327 = smul.addr %s324, 8
      %s328 = sadd.s32 %s326, %s327
      %s329 = smul.addr %s328, 4
      %s330 = scalar_lea.vmem %s1, %s329
      %p331 = pneg %p83
      %p332 = pneg %p80
      %p333 = pneg %p104
      %p334 = pneg %p101
      %p335 = pneg %p125
      %p336 = pneg %p122
      %p337 = pneg %p146
      %p338 = pneg %p143
      %p339 = pneg %p167
      %p340 = pneg %p164
      %p341 = pneg %p188
      %p342 = pneg %p185
      %p343 = pneg %p216
      %p344 = pneg %p213
      %p345 = scmp.lt.s32.totalorder %s24, 1
      %s346 = scalar_select %p345, %s24, 1
      %p347 = scmp.lt.s32.totalorder %s25, 0
      %s348 = scalar_select %p347, %s25, 0
      %s349 = sadd.s32 %s348, %s346
      %s350 = smul.addr %s349, 8
      %s351 = scalar_lea.vmem %s7, %s350
      %p352 = pneg %p244
      %p353 = pneg %p241
      %p354 = scmp.lt.s32.totalorder %s24, 1
      %s355 = scalar_select %p354, %s24, 1
      %p356 = scmp.lt.s32.totalorder %s25, 0
      %s357 = scalar_select %p356, %s25, 0
      %s358 = sadd.s32 %s357, %s355
      %s359 = smul.addr %s358, 8
      %s360 = scalar_lea.vmem %s8, %s359
      %s361 = smul.u32 8, %s25
      %p362 = scmp.lt.s32.totalorder %s24, 1
      %s363 = scalar_select %p362, %s24, 1
      %p364 = scmp.lt.s32.totalorder %s361, 7
      %s365 = scalar_select %p364, %s361, 7
      %s366 = smul.addr %s363, 8
      %s367 = sadd.s32 %s365, %s366
      %s368 = smul.addr %s367, 4
      %s369 = scalar_lea.vmem %s0, %s368
      %s370 = smul.u32 8, %s25
      %s371 = smul.u32 8, %s25
      %p372 = scmp.lt.s32.totalorder %s24, 1
      %s373 = scalar_select %p372, %s24, 1
      %p374 = scmp.lt.s32.totalorder %s371, 7
      %s375 = scalar_select %p374, %s371, 7
      %s376 = smul.addr %s373, 8
      %s377 = sadd.s32 %s375, %s376
      %s378 = smul.addr %s377, 4
      %s379 = scalar_lea.vmem %s1, %s378
      %s380 = smul.u32 8, %s25
      %p381 = scmp.lt.s32.totalorder %s24, 1
      %s382 = scalar_select %p381, %s24, 1
      %p383 = scmp.lt.s32.totalorder %s25, 0
      %s384 = scalar_select %p383, %s25, 0
      %s385 = sadd.s32 %s384, %s382
      %s386 = smul.addr %s385, 8
      %s387 = scalar_lea.vmem %s7, %s386
      %p388 = scmp.lt.s32.totalorder %s24, 1
      %s389 = scalar_select %p388, %s24, 1
      %p390 = scmp.lt.s32.totalorder %s25, 0
      %s391 = scalar_select %p390, %s25, 0
      %s392 = sadd.s32 %s391, %s389
      %s393 = smul.addr %s392, 8
      %s394 = scalar_lea.vmem %s8, %s393
      %v396 = vld [vmem:[%s369] sm:$0xf]
      %v397 = vld [vmem:[%s369 + $0x4] sm:$0xf]
      %v398 = vld [vmem:[%s369 + $0x8] sm:$0xf]
      %v399 = vld [vmem:[%s369 + $0xc] sm:$0xf]
      %v400 = vld [vmem:[%s369 + $0x10] sm:$0xf]
      %v401 = vld [vmem:[%s369 + $0x14] sm:$0xf]
      %v402 = vld [vmem:[%s369 + $0x18] sm:$0xf]
      %v403 = vld [vmem:[%s369 + $0x1c] sm:$0xf]
      %v404 = vld [vmem:[%s379] sm:$0xf]
      %v405 = vld [vmem:[%s379 + $0x4] sm:$0xf]
      %v406 = vld [vmem:[%s379 + $0x8] sm:$0xf]
      %v407 = vld [vmem:[%s379 + $0xc] sm:$0xf]
      %v408 = vld [vmem:[%s379 + $0x10] sm:$0xf]
      %v409 = vld [vmem:[%s379 + $0x14] sm:$0xf]
      %v410 = vld [vmem:[%s379 + $0x18] sm:$0xf]
      %v411 = vld [vmem:[%s379 + $0x1c] sm:$0xf]
      %v412 = vld [vmem:[%s2] sm:$0xf]
      %v413 = vld [vmem:[%s2 + $0x4] sm:$0xf]
      %v414 = vld [vmem:[%s2 + $0x8] sm:$0xf]
      %v415 = vld [vmem:[%s2 + $0xc] sm:$0xf]
      %v416 = vld [vmem:[%s2 + $0x10] sm:$0xf]
      %v417 = vld [vmem:[%s2 + $0x14] sm:$0xf]
      %v418 = vld [vmem:[%s2 + $0x18] sm:$0xf]
      %v419 = vld [vmem:[%s2 + $0x1c] sm:$0xf]
      %v420 = vld [vmem:[%s2 + $0x20] sm:$0xf]
      %v421 = vld [vmem:[%s2 + $0x24] sm:$0xf]
      %v422 = vld [vmem:[%s2 + $0x28] sm:$0xf]
      %v423 = vld [vmem:[%s2 + $0x2c] sm:$0xf]
      %v424 = vld [vmem:[%s2 + $0x30] sm:$0xf]
      %v425 = vld [vmem:[%s2 + $0x34] sm:$0xf]
      %v426 = vld [vmem:[%s2 + $0x38] sm:$0xf]
      %v427 = vld [vmem:[%s2 + $0x3c] sm:$0xf]
      %v436 = vunpack.c.l.b16 %v396
      %v437 = vunpack.c.l.b16 %v397
      %v438 = vunpack.c.l.b16 %v398
      %v439 = vunpack.c.l.b16 %v399
      %v440 = vunpack.c.l.b16 %v400
      %v441 = vunpack.c.l.b16 %v401
      %v442 = vunpack.c.l.b16 %v402
      %v443 = vunpack.c.l.b16 %v403
      %v444 = vpack.c.b16 %v437, %v436
      %v445 = vpack.c.b16 %v439, %v438
      %v446 = vpack.c.b16 %v441, %v440
      %v447 = vpack.c.b16 %v443, %v442
      %v468 = vunpack.c.l.b16 %v412
      %v469 = vunpack.c.l.b16 %v413
      %v470 = vunpack.c.l.b16 %v414
      %v471 = vunpack.c.l.b16 %v415
      %v472 = vunpack.c.l.b16 %v416
      %v473 = vunpack.c.l.b16 %v417
      %v474 = vunpack.c.l.b16 %v418
      %v475 = vunpack.c.l.b16 %v419
      %v476 = vunpack.c.l.b16 %v420
      %v477 = vunpack.c.l.b16 %v421
      %v478 = vunpack.c.l.b16 %v422
      %v479 = vunpack.c.l.b16 %v423
      %v480 = vunpack.c.l.b16 %v424
      %v481 = vunpack.c.l.b16 %v425
      %v482 = vunpack.c.l.b16 %v426
      %v483 = vunpack.c.l.b16 %v427
      %v484 = vpack.c.b16 %v469, %v468
      %v485 = vpack.c.b16 %v471, %v470
      %v486 = vpack.c.b16 %v473, %v472
      %v487 = vpack.c.b16 %v475, %v474
      %v488 = vpack.c.b16 %v477, %v476
      %v489 = vpack.c.b16 %v479, %v478
      %v490 = vpack.c.b16 %v481, %v480
      %v491 = vpack.c.b16 %v483, %v482
      %500 = vmatpush.bf16.msra.mxu0 %v491
      %501 = vmatpush.bf16.msra.mxu0 %v490
      %502 = vmatpush.bf16.msra.mxu0 %v489
      %503 = vmatpush.bf16.msra.mxu0 %v488
      %504 = vmatpush.bf16.msra.mxu0 %v487
      %505 = vmatpush.bf16.msra.mxu0 %v486
      %506 = vmatpush.bf16.msra.mxu0 %v485
      %507 = vmatpush.bf16.msra.mxu0 %v484
      %508 = vmatmul.bf16.gmra.mxu0 %v444
      %v509 = vpop.f32.mrf.mxu0
      %v510 = vadd.f32 0.0, %v509
      %v511 = vpop.f32.mrf.mxu0
      %v512 = vadd.f32 0.0, %v511
      %513 = vmatmul.bf16.gmra.mxu0 %v445
      %v514 = vpop.f32.mrf.mxu0
      %v515 = vadd.f32 0.0, %v514
      %v516 = vpop.f32.mrf.mxu0
      %v517 = vadd.f32 0.0, %v516
      %518 = vmatmul.bf16.gmra.mxu0 %v446
      %v519 = vpop.f32.mrf.mxu0
      %v520 = vadd.f32 0.0, %v519
      %v521 = vpop.f32.mrf.mxu0
      %v522 = vadd.f32 0.0, %v521
      %523 = vmatmul.bf16.gmra.mxu0 %v447
      %v524 = vpop.f32.mrf.mxu0
      %v525 = vadd.f32 0.0, %v524
      %v526 = vpop.f32.mrf.mxu0
      %v527 = vadd.f32 0.0, %v526
      %528 = vdwg.mxu0
      %v529 = vld [vmem:[%s3] sm:$0xf]
      %v530 = vld [vmem:[%s3 + $0x4] sm:$0xf]
      %v531 = vld [vmem:[%s3 + $0x8] sm:$0xf]
      %v532 = vld [vmem:[%s3 + $0xc] sm:$0xf]
      %v533 = vld [vmem:[%s3 + $0x10] sm:$0xf]
      %v534 = vld [vmem:[%s3 + $0x14] sm:$0xf]
      %v535 = vld [vmem:[%s3 + $0x18] sm:$0xf]
      %v536 = vld [vmem:[%s3 + $0x1c] sm:$0xf]
      %v537 = vld [vmem:[%s3 + $0x20] sm:$0xf]
      %v538 = vld [vmem:[%s3 + $0x24] sm:$0xf]
      %v539 = vld [vmem:[%s3 + $0x28] sm:$0xf]
      %v540 = vld [vmem:[%s3 + $0x2c] sm:$0xf]
      %v541 = vld [vmem:[%s3 + $0x30] sm:$0xf]
      %v542 = vld [vmem:[%s3 + $0x34] sm:$0xf]
      %v543 = vld [vmem:[%s3 + $0x38] sm:$0xf]
      %v544 = vld [vmem:[%s3 + $0x3c] sm:$0xf]
      %v553 = vunpack.c.l.b16 %v404
      %v554 = vunpack.c.l.b16 %v405
      %v555 = vunpack.c.l.b16 %v406
      %v556 = vunpack.c.l.b16 %v407
      %v557 = vunpack.c.l.b16 %v408
      %v558 = vunpack.c.l.b16 %v409
      %v559 = vunpack.c.l.b16 %v410
      %v560 = vunpack.c.l.b16 %v411
      %v561 = vpack.c.b16 %v554, %v553
      %v562 = vpack.c.b16 %v556, %v555
      %v563 = vpack.c.b16 %v558, %v557
      %v564 = vpack.c.b16 %v560, %v559
      %v585 = vunpack.c.l.b16 %v529
      %v586 = vunpack.c.l.b16 %v530
      %v587 = vunpack.c.l.b16 %v531
      %v588 = vunpack.c.l.b16 %v532
      %v589 = vunpack.c.l.b16 %v533
      %v590 = vunpack.c.l.b16 %v534
      %v591 = vunpack.c.l.b16 %v535
      %v592 = vunpack.c.l.b16 %v536
      %v593 = vunpack.c.l.b16 %v537
      %v594 = vunpack.c.l.b16 %v538
      %v595 = vunpack.c.l.b16 %v539
      %v596 = vunpack.c.l.b16 %v540
      %v597 = vunpack.c.l.b16 %v541
      %v598 = vunpack.c.l.b16 %v542
      %v599 = vunpack.c.l.b16 %v543
      %v600 = vunpack.c.l.b16 %v544
      %v601 = vpack.c.b16 %v586, %v585
      %v602 = vpack.c.b16 %v588, %v587
      %v603 = vpack.c.b16 %v590, %v589
      %v604 = vpack.c.b16 %v592, %v591
      %v605 = vpack.c.b16 %v594, %v593
      %v606 = vpack.c.b16 %v596, %v595
      %v607 = vpack.c.b16 %v598, %v597
      %v608 = vpack.c.b16 %v600, %v599
      %617 = vmatpush.bf16.msra.mxu0 %v608
      %618 = vmatpush.bf16.msra.mxu0 %v607
      %619 = vmatpush.bf16.msra.mxu0 %v606
      %620 = vmatpush.bf16.msra.mxu0 %v605
      %621 = vmatpush.bf16.msra.mxu0 %v604
      %622 = vmatpush.bf16.msra.mxu0 %v603
      %623 = vmatpush.bf16.msra.mxu0 %v602
      %624 = vmatpush.bf16.msra.mxu0 %v601
      %625 = vmatmul.bf16.gmra.mxu0 %v561
      %v626 = vpop.f32.mrf.mxu0
      %v627 = vadd.f32 0.0, %v626
      %v628 = vpop.f32.mrf.mxu0
      %v629 = vadd.f32 0.0, %v628
      %630 = vmatmul.bf16.gmra.mxu0 %v562
      %v631 = vpop.f32.mrf.mxu0
      %v632 = vadd.f32 0.0, %v631
      %v633 = vpop.f32.mrf.mxu0
      %v634 = vadd.f32 0.0, %v633
      %635 = vmatmul.bf16.gmra.mxu0 %v563
      %v636 = vpop.f32.mrf.mxu0
      %v637 = vadd.f32 0.0, %v636
      %v638 = vpop.f32.mrf.mxu0
      %v639 = vadd.f32 0.0, %v638
      %640 = vmatmul.bf16.gmra.mxu0 %v564
      %v641 = vpop.f32.mrf.mxu0
      %v642 = vadd.f32 0.0, %v641
      %v643 = vpop.f32.mrf.mxu0
      %v644 = vadd.f32 0.0, %v643
      %645 = vdwg.mxu0
      %v646 = vpack.c.bf16 %v510, %v510
      %v647 = vpack.c.bf16 %v512, %v512
      %v648 = vpack.c.bf16 %v515, %v515
      %v649 = vpack.c.bf16 %v517, %v517
      %v650 = vpack.c.bf16 %v520, %v520
      %v651 = vpack.c.bf16 %v522, %v522
      %v652 = vpack.c.bf16 %v525, %v525
      %v653 = vpack.c.bf16 %v527, %v527
      %v654 = vpack.c.bf16 %v627, %v627
      %v655 = vpack.c.bf16 %v629, %v629
      %v656 = vpack.c.bf16 %v632, %v632
      %v657 = vpack.c.bf16 %v634, %v634
      %v658 = vpack.c.bf16 %v637, %v637
      %v659 = vpack.c.bf16 %v639, %v639
      %v660 = vpack.c.bf16 %v642, %v642
      %v661 = vpack.c.bf16 %v644, %v644
      %662 = vmatpush.bf16.xpose.msra.mxu0 0
      %663 = vmatpush.bf16.xpose.msra.mxu0 0
      %664 = vmatpush.bf16.xpose.msra.mxu0 0
      %665 = vmatpush.bf16.xpose.msra.mxu0 0
      %666 = vmatpush.bf16.xpose.msra.mxu0 0
      %667 = vmatpush.bf16.xpose.msra.mxu0 0
      %668 = vmatpush.bf16.xpose.msra.mxu0 0
      %669 = vmatpush.bf16.xpose.msra.mxu0 %v654
      %670 = vmatmul.bf16.gmra.mxu0 %v646
      %v671 = vpop.f32.mrf.mxu0
      %v672 = vadd.f32 0.0, %v671
      %v673 = vpop.f32.mrf.mxu0
      %674 = vdwg.mxu0
      %675 = vmatpush.bf16.xpose.msra.mxu0 0
      %676 = vmatpush.bf16.xpose.msra.mxu0 0
      %677 = vmatpush.bf16.xpose.msra.mxu0 0
      %678 = vmatpush.bf16.xpose.msra.mxu0 0
      %679 = vmatpush.bf16.xpose.msra.mxu0 0
      %680 = vmatpush.bf16.xpose.msra.mxu0 0
      %681 = vmatpush.bf16.xpose.msra.mxu0 0
      %682 = vmatpush.bf16.xpose.msra.mxu0 %v655
      %683 = vmatmul.bf16.gmra.mxu0 %v647
      %v684 = vpop.f32.mrf.mxu0
      %v685 = vadd.f32 0.0, %v684
      %v686 = vpop.f32.mrf.mxu0
      %687 = vdwg.mxu0
      %688 = vmatpush.bf16.xpose.msra.mxu0 0
      %689 = vmatpush.bf16.xpose.msra.mxu0 0
      %690 = vmatpush.bf16.xpose.msra.mxu0 0
      %691 = vmatpush.bf16.xpose.msra.mxu0 0
      %692 = vmatpush.bf16.xpose.msra.mxu0 0
      %693 = vmatpush.bf16.xpose.msra.mxu0 0
      %694 = vmatpush.bf16.xpose.msra.mxu0 0
      %695 = vmatpush.bf16.xpose.msra.mxu0 %v656
      %696 = vmatmul.bf16.gmra.mxu0 %v648
      %v697 = vpop.f32.mrf.mxu0
      %v698 = vadd.f32 0.0, %v697
      %v699 = vpop.f32.mrf.mxu0
      %700 = vdwg.mxu0
      %701 = vmatpush.bf16.xpose.msra.mxu0 0
      %702 = vmatpush.bf16.xpose.msra.mxu0 0
      %703 = vmatpush.bf16.xpose.msra.mxu0 0
      %704 = vmatpush.bf16.xpose.msra.mxu0 0
      %705 = vmatpush.bf16.xpose.msra.mxu0 0
      %706 = vmatpush.bf16.xpose.msra.mxu0 0
      %707 = vmatpush.bf16.xpose.msra.mxu0 0
      %708 = vmatpush.bf16.xpose.msra.mxu0 %v657
      %709 = vmatmul.bf16.gmra.mxu0 %v649
      %v710 = vpop.f32.mrf.mxu0
      %v711 = vadd.f32 0.0, %v710
      %v712 = vpop.f32.mrf.mxu0
      %713 = vdwg.mxu0
      %714 = vmatpush.bf16.xpose.msra.mxu0 0
      %715 = vmatpush.bf16.xpose.msra.mxu0 0
      %716 = vmatpush.bf16.xpose.msra.mxu0 0
      %717 = vmatpush.bf16.xpose.msra.mxu0 0
      %718 = vmatpush.bf16.xpose.msra.mxu0 0
      %719 = vmatpush.bf16.xpose.msra.mxu0 0
      %720 = vmatpush.bf16.xpose.msra.mxu0 0
      %721 = vmatpush.bf16.xpose.msra.mxu0 %v658
      %722 = vmatmul.bf16.gmra.mxu0 %v650
      %v723 = vpop.f32.mrf.mxu0
      %v724 = vadd.f32 0.0, %v723
      %v725 = vpop.f32.mrf.mxu0
      %726 = vdwg.mxu0
      %727 = vmatpush.bf16.xpose.msra.mxu0 0
      %728 = vmatpush.bf16.xpose.msra.mxu0 0
      %729 = vmatpush.bf16.xpose.msra.mxu0 0
      %730 = vmatpush.bf16.xpose.msra.mxu0 0
      %731 = vmatpush.bf16.xpose.msra.mxu0 0
      %732 = vmatpush.bf16.xpose.msra.mxu0 0
      %733 = vmatpush.bf16.xpose.msra.mxu0 0
      %734 = vmatpush.bf16.xpose.msra.mxu0 %v659
      %735 = vmatmul.bf16.gmra.mxu0 %v651
      %v736 = vpop.f32.mrf.mxu0
      %v737 = vadd.f32 0.0, %v736
      %v738 = vpop.f32.mrf.mxu0
      %739 = vdwg.mxu0
      %740 = vmatpush.bf16.xpose.msra.mxu0 0
      %741 = vmatpush.bf16.xpose.msra.mxu0 0
      %742 = vmatpush.bf16.xpose.msra.mxu0 0
      %743 = vmatpush.bf16.xpose.msra.mxu0 0
      %744 = vmatpush.bf16.xpose.msra.mxu0 0
      %745 = vmatpush.bf16.xpose.msra.mxu0 0
      %746 = vmatpush.bf16.xpose.msra.mxu0 0
      %747 = vmatpush.bf16.xpose.msra.mxu0 %v660
      %748 = vmatmul.bf16.gmra.mxu0 %v652
      %v749 = vpop.f32.mrf.mxu0
      %v750 = vadd.f32 0.0, %v749
      %v751 = vpop.f32.mrf.mxu0
      %752 = vdwg.mxu0
      %753 = vmatpush.bf16.xpose.msra.mxu0 0
      %754 = vmatpush.bf16.xpose.msra.mxu0 0
      %755 = vmatpush.bf16.xpose.msra.mxu0 0
      %756 = vmatpush.bf16.xpose.msra.mxu0 0
      %757 = vmatpush.bf16.xpose.msra.mxu0 0
      %758 = vmatpush.bf16.xpose.msra.mxu0 0
      %759 = vmatpush.bf16.xpose.msra.mxu0 0
      %760 = vmatpush.bf16.xpose.msra.mxu0 %v661
      %761 = vmatmul.bf16.gmra.mxu0 %v653
      %v762 = vpop.f32.mrf.mxu0
      %v763 = vadd.f32 0.0, %v762
      %v764 = vpop.f32.mrf.mxu0
      %765 = vdwg.mxu0
      %vm766 = vcmask 64512
      %v767 = vsel %vm766, %v672, -inf
      %768 = vmax.xlane.f32.xlu0 %v767
      %v769 = vpop.xlane.xlu0 %768
      %v770 = vsel %vm766, %v685, -inf
      %771 = vmax.xlane.f32.xlu0 %v770
      %v772 = vpop.xlane.xlu0 %771
      %v773 = vsel %vm766, %v698, -inf
      %774 = vmax.xlane.f32.xlu0 %v773
      %v775 = vpop.xlane.xlu0 %774
      %v776 = vsel %vm766, %v711, -inf
      %777 = vmax.xlane.f32.xlu0 %v776
      %v778 = vpop.xlane.xlu0 %777
      %v779 = vsel %vm766, %v724, -inf
      %780 = vmax.xlane.f32.xlu0 %v779
      %v781 = vpop.xlane.xlu0 %780
      %v782 = vsel %vm766, %v737, -inf
      %783 = vmax.xlane.f32.xlu0 %v782
      %v784 = vpop.xlane.xlu0 %783
      %v785 = vsel %vm766, %v750, -inf
      %786 = vmax.xlane.f32.xlu0 %v785
      %v787 = vpop.xlane.xlu0 %786
      %v788 = vsel %vm766, %v763, -inf
      %789 = vmax.xlane.f32.xlu0 %v788
      %v790 = vpop.xlane.xlu0 %789
      %v791 = vsub.f32 %v672, %v769
      %v792 = vsub.f32 %v685, %v772
      %v793 = vsub.f32 %v698, %v775
      %v794 = vsub.f32 %v711, %v778
      %v795 = vsub.f32 %v724, %v781
      %v796 = vsub.f32 %v737, %v784
      %v797 = vsub.f32 %v750, %v787
      %v798 = vsub.f32 %v763, %v790
      %v799 = vpack.c.bf16 %v791, %v791
      %v800 = vpack.c.bf16 %v792, %v792
      %v801 = vpack.c.bf16 %v793, %v793
      %v802 = vpack.c.bf16 %v794, %v794
      %v803 = vpack.c.bf16 %v795, %v795
      %v804 = vpack.c.bf16 %v796, %v796
      %v805 = vpack.c.bf16 %v797, %v797
      %v806 = vpack.c.bf16 %v798, %v798
      %v807 = vunpack.c.l.bf16 %v799
      %v808 = vunpack.c.l.bf16 %v800
      %v809 = vunpack.c.l.bf16 %v801
      %v810 = vunpack.c.l.bf16 %v802
      %v811 = vunpack.c.l.bf16 %v803
      %v812 = vunpack.c.l.bf16 %v804
      %v813 = vunpack.c.l.bf16 %v805
      %v814 = vunpack.c.l.bf16 %v806
      %v815 = vmul.f32 %v807, 1.442695
      %v816 = vpow.pop %v815
      %v817 = vmul.f32 %v808, 1.442695
      %v818 = vpow.pop %v817
      %v819 = vmul.f32 %v809, 1.442695
      %v820 = vpow.pop %v819
      %v821 = vmul.f32 %v810, 1.442695
      %v822 = vpow.pop %v821
      %v823 = vmul.f32 %v811, 1.442695
      %v824 = vpow.pop %v823
      %v825 = vmul.f32 %v812, 1.442695
      %v826 = vpow.pop %v825
      %v827 = vmul.f32 %v813, 1.442695
      %v828 = vpow.pop %v827
      %v829 = vmul.f32 %v814, 1.442695
      %v830 = vpow.pop %v829
      %v831 = vpack.c.bf16 %v816, %v816
      %v832 = vpack.c.bf16 %v818, %v818
      %v833 = vpack.c.bf16 %v820, %v820
      %v834 = vpack.c.bf16 %v822, %v822
      %v835 = vpack.c.bf16 %v824, %v824
      %v836 = vpack.c.bf16 %v826, %v826
      %v837 = vpack.c.bf16 %v828, %v828
      %v838 = vpack.c.bf16 %v830, %v830
      %v839 = vunpack.c.l.bf16 %v831
      %v840 = vunpack.c.l.bf16 %v832
      %v841 = vunpack.c.l.bf16 %v833
      %v842 = vunpack.c.l.bf16 %v834
      %v843 = vunpack.c.l.bf16 %v835
      %v844 = vunpack.c.l.bf16 %v836
      %v845 = vunpack.c.l.bf16 %v837
      %v846 = vunpack.c.l.bf16 %v838
      %v847 = vsel %vm766, %v839, 0.0
      %848 = vadd.xlane.f32.xlu0 %v847
      %v849 = vpop.xlane.xlu0 %848
      %v850 = vsel %vm766, %v840, 0.0
      %851 = vadd.xlane.f32.xlu0 %v850
      %v852 = vpop.xlane.xlu0 %851
      %v853 = vsel %vm766, %v841, 0.0
      %854 = vadd.xlane.f32.xlu0 %v853
      %v855 = vpop.xlane.xlu0 %854
      %v856 = vsel %vm766, %v842, 0.0
      %857 = vadd.xlane.f32.xlu0 %v856
      %v858 = vpop.xlane.xlu0 %857
      %v859 = vsel %vm766, %v843, 0.0
      %860 = vadd.xlane.f32.xlu0 %v859
      %v861 = vpop.xlane.xlu0 %860
      %v862 = vsel %vm766, %v844, 0.0
      %863 = vadd.xlane.f32.xlu0 %v862
      %v864 = vpop.xlane.xlu0 %863
      %v865 = vsel %vm766, %v845, 0.0
      %866 = vadd.xlane.f32.xlu0 %v865
      %v867 = vpop.xlane.xlu0 %866
      %v868 = vsel %vm766, %v846, 0.0
      %869 = vadd.xlane.f32.xlu0 %v868
      %v870 = vpop.xlane.xlu0 %869
      %v871 = vld [vmem:[%s4] sm:$0xff]
      %v872 = vmul.f32 %v839, %v871
      %v873 = vmul.f32 %v840, %v871
      %v874 = vmul.f32 %v841, %v871
      %v875 = vmul.f32 %v842, %v871
      %v876 = vmul.f32 %v843, %v871
      %v877 = vmul.f32 %v844, %v871
      %v878 = vmul.f32 %v845, %v871
      %v879 = vmul.f32 %v846, %v871
      %v880 = vsel %vm766, %v872, 0.0
      %881 = vadd.xlane.f32.xlu0 %v880
      %v882 = vpop.xlane.xlu0 %881
      %v883 = vsel %vm766, %v873, 0.0
      %884 = vadd.xlane.f32.xlu0 %v883
      %v885 = vpop.xlane.xlu0 %884
      %v886 = vsel %vm766, %v874, 0.0
      %887 = vadd.xlane.f32.xlu0 %v886
      %v888 = vpop.xlane.xlu0 %887
      %v889 = vsel %vm766, %v875, 0.0
      %890 = vadd.xlane.f32.xlu0 %v889
      %v891 = vpop.xlane.xlu0 %890
      %v892 = vsel %vm766, %v876, 0.0
      %893 = vadd.xlane.f32.xlu0 %v892
      %v894 = vpop.xlane.xlu0 %893
      %v895 = vsel %vm766, %v877, 0.0
      %896 = vadd.xlane.f32.xlu0 %v895
      %v897 = vpop.xlane.xlu0 %896
      %v898 = vsel %vm766, %v878, 0.0
      %899 = vadd.xlane.f32.xlu0 %v898
      %v900 = vpop.xlane.xlu0 %899
      %v901 = vsel %vm766, %v879, 0.0
      %902 = vadd.xlane.f32.xlu0 %v901
      %v903 = vpop.xlane.xlu0 %902
      %v904 = vld [vmem:[%s5] sm:$0xff]
      %v905 = vmul.f32 %v839, %v904
      %v906 = vmul.f32 %v840, %v904
      %v907 = vmul.f32 %v841, %v904
      %v908 = vmul.f32 %v842, %v904
      %v909 = vmul.f32 %v843, %v904
      %v910 = vmul.f32 %v844, %v904
      %v911 = vmul.f32 %v845, %v904
      %v912 = vmul.f32 %v846, %v904
      %v913 = vsel %vm766, %v905, 0.0
      %914 = vadd.xlane.f32.xlu0 %v913
      %v915 = vpop.xlane.xlu0 %914
      %v916 = vsel %vm766, %v906, 0.0
      %917 = vadd.xlane.f32.xlu0 %v916
      %v918 = vpop.xlane.xlu0 %917
      %v919 = vsel %vm766, %v907, 0.0
      %920 = vadd.xlane.f32.xlu0 %v919
      %v921 = vpop.xlane.xlu0 %920
      %v922 = vsel %vm766, %v908, 0.0
      %923 = vadd.xlane.f32.xlu0 %v922
      %v924 = vpop.xlane.xlu0 %923
      %v925 = vsel %vm766, %v909, 0.0
      %926 = vadd.xlane.f32.xlu0 %v925
      %v927 = vpop.xlane.xlu0 %926
      %v928 = vsel %vm766, %v910, 0.0
      %929 = vadd.xlane.f32.xlu0 %v928
      %v930 = vpop.xlane.xlu0 %929
      %v931 = vsel %vm766, %v911, 0.0
      %932 = vadd.xlane.f32.xlu0 %v931
      %v933 = vpop.xlane.xlu0 %932
      %v934 = vsel %vm766, %v912, 0.0
      %935 = vadd.xlane.f32.xlu0 %v934
      %v936 = vpop.xlane.xlu0 %935
      %v937 = vrcp.pop %v849
      %v938 = vmul.f32 %v849, %v937
      %v939 = vsub.f32 1.0, %v938
      %v940 = vmul.f32 %v937, %v939
      %v941 = vadd.f32 %v937, %v940
      %vm942 = vweird.f32 %v849
      %vm943 = vweird.f32 %v937
      %vm944 = vmor %vm942, %vm943
      %v945 = vsel %vm944, %v937, %v941
      %v946 = vand.u32 2147483647, %v849
      %vm947 = vcmp.eq.f32.partialorder %v946, 8.507059e+37
      %v948 = vand.u32 %v849, 2147483648
      %v949 = vor.u32 1.1754944e-38, %v948
      %v950 = vsel %vm947, %v949, %v945
      %v951 = vmul.f32 %v882, %v950
      %v952 = vrcp.pop %v852
      %v953 = vmul.f32 %v852, %v952
      %v954 = vsub.f32 1.0, %v953
      %v955 = vmul.f32 %v952, %v954
      %v956 = vadd.f32 %v952, %v955
      %vm957 = vweird.f32 %v852
      %vm958 = vweird.f32 %v952
      %vm959 = vmor %vm957, %vm958
      %v960 = vsel %vm959, %v952, %v956
      %v961 = vand.u32 2147483647, %v852
      %vm962 = vcmp.eq.f32.partialorder %v961, 8.507059e+37
      %v963 = vand.u32 %v852, 2147483648
      %v964 = vor.u32 1.1754944e-38, %v963
      %v965 = vsel %vm962, %v964, %v960
      %v966 = vmul.f32 %v885, %v965
      %v967 = vrcp.pop %v855
      %v968 = vmul.f32 %v855, %v967
      %v969 = vsub.f32 1.0, %v968
      %v970 = vmul.f32 %v967, %v969
      %v971 = vadd.f32 %v967, %v970
      %vm972 = vweird.f32 %v855
      %vm973 = vweird.f32 %v967
      %vm974 = vmor %vm972, %vm973
      %v975 = vsel %vm974, %v967, %v971
      %v976 = vand.u32 2147483647, %v855
      %vm977 = vcmp.eq.f32.partialorder %v976, 8.507059e+37
      %v978 = vand.u32 %v855, 2147483648
      %v979 = vor.u32 1.1754944e-38, %v978
      %v980 = vsel %vm977, %v979, %v975
      %v981 = vmul.f32 %v888, %v980
      %v982 = vrcp.pop %v858
      %v983 = vmul.f32 %v858, %v982
      %v984 = vsub.f32 1.0, %v983
      %v985 = vmul.f32 %v982, %v984
      %v986 = vadd.f32 %v982, %v985
      %vm987 = vweird.f32 %v858
      %vm988 = vweird.f32 %v982
      %vm989 = vmor %vm987, %vm988
      %v990 = vsel %vm989, %v982, %v986
      %v991 = vand.u32 2147483647, %v858
      %vm992 = vcmp.eq.f32.partialorder %v991, 8.507059e+37
      %v993 = vand.u32 %v858, 2147483648
      %v994 = vor.u32 1.1754944e-38, %v993
      %v995 = vsel %vm992, %v994, %v990
      %v996 = vmul.f32 %v891, %v995
      %v997 = vrcp.pop %v861
      %v998 = vmul.f32 %v861, %v997
      %v999 = vsub.f32 1.0, %v998
      %v1000 = vmul.f32 %v997, %v999
      %v1001 = vadd.f32 %v997, %v1000
      %vm1002 = vweird.f32 %v861
      %vm1003 = vweird.f32 %v997
      %vm1004 = vmor %vm1002, %vm1003
      %v1005 = vsel %vm1004, %v997, %v1001
      %v1006 = vand.u32 2147483647, %v861
      %vm1007 = vcmp.eq.f32.partialorder %v1006, 8.507059e+37
      %v1008 = vand.u32 %v861, 2147483648
      %v1009 = vor.u32 1.1754944e-38, %v1008
      %v1010 = vsel %vm1007, %v1009, %v1005
      %v1011 = vmul.f32 %v894, %v1010
      %v1012 = vrcp.pop %v864
      %v1013 = vmul.f32 %v864, %v1012
      %v1014 = vsub.f32 1.0, %v1013
      %v1015 = vmul.f32 %v1012, %v1014
      %v1016 = vadd.f32 %v1012, %v1015
      %vm1017 = vweird.f32 %v864
      %vm1018 = vweird.f32 %v1012
      %vm1019 = vmor %vm1017, %vm1018
      %v1020 = vsel %vm1019, %v1012, %v1016
      %v1021 = vand.u32 2147483647, %v864
      %vm1022 = vcmp.eq.f32.partialorder %v1021, 8.507059e+37
      %v1023 = vand.u32 %v864, 2147483648
      %v1024 = vor.u32 1.1754944e-38, %v1023
      %v1025 = vsel %vm1022, %v1024, %v1020
      %v1026 = vmul.f32 %v897, %v1025
      %v1027 = vrcp.pop %v867
      %v1028 = vmul.f32 %v867, %v1027
      %v1029 = vsub.f32 1.0, %v1028
      %v1030 = vmul.f32 %v1027, %v1029
      %v1031 = vadd.f32 %v1027, %v1030
      %vm1032 = vweird.f32 %v867
      %vm1033 = vweird.f32 %v1027
      %vm1034 = vmor %vm1032, %vm1033
      %v1035 = vsel %vm1034, %v1027, %v1031
      %v1036 = vand.u32 2147483647, %v867
      %vm1037 = vcmp.eq.f32.partialorder %v1036, 8.507059e+37
      %v1038 = vand.u32 %v867, 2147483648
      %v1039 = vor.u32 1.1754944e-38, %v1038
      %v1040 = vsel %vm1037, %v1039, %v1035
      %v1041 = vmul.f32 %v900, %v1040
      %v1042 = vrcp.pop %v870
      %v1043 = vmul.f32 %v870, %v1042
      %v1044 = vsub.f32 1.0, %v1043
      %v1045 = vmul.f32 %v1042, %v1044
      %v1046 = vadd.f32 %v1042, %v1045
      %vm1047 = vweird.f32 %v870
      %vm1048 = vweird.f32 %v1042
      %vm1049 = vmor %vm1047, %vm1048
      %v1050 = vsel %vm1049, %v1042, %v1046
      %v1051 = vand.u32 2147483647, %v870
      %vm1052 = vcmp.eq.f32.partialorder %v1051, 8.507059e+37
      %v1053 = vand.u32 %v870, 2147483648
      %v1054 = vor.u32 1.1754944e-38, %v1053
      %v1055 = vsel %vm1052, %v1054, %v1050
      %v1056 = vmul.f32 %v903, %v1055
      %v1057 = vmul.f32 %v849, 1e-06
      %v1058 = vmul.f32 %v852, 1e-06
      %v1059 = vmul.f32 %v855, 1e-06
      %v1060 = vmul.f32 %v858, 1e-06
      %v1061 = vmul.f32 %v861, 1e-06
      %v1062 = vmul.f32 %v864, 1e-06
      %v1063 = vmul.f32 %v867, 1e-06
      %v1064 = vmul.f32 %v870, 1e-06
      %v1065 = vmax.f32 %v882, %v1057
      %v1066 = vmax.f32 %v885, %v1058
      %v1067 = vmax.f32 %v888, %v1059
      %v1068 = vmax.f32 %v891, %v1060
      %v1069 = vmax.f32 %v894, %v1061
      %v1070 = vmax.f32 %v897, %v1062
      %v1071 = vmax.f32 %v900, %v1063
      %v1072 = vmax.f32 %v903, %v1064
      %v1073 = vrcp.pop %v1065
      %v1074 = vmul.f32 %v1065, %v1073
      %v1075 = vsub.f32 1.0, %v1074
      %v1076 = vmul.f32 %v1073, %v1075
      %v1077 = vadd.f32 %v1073, %v1076
      %vm1078 = vweird.f32 %v1065
      %vm1079 = vweird.f32 %v1073
      %vm1080 = vmor %vm1078, %vm1079
      %v1081 = vsel %vm1080, %v1073, %v1077
      %v1082 = vand.u32 2147483647, %v1065
      %vm1083 = vcmp.eq.f32.partialorder %v1082, 8.507059e+37
      %v1084 = vand.u32 %v1065, 2147483648
      %v1085 = vor.u32 1.1754944e-38, %v1084
      %v1086 = vsel %vm1083, %v1085, %v1081
      %v1087 = vmul.f32 %v915, %v1086
      %v1088 = vrcp.pop %v1066
      %v1089 = vmul.f32 %v1066, %v1088
      %v1090 = vsub.f32 1.0, %v1089
      %v1091 = vmul.f32 %v1088, %v1090
      %v1092 = vadd.f32 %v1088, %v1091
      %vm1093 = vweird.f32 %v1066
      %vm1094 = vweird.f32 %v1088
      %vm1095 = vmor %vm1093, %vm1094
      %v1096 = vsel %vm1095, %v1088, %v1092
      %v1097 = vand.u32 2147483647, %v1066
      %vm1098 = vcmp.eq.f32.partialorder %v1097, 8.507059e+37
      %v1099 = vand.u32 %v1066, 2147483648
      %v1100 = vor.u32 1.1754944e-38, %v1099
      %v1101 = vsel %vm1098, %v1100, %v1096
      %v1102 = vmul.f32 %v918, %v1101
      %v1103 = vrcp.pop %v1067
      %v1104 = vmul.f32 %v1067, %v1103
      %v1105 = vsub.f32 1.0, %v1104
      %v1106 = vmul.f32 %v1103, %v1105
      %v1107 = vadd.f32 %v1103, %v1106
      %vm1108 = vweird.f32 %v1067
      %vm1109 = vweird.f32 %v1103
      %vm1110 = vmor %vm1108, %vm1109
      %v1111 = vsel %vm1110, %v1103, %v1107
      %v1112 = vand.u32 2147483647, %v1067
      %vm1113 = vcmp.eq.f32.partialorder %v1112, 8.507059e+37
      %v1114 = vand.u32 %v1067, 2147483648
      %v1115 = vor.u32 1.1754944e-38, %v1114
      %v1116 = vsel %vm1113, %v1115, %v1111
      %v1117 = vmul.f32 %v921, %v1116
      %v1118 = vrcp.pop %v1068
      %v1119 = vmul.f32 %v1068, %v1118
      %v1120 = vsub.f32 1.0, %v1119
      %v1121 = vmul.f32 %v1118, %v1120
      %v1122 = vadd.f32 %v1118, %v1121
      %vm1123 = vweird.f32 %v1068
      %vm1124 = vweird.f32 %v1118
      %vm1125 = vmor %vm1123, %vm1124
      %v1126 = vsel %vm1125, %v1118, %v1122
      %v1127 = vand.u32 2147483647, %v1068
      %vm1128 = vcmp.eq.f32.partialorder %v1127, 8.507059e+37
      %v1129 = vand.u32 %v1068, 2147483648
      %v1130 = vor.u32 1.1754944e-38, %v1129
      %v1131 = vsel %vm1128, %v1130, %v1126
      %v1132 = vmul.f32 %v924, %v1131
      %v1133 = vrcp.pop %v1069
      %v1134 = vmul.f32 %v1069, %v1133
      %v1135 = vsub.f32 1.0, %v1134
      %v1136 = vmul.f32 %v1133, %v1135
      %v1137 = vadd.f32 %v1133, %v1136
      %vm1138 = vweird.f32 %v1069
      %vm1139 = vweird.f32 %v1133
      %vm1140 = vmor %vm1138, %vm1139
      %v1141 = vsel %vm1140, %v1133, %v1137
      %v1142 = vand.u32 2147483647, %v1069
      %vm1143 = vcmp.eq.f32.partialorder %v1142, 8.507059e+37
      %v1144 = vand.u32 %v1069, 2147483648
      %v1145 = vor.u32 1.1754944e-38, %v1144
      %v1146 = vsel %vm1143, %v1145, %v1141
      %v1147 = vmul.f32 %v927, %v1146
      %v1148 = vrcp.pop %v1070
      %v1149 = vmul.f32 %v1070, %v1148
      %v1150 = vsub.f32 1.0, %v1149
      %v1151 = vmul.f32 %v1148, %v1150
      %v1152 = vadd.f32 %v1148, %v1151
      %vm1153 = vweird.f32 %v1070
      %vm1154 = vweird.f32 %v1148
      %vm1155 = vmor %vm1153, %vm1154
      %v1156 = vsel %vm1155, %v1148, %v1152
      %v1157 = vand.u32 2147483647, %v1070
      %vm1158 = vcmp.eq.f32.partialorder %v1157, 8.507059e+37
      %v1159 = vand.u32 %v1070, 2147483648
      %v1160 = vor.u32 1.1754944e-38, %v1159
      %v1161 = vsel %vm1158, %v1160, %v1156
      %v1162 = vmul.f32 %v930, %v1161
      %v1163 = vrcp.pop %v1071
      %v1164 = vmul.f32 %v1071, %v1163
      %v1165 = vsub.f32 1.0, %v1164
      %v1166 = vmul.f32 %v1163, %v1165
      %v1167 = vadd.f32 %v1163, %v1166
      %vm1168 = vweird.f32 %v1071
      %vm1169 = vweird.f32 %v1163
      %vm1170 = vmor %vm1168, %vm1169
      %v1171 = vsel %vm1170, %v1163, %v1167
      %v1172 = vand.u32 2147483647, %v1071
      %vm1173 = vcmp.eq.f32.partialorder %v1172, 8.507059e+37
      %v1174 = vand.u32 %v1071, 2147483648
      %v1175 = vor.u32 1.1754944e-38, %v1174
      %v1176 = vsel %vm1173, %v1175, %v1171
      %v1177 = vmul.f32 %v933, %v1176
      %v1178 = vrcp.pop %v1072
      %v1179 = vmul.f32 %v1072, %v1178
      %v1180 = vsub.f32 1.0, %v1179
      %v1181 = vmul.f32 %v1178, %v1180
      %v1182 = vadd.f32 %v1178, %v1181
      %vm1183 = vweird.f32 %v1072
      %vm1184 = vweird.f32 %v1178
      %vm1185 = vmor %vm1183, %vm1184
      %v1186 = vsel %vm1185, %v1178, %v1182
      %v1187 = vand.u32 2147483647, %v1072
      %vm1188 = vcmp.eq.f32.partialorder %v1187, 8.507059e+37
      %v1189 = vand.u32 %v1072, 2147483648
      %v1190 = vor.u32 1.1754944e-38, %v1189
      %v1191 = vsel %vm1188, %v1190, %v1186
      %v1192 = vmul.f32 %v936, %v1191
      %v1201 = vlaneseq
      %v1202 = vand.u32 %v1201, 127
      %v1203 = vperm.slane %v1087, %v1202
      %v1204 = vperm.slane %v1102, %v1202
      %v1205 = vperm.slane %v1117, %v1202
      %v1206 = vperm.slane %v1132, %v1202
      %v1207 = vperm.slane %v1147, %v1202
      %v1208 = vperm.slane %v1162, %v1202
      %v1209 = vperm.slane %v1177, %v1202
      %v1210 = vperm.slane %v1192, %v1202
      %vm1211 = vcmask 1041409
      %v1212 = vsel %vm1211, %v1204, %v1203
      %vm1213 = vcmask 1042434
      %v1214 = vsel %vm1213, %v1205, %v1212
      %vm1215 = vcmask 1043459
      %v1216 = vsel %vm1215, %v1206, %v1214
      %vm1217 = vcmask 1044484
      %v1218 = vsel %vm1217, %v1207, %v1216
      %vm1219 = vcmask 1045509
      %v1220 = vsel %vm1219, %v1208, %v1218
      %vm1221 = vcmask 1046534
      %v1222 = vsel %vm1221, %v1209, %v1220
      %vm1223 = vcmask 1047559
      %v1224 = vsel %vm1223, %v1210, %v1222
      %1226 = vst.msk [vmem:[%s387] sm:$0xff] %vm766, %v1224
      %v1227 = vsub.f32 1.0, %v951
      %v1228 = vsub.f32 1.0, %v966
      %v1229 = vsub.f32 1.0, %v981
      %v1230 = vsub.f32 1.0, %v996
      %v1231 = vsub.f32 1.0, %v1011
      %v1232 = vsub.f32 1.0, %v1026
      %v1233 = vsub.f32 1.0, %v1041
      %v1234 = vsub.f32 1.0, %v1056
      %v1243 = vperm.slane %v1227, %v1202
      %v1244 = vperm.slane %v1228, %v1202
      %v1245 = vperm.slane %v1229, %v1202
      %v1246 = vperm.slane %v1230, %v1202
      %v1247 = vperm.slane %v1231, %v1202
      %v1248 = vperm.slane %v1232, %v1202
      %v1249 = vperm.slane %v1233, %v1202
      %v1250 = vperm.slane %v1234, %v1202
      %v1251 = vsel %vm1211, %v1244, %v1243
      %v1252 = vsel %vm1213, %v1245, %v1251
      %v1253 = vsel %vm1215, %v1246, %v1252
      %v1254 = vsel %vm1217, %v1247, %v1253
      %v1255 = vsel %vm1219, %v1248, %v1254
      %v1256 = vsel %vm1221, %v1249, %v1255
      %v1257 = vsel %vm1223, %v1250, %v1256
      %1259 = vst.msk [vmem:[%s394] sm:$0xff] %vm766, %v1257
      %p1260 = scmp.lt.s32.totalorder %s24, 1
      %s1261 = scalar_select %p1260, %s24, 1
      %p1262 = scmp.lt.s32.totalorder %s25, 0
      %s1263 = scalar_select %p1262, %s25, 0
      %s1264 = sadd.s32 %s1263, %s1261
      %s1265 = smul.addr %s1264, 8
      %s1266 = scalar_lea.vmem %s7, %s1265
      %p1267 = scmp.lt.s32.totalorder %s24, 1
      %s1268 = scalar_select %p1267, %s24, 1
      %p1269 = scmp.lt.s32.totalorder %s25, 0
      %s1270 = scalar_select %p1269, %s25, 0
      %s1271 = sadd.s32 %s1270, %s1268
      %s1272 = smul.addr %s1271, 8
      %s1273 = scalar_lea.vmem %s8, %s1272
      // Predicated region
      $region49: #{cstr_forward.15} parent=47 // pred_check
        %p1274 = pneg %p213
      $region50: #{cstr_forward.15} parent=47 // pred_check_branch
        %1276 = sbr.rel (%p1274) target = $region52
      $region51: #{cstr_forward.15} parent=47 // pred_region
        _
      $region52: #{cstr_forward.15} parent=47 // pred_fallthru
        _
      // Predicated region
      $region53: #{cstr_forward.15} parent=47 // pred_check
        %p1277 = pneg %p241
      $region54: #{cstr_forward.15} parent=47 // pred_check_branch
        %1279 = sbr.rel (%p1277) target = $region56
      $region55: #{cstr_forward.15} parent=47 // pred_region
        _
      $region56: #{cstr_forward.15} parent=47 // pred_fallthru
        _
    $region48: #{cstr_forward.15} parent=5 // pred_fallthru
      _
    %p1280 = scmp.le.s32.totalorder 2, %s15
    // Predicated region
    $region57: #{cstr_forward.15} parent=5 // pred_check
      %p1281 = pneg %p1280
    $region58: #{cstr_forward.15} parent=5 // pred_check_branch
      %1283 = sbr.rel (%p1281) target = $region60
    $region59: #{cstr_forward.15} parent=5 // pred_region
      %s1284 = ssub.s32 %s15, 2
      // Predicated region
      $region61: #{cstr_forward.15} parent=59 // pred_check
        %p1285 = pneg %p219
      $region62: #{cstr_forward.15} parent=59 // pred_check_branch
        %1287 = sbr.rel (%p1285) target = $region64
      $region63: #{cstr_forward.15} parent=59 // pred_region
        %p1288 = scmp.lt.s32.totalorder %s26, 1
        %s1289 = scalar_select %p1288, %s26, 1
        %p1290 = scmp.lt.s32.totalorder %s27, 0
        %s1291 = scalar_select %p1290, %s27, 0
        %s1292 = sadd.s32 %s1291, %s1289
        %s1293 = smul.addr %s1292, 8
        %s1294 = scalar_lea.vmem %s7, %s1293
      $region64: #{cstr_forward.15} parent=59 // pred_fallthru
        _
      // Predicated region
      $region65: #{cstr_forward.15} parent=59 // pred_check
        %p1295 = pneg %p247
      $region66: #{cstr_forward.15} parent=59 // pred_check_branch
        %1297 = sbr.rel (%p1295) target = $region68
      $region67: #{cstr_forward.15} parent=59 // pred_region
        %p1298 = scmp.lt.s32.totalorder %s26, 1
        %s1299 = scalar_select %p1298, %s26, 1
        %p1300 = scmp.lt.s32.totalorder %s27, 0
        %s1301 = scalar_select %p1300, %s27, 0
        %s1302 = sadd.s32 %s1301, %s1299
        %s1303 = smul.addr %s1302, 8
        %s1304 = scalar_lea.vmem %s8, %s1303
      $region68: #{cstr_forward.15} parent=59 // pred_fallthru
        _
    $region60: #{cstr_forward.15} parent=5 // pred_fallthru
      _
  $region6: #{cstr_forward.15} parent=0 // loop_footer
    %s19 = sadd.s32 1, %s15
  $region7: #{cstr_forward.15} parent=0 // loop_footer_branch
    %14 = sbr.rel target = $region3
  $region8: #{cstr_forward.15} parent=0 // loop_exit
    _

</llo_original>
